<compile_context>
chip_gen: v5e
topology: v5e:2x2
jax: 0.10.0
libtpu: 0.0.40
codegen_flags: <defaults>
</compile_context>

<pallas_src>
import functools

import jax
import jax.numpy as jnp
from jax.experimental import pallas as pl
from jax.experimental.pallas import tpu as pltpu

_BN_EPS = 1e-5
_MM_DTYPE = jnp.float32   # flip to jnp.bfloat16 on v6e/v7x for lower HBM/VMEM bytes


# ------------------------------ Pallas kernels ------------------------------

def _conv_s2_kernel(ph_ref, w_ref, b_ref, y_ref, st_ref, *, kh, kw, oh, ow, cin, cout):
    """First conv (k=5, stride=2, pad=2) on a phase-split zero-padded input.

    ph_ref : (4, PH, PW, cin)   stride-2 phase planes of the padded image
    w_ref  : (kh*kw, cin, cout) flattened HWIO weights
    b_ref  : (1, cout)
    y_ref  : (oh, ow, cout)     raw conv output (pre-BN) -> consumed by next stage
    st_ref : (2, cout)          per-image [sum, sum_of_squares] for BatchNorm
    """
    m = oh * ow
    acc = jnp.zeros((m, cout), jnp.float32) + b_ref[...]
    for ki in range(kh):
        for kj in range(kw):
            p = (ki % 2) * 2 + (kj % 2)          # phase plane for this tap
            xs = ph_ref[p, ki // 2:ki // 2 + oh, kj // 2:kj // 2 + ow, :].reshape(m, cin)
            acc = acc + jnp.dot(xs.astype(_MM_DTYPE),
                                w_ref[ki * kw + kj].astype(_MM_DTYPE),
                                preferred_element_type=jnp.float32)
    y_ref[...] = acc.reshape(oh, ow, cout)
    s = jnp.sum(acc, axis=0, keepdims=True)
    ss = jnp.sum(acc * acc, axis=0, keepdims=True)
    st_ref[...] = jnp.concatenate([s, ss], axis=0)


def _conv_s1_kernel(sc_ref, sh_ref, x_ref, w_ref, b_ref, y_ref, st_ref, pad_scr,
                    *, kh, kw, pad, h, w, oh, ow, cin, cout):
    """Fused [prev-stage BN affine + Swish] -> stride-1 conv -> bias -> BN stats."""
    a = x_ref[...] * sc_ref[...] + sh_ref[...]          # BN affine of previous stage
    a = a * jax.nn.sigmoid(a)                           # Swish
    if pad > 0:                                         # zero-pad inside VMEM scratch
        pad_scr[...] = jnp.zeros((h + 2 * pad, w + 2 * pad, cin), jnp.float32)
    pad_scr[pad:pad + h, pad:pad + w, :] = a
    m = oh * ow
    acc = jnp.zeros((m, cout), jnp.float32) + b_ref[...]
    for ki in range(kh):
        for kj in range(kw):
            xs = pad_scr[ki:ki + oh, kj:kj + ow, :].reshape(m, cin)
            acc = acc + jnp.dot(xs.astype(_MM_DTYPE),
                                w_ref[ki * kw + kj].astype(_MM_DTYPE),
                                preferred_element_type=jnp.float32)
    y_ref[...] = acc.reshape(oh, ow, cout)
    s = jnp.sum(acc, axis=0, keepdims=True)
    ss = jnp.sum(acc * acc, axis=0, keepdims=True)
    st_ref[...] = jnp.concatenate([s, ss], axis=0)


def _bn_swish_residual_kernel(sc0_ref, sh0_ref, sc3_ref, sh3_ref, y0_ref, r3_ref, o_ref,
                              *, alpha):
    """out = swish(bn0(y0)) + alpha * swish(bn3(r3))  (x_in recomputed from raw y0)."""
    a = y0_ref[...] * sc0_ref[...] + sh0_ref[...]
    a = a * jax.nn.sigmoid(a)
    r = r3_ref[...] * sc3_ref[...] + sh3_ref[...]
    r = r * jax.nn.sigmoid(r)
    o_ref[...] = a + alpha * r


# ------------------------------ stage wrappers ------------------------------

def _compiler_params():
    # Batch axis is data-parallel -> both TensorCores get work on v7x.
    return pltpu.CompilerParams(dimension_semantics=("parallel",))


def _conv_stage_s2(x_nhwc, w_hwio, bias):
    """conv 5x5 / stride 2 / pad 2.  Returns (raw conv output NHWC, per-image stats)."""
    n, h, w, cin = x_nhwc.shape
    kh, kw, _, cout = w_hwio.shape
    assert (kh, kw) == (5, 5) and h % 2 == 0 and w % 2 == 0
    pad = 2
    oh = (h + 2 * pad - kh) // 2 + 1
    ow = (w + 2 * pad - kw) // 2 + 1
    # Zero-pad and split into 4 stride-2 phase planes (XLA, ~1.5x input bytes). This
    # replaces the 25x HBM im2col blow-up; patch formation happens entirely in VMEM.
    xp = jnp.pad(x_nhwc, ((0, 0), (pad, pad), (pad, pad), (0, 0)))
    ph = jnp.stack([xp[:, 0::2, 0::2, :], xp[:, 0::2, 1::2, :],
                    xp[:, 1::2, 0::2, :], xp[:, 1::2, 1::2, :]], axis=1)
    php, pwp = ph.shape[2], ph.shape[3]
    kern = functools.partial(_conv_s2_kernel, kh=kh, kw=kw, oh=oh, ow=ow, cin=cin, cout=cout)
    y, stats = pl.pallas_call(
        kern,
        grid=(n,),
        in_specs=[
            pl.BlockSpec((None, 4, php, pwp, cin), lambda i: (i, 0, 0, 0, 0)),
            pl.BlockSpec((kh * kw, cin, cout), lambda i: (0, 0, 0)),
            pl.BlockSpec((1, cout), lambda i: (0, 0)),
        ],
        out_specs=(
            pl.BlockSpec((None, oh, ow, cout), lambda i: (i, 0, 0, 0)),
            pl.BlockSpec((None, 2, cout), lambda i: (i, 0, 0)),
        ),
        out_shape=(
            jax.ShapeDtypeStruct((n, oh, ow, cout), jnp.float32),
            jax.ShapeDtypeStruct((n, 2, cout), jnp.float32),
        ),
        compiler_params=_compiler_params(),
    )(ph, w_hwio.reshape(kh * kw, cin, cout), bias.reshape(1, cout))
    return y, stats


def _conv_stage_s1(x_raw, scale, shift, w_hwio, bias, pad):
    """Fused [BN affine + Swish] -> conv (stride 1).  x_raw is the previous stage's raw
    conv output; (scale, shift) fold its BatchNorm."""
    n, h, w, cin = x_raw.shape
    kh, kw, _, cout = w_hwio.shape
    oh = h + 2 * pad - kh + 1
    ow = w + 2 * pad - kw + 1
    kern = functools.partial(_conv_s1_kernel, kh=kh, kw=kw, pad=pad,
                             h=h, w=w, oh=oh, ow=ow, cin=cin, cout=cout)
    y, stats = pl.pallas_call(
        kern,
        grid=(n,),
        in_specs=[
            pl.BlockSpec((1, 1, cin), lambda i: (0, 0, 0)),            # scale
            pl.BlockSpec((1, 1, cin), lambda i: (0, 0, 0)),            # shift
            pl.BlockSpec((None, h, w, cin), lambda i: (i, 0, 0, 0)),   # raw activations
            pl.BlockSpec((kh * kw, cin, cout), lambda i: (0, 0, 0)),   # weights
            pl.BlockSpec((1, cout), lambda i: (0, 0)),                 # bias
        ],
        out_specs=(
            pl.BlockSpec((None, oh, ow, cout), lambda i: (i, 0, 0, 0)),
            pl.BlockSpec((None, 2, cout), lambda i: (i, 0, 0)),
        ),
        out_shape=(
            jax.ShapeDtypeStruct((n, oh, ow, cout), jnp.float32),
            jax.ShapeDtypeStruct((n, 2, cout), jnp.float32),
        ),
        scratch_shapes=[pltpu.VMEM((h + 2 * pad, w + 2 * pad, cin), jnp.float32)],
        compiler_params=_compiler_params(),
    )(scale.reshape(1, 1, cin), shift.reshape(1, 1, cin), x_raw,
      w_hwio.reshape(kh * kw, cin, cout), bias.reshape(1, cout))
    return y, stats


def _final_stage(y0_raw, sc0, sh0, r3_raw, sc3, sh3, alpha):
    n, oh, ow, c = y0_raw.shape
    kern = functools.partial(_bn_swish_residual_kernel, alpha=alpha)
    vec = pl.BlockSpec((1, 1, c), lambda i: (0, 0, 0))
    act = pl.BlockSpec((None, oh, ow, c), lambda i: (i, 0, 0, 0))
    return pl.pallas_call(
        kern,
        grid=(n,),
        in_specs=[vec, vec, vec, vec, act, act],
        out_specs=pl.BlockSpec((None, oh, ow, c), lambda i: (i, 0, 0, 0)),
        out_shape=jax.ShapeDtypeStruct((n, oh, ow, c), jnp.float32),
        compiler_params=_compiler_params(),
    )(sc0.reshape(1, 1, c), sh0.reshape(1, 1, c),
      sc3.reshape(1, 1, c), sh3.reshape(1, 1, c), y0_raw, r3_raw)


def _bn_scale_shift(stats, gamma, beta, m_total, eps=_BN_EPS):
    """Fold global batch statistics (sum, sumsq reduced over all grid steps) into
    per-channel (scale, shift).  One-pass: var = E[x^2] - mean^2 (biased)."""
    s = jnp.sum(stats[:, 0, :], axis=0)
    ss = jnp.sum(stats[:, 1, :], axis=0)
    mean = s / m_total
    var = ss / m_total - mean * mean
    scale = gamma * jax.lax.rsqrt(var + eps)
    shift = beta - mean * scale
    return scale, shift


# ------------------------------ parameters ------------------------------

def init_params(key, in_channel, out_channel):
    dim = out_channel
    half = dim // 2
    keys = jax.random.split(key, 8)

    def w(k, shape):
        return 0.1 * jax.random.normal(k, shape, dtype=jnp.float32)

    return dict(
        noise_w=jnp.zeros((in_channel,), jnp.float32),          # nn.Parameter(zeros)
        conv_w=w(keys[0], (5, 5, in_channel, dim)),
        conv_b=w(keys[1], (dim,)),
        bn_g=jnp.ones((dim,), jnp.float32), bn_b=jnp.zeros((dim,), jnp.float32),
        rconv1_w=w(keys[2], (5, 5, dim, dim)), rconv1_b=w(keys[3], (dim,)),
        rbn1_g=jnp.ones((dim,), jnp.float32), rbn1_b=jnp.zeros((dim,), jnp.float32),
        rconv2_w=w(keys[4], (1, 1, dim, half)), rconv2_b=w(keys[5], (half,)),
        rbn2_g=jnp.ones((half,), jnp.float32), rbn2_b=jnp.zeros((half,), jnp.float32),
        rconv3_w=w(keys[6], (5, 5, half, dim)), rconv3_b=w(keys[7], (dim,)),
        rbn3_g=jnp.ones((dim,), jnp.float32), rbn3_b=jnp.zeros((dim,), jnp.float32),
    )


# ------------------------------ forward (Pallas) ------------------------------

def conv_block_forward(params, x_nchw, noise=None):
    x = jnp.transpose(x_nchw, (0, 2, 3, 1)).astype(jnp.float32)   # NCHW -> NHWC
    if noise is not None:
        # TODO(synk): PyTorch draws noise via torch.randn_like(x); here the caller
        # supplies the (NCHW) noise tensor so RNG semantics are not replicated.
        x = x + params["noise_w"][None, None, None, :] * jnp.transpose(noise, (0, 2, 3, 1))

    # stage 0: _conv (k5 s2 p2); BN0 stats accumulated in-kernel
    y0, st0 = _conv_stage_s2(x, params["conv_w"], params["conv_b"])
    n, oh, ow, dim = y0.shape
    m = n * oh * ow
    sc0, sh0 = _bn_scale_shift(st0, params["bn_g"], params["bn_b"], m)

    # ResidualBlock: each conv kernel applies the previous BN affine + Swish on the fly
    r1, st1 = _conv_stage_s1(y0, sc0, sh0, params["rconv1_w"], params["rconv1_b"], pad=2)
    sc1, sh1 = _bn_scale_shift(st1, params["rbn1_g"], params["rbn1_b"], m)

    r2, st2 = _conv_stage_s1(r1, sc1, sh1, params["rconv2_w"], params["rconv2_b"], pad=0)
    sc2, sh2 = _bn_scale_shift(st2, params["rbn2_g"], params["rbn2_b"], m)

    r3, st3 = _conv_stage_s1(r2, sc2, sh2, params["rconv3_w"], params["rconv3_b"], pad=2)
    sc3, sh3 = _bn_scale_shift(st3, params["rbn3_g"], params["rbn3_b"], m)

    # fused finale: out = swish(bn0(y0)) + 0.1 * swish(bn3(r3))
    out = _final_stage(y0, sc0, sh0, r3, sc3, sh3, alpha=0.1)
    return jnp.transpose(out, (0, 3, 1, 2))                       # back to NCHW


# ------------------------------ pure-JAX reference ------------------------------

def _conv_ref(x, w, b, stride, pad):
    y = jax.lax.conv_general_dilated(
        x, w, window_strides=(stride, stride),
        padding=[(pad, pad), (pad, pad)],
        dimension_numbers=("NHWC", "HWIO", "NHWC"))
    return y + b[None, None, None, :]


def _bn_ref(x, g, b, eps=_BN_EPS):
    mean = x.mean(axis=(0, 1, 2), keepdims=True)
    var = jnp.square(x - mean).mean(axis=(0, 1, 2), keepdims=True)
    return (x - mean) * jax.lax.rsqrt(var + eps) * g + b


def _swish_ref(x):
    return x * jax.nn.sigmoid(x)


def conv_block_ref(params, x_nchw, noise=None):
    x = jnp.transpose(x_nchw, (0, 2, 3, 1)).astype(jnp.float32)
    if noise is not None:
        x = x + params["noise_w"][None, None, None, :] * jnp.transpose(noise, (0, 2, 3, 1))
    y = _swish_ref(_bn_ref(_conv_ref(x, params["conv_w"], params["conv_b"], 2, 2),
                           params["bn_g"], params["bn_b"]))
    r = _swish_ref(_bn_ref(_conv_ref(y, params["rconv1_w"], params["rconv1_b"], 1, 2),
                           params["rbn1_g"], params["rbn1_b"]))
    r = _swish_ref(_bn_ref(_conv_ref(r, params["rconv2_w"], params["rconv2_b"], 1, 0),
                           params["rbn2_g"], params["rbn2_b"]))
    r = _bn_ref(_conv_ref(r, params["rconv3_w"], params["rconv3_b"], 1, 2),
                params["rbn3_g"], params["rbn3_b"])
    out = y + 0.1 * _swish_ref(r)
    return jnp.transpose(out, (0, 3, 1, 2))


if __name__ == "__main__":
    key = jax.random.PRNGKey(0)
    k_param, k_x = jax.random.split(key)

    in_channel, out_channel = 4, 8
    params = init_params(k_param, in_channel, out_channel)
    x = jax.random.normal(k_x, (2, in_channel, 16, 16), dtype=jnp.float32)  # NCHW

    fwd = jax.jit(conv_block_forward)
    out = jax.block_until_ready(fwd(params, x))

    ref = jax.block_until_ready(conv_block_ref(params, x, noise=None))
    assert out.shape == (2, out_channel, 8, 8), out.shape
    assert bool(jnp.allclose(out, ref, rtol=1e-3, atol=1e-3)), float(jnp.max(jnp.abs(out - ref)))

    print("KERNEL_OK")
</pallas_src>

<mosaic_0001>
module attributes {stable_mosaic.version = 11 : i64} {
  func.func @_conv_s2_kernel(%arg0: i32, %arg1: memref<1x4x10x10x4xf32, #tpu.memory_space<vmem>>, %arg2: memref<25x4x8xf32, #tpu.memory_space<vmem>>, %arg3: memref<1x8xf32, #tpu.memory_space<vmem>>, %arg4: memref<1x8x8x8xf32, #tpu.memory_space<vmem>>, %arg5: memref<1x2x8xf32, #tpu.memory_space<vmem>>) attributes {dimension_semantics = [#tpu.dimension_semantics<parallel>], iteration_bounds = array<i64: 2>, scalar_prefetch = 0 : i64, scratch_operands = 0 : i64, tpu.core_type = #tpu.core_type<tc>, window_params = [{transform_indices = @transform_0, window_bounds = array<i64: 1, 4, 10, 10, 4>}, {pipeline_mode = #tpu.pipeline_mode<synchronous>, transform_indices = @transform_1, window_bounds = array<i64: 25, 4, 8>}, {pipeline_mode = #tpu.pipeline_mode<synchronous>, transform_indices = @transform_2, window_bounds = array<i64: 1, 8>}, {transform_indices = @transform_3, window_bounds = array<i64: 1, 8, 8, 8>}, {transform_indices = @transform_4, window_bounds = array<i64: 1, 2, 8>}]} {
    %cst = arith.constant 0.000000e+00 : f32
    %0 = vector.broadcast %cst : f32 to vector<64x8xf32>
    %c0 = arith.constant 0 : index
    %c0_0 = arith.constant 0 : index
    %1 = vector.load %arg3[%c0, %c0_0] : memref<1x8xf32, #tpu.memory_space<vmem>>, vector<1x8xf32>
    %2 = vector.broadcast %1 : vector<1x8xf32> to vector<64x8xf32>
    %3 = arith.addf %0, %2 : vector<64x8xf32>
    %c0_1 = arith.constant 0 : index
    %c0_2 = arith.constant 0 : index
    %c0_3 = arith.constant 0 : index
    %c0_4 = arith.constant 0 : index
    %c0_5 = arith.constant 0 : index
    %4 = vector.load %arg1[%c0_1, %c0_2, %c0_3, %c0_4, %c0_5] : memref<1x4x10x10x4xf32, #tpu.memory_space<vmem>>, vector<1x1x8x8x4xf32>
    %5 = vector.shape_cast %4 : vector<1x1x8x8x4xf32> to vector<8x8x4xf32>
    %6 = vector.shape_cast %5 : vector<8x8x4xf32> to vector<64x4xf32>
    %c0_6 = arith.constant 0 : index
    %c0_7 = arith.constant 0 : index
    %c0_8 = arith.constant 0 : index
    %7 = vector.load %arg2[%c0_6, %c0_7, %c0_8] : memref<25x4x8xf32, #tpu.memory_space<vmem>>, vector<1x4x8xf32>
    %8 = vector.shape_cast %7 : vector<1x4x8xf32> to vector<4x8xf32>
    %cst_9 = arith.constant dense<0.000000e+00> : vector<64x8xf32>
    %9 = tpu.matmul %6, %8, %cst_9 {dimension_numbers = #tpu.dot_dimension_numbers<[1], [0], [0], [1], [0, 0, 1, 1], [], []>} : vector<64x4xf32>, vector<4x8xf32>, vector<64x8xf32> -> vector<64x8xf32>
    %10 = arith.addf %3, %9 : vector<64x8xf32>
    %c0_10 = arith.constant 0 : index
    %c1 = arith.constant 1 : index
    %c0_11 = arith.constant 0 : index
    %c0_12 = arith.constant 0 : index
    %c0_13 = arith.constant 0 : index
    %11 = vector.load %arg1[%c0_10, %c1, %c0_11, %c0_12, %c0_13] : memref<1x4x10x10x4xf32, #tpu.memory_space<vmem>>, vector<1x1x8x8x4xf32>
    %12 = vector.shape_cast %11 : vector<1x1x8x8x4xf32> to vector<8x8x4xf32>
    %13 = vector.shape_cast %12 : vector<8x8x4xf32> to vector<64x4xf32>
    %c1_14 = arith.constant 1 : index
    %c0_15 = arith.constant 0 : index
    %c0_16 = arith.constant 0 : index
    %14 = vector.load %arg2[%c1_14, %c0_15, %c0_16] : memref<25x4x8xf32, #tpu.memory_space<vmem>>, vector<1x4x8xf32>
    %15 = vector.shape_cast %14 : vector<1x4x8xf32> to vector<4x8xf32>
    %cst_17 = arith.constant dense<0.000000e+00> : vector<64x8xf32>
    %16 = tpu.matmul %13, %15, %cst_17 {dimension_numbers = #tpu.dot_dimension_numbers<[1], [0], [0], [1], [0, 0, 1, 1], [], []>} : vector<64x4xf32>, vector<4x8xf32>, vector<64x8xf32> -> vector<64x8xf32>
    %17 = arith.addf %10, %16 : vector<64x8xf32>
    %c0_18 = arith.constant 0 : index
    %c0_19 = arith.constant 0 : index
    %c0_20 = arith.constant 0 : index
    %c1_21 = arith.constant 1 : index
    %c0_22 = arith.constant 0 : index
    %18 = vector.load %arg1[%c0_18, %c0_19, %c0_20, %c1_21, %c0_22] : memref<1x4x10x10x4xf32, #tpu.memory_space<vmem>>, vector<1x1x8x8x4xf32>
    %19 = vector.shape_cast %18 : vector<1x1x8x8x4xf32> to vector<8x8x4xf32>
    %20 = vector.shape_cast %19 : vector<8x8x4xf32> to vector<64x4xf32>
    %c2 = arith.constant 2 : index
    %c0_23 = arith.constant 0 : index
    %c0_24 = arith.constant 0 : index
    %21 = vector.load %arg2[%c2, %c0_23, %c0_24] : memref<25x4x8xf32, #tpu.memory_space<vmem>>, vector<1x4x8xf32>
    %22 = vector.shape_cast %21 : vector<1x4x8xf32> to vector<4x8xf32>
    %cst_25 = arith.constant dense<0.000000e+00> : vector<64x8xf32>
    %23 = tpu.matmul %20, %22, %cst_25 {dimension_numbers = #tpu.dot_dimension_numbers<[1], [0], [0], [1], [0, 0, 1, 1], [], []>} : vector<64x4xf32>, vector<4x8xf32>, vector<64x8xf32> -> vector<64x8xf32>
    %24 = arith.addf %17, %23 : vector<64x8xf32>
    %c0_26 = arith.constant 0 : index
    %c1_27 = arith.constant 1 : index
    %c0_28 = arith.constant 0 : index
    %c1_29 = arith.constant 1 : index
    %c0_30 = arith.constant 0 : index
    %25 = vector.load %arg1[%c0_26, %c1_27, %c0_28, %c1_29, %c0_30] : memref<1x4x10x10x4xf32, #tpu.memory_space<vmem>>, vector<1x1x8x8x4xf32>
    %26 = vector.shape_cast %25 : vector<1x1x8x8x4xf32> to vector<8x8x4xf32>
    %27 = vector.shape_cast %26 : vector<8x8x4xf32> to vector<64x4xf32>
    %c3 = arith.constant 3 : index
    %c0_31 = arith.constant 0 : index
    %c0_32 = arith.constant 0 : index
    %28 = vector.load %arg2[%c3, %c0_31, %c0_32] : memref<25x4x8xf32, #tpu.memory_space<vmem>>, vector<1x4x8xf32>
    %29 = vector.shape_cast %28 : vector<1x4x8xf32> to vector<4x8xf32>
    %cst_33 = arith.constant dense<0.000000e+00> : vector<64x8xf32>
    %30 = tpu.matmul %27, %29, %cst_33 {dimension_numbers = #tpu.dot_dimension_numbers<[1], [0], [0], [1], [0, 0, 1, 1], [], []>} : vector<64x4xf32>, vector<4x8xf32>, vector<64x8xf32> -> vector<64x8xf32>
    %31 = arith.addf %24, %30 : vector<64x8xf32>
    %c0_34 = arith.constant 0 : index
    %c0_35 = arith.constant 0 : index
    %c0_36 = arith.constant 0 : index
    %c2_37 = arith.constant 2 : index
    %c0_38 = arith.constant 0 : index
    %32 = vector.load %arg1[%c0_34, %c0_35, %c0_36, %c2_37, %c0_38] : memref<1x4x10x10x4xf32, #tpu.memory_space<vmem>>, vector<1x1x8x8x4xf32>
    %33 = vector.shape_cast %32 : vector<1x1x8x8x4xf32> to vector<8x8x4xf32>
    %34 = vector.shape_cast %33 : vector<8x8x4xf32> to vector<64x4xf32>
    %c4 = arith.constant 4 : index
    %c0_39 = arith.constant 0 : index
    %c0_40 = arith.constant 0 : index
    %35 = vector.load %arg2[%c4, %c0_39, %c0_40] : memref<25x4x8xf32, #tpu.memory_space<vmem>>, vector<1x4x8xf32>
    %36 = vector.shape_cast %35 : vector<1x4x8xf32> to vector<4x8xf32>
    %cst_41 = arith.constant dense<0.000000e+00> : vector<64x8xf32>
    %37 = tpu.matmul %34, %36, %cst_41 {dimension_numbers = #tpu.dot_dimension_numbers<[1], [0], [0], [1], [0, 0, 1, 1], [], []>} : vector<64x4xf32>, vector<4x8xf32>, vector<64x8xf32> -> vector<64x8xf32>
    %38 = arith.addf %31, %37 : vector<64x8xf32>
    %c0_42 = arith.constant 0 : index
    %c2_43 = arith.constant 2 : index
    %c0_44 = arith.constant 0 : index
    %c0_45 = arith.constant 0 : index
    %c0_46 = arith.constant 0 : index
    %39 = vector.load %arg1[%c0_42, %c2_43, %c0_44, %c0_45, %c0_46] : memref<1x4x10x10x4xf32, #tpu.memory_space<vmem>>, vector<1x1x8x8x4xf32>
    %40 = vector.shape_cast %39 : vector<1x1x8x8x4xf32> to vector<8x8x4xf32>
    %41 = vector.shape_cast %40 : vector<8x8x4xf32> to vector<64x4xf32>
    %c5 = arith.constant 5 : index
    %c0_47 = arith.constant 0 : index
    %c0_48 = arith.constant 0 : index
    %42 = vector.load %arg2[%c5, %c0_47, %c0_48] : memref<25x4x8xf32, #tpu.memory_space<vmem>>, vector<1x4x8xf32>
    %43 = vector.shape_cast %42 : vector<1x4x8xf32> to vector<4x8xf32>
    %cst_49 = arith.constant dense<0.000000e+00> : vector<64x8xf32>
    %44 = tpu.matmul %41, %43, %cst_49 {dimension_numbers = #tpu.dot_dimension_numbers<[1], [0], [0], [1], [0, 0, 1, 1], [], []>} : vector<64x4xf32>, vector<4x8xf32>, vector<64x8xf32> -> vector<64x8xf32>
    %45 = arith.addf %38, %44 : vector<64x8xf32>
    %c0_50 = arith.constant 0 : index
    %c3_51 = arith.constant 3 : index
    %c0_52 = arith.constant 0 : index
    %c0_53 = arith.constant 0 : index
    %c0_54 = arith.constant 0 : index
    %46 = vector.load %arg1[%c0_50, %c3_51, %c0_52, %c0_53, %c0_54] : memref<1x4x10x10x4xf32, #tpu.memory_space<vmem>>, vector<1x1x8x8x4xf32>
    %47 = vector.shape_cast %46 : vector<1x1x8x8x4xf32> to vector<8x8x4xf32>
    %48 = vector.shape_cast %47 : vector<8x8x4xf32> to vector<64x4xf32>
    %c6 = arith.constant 6 : index
    %c0_55 = arith.constant 0 : index
    %c0_56 = arith.constant 0 : index
    %49 = vector.load %arg2[%c6, %c0_55, %c0_56] : memref<25x4x8xf32, #tpu.memory_space<vmem>>, vector<1x4x8xf32>
    %50 = vector.shape_cast %49 : vector<1x4x8xf32> to vector<4x8xf32>
    %cst_57 = arith.constant dense<0.000000e+00> : vector<64x8xf32>
    %51 = tpu.matmul %48, %50, %cst_57 {dimension_numbers = #tpu.dot_dimension_numbers<[1], [0], [0], [1], [0, 0, 1, 1], [], []>} : vector<64x4xf32>, vector<4x8xf32>, vector<64x8xf32> -> vector<64x8xf32>
    %52 = arith.addf %45, %51 : vector<64x8xf32>
    %c0_58 = arith.constant 0 : index
    %c2_59 = arith.constant 2 : index
    %c0_60 = arith.constant 0 : index
    %c1_61 = arith.constant 1 : index
    %c0_62 = arith.constant 0 : index
    %53 = vector.load %arg1[%c0_58, %c2_59, %c0_60, %c1_61, %c0_62] : memref<1x4x10x10x4xf32, #tpu.memory_space<vmem>>, vector<1x1x8x8x4xf32>
    %54 = vector.shape_cast %53 : vector<1x1x8x8x4xf32> to vector<8x8x4xf32>
    %55 = vector.shape_cast %54 : vector<8x8x4xf32> to vector<64x4xf32>
    %c7 = arith.constant 7 : index
    %c0_63 = arith.constant 0 : index
    %c0_64 = arith.constant 0 : index
    %56 = vector.load %arg2[%c7, %c0_63, %c0_64] : memref<25x4x8xf32, #tpu.memory_space<vmem>>, vector<1x4x8xf32>
    %57 = vector.shape_cast %56 : vector<1x4x8xf32> to vector<4x8xf32>
    %cst_65 = arith.constant dense<0.000000e+00> : vector<64x8xf32>
    %58 = tpu.matmul %55, %57, %cst_65 {dimension_numbers = #tpu.dot_dimension_numbers<[1], [0], [0], [1], [0, 0, 1, 1], [], []>} : vector<64x4xf32>, vector<4x8xf32>, vector<64x8xf32> -> vector<64x8xf32>
    %59 = arith.addf %52, %58 : vector<64x8xf32>
    %c0_66 = arith.constant 0 : index
    %c3_67 = arith.constant 3 : index
    %c0_68 = arith.constant 0 : index
    %c1_69 = arith.constant 1 : index
    %c0_70 = arith.constant 0 : index
    %60 = vector.load %arg1[%c0_66, %c3_67, %c0_68, %c1_69, %c0_70] : memref<1x4x10x10x4xf32, #tpu.memory_space<vmem>>, vector<1x1x8x8x4xf32>
    %61 = vector.shape_cast %60 : vector<1x1x8x8x4xf32> to vector<8x8x4xf32>
    %62 = vector.shape_cast %61 : vector<8x8x4xf32> to vector<64x4xf32>
    %c8 = arith.constant 8 : index
    %c0_71 = arith.constant 0 : index
    %c0_72 = arith.constant 0 : index
    %63 = vector.load %arg2[%c8, %c0_71, %c0_72] : memref<25x4x8xf32, #tpu.memory_space<vmem>>, vector<1x4x8xf32>
    %64 = vector.shape_cast %63 : vector<1x4x8xf32> to vector<4x8xf32>
    %cst_73 = arith.constant dense<0.000000e+00> : vector<64x8xf32>
    %65 = tpu.matmul %62, %64, %cst_73 {dimension_numbers = #tpu.dot_dimension_numbers<[1], [0], [0], [1], [0, 0, 1, 1], [], []>} : vector<64x4xf32>, vector<4x8xf32>, vector<64x8xf32> -> vector<64x8xf32>
    %66 = arith.addf %59, %65 : vector<64x8xf32>
    %c0_74 = arith.constant 0 : index
    %c2_75 = arith.constant 2 : index
    %c0_76 = arith.constant 0 : index
    %c2_77 = arith.constant 2 : index
    %c0_78 = arith.constant 0 : index
    %67 = vector.load %arg1[%c0_74, %c2_75, %c0_76, %c2_77, %c0_78] : memref<1x4x10x10x4xf32, #tpu.memory_space<vmem>>, vector<1x1x8x8x4xf32>
    %68 = vector.shape_cast %67 : vector<1x1x8x8x4xf32> to vector<8x8x4xf32>
    %69 = vector.shape_cast %68 : vector<8x8x4xf32> to vector<64x4xf32>
    %c9 = arith.constant 9 : index
    %c0_79 = arith.constant 0 : index
    %c0_80 = arith.constant 0 : index
    %70 = vector.load %arg2[%c9, %c0_79, %c0_80] : memref<25x4x8xf32, #tpu.memory_space<vmem>>, vector<1x4x8xf32>
    %71 = vector.shape_cast %70 : vector<1x4x8xf32> to vector<4x8xf32>
    %cst_81 = arith.constant dense<0.000000e+00> : vector<64x8xf32>
    %72 = tpu.matmul %69, %71, %cst_81 {dimension_numbers = #tpu.dot_dimension_numbers<[1], [0], [0], [1], [0, 0, 1, 1], [], []>} : vector<64x4xf32>, vector<4x8xf32>, vector<64x8xf32> -> vector<64x8xf32>
    %73 = arith.addf %66, %72 : vector<64x8xf32>
    %c0_82 = arith.constant 0 : index
    %c0_83 = arith.constant 0 : index
    %c1_84 = arith.constant 1 : index
    %c0_85 = arith.constant 0 : index
    %c0_86 = arith.constant 0 : index
    %74 = vector.load %arg1[%c0_82, %c0_83, %c1_84, %c0_85, %c0_86] : memref<1x4x10x10x4xf32, #tpu.memory_space<vmem>>, vector<1x1x8x8x4xf32>
    %75 = vector.shape_cast %74 : vector<1x1x8x8x4xf32> to vector<8x8x4xf32>
    %76 = vector.shape_cast %75 : vector<8x8x4xf32> to vector<64x4xf32>
    %c10 = arith.constant 10 : index
    %c0_87 = arith.constant 0 : index
    %c0_88 = arith.constant 0 : index
    %77 = vector.load %arg2[%c10, %c0_87, %c0_88] : memref<25x4x8xf32, #tpu.memory_space<vmem>>, vector<1x4x8xf32>
    %78 = vector.shape_cast %77 : vector<1x4x8xf32> to vector<4x8xf32>
    %cst_89 = arith.constant dense<0.000000e+00> : vector<64x8xf32>
    %79 = tpu.matmul %76, %78, %cst_89 {dimension_numbers = #tpu.dot_dimension_numbers<[1], [0], [0], [1], [0, 0, 1, 1], [], []>} : vector<64x4xf32>, vector<4x8xf32>, vector<64x8xf32> -> vector<64x8xf32>
    %80 = arith.addf %73, %79 : vector<64x8xf32>
    %c0_90 = arith.constant 0 : index
    %c1_91 = arith.constant 1 : index
    %c1_92 = arith.constant 1 : index
    %c0_93 = arith.constant 0 : index
    %c0_94 = arith.constant 0 : index
    %81 = vector.load %arg1[%c0_90, %c1_91, %c1_92, %c0_93, %c0_94] : memref<1x4x10x10x4xf32, #tpu.memory_space<vmem>>, vector<1x1x8x8x4xf32>
    %82 = vector.shape_cast %81 : vector<1x1x8x8x4xf32> to vector<8x8x4xf32>
    %83 = vector.shape_cast %82 : vector<8x8x4xf32> to vector<64x4xf32>
    %c11 = arith.constant 11 : index
    %c0_95 = arith.constant 0 : index
    %c0_96 = arith.constant 0 : index
    %84 = vector.load %arg2[%c11, %c0_95, %c0_96] : memref<25x4x8xf32, #tpu.memory_space<vmem>>, vector<1x4x8xf32>
    %85 = vector.shape_cast %84 : vector<1x4x8xf32> to vector<4x8xf32>
    %cst_97 = arith.constant dense<0.000000e+00> : vector<64x8xf32>
    %86 = tpu.matmul %83, %85, %cst_97 {dimension_numbers = #tpu.dot_dimension_numbers<[1], [0], [0], [1], [0, 0, 1, 1], [], []>} : vector<64x4xf32>, vector<4x8xf32>, vector<64x8xf32> -> vector<64x8xf32>
    %87 = arith.addf %80, %86 : vector<64x8xf32>
    %c0_98 = arith.constant 0 : index
    %c0_99 = arith.constant 0 : index
    %c1_100 = arith.constant 1 : index
    %c1_101 = arith.constant 1 : index
    %c0_102 = arith.constant 0 : index
    %88 = vector.load %arg1[%c0_98, %c0_99, %c1_100, %c1_101, %c0_102] : memref<1x4x10x10x4xf32, #tpu.memory_space<vmem>>, vector<1x1x8x8x4xf32>
    %89 = vector.shape_cast %88 : vector<1x1x8x8x4xf32> to vector<8x8x4xf32>
    %90 = vector.shape_cast %89 : vector<8x8x4xf32> to vector<64x4xf32>
    %c12 = arith.constant 12 : index
    %c0_103 = arith.constant 0 : index
    %c0_104 = arith.constant 0 : index
    %91 = vector.load %arg2[%c12, %c0_103, %c0_104] : memref<25x4x8xf32, #tpu.memory_space<vmem>>, vector<1x4x8xf32>
    %92 = vector.shape_cast %91 : vector<1x4x8xf32> to vector<4x8xf32>
    %cst_105 = arith.constant dense<0.000000e+00> : vector<64x8xf32>
    %93 = tpu.matmul %90, %92, %cst_105 {dimension_numbers = #tpu.dot_dimension_numbers<[1], [0], [0], [1], [0, 0, 1, 1], [], []>} : vector<64x4xf32>, vector<4x8xf32>, vector<64x8xf32> -> vector<64x8xf32>
    %94 = arith.addf %87, %93 : vector<64x8xf32>
    %c0_106 = arith.constant 0 : index
    %c1_107 = arith.constant 1 : index
    %c1_108 = arith.constant 1 : index
    %c1_109 = arith.constant 1 : index
    %c0_110 = arith.constant 0 : index
    %95 = vector.load %arg1[%c0_106, %c1_107, %c1_108, %c1_109, %c0_110] : memref<1x4x10x10x4xf32, #tpu.memory_space<vmem>>, vector<1x1x8x8x4xf32>
    %96 = vector.shape_cast %95 : vector<1x1x8x8x4xf32> to vector<8x8x4xf32>
    %97 = vector.shape_cast %96 : vector<8x8x4xf32> to vector<64x4xf32>
    %c13 = arith.constant 13 : index
    %c0_111 = arith.constant 0 : index
    %c0_112 = arith.constant 0 : index
    %98 = vector.load %arg2[%c13, %c0_111, %c0_112] : memref<25x4x8xf32, #tpu.memory_space<vmem>>, vector<1x4x8xf32>
    %99 = vector.shape_cast %98 : vector<1x4x8xf32> to vector<4x8xf32>
    %cst_113 = arith.constant dense<0.000000e+00> : vector<64x8xf32>
    %100 = tpu.matmul %97, %99, %cst_113 {dimension_numbers = #tpu.dot_dimension_numbers<[1], [0], [0], [1], [0, 0, 1, 1], [], []>} : vector<64x4xf32>, vector<4x8xf32>, vector<64x8xf32> -> vector<64x8xf32>
    %101 = arith.addf %94, %100 : vector<64x8xf32>
    %c0_114 = arith.constant 0 : index
    %c0_115 = arith.constant 0 : index
    %c1_116 = arith.constant 1 : index
    %c2_117 = arith.constant 2 : index
    %c0_118 = arith.constant 0 : index
    %102 = vector.load %arg1[%c0_114, %c0_115, %c1_116, %c2_117, %c0_118] : memref<1x4x10x10x4xf32, #tpu.memory_space<vmem>>, vector<1x1x8x8x4xf32>
    %103 = vector.shape_cast %102 : vector<1x1x8x8x4xf32> to vector<8x8x4xf32>
    %104 = vector.shape_cast %103 : vector<8x8x4xf32> to vector<64x4xf32>
    %c14 = arith.constant 14 : index
    %c0_119 = arith.constant 0 : index
    %c0_120 = arith.constant 0 : index
    %105 = vector.load %arg2[%c14, %c0_119, %c0_120] : memref<25x4x8xf32, #tpu.memory_space<vmem>>, vector<1x4x8xf32>
    %106 = vector.shape_cast %105 : vector<1x4x8xf32> to vector<4x8xf32>
    %cst_121 = arith.constant dense<0.000000e+00> : vector<64x8xf32>
    %107 = tpu.matmul %104, %106, %cst_121 {dimension_numbers = #tpu.dot_dimension_numbers<[1], [0], [0], [1], [0, 0, 1, 1], [], []>} : vector<64x4xf32>, vector<4x8xf32>, vector<64x8xf32> -> vector<64x8xf32>
    %108 = arith.addf %101, %107 : vector<64x8xf32>
    %c0_122 = arith.constant 0 : index
    %c2_123 = arith.constant 2 : index
    %c1_124 = arith.constant 1 : index
    %c0_125 = arith.constant 0 : index
    %c0_126 = arith.constant 0 : index
    %109 = vector.load %arg1[%c0_122, %c2_123, %c1_124, %c0_125, %c0_126] : memref<1x4x10x10x4xf32, #tpu.memory_space<vmem>>, vector<1x1x8x8x4xf32>
    %110 = vector.shape_cast %109 : vector<1x1x8x8x4xf32> to vector<8x8x4xf32>
    %111 = vector.shape_cast %110 : vector<8x8x4xf32> to vector<64x4xf32>
    %c15 = arith.constant 15 : index
    %c0_127 = arith.constant 0 : index
    %c0_128 = arith.constant 0 : index
    %112 = vector.load %arg2[%c15, %c0_127, %c0_128] : memref<25x4x8xf32, #tpu.memory_space<vmem>>, vector<1x4x8xf32>
    %113 = vector.shape_cast %112 : vector<1x4x8xf32> to vector<4x8xf32>
    %cst_129 = arith.constant dense<0.000000e+00> : vector<64x8xf32>
    %114 = tpu.matmul %111, %113, %cst_129 {dimension_numbers = #tpu.dot_dimension_numbers<[1], [0], [0], [1], [0, 0, 1, 1], [], []>} : vector<64x4xf32>, vector<4x8xf32>, vector<64x8xf32> -> vector<64x8xf32>
    %115 = arith.addf %108, %114 : vector<64x8xf32>
    %c0_130 = arith.constant 0 : index
    %c3_131 = arith.constant 3 : index
    %c1_132 = arith.constant 1 : index
    %c0_133 = arith.constant 0 : index
    %c0_134 = arith.constant 0 : index
    %116 = vector.load %arg1[%c0_130, %c3_131, %c1_132, %c0_133, %c0_134] : memref<1x4x10x10x4xf32, #tpu.memory_space<vmem>>, vector<1x1x8x8x4xf32>
    %117 = vector.shape_cast %116 : vector<1x1x8x8x4xf32> to vector<8x8x4xf32>
    %118 = vector.shape_cast %117 : vector<8x8x4xf32> to vector<64x4xf32>
    %c16 = arith.constant 16 : index
    %c0_135 = arith.constant 0 : index
    %c0_136 = arith.constant 0 : index
    %119 = vector.load %arg2[%c16, %c0_135, %c0_136] : memref<25x4x8xf32, #tpu.memory_space<vmem>>, vector<1x4x8xf32>
    %120 = vector.shape_cast %119 : vector<1x4x8xf32> to vector<4x8xf32>
    %cst_137 = arith.constant dense<0.000000e+00> : vector<64x8xf32>
    %121 = tpu.matmul %118, %120, %cst_137 {dimension_numbers = #tpu.dot_dimension_numbers<[1], [0], [0], [1], [0, 0, 1, 1], [], []>} : vector<64x4xf32>, vector<4x8xf32>, vector<64x8xf32> -> vector<64x8xf32>
    %122 = arith.addf %115, %121 : vector<64x8xf32>
    %c0_138 = arith.constant 0 : index
    %c2_139 = arith.constant 2 : index
    %c1_140 = arith.constant 1 : index
    %c1_141 = arith.constant 1 : index
    %c0_142 = arith.constant 0 : index
    %123 = vector.load %arg1[%c0_138, %c2_139, %c1_140, %c1_141, %c0_142] : memref<1x4x10x10x4xf32, #tpu.memory_space<vmem>>, vector<1x1x8x8x4xf32>
    %124 = vector.shape_cast %123 : vector<1x1x8x8x4xf32> to vector<8x8x4xf32>
    %125 = vector.shape_cast %124 : vector<8x8x4xf32> to vector<64x4xf32>
    %c17 = arith.constant 17 : index
    %c0_143 = arith.constant 0 : index
    %c0_144 = arith.constant 0 : index
    %126 = vector.load %arg2[%c17, %c0_143, %c0_144] : memref<25x4x8xf32, #tpu.memory_space<vmem>>, vector<1x4x8xf32>
    %127 = vector.shape_cast %126 : vector<1x4x8xf32> to vector<4x8xf32>
    %cst_145 = arith.constant dense<0.000000e+00> : vector<64x8xf32>
    %128 = tpu.matmul %125, %127, %cst_145 {dimension_numbers = #tpu.dot_dimension_numbers<[1], [0], [0], [1], [0, 0, 1, 1], [], []>} : vector<64x4xf32>, vector<4x8xf32>, vector<64x8xf32> -> vector<64x8xf32>
    %129 = arith.addf %122, %128 : vector<64x8xf32>
    %c0_146 = arith.constant 0 : index
    %c3_147 = arith.constant 3 : index
    %c1_148 = arith.constant 1 : index
    %c1_149 = arith.constant 1 : index
    %c0_150 = arith.constant 0 : index
    %130 = vector.load %arg1[%c0_146, %c3_147, %c1_148, %c1_149, %c0_150] : memref<1x4x10x10x4xf32, #tpu.memory_space<vmem>>, vector<1x1x8x8x4xf32>
    %131 = vector.shape_cast %130 : vector<1x1x8x8x4xf32> to vector<8x8x4xf32>
    %132 = vector.shape_cast %131 : vector<8x8x4xf32> to vector<64x4xf32>
    %c18 = arith.constant 18 : index
    %c0_151 = arith.constant 0 : index
    %c0_152 = arith.constant 0 : index
    %133 = vector.load %arg2[%c18, %c0_151, %c0_152] : memref<25x4x8xf32, #tpu.memory_space<vmem>>, vector<1x4x8xf32>
    %134 = vector.shape_cast %133 : vector<1x4x8xf32> to vector<4x8xf32>
    %cst_153 = arith.constant dense<0.000000e+00> : vector<64x8xf32>
    %135 = tpu.matmul %132, %134, %cst_153 {dimension_numbers = #tpu.dot_dimension_numbers<[1], [0], [0], [1], [0, 0, 1, 1], [], []>} : vector<64x4xf32>, vector<4x8xf32>, vector<64x8xf32> -> vector<64x8xf32>
    %136 = arith.addf %129, %135 : vector<64x8xf32>
    %c0_154 = arith.constant 0 : index
    %c2_155 = arith.constant 2 : index
    %c1_156 = arith.constant 1 : index
    %c2_157 = arith.constant 2 : index
    %c0_158 = arith.constant 0 : index
    %137 = vector.load %arg1[%c0_154, %c2_155, %c1_156, %c2_157, %c0_158] : memref<1x4x10x10x4xf32, #tpu.memory_space<vmem>>, vector<1x1x8x8x4xf32>
    %138 = vector.shape_cast %137 : vector<1x1x8x8x4xf32> to vector<8x8x4xf32>
    %139 = vector.shape_cast %138 : vector<8x8x4xf32> to vector<64x4xf32>
    %c19 = arith.constant 19 : index
    %c0_159 = arith.constant 0 : index
    %c0_160 = arith.constant 0 : index
    %140 = vector.load %arg2[%c19, %c0_159, %c0_160] : memref<25x4x8xf32, #tpu.memory_space<vmem>>, vector<1x4x8xf32>
    %141 = vector.shape_cast %140 : vector<1x4x8xf32> to vector<4x8xf32>
    %cst_161 = arith.constant dense<0.000000e+00> : vector<64x8xf32>
    %142 = tpu.matmul %139, %141, %cst_161 {dimension_numbers = #tpu.dot_dimension_numbers<[1], [0], [0], [1], [0, 0, 1, 1], [], []>} : vector<64x4xf32>, vector<4x8xf32>, vector<64x8xf32> -> vector<64x8xf32>
    %143 = arith.addf %136, %142 : vector<64x8xf32>
    %c0_162 = arith.constant 0 : index
    %c0_163 = arith.constant 0 : index
    %c2_164 = arith.constant 2 : index
    %c0_165 = arith.constant 0 : index
    %c0_166 = arith.constant 0 : index
    %144 = vector.load %arg1[%c0_162, %c0_163, %c2_164, %c0_165, %c0_166] : memref<1x4x10x10x4xf32, #tpu.memory_space<vmem>>, vector<1x1x8x8x4xf32>
    %145 = vector.shape_cast %144 : vector<1x1x8x8x4xf32> to vector<8x8x4xf32>
    %146 = vector.shape_cast %145 : vector<8x8x4xf32> to vector<64x4xf32>
    %c20 = arith.constant 20 : index
    %c0_167 = arith.constant 0 : index
    %c0_168 = arith.constant 0 : index
    %147 = vector.load %arg2[%c20, %c0_167, %c0_168] : memref<25x4x8xf32, #tpu.memory_space<vmem>>, vector<1x4x8xf32>
    %148 = vector.shape_cast %147 : vector<1x4x8xf32> to vector<4x8xf32>
    %cst_169 = arith.constant dense<0.000000e+00> : vector<64x8xf32>
    %149 = tpu.matmul %146, %148, %cst_169 {dimension_numbers = #tpu.dot_dimension_numbers<[1], [0], [0], [1], [0, 0, 1, 1], [], []>} : vector<64x4xf32>, vector<4x8xf32>, vector<64x8xf32> -> vector<64x8xf32>
    %150 = arith.addf %143, %149 : vector<64x8xf32>
    %c0_170 = arith.constant 0 : index
    %c1_171 = arith.constant 1 : index
    %c2_172 = arith.constant 2 : index
    %c0_173 = arith.constant 0 : index
    %c0_174 = arith.constant 0 : index
    %151 = vector.load %arg1[%c0_170, %c1_171, %c2_172, %c0_173, %c0_174] : memref<1x4x10x10x4xf32, #tpu.memory_space<vmem>>, vector<1x1x8x8x4xf32>
    %152 = vector.shape_cast %151 : vector<1x1x8x8x4xf32> to vector<8x8x4xf32>
    %153 = vector.shape_cast %152 : vector<8x8x4xf32> to vector<64x4xf32>
    %c21 = arith.constant 21 : index
    %c0_175 = arith.constant 0 : index
    %c0_176 = arith.constant 0 : index
    %154 = vector.load %arg2[%c21, %c0_175, %c0_176] : memref<25x4x8xf32, #tpu.memory_space<vmem>>, vector<1x4x8xf32>
    %155 = vector.shape_cast %154 : vector<1x4x8xf32> to vector<4x8xf32>
    %cst_177 = arith.constant dense<0.000000e+00> : vector<64x8xf32>
    %156 = tpu.matmul %153, %155, %cst_177 {dimension_numbers = #tpu.dot_dimension_numbers<[1], [0], [0], [1], [0, 0, 1, 1], [], []>} : vector<64x4xf32>, vector<4x8xf32>, vector<64x8xf32> -> vector<64x8xf32>
    %157 = arith.addf %150, %156 : vector<64x8xf32>
    %c0_178 = arith.constant 0 : index
    %c0_179 = arith.constant 0 : index
    %c2_180 = arith.constant 2 : index
    %c1_181 = arith.constant 1 : index
    %c0_182 = arith.constant 0 : index
    %158 = vector.load %arg1[%c0_178, %c0_179, %c2_180, %c1_181, %c0_182] : memref<1x4x10x10x4xf32, #tpu.memory_space<vmem>>, vector<1x1x8x8x4xf32>
    %159 = vector.shape_cast %158 : vector<1x1x8x8x4xf32> to vector<8x8x4xf32>
    %160 = vector.shape_cast %159 : vector<8x8x4xf32> to vector<64x4xf32>
    %c22 = arith.constant 22 : index
    %c0_183 = arith.constant 0 : index
    %c0_184 = arith.constant 0 : index
    %161 = vector.load %arg2[%c22, %c0_183, %c0_184] : memref<25x4x8xf32, #tpu.memory_space<vmem>>, vector<1x4x8xf32>
    %162 = vector.shape_cast %161 : vector<1x4x8xf32> to vector<4x8xf32>
    %cst_185 = arith.constant dense<0.000000e+00> : vector<64x8xf32>
    %163 = tpu.matmul %160, %162, %cst_185 {dimension_numbers = #tpu.dot_dimension_numbers<[1], [0], [0], [1], [0, 0, 1, 1], [], []>} : vector<64x4xf32>, vector<4x8xf32>, vector<64x8xf32> -> vector<64x8xf32>
    %164 = arith.addf %157, %163 : vector<64x8xf32>
    %c0_186 = arith.constant 0 : index
    %c1_187 = arith.constant 1 : index
    %c2_188 = arith.constant 2 : index
    %c1_189 = arith.constant 1 : index
    %c0_190 = arith.constant 0 : index
    %165 = vector.load %arg1[%c0_186, %c1_187, %c2_188, %c1_189, %c0_190] : memref<1x4x10x10x4xf32, #tpu.memory_space<vmem>>, vector<1x1x8x8x4xf32>
    %166 = vector.shape_cast %165 : vector<1x1x8x8x4xf32> to vector<8x8x4xf32>
    %167 = vector.shape_cast %166 : vector<8x8x4xf32> to vector<64x4xf32>
    %c23 = arith.constant 23 : index
    %c0_191 = arith.constant 0 : index
    %c0_192 = arith.constant 0 : index
    %168 = vector.load %arg2[%c23, %c0_191, %c0_192] : memref<25x4x8xf32, #tpu.memory_space<vmem>>, vector<1x4x8xf32>
    %169 = vector.shape_cast %168 : vector<1x4x8xf32> to vector<4x8xf32>
    %cst_193 = arith.constant dense<0.000000e+00> : vector<64x8xf32>
    %170 = tpu.matmul %167, %169, %cst_193 {dimension_numbers = #tpu.dot_dimension_numbers<[1], [0], [0], [1], [0, 0, 1, 1], [], []>} : vector<64x4xf32>, vector<4x8xf32>, vector<64x8xf32> -> vector<64x8xf32>
    %171 = arith.addf %164, %170 : vector<64x8xf32>
    %c0_194 = arith.constant 0 : index
    %c0_195 = arith.constant 0 : index
    %c2_196 = arith.constant 2 : index
    %c2_197 = arith.constant 2 : index
    %c0_198 = arith.constant 0 : index
    %172 = vector.load %arg1[%c0_194, %c0_195, %c2_196, %c2_197, %c0_198] : memref<1x4x10x10x4xf32, #tpu.memory_space<vmem>>, vector<1x1x8x8x4xf32>
    %173 = vector.shape_cast %172 : vector<1x1x8x8x4xf32> to vector<8x8x4xf32>
    %174 = vector.shape_cast %173 : vector<8x8x4xf32> to vector<64x4xf32>
    %c24 = arith.constant 24 : index
    %c0_199 = arith.constant 0 : index
    %c0_200 = arith.constant 0 : index
    %175 = vector.load %arg2[%c24, %c0_199, %c0_200] : memref<25x4x8xf32, #tpu.memory_space<vmem>>, vector<1x4x8xf32>
    %176 = vector.shape_cast %175 : vector<1x4x8xf32> to vector<4x8xf32>
    %cst_201 = arith.constant dense<0.000000e+00> : vector<64x8xf32>
    %177 = tpu.matmul %174, %176, %cst_201 {dimension_numbers = #tpu.dot_dimension_numbers<[1], [0], [0], [1], [0, 0, 1, 1], [], []>} : vector<64x4xf32>, vector<4x8xf32>, vector<64x8xf32> -> vector<64x8xf32>
    %178 = arith.addf %171, %177 : vector<64x8xf32>
    %179 = vector.shape_cast %178 : vector<64x8xf32> to vector<8x8x8xf32>
    %c0_202 = arith.constant 0 : index
    %c0_203 = arith.constant 0 : index
    %c0_204 = arith.constant 0 : index
    %c0_205 = arith.constant 0 : index
    %180 = vector.load %arg4[%c0_202, %c0_203, %c0_204, %c0_205] : memref<1x8x8x8xf32, #tpu.memory_space<vmem>>, vector<1x8x8x8xf32>
    %181 = vector.shape_cast %180 : vector<1x8x8x8xf32> to vector<8x8x8xf32>
    %182 = vector.shape_cast %179 : vector<8x8x8xf32> to vector<1x8x8x8xf32>
    tpu.vector_store %arg4[%c0_202, %c0_203, %c0_204, %c0_205], %182 {strides = array<i32>} : memref<1x8x8x8xf32, #tpu.memory_space<vmem>>, vector<1x8x8x8xf32>,
    %cst_206 = arith.constant dense<0.000000e+00> : vector<8xf32>
    %183 = vector.multi_reduction <add>, %178, %cst_206 [0] : vector<64x8xf32> to vector<8xf32>
    %184 = vector.shape_cast %183 : vector<8xf32> to vector<1x8xf32>
    %185 = arith.mulf %178, %178 : vector<64x8xf32>
    %cst_207 = arith.constant dense<0.000000e+00> : vector<8xf32>
    %186 = vector.multi_reduction <add>, %185, %cst_207 [0] : vector<64x8xf32> to vector<8xf32>
    %187 = vector.shape_cast %186 : vector<8xf32> to vector<1x8xf32>
    %188 = tpu.concatenate %184, %187 in 0 : vector<1x8xf32>, vector<1x8xf32> -> vector<2x8xf32>
    %c0_208 = arith.constant 0 : index
    %c0_209 = arith.constant 0 : index
    %c0_210 = arith.constant 0 : index
    %189 = vector.load %arg5[%c0_208, %c0_209, %c0_210] : memref<1x2x8xf32, #tpu.memory_space<vmem>>, vector<1x2x8xf32>
    %190 = vector.shape_cast %189 : vector<1x2x8xf32> to vector<2x8xf32>
    %191 = vector.shape_cast %188 : vector<2x8xf32> to vector<1x2x8xf32>
    tpu.vector_store %arg5[%c0_208, %c0_209, %c0_210], %191 {strides = array<i32>} : memref<1x2x8xf32, #tpu.memory_space<vmem>>, vector<1x2x8xf32>,
    return
  }
  func.func @transform_0(%arg0: i32) -> (i32, i32, i32, i32, i32) {
    %c0_i32 = arith.constant 0 : i32
    %c0_i32_0 = arith.constant 0 : i32
    %c0_i32_1 = arith.constant 0 : i32
    %c0_i32_2 = arith.constant 0 : i32
    %c0_i32_3 = arith.constant 0 : i32
    return %arg0, %c0_i32, %c0_i32_0, %c0_i32_1, %c0_i32_2 : i32, i32, i32, i32, i32
  }
  func.func @transform_1(%arg0: i32) -> (i32, i32, i32) {
    %c0_i32 = arith.constant 0 : i32
    %c0_i32_0 = arith.constant 0 : i32
    %c0_i32_1 = arith.constant 0 : i32
    %c0_i32_2 = arith.constant 0 : i32
    return %c0_i32, %c0_i32_0, %c0_i32_1 : i32, i32, i32
  }
  func.func @transform_2(%arg0: i32) -> (i32, i32) {
    %c0_i32 = arith.constant 0 : i32
    %c0_i32_0 = arith.constant 0 : i32
    %c0_i32_1 = arith.constant 0 : i32
    return %c0_i32, %c0_i32_0 : i32, i32
  }
  func.func @transform_3(%arg0: i32) -> (i32, i32, i32, i32) {
    %c0_i32 = arith.constant 0 : i32
    %c0_i32_0 = arith.constant 0 : i32
    %c0_i32_1 = arith.constant 0 : i32
    %c0_i32_2 = arith.constant 0 : i32
    return %arg0, %c0_i32, %c0_i32_0, %c0_i32_1 : i32, i32, i32, i32
  }
  func.func @transform_4(%arg0: i32) -> (i32, i32, i32) {
    %c0_i32 = arith.constant 0 : i32
    %c0_i32_0 = arith.constant 0 : i32
    %c0_i32_1 = arith.constant 0 : i32
    return %arg0, %c0_i32, %c0_i32_0 : i32, i32, i32
  }
}

module attributes {stable_mosaic.version = 11 : i64} {
  func.func @_conv_s1_kernel(%arg0: i32, %arg1: memref<1x1x8xf32, #tpu.memory_space<vmem>>, %arg2: memref<1x1x8xf32, #tpu.memory_space<vmem>>, %arg3: memref<1x8x8x8xf32, #tpu.memory_space<vmem>>, %arg4: memref<25x8x8xf32, #tpu.memory_space<vmem>>, %arg5: memref<1x8xf32, #tpu.memory_space<vmem>>, %arg6: memref<1x8x8x8xf32, #tpu.memory_space<vmem>>, %arg7: memref<1x2x8xf32, #tpu.memory_space<vmem>>, %arg8: memref<12x12x8xf32, #tpu.memory_space<vmem>>) attributes {dimension_semantics = [#tpu.dimension_semantics<parallel>], iteration_bounds = array<i64: 2>, scalar_prefetch = 0 : i64, scratch_operands = 1 : i64, tpu.core_type = #tpu.core_type<tc>, window_params = [{pipeline_mode = #tpu.pipeline_mode<synchronous>, transform_indices = @transform_0, window_bounds = array<i64: 1, 1, 8>}, {pipeline_mode = #tpu.pipeline_mode<synchronous>, transform_indices = @transform_1, window_bounds = array<i64: 1, 1, 8>}, {transform_indices = @transform_2, window_bounds = array<i64: 1, 8, 8, 8>}, {pipeline_mode = #tpu.pipeline_mode<synchronous>, transform_indices = @transform_3, window_bounds = array<i64: 25, 8, 8>}, {pipeline_mode = #tpu.pipeline_mode<synchronous>, transform_indices = @transform_4, window_bounds = array<i64: 1, 8>}, {transform_indices = @transform_5, window_bounds = array<i64: 1, 8, 8, 8>}, {transform_indices = @transform_6, window_bounds = array<i64: 1, 2, 8>}]} {
    %c0 = arith.constant 0 : index
    %c0_0 = arith.constant 0 : index
    %c0_1 = arith.constant 0 : index
    %c0_2 = arith.constant 0 : index
    %0 = vector.load %arg3[%c0, %c0_0, %c0_1, %c0_2] : memref<1x8x8x8xf32, #tpu.memory_space<vmem>>, vector<1x8x8x8xf32>
    %1 = vector.shape_cast %0 : vector<1x8x8x8xf32> to vector<8x8x8xf32>
    %c0_3 = arith.constant 0 : index
    %c0_4 = arith.constant 0 : index
    %c0_5 = arith.constant 0 : index
    %2 = vector.load %arg1[%c0_3, %c0_4, %c0_5] : memref<1x1x8xf32, #tpu.memory_space<vmem>>, vector<1x1x8xf32>
    %3 = vector.broadcast %2 : vector<1x1x8xf32> to vector<8x8x8xf32>
    %4 = arith.mulf %1, %3 : vector<8x8x8xf32>
    %c0_6 = arith.constant 0 : index
    %c0_7 = arith.constant 0 : index
    %c0_8 = arith.constant 0 : index
    %5 = vector.load %arg2[%c0_6, %c0_7, %c0_8] : memref<1x1x8xf32, #tpu.memory_space<vmem>>, vector<1x1x8xf32>
    %6 = vector.broadcast %5 : vector<1x1x8xf32> to vector<8x8x8xf32>
    %7 = arith.addf %4, %6 : vector<8x8x8xf32>
    %8 = arith.negf %7 : vector<8x8x8xf32>
    %9 = math.exp %8 : vector<8x8x8xf32>
    %cst = arith.constant 1.000000e+00 : f32
    %10 = vector.broadcast %cst : f32 to vector<8x8x8xf32>
    %11 = arith.addf %10, %9 : vector<8x8x8xf32>
    %12 = arith.divf %10, %11 : vector<8x8x8xf32>
    %13 = arith.mulf %7, %12 : vector<8x8x8xf32>
    %cst_9 = arith.constant 0.000000e+00 : f32
    %14 = vector.broadcast %cst_9 : f32 to vector<12x12x8xf32>
    %c0_10 = arith.constant 0 : index
    %c0_11 = arith.constant 0 : index
    %c0_12 = arith.constant 0 : index
    %15 = vector.load %arg8[%c0_10, %c0_11, %c0_12] : memref<12x12x8xf32, #tpu.memory_space<vmem>>, vector<12x12x8xf32>
    tpu.vector_store %arg8[%c0_10, %c0_11, %c0_12], %14 {strides = array<i32>} : memref<12x12x8xf32, #tpu.memory_space<vmem>>, vector<12x12x8xf32>,
    %c2 = arith.constant 2 : index
    %c2_13 = arith.constant 2 : index
    %c0_14 = arith.constant 0 : index
    %16 = vector.load %arg8[%c2, %c2_13, %c0_14] : memref<12x12x8xf32, #tpu.memory_space<vmem>>, vector<8x8x8xf32>
    tpu.vector_store %arg8[%c2, %c2_13, %c0_14], %13 {strides = array<i32>} : memref<12x12x8xf32, #tpu.memory_space<vmem>>, vector<8x8x8xf32>,
    %cst_15 = arith.constant 0.000000e+00 : f32
    %17 = vector.broadcast %cst_15 : f32 to vector<64x8xf32>
    %c0_16 = arith.constant 0 : index
    %c0_17 = arith.constant 0 : index
    %18 = vector.load %arg5[%c0_16, %c0_17] : memref<1x8xf32, #tpu.memory_space<vmem>>, vector<1x8xf32>
    %19 = vector.broadcast %18 : vector<1x8xf32> to vector<64x8xf32>
    %20 = arith.addf %17, %19 : vector<64x8xf32>
    %c0_18 = arith.constant 0 : index
    %c0_19 = arith.constant 0 : index
    %c0_20 = arith.constant 0 : index
    %21 = vector.load %arg8[%c0_18, %c0_19, %c0_20] : memref<12x12x8xf32, #tpu.memory_space<vmem>>, vector<8x8x8xf32>
    %22 = vector.shape_cast %21 : vector<8x8x8xf32> to vector<64x8xf32>
    %c0_21 = arith.constant 0 : index
    %c0_22 = arith.constant 0 : index
    %c0_23 = arith.constant 0 : index
    %23 = vector.load %arg4[%c0_21, %c0_22, %c0_23] : memref<25x8x8xf32, #tpu.memory_space<vmem>>, vector<1x8x8xf32>
    %24 = vector.shape_cast %23 : vector<1x8x8xf32> to vector<8x8xf32>
    %cst_24 = arith.constant dense<0.000000e+00> : vector<64x8xf32>
    %25 = tpu.matmul %22, %24, %cst_24 {dimension_numbers = #tpu.dot_dimension_numbers<[1], [0], [0], [1], [0, 0, 1, 1], [], []>} : vector<64x8xf32>, vector<8x8xf32>, vector<64x8xf32> -> vector<64x8xf32>
    %26 = arith.addf %20, %25 : vector<64x8xf32>
    %c0_25 = arith.constant 0 : index
    %c1 = arith.constant 1 : index
    %c0_26 = arith.constant 0 : index
    %27 = vector.load %arg8[%c0_25, %c1, %c0_26] : memref<12x12x8xf32, #tpu.memory_space<vmem>>, vector<8x8x8xf32>
    %28 = vector.shape_cast %27 : vector<8x8x8xf32> to vector<64x8xf32>
    %c1_27 = arith.constant 1 : index
    %c0_28 = arith.constant 0 : index
    %c0_29 = arith.constant 0 : index
    %29 = vector.load %arg4[%c1_27, %c0_28, %c0_29] : memref<25x8x8xf32, #tpu.memory_space<vmem>>, vector<1x8x8xf32>
    %30 = vector.shape_cast %29 : vector<1x8x8xf32> to vector<8x8xf32>
    %cst_30 = arith.constant dense<0.000000e+00> : vector<64x8xf32>
    %31 = tpu.matmul %28, %30, %cst_30 {dimension_numbers = #tpu.dot_dimension_numbers<[1], [0], [0], [1], [0, 0, 1, 1], [], []>} : vector<64x8xf32>, vector<8x8xf32>, vector<64x8xf32> -> vector<64x8xf32>
    %32 = arith.addf %26, %31 : vector<64x8xf32>
    %c0_31 = arith.constant 0 : index
    %c2_32 = arith.constant 2 : index
    %c0_33 = arith.constant 0 : index
    %33 = vector.load %arg8[%c0_31, %c2_32, %c0_33] : memref<12x12x8xf32, #tpu.memory_space<vmem>>, vector<8x8x8xf32>
    %34 = vector.shape_cast %33 : vector<8x8x8xf32> to vector<64x8xf32>
    %c2_34 = arith.constant 2 : index
    %c0_35 = arith.constant 0 : index
    %c0_36 = arith.constant 0 : index
    %35 = vector.load %arg4[%c2_34, %c0_35, %c0_36] : memref<25x8x8xf32, #tpu.memory_space<vmem>>, vector<1x8x8xf32>
    %36 = vector.shape_cast %35 : vector<1x8x8xf32> to vector<8x8xf32>
    %cst_37 = arith.constant dense<0.000000e+00> : vector<64x8xf32>
    %37 = tpu.matmul %34, %36, %cst_37 {dimension_numbers = #tpu.dot_dimension_numbers<[1], [0], [0], [1], [0, 0, 1, 1], [], []>} : vector<64x8xf32>, vector<8x8xf32>, vector<64x8xf32> -> vector<64x8xf32>
    %38 = arith.addf %32, %37 : vector<64x8xf32>
    %c0_38 = arith.constant 0 : index
    %c3 = arith.constant 3 : index
    %c0_39 = arith.constant 0 : index
    %39 = vector.load %arg8[%c0_38, %c3, %c0_39] : memref<12x12x8xf32, #tpu.memory_space<vmem>>, vector<8x8x8xf32>
    %40 = vector.shape_cast %39 : vector<8x8x8xf32> to vector<64x8xf32>
    %c3_40 = arith.constant 3 : index
    %c0_41 = arith.constant 0 : index
    %c0_42 = arith.constant 0 : index
    %41 = vector.load %arg4[%c3_40, %c0_41, %c0_42] : memref<25x8x8xf32, #tpu.memory_space<vmem>>, vector<1x8x8xf32>
    %42 = vector.shape_cast %41 : vector<1x8x8xf32> to vector<8x8xf32>
    %cst_43 = arith.constant dense<0.000000e+00> : vector<64x8xf32>
    %43 = tpu.matmul %40, %42, %cst_43 {dimension_numbers = #tpu.dot_dimension_numbers<[1], [0], [0], [1], [0, 0, 1, 1], [], []>} : vector<64x8xf32>, vector<8x8xf32>, vector<64x8xf32> -> vector<64x8xf32>
    %44 = arith.addf %38, %43 : vector<64x8xf32>
    %c0_44 = arith.constant 0 : index
    %c4 = arith.constant 4 : index
    %c0_45 = arith.constant 0 : index
    %45 = vector.load %arg8[%c0_44, %c4, %c0_45] : memref<12x12x8xf32, #tpu.memory_space<vmem>>, vector<8x8x8xf32>
    %46 = vector.shape_cast %45 : vector<8x8x8xf32> to vector<64x8xf32>
    %c4_46 = arith.constant 4 : index
    %c0_47 = arith.constant 0 : index
    %c0_48 = arith.constant 0 : index
    %47 = vector.load %arg4[%c4_46, %c0_47, %c0_48] : memref<25x8x8xf32, #tpu.memory_space<vmem>>, vector<1x8x8xf32>
    %48 = vector.shape_cast %47 : vector<1x8x8xf32> to vector<8x8xf32>
    %cst_49 = arith.constant dense<0.000000e+00> : vector<64x8xf32>
    %49 = tpu.matmul %46, %48, %cst_49 {dimension_numbers = #tpu.dot_dimension_numbers<[1], [0], [0], [1], [0, 0, 1, 1], [], []>} : vector<64x8xf32>, vector<8x8xf32>, vector<64x8xf32> -> vector<64x8xf32>
    %50 = arith.addf %44, %49 : vector<64x8xf32>
    %c1_50 = arith.constant 1 : index
    %c0_51 = arith.constant 0 : index
    %c0_52 = arith.constant 0 : index
    %51 = vector.load %arg8[%c1_50, %c0_51, %c0_52] : memref<12x12x8xf32, #tpu.memory_space<vmem>>, vector<8x8x8xf32>
    %52 = vector.shape_cast %51 : vector<8x8x8xf32> to vector<64x8xf32>
    %c5 = arith.constant 5 : index
    %c0_53 = arith.constant 0 : index
    %c0_54 = arith.constant 0 : index
    %53 = vector.load %arg4[%c5, %c0_53, %c0_54] : memref<25x8x8xf32, #tpu.memory_space<vmem>>, vector<1x8x8xf32>
    %54 = vector.shape_cast %53 : vector<1x8x8xf32> to vector<8x8xf32>
    %cst_55 = arith.constant dense<0.000000e+00> : vector<64x8xf32>
    %55 = tpu.matmul %52, %54, %cst_55 {dimension_numbers = #tpu.dot_dimension_numbers<[1], [0], [0], [1], [0, 0, 1, 1], [], []>} : vector<64x8xf32>, vector<8x8xf32>, vector<64x8xf32> -> vector<64x8xf32>
    %56 = arith.addf %50, %55 : vector<64x8xf32>
    %c1_56 = arith.constant 1 : index
    %c1_57 = arith.constant 1 : index
    %c0_58 = arith.constant 0 : index
    %57 = vector.load %arg8[%c1_56, %c1_57, %c0_58] : memref<12x12x8xf32, #tpu.memory_space<vmem>>, vector<8x8x8xf32>
    %58 = vector.shape_cast %57 : vector<8x8x8xf32> to vector<64x8xf32>
    %c6 = arith.constant 6 : index
    %c0_59 = arith.constant 0 : index
    %c0_60 = arith.constant 0 : index
    %59 = vector.load %arg4[%c6, %c0_59, %c0_60] : memref<25x8x8xf32, #tpu.memory_space<vmem>>, vector<1x8x8xf32>
    %60 = vector.shape_cast %59 : vector<1x8x8xf32> to vector<8x8xf32>
    %cst_61 = arith.constant dense<0.000000e+00> : vector<64x8xf32>
    %61 = tpu.matmul %58, %60, %cst_61 {dimension_numbers = #tpu.dot_dimension_numbers<[1], [0], [0], [1], [0, 0, 1, 1], [], []>} : vector<64x8xf32>, vector<8x8xf32>, vector<64x8xf32> -> vector<64x8xf32>
    %62 = arith.addf %56, %61 : vector<64x8xf32>
    %c1_62 = arith.constant 1 : index
    %c2_63 = arith.constant 2 : index
    %c0_64 = arith.constant 0 : index
    %63 = vector.load %arg8[%c1_62, %c2_63, %c0_64] : memref<12x12x8xf32, #tpu.memory_space<vmem>>, vector<8x8x8xf32>
    %64 = vector.shape_cast %63 : vector<8x8x8xf32> to vector<64x8xf32>
    %c7 = arith.constant 7 : index
    %c0_65 = arith.constant 0 : index
    %c0_66 = arith.constant 0 : index
    %65 = vector.load %arg4[%c7, %c0_65, %c0_66] : memref<25x8x8xf32, #tpu.memory_space<vmem>>, vector<1x8x8xf32>
    %66 = vector.shape_cast %65 : vector<1x8x8xf32> to vector<8x8xf32>
    %cst_67 = arith.constant dense<0.000000e+00> : vector<64x8xf32>
    %67 = tpu.matmul %64, %66, %cst_67 {dimension_numbers = #tpu.dot_dimension_numbers<[1], [0], [0], [1], [0, 0, 1, 1], [], []>} : vector<64x8xf32>, vector<8x8xf32>, vector<64x8xf32> -> vector<64x8xf32>
    %68 = arith.addf %62, %67 : vector<64x8xf32>
    %c1_68 = arith.constant 1 : index
    %c3_69 = arith.constant 3 : index
    %c0_70 = arith.constant 0 : index
    %69 = vector.load %arg8[%c1_68, %c3_69, %c0_70] : memref<12x12x8xf32, #tpu.memory_space<vmem>>, vector<8x8x8xf32>
    %70 = vector.shape_cast %69 : vector<8x8x8xf32> to vector<64x8xf32>
    %c8 = arith.constant 8 : index
    %c0_71 = arith.constant 0 : index
    %c0_72 = arith.constant 0 : index
    %71 = vector.load %arg4[%c8, %c0_71, %c0_72] : memref<25x8x8xf32, #tpu.memory_space<vmem>>, vector<1x8x8xf32>
    %72 = vector.shape_cast %71 : vector<1x8x8xf32> to vector<8x8xf32>
    %cst_73 = arith.constant dense<0.000000e+00> : vector<64x8xf32>
    %73 = tpu.matmul %70, %72, %cst_73 {dimension_numbers = #tpu.dot_dimension_numbers<[1], [0], [0], [1], [0, 0, 1, 1], [], []>} : vector<64x8xf32>, vector<8x8xf32>, vector<64x8xf32> -> vector<64x8xf32>
    %74 = arith.addf %68, %73 : vector<64x8xf32>
    %c1_74 = arith.constant 1 : index
    %c4_75 = arith.constant 4 : index
    %c0_76 = arith.constant 0 : index
    %75 = vector.load %arg8[%c1_74, %c4_75, %c0_76] : memref<12x12x8xf32, #tpu.memory_space<vmem>>, vector<8x8x8xf32>
    %76 = vector.shape_cast %75 : vector<8x8x8xf32> to vector<64x8xf32>
    %c9 = arith.constant 9 : index
    %c0_77 = arith.constant 0 : index
    %c0_78 = arith.constant 0 : index
    %77 = vector.load %arg4[%c9, %c0_77, %c0_78] : memref<25x8x8xf32, #tpu.memory_space<vmem>>, vector<1x8x8xf32>
    %78 = vector.shape_cast %77 : vector<1x8x8xf32> to vector<8x8xf32>
    %cst_79 = arith.constant dense<0.000000e+00> : vector<64x8xf32>
    %79 = tpu.matmul %76, %78, %cst_79 {dimension_numbers = #tpu.dot_dimension_numbers<[1], [0], [0], [1], [0, 0, 1, 1], [], []>} : vector<64x8xf32>, vector<8x8xf32>, vector<64x8xf32> -> vector<64x8xf32>
    %80 = arith.addf %74, %79 : vector<64x8xf32>
    %c2_80 = arith.constant 2 : index
    %c0_81 = arith.constant 0 : index
    %c0_82 = arith.constant 0 : index
    %81 = vector.load %arg8[%c2_80, %c0_81, %c0_82] : memref<12x12x8xf32, #tpu.memory_space<vmem>>, vector<8x8x8xf32>
    %82 = vector.shape_cast %81 : vector<8x8x8xf32> to vector<64x8xf32>
    %c10 = arith.constant 10 : index
    %c0_83 = arith.constant 0 : index
    %c0_84 = arith.constant 0 : index
    %83 = vector.load %arg4[%c10, %c0_83, %c0_84] : memref<25x8x8xf32, #tpu.memory_space<vmem>>, vector<1x8x8xf32>
    %84 = vector.shape_cast %83 : vector<1x8x8xf32> to vector<8x8xf32>
    %cst_85 = arith.constant dense<0.000000e+00> : vector<64x8xf32>
    %85 = tpu.matmul %82, %84, %cst_85 {dimension_numbers = #tpu.dot_dimension_numbers<[1], [0], [0], [1], [0, 0, 1, 1], [], []>} : vector<64x8xf32>, vector<8x8xf32>, vector<64x8xf32> -> vector<64x8xf32>
    %86 = arith.addf %80, %85 : vector<64x8xf32>
    %c2_86 = arith.constant 2 : index
    %c1_87 = arith.constant 1 : index
    %c0_88 = arith.constant 0 : index
    %87 = vector.load %arg8[%c2_86, %c1_87, %c0_88] : memref<12x12x8xf32, #tpu.memory_space<vmem>>, vector<8x8x8xf32>
    %88 = vector.shape_cast %87 : vector<8x8x8xf32> to vector<64x8xf32>
    %c11 = arith.constant 11 : index
    %c0_89 = arith.constant 0 : index
    %c0_90 = arith.constant 0 : index
    %89 = vector.load %arg4[%c11, %c0_89, %c0_90] : memref<25x8x8xf32, #tpu.memory_space<vmem>>, vector<1x8x8xf32>
    %90 = vector.shape_cast %89 : vector<1x8x8xf32> to vector<8x8xf32>
    %cst_91 = arith.constant dense<0.000000e+00> : vector<64x8xf32>
    %91 = tpu.matmul %88, %90, %cst_91 {dimension_numbers = #tpu.dot_dimension_numbers<[1], [0], [0], [1], [0, 0, 1, 1], [], []>} : vector<64x8xf32>, vector<8x8xf32>, vector<64x8xf32> -> vector<64x8xf32>
    %92 = arith.addf %86, %91 : vector<64x8xf32>
    %c2_92 = arith.constant 2 : index
    %c2_93 = arith.constant 2 : index
    %c0_94 = arith.constant 0 : index
    %93 = vector.load %arg8[%c2_92, %c2_93, %c0_94] : memref<12x12x8xf32, #tpu.memory_space<vmem>>, vector<8x8x8xf32>
    %94 = vector.shape_cast %93 : vector<8x8x8xf32> to vector<64x8xf32>
    %c12 = arith.constant 12 : index
    %c0_95 = arith.constant 0 : index
    %c0_96 = arith.constant 0 : index
    %95 = vector.load %arg4[%c12, %c0_95, %c0_96] : memref<25x8x8xf32, #tpu.memory_space<vmem>>, vector<1x8x8xf32>
    %96 = vector.shape_cast %95 : vector<1x8x8xf32> to vector<8x8xf32>
    %cst_97 = arith.constant dense<0.000000e+00> : vector<64x8xf32>
    %97 = tpu.matmul %94, %96, %cst_97 {dimension_numbers = #tpu.dot_dimension_numbers<[1], [0], [0], [1], [0, 0, 1, 1], [], []>} : vector<64x8xf32>, vector<8x8xf32>, vector<64x8xf32> -> vector<64x8xf32>
    %98 = arith.addf %92, %97 : vector<64x8xf32>
    %c2_98 = arith.constant 2 : index
    %c3_99 = arith.constant 3 : index
    %c0_100 = arith.constant 0 : index
    %99 = vector.load %arg8[%c2_98, %c3_99, %c0_100] : memref<12x12x8xf32, #tpu.memory_space<vmem>>, vector<8x8x8xf32>
    %100 = vector.shape_cast %99 : vector<8x8x8xf32> to vector<64x8xf32>
    %c13 = arith.constant 13 : index
    %c0_101 = arith.constant 0 : index
    %c0_102 = arith.constant 0 : index
    %101 = vector.load %arg4[%c13, %c0_101, %c0_102] : memref<25x8x8xf32, #tpu.memory_space<vmem>>, vector<1x8x8xf32>
    %102 = vector.shape_cast %101 : vector<1x8x8xf32> to vector<8x8xf32>
    %cst_103 = arith.constant dense<0.000000e+00> : vector<64x8xf32>
    %103 = tpu.matmul %100, %102, %cst_103 {dimension_numbers = #tpu.dot_dimension_numbers<[1], [0], [0], [1], [0, 0, 1, 1], [], []>} : vector<64x8xf32>, vector<8x8xf32>, vector<64x8xf32> -> vector<64x8xf32>
    %104 = arith.addf %98, %103 : vector<64x8xf32>
    %c2_104 = arith.constant 2 : index
    %c4_105 = arith.constant 4 : index
    %c0_106 = arith.constant 0 : index
    %105 = vector.load %arg8[%c2_104, %c4_105, %c0_106] : memref<12x12x8xf32, #tpu.memory_space<vmem>>, vector<8x8x8xf32>
    %106 = vector.shape_cast %105 : vector<8x8x8xf32> to vector<64x8xf32>
    %c14 = arith.constant 14 : index
    %c0_107 = arith.constant 0 : index
    %c0_108 = arith.constant 0 : index
    %107 = vector.load %arg4[%c14, %c0_107, %c0_108] : memref<25x8x8xf32, #tpu.memory_space<vmem>>, vector<1x8x8xf32>
    %108 = vector.shape_cast %107 : vector<1x8x8xf32> to vector<8x8xf32>
    %cst_109 = arith.constant dense<0.000000e+00> : vector<64x8xf32>
    %109 = tpu.matmul %106, %108, %cst_109 {dimension_numbers = #tpu.dot_dimension_numbers<[1], [0], [0], [1], [0, 0, 1, 1], [], []>} : vector<64x8xf32>, vector<8x8xf32>, vector<64x8xf32> -> vector<64x8xf32>
    %110 = arith.addf %104, %109 : vector<64x8xf32>
    %c3_110 = arith.constant 3 : index
    %c0_111 = arith.constant 0 : index
    %c0_112 = arith.constant 0 : index
    %111 = vector.load %arg8[%c3_110, %c0_111, %c0_112] : memref<12x12x8xf32, #tpu.memory_space<vmem>>, vector<8x8x8xf32>
    %112 = vector.shape_cast %111 : vector<8x8x8xf32> to vector<64x8xf32>
    %c15 = arith.constant 15 : index
    %c0_113 = arith.constant 0 : index
    %c0_114 = arith.constant 0 : index
    %113 = vector.load %arg4[%c15, %c0_113, %c0_114] : memref<25x8x8xf32, #tpu.memory_space<vmem>>, vector<1x8x8xf32>
    %114 = vector.shape_cast %113 : vector<1x8x8xf32> to vector<8x8xf32>
    %cst_115 = arith.constant dense<0.000000e+00> : vector<64x8xf32>
    %115 = tpu.matmul %112, %114, %cst_115 {dimension_numbers = #tpu.dot_dimension_numbers<[1], [0], [0], [1], [0, 0, 1, 1], [], []>} : vector<64x8xf32>, vector<8x8xf32>, vector<64x8xf32> -> vector<64x8xf32>
    %116 = arith.addf %110, %115 : vector<64x8xf32>
    %c3_116 = arith.constant 3 : index
    %c1_117 = arith.constant 1 : index
    %c0_118 = arith.constant 0 : index
    %117 = vector.load %arg8[%c3_116, %c1_117, %c0_118] : memref<12x12x8xf32, #tpu.memory_space<vmem>>, vector<8x8x8xf32>
    %118 = vector.shape_cast %117 : vector<8x8x8xf32> to vector<64x8xf32>
    %c16 = arith.constant 16 : index
    %c0_119 = arith.constant 0 : index
    %c0_120 = arith.constant 0 : index
    %119 = vector.load %arg4[%c16, %c0_119, %c0_120] : memref<25x8x8xf32, #tpu.memory_space<vmem>>, vector<1x8x8xf32>
    %120 = vector.shape_cast %119 : vector<1x8x8xf32> to vector<8x8xf32>
    %cst_121 = arith.constant dense<0.000000e+00> : vector<64x8xf32>
    %121 = tpu.matmul %118, %120, %cst_121 {dimension_numbers = #tpu.dot_dimension_numbers<[1], [0], [0], [1], [0, 0, 1, 1], [], []>} : vector<64x8xf32>, vector<8x8xf32>, vector<64x8xf32> -> vector<64x8xf32>
    %122 = arith.addf %116, %121 : vector<64x8xf32>
    %c3_122 = arith.constant 3 : index
    %c2_123 = arith.constant 2 : index
    %c0_124 = arith.constant 0 : index
    %123 = vector.load %arg8[%c3_122, %c2_123, %c0_124] : memref<12x12x8xf32, #tpu.memory_space<vmem>>, vector<8x8x8xf32>
    %124 = vector.shape_cast %123 : vector<8x8x8xf32> to vector<64x8xf32>
    %c17 = arith.constant 17 : index
    %c0_125 = arith.constant 0 : index
    %c0_126 = arith.constant 0 : index
    %125 = vector.load %arg4[%c17, %c0_125, %c0_126] : memref<25x8x8xf32, #tpu.memory_space<vmem>>, vector<1x8x8xf32>
    %126 = vector.shape_cast %125 : vector<1x8x8xf32> to vector<8x8xf32>
    %cst_127 = arith.constant dense<0.000000e+00> : vector<64x8xf32>
    %127 = tpu.matmul %124, %126, %cst_127 {dimension_numbers = #tpu.dot_dimension_numbers<[1], [0], [0], [1], [0, 0, 1, 1], [], []>} : vector<64x8xf32>, vector<8x8xf32>, vector<64x8xf32> -> vector<64x8xf32>
    %128 = arith.addf %122, %127 : vector<64x8xf32>
    %c3_128 = arith.constant 3 : index
    %c3_129 = arith.constant 3 : index
    %c0_130 = arith.constant 0 : index
    %129 = vector.load %arg8[%c3_128, %c3_129, %c0_130] : memref<12x12x8xf32, #tpu.memory_space<vmem>>, vector<8x8x8xf32>
    %130 = vector.shape_cast %129 : vector<8x8x8xf32> to vector<64x8xf32>
    %c18 = arith.constant 18 : index
    %c0_131 = arith.constant 0 : index
    %c0_132 = arith.constant 0 : index
    %131 = vector.load %arg4[%c18, %c0_131, %c0_132] : memref<25x8x8xf32, #tpu.memory_space<vmem>>, vector<1x8x8xf32>
    %132 = vector.shape_cast %131 : vector<1x8x8xf32> to vector<8x8xf32>
    %cst_133 = arith.constant dense<0.000000e+00> : vector<64x8xf32>
    %133 = tpu.matmul %130, %132, %cst_133 {dimension_numbers = #tpu.dot_dimension_numbers<[1], [0], [0], [1], [0, 0, 1, 1], [], []>} : vector<64x8xf32>, vector<8x8xf32>, vector<64x8xf32> -> vector<64x8xf32>
    %134 = arith.addf %128, %133 : vector<64x8xf32>
    %c3_134 = arith.constant 3 : index
    %c4_135 = arith.constant 4 : index
    %c0_136 = arith.constant 0 : index
    %135 = vector.load %arg8[%c3_134, %c4_135, %c0_136] : memref<12x12x8xf32, #tpu.memory_space<vmem>>, vector<8x8x8xf32>
    %136 = vector.shape_cast %135 : vector<8x8x8xf32> to vector<64x8xf32>
    %c19 = arith.constant 19 : index
    %c0_137 = arith.constant 0 : index
    %c0_138 = arith.constant 0 : index
    %137 = vector.load %arg4[%c19, %c0_137, %c0_138] : memref<25x8x8xf32, #tpu.memory_space<vmem>>, vector<1x8x8xf32>
    %138 = vector.shape_cast %137 : vector<1x8x8xf32> to vector<8x8xf32>
    %cst_139 = arith.constant dense<0.000000e+00> : vector<64x8xf32>
    %139 = tpu.matmul %136, %138, %cst_139 {dimension_numbers = #tpu.dot_dimension_numbers<[1], [0], [0], [1], [0, 0, 1, 1], [], []>} : vector<64x8xf32>, vector<8x8xf32>, vector<64x8xf32> -> vector<64x8xf32>
    %140 = arith.addf %134, %139 : vector<64x8xf32>
    %c4_140 = arith.constant 4 : index
    %c0_141 = arith.constant 0 : index
    %c0_142 = arith.constant 0 : index
    %141 = vector.load %arg8[%c4_140, %c0_141, %c0_142] : memref<12x12x8xf32, #tpu.memory_space<vmem>>, vector<8x8x8xf32>
    %142 = vector.shape_cast %141 : vector<8x8x8xf32> to vector<64x8xf32>
    %c20 = arith.constant 20 : index
    %c0_143 = arith.constant 0 : index
    %c0_144 = arith.constant 0 : index
    %143 = vector.load %arg4[%c20, %c0_143, %c0_144] : memref<25x8x8xf32, #tpu.memory_space<vmem>>, vector<1x8x8xf32>
    %144 = vector.shape_cast %143 : vector<1x8x8xf32> to vector<8x8xf32>
    %cst_145 = arith.constant dense<0.000000e+00> : vector<64x8xf32>
    %145 = tpu.matmul %142, %144, %cst_145 {dimension_numbers = #tpu.dot_dimension_numbers<[1], [0], [0], [1], [0, 0, 1, 1], [], []>} : vector<64x8xf32>, vector<8x8xf32>, vector<64x8xf32> -> vector<64x8xf32>
    %146 = arith.addf %140, %145 : vector<64x8xf32>
    %c4_146 = arith.constant 4 : index
    %c1_147 = arith.constant 1 : index
    %c0_148 = arith.constant 0 : index
    %147 = vector.load %arg8[%c4_146, %c1_147, %c0_148] : memref<12x12x8xf32, #tpu.memory_space<vmem>>, vector<8x8x8xf32>
    %148 = vector.shape_cast %147 : vector<8x8x8xf32> to vector<64x8xf32>
    %c21 = arith.constant 21 : index
    %c0_149 = arith.constant 0 : index
    %c0_150 = arith.constant 0 : index
    %149 = vector.load %arg4[%c21, %c0_149, %c0_150] : memref<25x8x8xf32, #tpu.memory_space<vmem>>, vector<1x8x8xf32>
    %150 = vector.shape_cast %149 : vector<1x8x8xf32> to vector<8x8xf32>
    %cst_151 = arith.constant dense<0.000000e+00> : vector<64x8xf32>
    %151 = tpu.matmul %148, %150, %cst_151 {dimension_numbers = #tpu.dot_dimension_numbers<[1], [0], [0], [1], [0, 0, 1, 1], [], []>} : vector<64x8xf32>, vector<8x8xf32>, vector<64x8xf32> -> vector<64x8xf32>
    %152 = arith.addf %146, %151 : vector<64x8xf32>
    %c4_152 = arith.constant 4 : index
    %c2_153 = arith.constant 2 : index
    %c0_154 = arith.constant 0 : index
    %153 = vector.load %arg8[%c4_152, %c2_153, %c0_154] : memref<12x12x8xf32, #tpu.memory_space<vmem>>, vector<8x8x8xf32>
    %154 = vector.shape_cast %153 : vector<8x8x8xf32> to vector<64x8xf32>
    %c22 = arith.constant 22 : index
    %c0_155 = arith.constant 0 : index
    %c0_156 = arith.constant 0 : index
    %155 = vector.load %arg4[%c22, %c0_155, %c0_156] : memref<25x8x8xf32, #tpu.memory_space<vmem>>, vector<1x8x8xf32>
    %156 = vector.shape_cast %155 : vector<1x8x8xf32> to vector<8x8xf32>
    %cst_157 = arith.constant dense<0.000000e+00> : vector<64x8xf32>
    %157 = tpu.matmul %154, %156, %cst_157 {dimension_numbers = #tpu.dot_dimension_numbers<[1], [0], [0], [1], [0, 0, 1, 1], [], []>} : vector<64x8xf32>, vector<8x8xf32>, vector<64x8xf32> -> vector<64x8xf32>
    %158 = arith.addf %152, %157 : vector<64x8xf32>
    %c4_158 = arith.constant 4 : index
    %c3_159 = arith.constant 3 : index
    %c0_160 = arith.constant 0 : index
    %159 = vector.load %arg8[%c4_158, %c3_159, %c0_160] : memref<12x12x8xf32, #tpu.memory_space<vmem>>, vector<8x8x8xf32>
    %160 = vector.shape_cast %159 : vector<8x8x8xf32> to vector<64x8xf32>
    %c23 = arith.constant 23 : index
    %c0_161 = arith.constant 0 : index
    %c0_162 = arith.constant 0 : index
    %161 = vector.load %arg4[%c23, %c0_161, %c0_162] : memref<25x8x8xf32, #tpu.memory_space<vmem>>, vector<1x8x8xf32>
    %162 = vector.shape_cast %161 : vector<1x8x8xf32> to vector<8x8xf32>
    %cst_163 = arith.constant dense<0.000000e+00> : vector<64x8xf32>
    %163 = tpu.matmul %160, %162, %cst_163 {dimension_numbers = #tpu.dot_dimension_numbers<[1], [0], [0], [1], [0, 0, 1, 1], [], []>} : vector<64x8xf32>, vector<8x8xf32>, vector<64x8xf32> -> vector<64x8xf32>
    %164 = arith.addf %158, %163 : vector<64x8xf32>
    %c4_164 = arith.constant 4 : index
    %c4_165 = arith.constant 4 : index
    %c0_166 = arith.constant 0 : index
    %165 = vector.load %arg8[%c4_164, %c4_165, %c0_166] : memref<12x12x8xf32, #tpu.memory_space<vmem>>, vector<8x8x8xf32>
    %166 = vector.shape_cast %165 : vector<8x8x8xf32> to vector<64x8xf32>
    %c24 = arith.constant 24 : index
    %c0_167 = arith.constant 0 : index
    %c0_168 = arith.constant 0 : index
    %167 = vector.load %arg4[%c24, %c0_167, %c0_168] : memref<25x8x8xf32, #tpu.memory_space<vmem>>, vector<1x8x8xf32>
    %168 = vector.shape_cast %167 : vector<1x8x8xf32> to vector<8x8xf32>
    %cst_169 = arith.constant dense<0.000000e+00> : vector<64x8xf32>
    %169 = tpu.matmul %166, %168, %cst_169 {dimension_numbers = #tpu.dot_dimension_numbers<[1], [0], [0], [1], [0, 0, 1, 1], [], []>} : vector<64x8xf32>, vector<8x8xf32>, vector<64x8xf32> -> vector<64x8xf32>
    %170 = arith.addf %164, %169 : vector<64x8xf32>
    %171 = vector.shape_cast %170 : vector<64x8xf32> to vector<8x8x8xf32>
    %c0_170 = arith.constant 0 : index
    %c0_171 = arith.constant 0 : index
    %c0_172 = arith.constant 0 : index
    %c0_173 = arith.constant 0 : index
    %172 = vector.load %arg6[%c0_170, %c0_171, %c0_172, %c0_173] : memref<1x8x8x8xf32, #tpu.memory_space<vmem>>, vector<1x8x8x8xf32>
    %173 = vector.shape_cast %172 : vector<1x8x8x8xf32> to vector<8x8x8xf32>
    %174 = vector.shape_cast %171 : vector<8x8x8xf32> to vector<1x8x8x8xf32>
    tpu.vector_store %arg6[%c0_170, %c0_171, %c0_172, %c0_173], %174 {strides = array<i32>} : memref<1x8x8x8xf32, #tpu.memory_space<vmem>>, vector<1x8x8x8xf32>,
    %cst_174 = arith.constant dense<0.000000e+00> : vector<8xf32>
    %175 = vector.multi_reduction <add>, %170, %cst_174 [0] : vector<64x8xf32> to vector<8xf32>
    %176 = vector.shape_cast %175 : vector<8xf32> to vector<1x8xf32>
    %177 = arith.mulf %170, %170 : vector<64x8xf32>
    %cst_175 = arith.constant dense<0.000000e+00> : vector<8xf32>
    %178 = vector.multi_reduction <add>, %177, %cst_175 [0] : vector<64x8xf32> to vector<8xf32>
    %179 = vector.shape_cast %178 : vector<8xf32> to vector<1x8xf32>
    %180 = tpu.concatenate %176, %179 in 0 : vector<1x8xf32>, vector<1x8xf32> -> vector<2x8xf32>
    %c0_176 = arith.constant 0 : index
    %c0_177 = arith.constant 0 : index
    %c0_178 = arith.constant 0 : index
    %181 = vector.load %arg7[%c0_176, %c0_177, %c0_178] : memref<1x2x8xf32, #tpu.memory_space<vmem>>, vector<1x2x8xf32>
    %182 = vector.shape_cast %181 : vector<1x2x8xf32> to vector<2x8xf32>
    %183 = vector.shape_cast %180 : vector<2x8xf32> to vector<1x2x8xf32>
    tpu.vector_store %arg7[%c0_176, %c0_177, %c0_178], %183 {strides = array<i32>} : memref<1x2x8xf32, #tpu.memory_space<vmem>>, vector<1x2x8xf32>,
    return
  }
  func.func @transform_0(%arg0: i32) -> (i32, i32, i32) {
    %c0_i32 = arith.constant 0 : i32
    %c0_i32_0 = arith.constant 0 : i32
    %c0_i32_1 = arith.constant 0 : i32
    %c0_i32_2 = arith.constant 0 : i32
    return %c0_i32, %c0_i32_0, %c0_i32_1 : i32, i32, i32
  }
  func.func @transform_1(%arg0: i32) -> (i32, i32, i32) {
    %c0_i32 = arith.constant 0 : i32
    %c0_i32_0 = arith.constant 0 : i32
    %c0_i32_1 = arith.constant 0 : i32
    %c0_i32_2 = arith.constant 0 : i32
    return %c0_i32, %c0_i32_0, %c0_i32_1 : i32, i32, i32
  }
  func.func @transform_2(%arg0: i32) -> (i32, i32, i32, i32) {
    %c0_i32 = arith.constant 0 : i32
    %c0_i32_0 = arith.constant 0 : i32
    %c0_i32_1 = arith.constant 0 : i32
    %c0_i32_2 = arith.constant 0 : i32
    return %arg0, %c0_i32, %c0_i32_0, %c0_i32_1 : i32, i32, i32, i32
  }
  func.func @transform_3(%arg0: i32) -> (i32, i32, i32) {
    %c0_i32 = arith.constant 0 : i32
    %c0_i32_0 = arith.constant 0 : i32
    %c0_i32_1 = arith.constant 0 : i32
    %c0_i32_2 = arith.constant 0 : i32
    return %c0_i32, %c0_i32_0, %c0_i32_1 : i32, i32, i32
  }
  func.func @transform_4(%arg0: i32) -> (i32, i32) {
    %c0_i32 = arith.constant 0 : i32
    %c0_i32_0 = arith.constant 0 : i32
    %c0_i32_1 = arith.constant 0 : i32
    return %c0_i32, %c0_i32_0 : i32, i32
  }
  func.func @transform_5(%arg0: i32) -> (i32, i32, i32, i32) {
    %c0_i32 = arith.constant 0 : i32
    %c0_i32_0 = arith.constant 0 : i32
    %c0_i32_1 = arith.constant 0 : i32
    %c0_i32_2 = arith.constant 0 : i32
    return %arg0, %c0_i32, %c0_i32_0, %c0_i32_1 : i32, i32, i32, i32
  }
  func.func @transform_6(%arg0: i32) -> (i32, i32, i32) {
    %c0_i32 = arith.constant 0 : i32
    %c0_i32_0 = arith.constant 0 : i32
    %c0_i32_1 = arith.constant 0 : i32
    return %arg0, %c0_i32, %c0_i32_0 : i32, i32, i32
  }
}

module attributes {stable_mosaic.version = 11 : i64} {
  func.func @_conv_s1_kernel(%arg0: i32, %arg1: memref<1x1x8xf32, #tpu.memory_space<vmem>>, %arg2: memref<1x1x8xf32, #tpu.memory_space<vmem>>, %arg3: memref<1x8x8x8xf32, #tpu.memory_space<vmem>>, %arg4: memref<1x8x4xf32, #tpu.memory_space<vmem>>, %arg5: memref<1x4xf32, #tpu.memory_space<vmem>>, %arg6: memref<1x8x8x4xf32, #tpu.memory_space<vmem>>, %arg7: memref<1x2x4xf32, #tpu.memory_space<vmem>>, %arg8: memref<8x8x8xf32, #tpu.memory_space<vmem>>) attributes {dimension_semantics = [#tpu.dimension_semantics<parallel>], iteration_bounds = array<i64: 2>, scalar_prefetch = 0 : i64, scratch_operands = 1 : i64, tpu.core_type = #tpu.core_type<tc>, window_params = [{pipeline_mode = #tpu.pipeline_mode<synchronous>, transform_indices = @transform_0, window_bounds = array<i64: 1, 1, 8>}, {pipeline_mode = #tpu.pipeline_mode<synchronous>, transform_indices = @transform_1, window_bounds = array<i64: 1, 1, 8>}, {transform_indices = @transform_2, window_bounds = array<i64: 1, 8, 8, 8>}, {pipeline_mode = #tpu.pipeline_mode<synchronous>, transform_indices = @transform_3, window_bounds = array<i64: 1, 8, 4>}, {pipeline_mode = #tpu.pipeline_mode<synchronous>, transform_indices = @transform_4, window_bounds = array<i64: 1, 4>}, {transform_indices = @transform_5, window_bounds = array<i64: 1, 8, 8, 4>}, {transform_indices = @transform_6, window_bounds = array<i64: 1, 2, 4>}]} {
    %c0 = arith.constant 0 : index
    %c0_0 = arith.constant 0 : index
    %c0_1 = arith.constant 0 : index
    %c0_2 = arith.constant 0 : index
    %0 = vector.load %arg3[%c0, %c0_0, %c0_1, %c0_2] : memref<1x8x8x8xf32, #tpu.memory_space<vmem>>, vector<1x8x8x8xf32>
    %1 = vector.shape_cast %0 : vector<1x8x8x8xf32> to vector<8x8x8xf32>
    %c0_3 = arith.constant 0 : index
    %c0_4 = arith.constant 0 : index
    %c0_5 = arith.constant 0 : index
    %2 = vector.load %arg1[%c0_3, %c0_4, %c0_5] : memref<1x1x8xf32, #tpu.memory_space<vmem>>, vector<1x1x8xf32>
    %3 = vector.broadcast %2 : vector<1x1x8xf32> to vector<8x8x8xf32>
    %4 = arith.mulf %1, %3 : vector<8x8x8xf32>
    %c0_6 = arith.constant 0 : index
    %c0_7 = arith.constant 0 : index
    %c0_8 = arith.constant 0 : index
    %5 = vector.load %arg2[%c0_6, %c0_7, %c0_8] : memref<1x1x8xf32, #tpu.memory_space<vmem>>, vector<1x1x8xf32>
    %6 = vector.broadcast %5 : vector<1x1x8xf32> to vector<8x8x8xf32>
    %7 = arith.addf %4, %6 : vector<8x8x8xf32>
    %8 = arith.negf %7 : vector<8x8x8xf32>
    %9 = math.exp %8 : vector<8x8x8xf32>
    %cst = arith.constant 1.000000e+00 : f32
    %10 = vector.broadcast %cst : f32 to vector<8x8x8xf32>
    %11 = arith.addf %10, %9 : vector<8x8x8xf32>
    %12 = arith.divf %10, %11 : vector<8x8x8xf32>
    %13 = arith.mulf %7, %12 : vector<8x8x8xf32>
    %c0_9 = arith.constant 0 : index
    %c0_10 = arith.constant 0 : index
    %c0_11 = arith.constant 0 : index
    %14 = vector.load %arg8[%c0_9, %c0_10, %c0_11] : memref<8x8x8xf32, #tpu.memory_space<vmem>>, vector<8x8x8xf32>
    tpu.vector_store %arg8[%c0_9, %c0_10, %c0_11], %13 {strides = array<i32>} : memref<8x8x8xf32, #tpu.memory_space<vmem>>, vector<8x8x8xf32>,
    %cst_12 = arith.constant 0.000000e+00 : f32
    %15 = vector.broadcast %cst_12 : f32 to vector<64x4xf32>
    %c0_13 = arith.constant 0 : index
    %c0_14 = arith.constant 0 : index
    %16 = vector.load %arg5[%c0_13, %c0_14] : memref<1x4xf32, #tpu.memory_space<vmem>>, vector<1x4xf32>
    %17 = vector.broadcast %16 : vector<1x4xf32> to vector<64x4xf32>
    %18 = arith.addf %15, %17 : vector<64x4xf32>
    %c0_15 = arith.constant 0 : index
    %c0_16 = arith.constant 0 : index
    %c0_17 = arith.constant 0 : index
    %19 = vector.load %arg8[%c0_15, %c0_16, %c0_17] : memref<8x8x8xf32, #tpu.memory_space<vmem>>, vector<8x8x8xf32>
    %20 = vector.shape_cast %19 : vector<8x8x8xf32> to vector<64x8xf32>
    %c0_18 = arith.constant 0 : index
    %c0_19 = arith.constant 0 : index
    %c0_20 = arith.constant 0 : index
    %21 = vector.load %arg4[%c0_18, %c0_19, %c0_20] : memref<1x8x4xf32, #tpu.memory_space<vmem>>, vector<1x8x4xf32>
    %22 = vector.shape_cast %21 : vector<1x8x4xf32> to vector<8x4xf32>
    %cst_21 = arith.constant dense<0.000000e+00> : vector<64x4xf32>
    %23 = tpu.matmul %20, %22, %cst_21 {dimension_numbers = #tpu.dot_dimension_numbers<[1], [0], [0], [1], [0, 0, 1, 1], [], []>} : vector<64x8xf32>, vector<8x4xf32>, vector<64x4xf32> -> vector<64x4xf32>
    %24 = arith.addf %18, %23 : vector<64x4xf32>
    %25 = vector.shape_cast %24 : vector<64x4xf32> to vector<8x8x4xf32>
    %c0_22 = arith.constant 0 : index
    %c0_23 = arith.constant 0 : index
    %c0_24 = arith.constant 0 : index
    %c0_25 = arith.constant 0 : index
    %26 = vector.load %arg6[%c0_22, %c0_23, %c0_24, %c0_25] : memref<1x8x8x4xf32, #tpu.memory_space<vmem>>, vector<1x8x8x4xf32>
    %27 = vector.shape_cast %26 : vector<1x8x8x4xf32> to vector<8x8x4xf32>
    %28 = vector.shape_cast %25 : vector<8x8x4xf32> to vector<1x8x8x4xf32>
    tpu.vector_store %arg6[%c0_22, %c0_23, %c0_24, %c0_25], %28 {strides = array<i32>} : memref<1x8x8x4xf32, #tpu.memory_space<vmem>>, vector<1x8x8x4xf32>,
    %cst_26 = arith.constant dense<0.000000e+00> : vector<4xf32>
    %29 = vector.multi_reduction <add>, %24, %cst_26 [0] : vector<64x4xf32> to vector<4xf32>
    %30 = vector.shape_cast %29 : vector<4xf32> to vector<1x4xf32>
    %31 = arith.mulf %24, %24 : vector<64x4xf32>
    %cst_27 = arith.constant dense<0.000000e+00> : vector<4xf32>
    %32 = vector.multi_reduction <add>, %31, %cst_27 [0] : vector<64x4xf32> to vector<4xf32>
    %33 = vector.shape_cast %32 : vector<4xf32> to vector<1x4xf32>
    %34 = tpu.concatenate %30, %33 in 0 : vector<1x4xf32>, vector<1x4xf32> -> vector<2x4xf32>
    %c0_28 = arith.constant 0 : index
    %c0_29 = arith.constant 0 : index
    %c0_30 = arith.constant 0 : index
    %35 = vector.load %arg7[%c0_28, %c0_29, %c0_30] : memref<1x2x4xf32, #tpu.memory_space<vmem>>, vector<1x2x4xf32>
    %36 = vector.shape_cast %35 : vector<1x2x4xf32> to vector<2x4xf32>
    %37 = vector.shape_cast %34 : vector<2x4xf32> to vector<1x2x4xf32>
    tpu.vector_store %arg7[%c0_28, %c0_29, %c0_30], %37 {strides = array<i32>} : memref<1x2x4xf32, #tpu.memory_space<vmem>>, vector<1x2x4xf32>,
    return
  }
  func.func @transform_0(%arg0: i32) -> (i32, i32, i32) {
    %c0_i32 = arith.constant 0 : i32
    %c0_i32_0 = arith.constant 0 : i32
    %c0_i32_1 = arith.constant 0 : i32
    %c0_i32_2 = arith.constant 0 : i32
    return %c0_i32, %c0_i32_0, %c0_i32_1 : i32, i32, i32
  }
  func.func @transform_1(%arg0: i32) -> (i32, i32, i32) {
    %c0_i32 = arith.constant 0 : i32
    %c0_i32_0 = arith.constant 0 : i32
    %c0_i32_1 = arith.constant 0 : i32
    %c0_i32_2 = arith.constant 0 : i32
    return %c0_i32, %c0_i32_0, %c0_i32_1 : i32, i32, i32
  }
  func.func @transform_2(%arg0: i32) -> (i32, i32, i32, i32) {
    %c0_i32 = arith.constant 0 : i32
    %c0_i32_0 = arith.constant 0 : i32
    %c0_i32_1 = arith.constant 0 : i32
    %c0_i32_2 = arith.constant 0 : i32
    return %arg0, %c0_i32, %c0_i32_0, %c0_i32_1 : i32, i32, i32, i32
  }
  func.func @transform_3(%arg0: i32) -> (i32, i32, i32) {
    %c0_i32 = arith.constant 0 : i32
    %c0_i32_0 = arith.constant 0 : i32
    %c0_i32_1 = arith.constant 0 : i32
    %c0_i32_2 = arith.constant 0 : i32
    return %c0_i32, %c0_i32_0, %c0_i32_1 : i32, i32, i32
  }
  func.func @transform_4(%arg0: i32) -> (i32, i32) {
    %c0_i32 = arith.constant 0 : i32
    %c0_i32_0 = arith.constant 0 : i32
    %c0_i32_1 = arith.constant 0 : i32
    return %c0_i32, %c0_i32_0 : i32, i32
  }
  func.func @transform_5(%arg0: i32) -> (i32, i32, i32, i32) {
    %c0_i32 = arith.constant 0 : i32
    %c0_i32_0 = arith.constant 0 : i32
    %c0_i32_1 = arith.constant 0 : i32
    %c0_i32_2 = arith.constant 0 : i32
    return %arg0, %c0_i32, %c0_i32_0, %c0_i32_1 : i32, i32, i32, i32
  }
  func.func @transform_6(%arg0: i32) -> (i32, i32, i32) {
    %c0_i32 = arith.constant 0 : i32
    %c0_i32_0 = arith.constant 0 : i32
    %c0_i32_1 = arith.constant 0 : i32
    return %arg0, %c0_i32, %c0_i32_0 : i32, i32, i32
  }
}

module attributes {stable_mosaic.version = 11 : i64} {
  func.func @_conv_s1_kernel(%arg0: i32, %arg1: memref<1x1x4xf32, #tpu.memory_space<vmem>>, %arg2: memref<1x1x4xf32, #tpu.memory_space<vmem>>, %arg3: memref<1x8x8x4xf32, #tpu.memory_space<vmem>>, %arg4: memref<25x4x8xf32, #tpu.memory_space<vmem>>, %arg5: memref<1x8xf32, #tpu.memory_space<vmem>>, %arg6: memref<1x8x8x8xf32, #tpu.memory_space<vmem>>, %arg7: memref<1x2x8xf32, #tpu.memory_space<vmem>>, %arg8: memref<12x12x4xf32, #tpu.memory_space<vmem>>) attributes {dimension_semantics = [#tpu.dimension_semantics<parallel>], iteration_bounds = array<i64: 2>, scalar_prefetch = 0 : i64, scratch_operands = 1 : i64, tpu.core_type = #tpu.core_type<tc>, window_params = [{pipeline_mode = #tpu.pipeline_mode<synchronous>, transform_indices = @transform_0, window_bounds = array<i64: 1, 1, 4>}, {pipeline_mode = #tpu.pipeline_mode<synchronous>, transform_indices = @transform_1, window_bounds = array<i64: 1, 1, 4>}, {transform_indices = @transform_2, window_bounds = array<i64: 1, 8, 8, 4>}, {pipeline_mode = #tpu.pipeline_mode<synchronous>, transform_indices = @transform_3, window_bounds = array<i64: 25, 4, 8>}, {pipeline_mode = #tpu.pipeline_mode<synchronous>, transform_indices = @transform_4, window_bounds = array<i64: 1, 8>}, {transform_indices = @transform_5, window_bounds = array<i64: 1, 8, 8, 8>}, {transform_indices = @transform_6, window_bounds = array<i64: 1, 2, 8>}]} {
    %c0 = arith.constant 0 : index
    %c0_0 = arith.constant 0 : index
    %c0_1 = arith.constant 0 : index
    %c0_2 = arith.constant 0 : index
    %0 = vector.load %arg3[%c0, %c0_0, %c0_1, %c0_2] : memref<1x8x8x4xf32, #tpu.memory_space<vmem>>, vector<1x8x8x4xf32>
    %1 = vector.shape_cast %0 : vector<1x8x8x4xf32> to vector<8x8x4xf32>
    %c0_3 = arith.constant 0 : index
    %c0_4 = arith.constant 0 : index
    %c0_5 = arith.constant 0 : index
    %2 = vector.load %arg1[%c0_3, %c0_4, %c0_5] : memref<1x1x4xf32, #tpu.memory_space<vmem>>, vector<1x1x4xf32>
    %3 = vector.broadcast %2 : vector<1x1x4xf32> to vector<8x8x4xf32>
    %4 = arith.mulf %1, %3 : vector<8x8x4xf32>
    %c0_6 = arith.constant 0 : index
    %c0_7 = arith.constant 0 : index
    %c0_8 = arith.constant 0 : index
    %5 = vector.load %arg2[%c0_6, %c0_7, %c0_8] : memref<1x1x4xf32, #tpu.memory_space<vmem>>, vector<1x1x4xf32>
    %6 = vector.broadcast %5 : vector<1x1x4xf32> to vector<8x8x4xf32>
    %7 = arith.addf %4, %6 : vector<8x8x4xf32>
    %8 = arith.negf %7 : vector<8x8x4xf32>
    %9 = math.exp %8 : vector<8x8x4xf32>
    %cst = arith.constant 1.000000e+00 : f32
    %10 = vector.broadcast %cst : f32 to vector<8x8x4xf32>
    %11 = arith.addf %10, %9 : vector<8x8x4xf32>
    %12 = arith.divf %10, %11 : vector<8x8x4xf32>
    %13 = arith.mulf %7, %12 : vector<8x8x4xf32>
    %cst_9 = arith.constant 0.000000e+00 : f32
    %14 = vector.broadcast %cst_9 : f32 to vector<12x12x4xf32>
    %c0_10 = arith.constant 0 : index
    %c0_11 = arith.constant 0 : index
    %c0_12 = arith.constant 0 : index
    %15 = vector.load %arg8[%c0_10, %c0_11, %c0_12] : memref<12x12x4xf32, #tpu.memory_space<vmem>>, vector<12x12x4xf32>
    tpu.vector_store %arg8[%c0_10, %c0_11, %c0_12], %14 {strides = array<i32>} : memref<12x12x4xf32, #tpu.memory_space<vmem>>, vector<12x12x4xf32>,
    %c2 = arith.constant 2 : index
    %c2_13 = arith.constant 2 : index
    %c0_14 = arith.constant 0 : index
    %16 = vector.load %arg8[%c2, %c2_13, %c0_14] : memref<12x12x4xf32, #tpu.memory_space<vmem>>, vector<8x8x4xf32>
    tpu.vector_store %arg8[%c2, %c2_13, %c0_14], %13 {strides = array<i32>} : memref<12x12x4xf32, #tpu.memory_space<vmem>>, vector<8x8x4xf32>,
    %cst_15 = arith.constant 0.000000e+00 : f32
    %17 = vector.broadcast %cst_15 : f32 to vector<64x8xf32>
    %c0_16 = arith.constant 0 : index
    %c0_17 = arith.constant 0 : index
    %18 = vector.load %arg5[%c0_16, %c0_17] : memref<1x8xf32, #tpu.memory_space<vmem>>, vector<1x8xf32>
    %19 = vector.broadcast %18 : vector<1x8xf32> to vector<64x8xf32>
    %20 = arith.addf %17, %19 : vector<64x8xf32>
    %c0_18 = arith.constant 0 : index
    %c0_19 = arith.constant 0 : index
    %c0_20 = arith.constant 0 : index
    %21 = vector.load %arg8[%c0_18, %c0_19, %c0_20] : memref<12x12x4xf32, #tpu.memory_space<vmem>>, vector<8x8x4xf32>
    %22 = vector.shape_cast %21 : vector<8x8x4xf32> to vector<64x4xf32>
    %c0_21 = arith.constant 0 : index
    %c0_22 = arith.constant 0 : index
    %c0_23 = arith.constant 0 : index
    %23 = vector.load %arg4[%c0_21, %c0_22, %c0_23] : memref<25x4x8xf32, #tpu.memory_space<vmem>>, vector<1x4x8xf32>
    %24 = vector.shape_cast %23 : vector<1x4x8xf32> to vector<4x8xf32>
    %cst_24 = arith.constant dense<0.000000e+00> : vector<64x8xf32>
    %25 = tpu.matmul %22, %24, %cst_24 {dimension_numbers = #tpu.dot_dimension_numbers<[1], [0], [0], [1], [0, 0, 1, 1], [], []>} : vector<64x4xf32>, vector<4x8xf32>, vector<64x8xf32> -> vector<64x8xf32>
    %26 = arith.addf %20, %25 : vector<64x8xf32>
    %c0_25 = arith.constant 0 : index
    %c1 = arith.constant 1 : index
    %c0_26 = arith.constant 0 : index
    %27 = vector.load %arg8[%c0_25, %c1, %c0_26] : memref<12x12x4xf32, #tpu.memory_space<vmem>>, vector<8x8x4xf32>
    %28 = vector.shape_cast %27 : vector<8x8x4xf32> to vector<64x4xf32>
    %c1_27 = arith.constant 1 : index
    %c0_28 = arith.constant 0 : index
    %c0_29 = arith.constant 0 : index
    %29 = vector.load %arg4[%c1_27, %c0_28, %c0_29] : memref<25x4x8xf32, #tpu.memory_space<vmem>>, vector<1x4x8xf32>
    %30 = vector.shape_cast %29 : vector<1x4x8xf32> to vector<4x8xf32>
    %cst_30 = arith.constant dense<0.000000e+00> : vector<64x8xf32>
    %31 = tpu.matmul %28, %30, %cst_30 {dimension_numbers = #tpu.dot_dimension_numbers<[1], [0], [0], [1], [0, 0, 1, 1], [], []>} : vector<64x4xf32>, vector<4x8xf32>, vector<64x8xf32> -> vector<64x8xf32>
    %32 = arith.addf %26, %31 : vector<64x8xf32>
    %c0_31 = arith.constant 0 : index
    %c2_32 = arith.constant 2 : index
    %c0_33 = arith.constant 0 : index
    %33 = vector.load %arg8[%c0_31, %c2_32, %c0_33] : memref<12x12x4xf32, #tpu.memory_space<vmem>>, vector<8x8x4xf32>
    %34 = vector.shape_cast %33 : vector<8x8x4xf32> to vector<64x4xf32>
    %c2_34 = arith.constant 2 : index
    %c0_35 = arith.constant 0 : index
    %c0_36 = arith.constant 0 : index
    %35 = vector.load %arg4[%c2_34, %c0_35, %c0_36] : memref<25x4x8xf32, #tpu.memory_space<vmem>>, vector<1x4x8xf32>
    %36 = vector.shape_cast %35 : vector<1x4x8xf32> to vector<4x8xf32>
    %cst_37 = arith.constant dense<0.000000e+00> : vector<64x8xf32>
    %37 = tpu.matmul %34, %36, %cst_37 {dimension_numbers = #tpu.dot_dimension_numbers<[1], [0], [0], [1], [0, 0, 1, 1], [], []>} : vector<64x4xf32>, vector<4x8xf32>, vector<64x8xf32> -> vector<64x8xf32>
    %38 = arith.addf %32, %37 : vector<64x8xf32>
    %c0_38 = arith.constant 0 : index
    %c3 = arith.constant 3 : index
    %c0_39 = arith.constant 0 : index
    %39 = vector.load %arg8[%c0_38, %c3, %c0_39] : memref<12x12x4xf32, #tpu.memory_space<vmem>>, vector<8x8x4xf32>
    %40 = vector.shape_cast %39 : vector<8x8x4xf32> to vector<64x4xf32>
    %c3_40 = arith.constant 3 : index
    %c0_41 = arith.constant 0 : index
    %c0_42 = arith.constant 0 : index
    %41 = vector.load %arg4[%c3_40, %c0_41, %c0_42] : memref<25x4x8xf32, #tpu.memory_space<vmem>>, vector<1x4x8xf32>
    %42 = vector.shape_cast %41 : vector<1x4x8xf32> to vector<4x8xf32>
    %cst_43 = arith.constant dense<0.000000e+00> : vector<64x8xf32>
    %43 = tpu.matmul %40, %42, %cst_43 {dimension_numbers = #tpu.dot_dimension_numbers<[1], [0], [0], [1], [0, 0, 1, 1], [], []>} : vector<64x4xf32>, vector<4x8xf32>, vector<64x8xf32> -> vector<64x8xf32>
    %44 = arith.addf %38, %43 : vector<64x8xf32>
    %c0_44 = arith.constant 0 : index
    %c4 = arith.constant 4 : index
    %c0_45 = arith.constant 0 : index
    %45 = vector.load %arg8[%c0_44, %c4, %c0_45] : memref<12x12x4xf32, #tpu.memory_space<vmem>>, vector<8x8x4xf32>
    %46 = vector.shape_cast %45 : vector<8x8x4xf32> to vector<64x4xf32>
    %c4_46 = arith.constant 4 : index
    %c0_47 = arith.constant 0 : index
    %c0_48 = arith.constant 0 : index
    %47 = vector.load %arg4[%c4_46, %c0_47, %c0_48] : memref<25x4x8xf32, #tpu.memory_space<vmem>>, vector<1x4x8xf32>
    %48 = vector.shape_cast %47 : vector<1x4x8xf32> to vector<4x8xf32>
    %cst_49 = arith.constant dense<0.000000e+00> : vector<64x8xf32>
    %49 = tpu.matmul %46, %48, %cst_49 {dimension_numbers = #tpu.dot_dimension_numbers<[1], [0], [0], [1], [0, 0, 1, 1], [], []>} : vector<64x4xf32>, vector<4x8xf32>, vector<64x8xf32> -> vector<64x8xf32>
    %50 = arith.addf %44, %49 : vector<64x8xf32>
    %c1_50 = arith.constant 1 : index
    %c0_51 = arith.constant 0 : index
    %c0_52 = arith.constant 0 : index
    %51 = vector.load %arg8[%c1_50, %c0_51, %c0_52] : memref<12x12x4xf32, #tpu.memory_space<vmem>>, vector<8x8x4xf32>
    %52 = vector.shape_cast %51 : vector<8x8x4xf32> to vector<64x4xf32>
    %c5 = arith.constant 5 : index
    %c0_53 = arith.constant 0 : index
    %c0_54 = arith.constant 0 : index
    %53 = vector.load %arg4[%c5, %c0_53, %c0_54] : memref<25x4x8xf32, #tpu.memory_space<vmem>>, vector<1x4x8xf32>
    %54 = vector.shape_cast %53 : vector<1x4x8xf32> to vector<4x8xf32>
    %cst_55 = arith.constant dense<0.000000e+00> : vector<64x8xf32>
    %55 = tpu.matmul %52, %54, %cst_55 {dimension_numbers = #tpu.dot_dimension_numbers<[1], [0], [0], [1], [0, 0, 1, 1], [], []>} : vector<64x4xf32>, vector<4x8xf32>, vector<64x8xf32> -> vector<64x8xf32>
    %56 = arith.addf %50, %55 : vector<64x8xf32>
    %c1_56 = arith.constant 1 : index
    %c1_57 = arith.constant 1 : index
    %c0_58 = arith.constant 0 : index
    %57 = vector.load %arg8[%c1_56, %c1_57, %c0_58] : memref<12x12x4xf32, #tpu.memory_space<vmem>>, vector<8x8x4xf32>
    %58 = vector.shape_cast %57 : vector<8x8x4xf32> to vector<64x4xf32>
    %c6 = arith.constant 6 : index
    %c0_59 = arith.constant 0 : index
    %c0_60 = arith.constant 0 : index
    %59 = vector.load %arg4[%c6, %c0_59, %c0_60] : memref<25x4x8xf32, #tpu.memory_space<vmem>>, vector<1x4x8xf32>
    %60 = vector.shape_cast %59 : vector<1x4x8xf32> to vector<4x8xf32>
    %cst_61 = arith.constant dense<0.000000e+00> : vector<64x8xf32>
    %61 = tpu.matmul %58, %60, %cst_61 {dimension_numbers = #tpu.dot_dimension_numbers<[1], [0], [0], [1], [0, 0, 1, 1], [], []>} : vector<64x4xf32>, vector<4x8xf32>, vector<64x8xf32> -> vector<64x8xf32>
    %62 = arith.addf %56, %61 : vector<64x8xf32>
    %c1_62 = arith.constant 1 : index
    %c2_63 = arith.constant 2 : index
    %c0_64 = arith.constant 0 : index
    %63 = vector.load %arg8[%c1_62, %c2_63, %c0_64] : memref<12x12x4xf32, #tpu.memory_space<vmem>>, vector<8x8x4xf32>
    %64 = vector.shape_cast %63 : vector<8x8x4xf32> to vector<64x4xf32>
    %c7 = arith.constant 7 : index
    %c0_65 = arith.constant 0 : index
    %c0_66 = arith.constant 0 : index
    %65 = vector.load %arg4[%c7, %c0_65, %c0_66] : memref<25x4x8xf32, #tpu.memory_space<vmem>>, vector<1x4x8xf32>
    %66 = vector.shape_cast %65 : vector<1x4x8xf32> to vector<4x8xf32>
    %cst_67 = arith.constant dense<0.000000e+00> : vector<64x8xf32>
    %67 = tpu.matmul %64, %66, %cst_67 {dimension_numbers = #tpu.dot_dimension_numbers<[1], [0], [0], [1], [0, 0, 1, 1], [], []>} : vector<64x4xf32>, vector<4x8xf32>, vector<64x8xf32> -> vector<64x8xf32>
    %68 = arith.addf %62, %67 : vector<64x8xf32>
    %c1_68 = arith.constant 1 : index
    %c3_69 = arith.constant 3 : index
    %c0_70 = arith.constant 0 : index
    %69 = vector.load %arg8[%c1_68, %c3_69, %c0_70] : memref<12x12x4xf32, #tpu.memory_space<vmem>>, vector<8x8x4xf32>
    %70 = vector.shape_cast %69 : vector<8x8x4xf32> to vector<64x4xf32>
    %c8 = arith.constant 8 : index
    %c0_71 = arith.constant 0 : index
    %c0_72 = arith.constant 0 : index
    %71 = vector.load %arg4[%c8, %c0_71, %c0_72] : memref<25x4x8xf32, #tpu.memory_space<vmem>>, vector<1x4x8xf32>
    %72 = vector.shape_cast %71 : vector<1x4x8xf32> to vector<4x8xf32>
    %cst_73 = arith.constant dense<0.000000e+00> : vector<64x8xf32>
    %73 = tpu.matmul %70, %72, %cst_73 {dimension_numbers = #tpu.dot_dimension_numbers<[1], [0], [0], [1], [0, 0, 1, 1], [], []>} : vector<64x4xf32>, vector<4x8xf32>, vector<64x8xf32> -> vector<64x8xf32>
    %74 = arith.addf %68, %73 : vector<64x8xf32>
    %c1_74 = arith.constant 1 : index
    %c4_75 = arith.constant 4 : index
    %c0_76 = arith.constant 0 : index
    %75 = vector.load %arg8[%c1_74, %c4_75, %c0_76] : memref<12x12x4xf32, #tpu.memory_space<vmem>>, vector<8x8x4xf32>
    %76 = vector.shape_cast %75 : vector<8x8x4xf32> to vector<64x4xf32>
    %c9 = arith.constant 9 : index
    %c0_77 = arith.constant 0 : index
    %c0_78 = arith.constant 0 : index
    %77 = vector.load %arg4[%c9, %c0_77, %c0_78] : memref<25x4x8xf32, #tpu.memory_space<vmem>>, vector<1x4x8xf32>
    %78 = vector.shape_cast %77 : vector<1x4x8xf32> to vector<4x8xf32>
    %cst_79 = arith.constant dense<0.000000e+00> : vector<64x8xf32>
    %79 = tpu.matmul %76, %78, %cst_79 {dimension_numbers = #tpu.dot_dimension_numbers<[1], [0], [0], [1], [0, 0, 1, 1], [], []>} : vector<64x4xf32>, vector<4x8xf32>, vector<64x8xf32> -> vector<64x8xf32>
    %80 = arith.addf %74, %79 : vector<64x8xf32>
    %c2_80 = arith.constant 2 : index
    %c0_81 = arith.constant 0 : index
    %c0_82 = arith.constant 0 : index
    %81 = vector.load %arg8[%c2_80, %c0_81, %c0_82] : memref<12x12x4xf32, #tpu.memory_space<vmem>>, vector<8x8x4xf32>
    %82 = vector.shape_cast %81 : vector<8x8x4xf32> to vector<64x4xf32>
    %c10 = arith.constant 10 : index
    %c0_83 = arith.constant 0 : index
    %c0_84 = arith.constant 0 : index
    %83 = vector.load %arg4[%c10, %c0_83, %c0_84] : memref<25x4x8xf32, #tpu.memory_space<vmem>>, vector<1x4x8xf32>
    %84 = vector.shape_cast %83 : vector<1x4x8xf32> to vector<4x8xf32>
    %cst_85 = arith.constant dense<0.000000e+00> : vector<64x8xf32>
    %85 = tpu.matmul %82, %84, %cst_85 {dimension_numbers = #tpu.dot_dimension_numbers<[1], [0], [0], [1], [0, 0, 1, 1], [], []>} : vector<64x4xf32>, vector<4x8xf32>, vector<64x8xf32> -> vector<64x8xf32>
    %86 = arith.addf %80, %85 : vector<64x8xf32>
    %c2_86 = arith.constant 2 : index
    %c1_87 = arith.constant 1 : index
    %c0_88 = arith.constant 0 : index
    %87 = vector.load %arg8[%c2_86, %c1_87, %c0_88] : memref<12x12x4xf32, #tpu.memory_space<vmem>>, vector<8x8x4xf32>
    %88 = vector.shape_cast %87 : vector<8x8x4xf32> to vector<64x4xf32>
    %c11 = arith.constant 11 : index
    %c0_89 = arith.constant 0 : index
    %c0_90 = arith.constant 0 : index
    %89 = vector.load %arg4[%c11, %c0_89, %c0_90] : memref<25x4x8xf32, #tpu.memory_space<vmem>>, vector<1x4x8xf32>
    %90 = vector.shape_cast %89 : vector<1x4x8xf32> to vector<4x8xf32>
    %cst_91 = arith.constant dense<0.000000e+00> : vector<64x8xf32>
    %91 = tpu.matmul %88, %90, %cst_91 {dimension_numbers = #tpu.dot_dimension_numbers<[1], [0], [0], [1], [0, 0, 1, 1], [], []>} : vector<64x4xf32>, vector<4x8xf32>, vector<64x8xf32> -> vector<64x8xf32>
    %92 = arith.addf %86, %91 : vector<64x8xf32>
    %c2_92 = arith.constant 2 : index
    %c2_93 = arith.constant 2 : index
    %c0_94 = arith.constant 0 : index
    %93 = vector.load %arg8[%c2_92, %c2_93, %c0_94] : memref<12x12x4xf32, #tpu.memory_space<vmem>>, vector<8x8x4xf32>
    %94 = vector.shape_cast %93 : vector<8x8x4xf32> to vector<64x4xf32>
    %c12 = arith.constant 12 : index
    %c0_95 = arith.constant 0 : index
    %c0_96 = arith.constant 0 : index
    %95 = vector.load %arg4[%c12, %c0_95, %c0_96] : memref<25x4x8xf32, #tpu.memory_space<vmem>>, vector<1x4x8xf32>
    %96 = vector.shape_cast %95 : vector<1x4x8xf32> to vector<4x8xf32>
    %cst_97 = arith.constant dense<0.000000e+00> : vector<64x8xf32>
    %97 = tpu.matmul %94, %96, %cst_97 {dimension_numbers = #tpu.dot_dimension_numbers<[1], [0], [0], [1], [0, 0, 1, 1], [], []>} : vector<64x4xf32>, vector<4x8xf32>, vector<64x8xf32> -> vector<64x8xf32>
    %98 = arith.addf %92, %97 : vector<64x8xf32>
    %c2_98 = arith.constant 2 : index
    %c3_99 = arith.constant 3 : index
    %c0_100 = arith.constant 0 : index
    %99 = vector.load %arg8[%c2_98, %c3_99, %c0_100] : memref<12x12x4xf32, #tpu.memory_space<vmem>>, vector<8x8x4xf32>
    %100 = vector.shape_cast %99 : vector<8x8x4xf32> to vector<64x4xf32>
    %c13 = arith.constant 13 : index
    %c0_101 = arith.constant 0 : index
    %c0_102 = arith.constant 0 : index
    %101 = vector.load %arg4[%c13, %c0_101, %c0_102] : memref<25x4x8xf32, #tpu.memory_space<vmem>>, vector<1x4x8xf32>
    %102 = vector.shape_cast %101 : vector<1x4x8xf32> to vector<4x8xf32>
    %cst_103 = arith.constant dense<0.000000e+00> : vector<64x8xf32>
    %103 = tpu.matmul %100, %102, %cst_103 {dimension_numbers = #tpu.dot_dimension_numbers<[1], [0], [0], [1], [0, 0, 1, 1], [], []>} : vector<64x4xf32>, vector<4x8xf32>, vector<64x8xf32> -> vector<64x8xf32>
    %104 = arith.addf %98, %103 : vector<64x8xf32>
    %c2_104 = arith.constant 2 : index
    %c4_105 = arith.constant 4 : index
    %c0_106 = arith.constant 0 : index
    %105 = vector.load %arg8[%c2_104, %c4_105, %c0_106] : memref<12x12x4xf32, #tpu.memory_space<vmem>>, vector<8x8x4xf32>
    %106 = vector.shape_cast %105 : vector<8x8x4xf32> to vector<64x4xf32>
    %c14 = arith.constant 14 : index
    %c0_107 = arith.constant 0 : index
    %c0_108 = arith.constant 0 : index
    %107 = vector.load %arg4[%c14, %c0_107, %c0_108] : memref<25x4x8xf32, #tpu.memory_space<vmem>>, vector<1x4x8xf32>
    %108 = vector.shape_cast %107 : vector<1x4x8xf32> to vector<4x8xf32>
    %cst_109 = arith.constant dense<0.000000e+00> : vector<64x8xf32>
    %109 = tpu.matmul %106, %108, %cst_109 {dimension_numbers = #tpu.dot_dimension_numbers<[1], [0], [0], [1], [0, 0, 1, 1], [], []>} : vector<64x4xf32>, vector<4x8xf32>, vector<64x8xf32> -> vector<64x8xf32>
    %110 = arith.addf %104, %109 : vector<64x8xf32>
    %c3_110 = arith.constant 3 : index
    %c0_111 = arith.constant 0 : index
    %c0_112 = arith.constant 0 : index
    %111 = vector.load %arg8[%c3_110, %c0_111, %c0_112] : memref<12x12x4xf32, #tpu.memory_space<vmem>>, vector<8x8x4xf32>
    %112 = vector.shape_cast %111 : vector<8x8x4xf32> to vector<64x4xf32>
    %c15 = arith.constant 15 : index
    %c0_113 = arith.constant 0 : index
    %c0_114 = arith.constant 0 : index
    %113 = vector.load %arg4[%c15, %c0_113, %c0_114] : memref<25x4x8xf32, #tpu.memory_space<vmem>>, vector<1x4x8xf32>
    %114 = vector.shape_cast %113 : vector<1x4x8xf32> to vector<4x8xf32>
    %cst_115 = arith.constant dense<0.000000e+00> : vector<64x8xf32>
    %115 = tpu.matmul %112, %114, %cst_115 {dimension_numbers = #tpu.dot_dimension_numbers<[1], [0], [0], [1], [0, 0, 1, 1], [], []>} : vector<64x4xf32>, vector<4x8xf32>, vector<64x8xf32> -> vector<64x8xf32>
    %116 = arith.addf %110, %115 : vector<64x8xf32>
    %c3_116 = arith.constant 3 : index
    %c1_117 = arith.constant 1 : index
    %c0_118 = arith.constant 0 : index
    %117 = vector.load %arg8[%c3_116, %c1_117, %c0_118] : memref<12x12x4xf32, #tpu.memory_space<vmem>>, vector<8x8x4xf32>
    %118 = vector.shape_cast %117 : vector<8x8x4xf32> to vector<64x4xf32>
    %c16 = arith.constant 16 : index
    %c0_119 = arith.constant 0 : index
    %c0_120 = arith.constant 0 : index
    %119 = vector.load %arg4[%c16, %c0_119, %c0_120] : memref<25x4x8xf32, #tpu.memory_space<vmem>>, vector<1x4x8xf32>
    %120 = vector.shape_cast %119 : vector<1x4x8xf32> to vector<4x8xf32>
    %cst_121 = arith.constant dense<0.000000e+00> : vector<64x8xf32>
    %121 = tpu.matmul %118, %120, %cst_121 {dimension_numbers = #tpu.dot_dimension_numbers<[1], [0], [0], [1], [0, 0, 1, 1], [], []>} : vector<64x4xf32>, vector<4x8xf32>, vector<64x8xf32> -> vector<64x8xf32>
    %122 = arith.addf %116, %121 : vector<64x8xf32>
    %c3_122 = arith.constant 3 : index
    %c2_123 = arith.constant 2 : index
    %c0_124 = arith.constant 0 : index
    %123 = vector.load %arg8[%c3_122, %c2_123, %c0_124] : memref<12x12x4xf32, #tpu.memory_space<vmem>>, vector<8x8x4xf32>
    %124 = vector.shape_cast %123 : vector<8x8x4xf32> to vector<64x4xf32>
    %c17 = arith.constant 17 : index
    %c0_125 = arith.constant 0 : index
    %c0_126 = arith.constant 0 : index
    %125 = vector.load %arg4[%c17, %c0_125, %c0_126] : memref<25x4x8xf32, #tpu.memory_space<vmem>>, vector<1x4x8xf32>
    %126 = vector.shape_cast %125 : vector<1x4x8xf32> to vector<4x8xf32>
    %cst_127 = arith.constant dense<0.000000e+00> : vector<64x8xf32>
    %127 = tpu.matmul %124, %126, %cst_127 {dimension_numbers = #tpu.dot_dimension_numbers<[1], [0], [0], [1], [0, 0, 1, 1], [], []>} : vector<64x4xf32>, vector<4x8xf32>, vector<64x8xf32> -> vector<64x8xf32>
    %128 = arith.addf %122, %127 : vector<64x8xf32>
    %c3_128 = arith.constant 3 : index
    %c3_129 = arith.constant 3 : index
    %c0_130 = arith.constant 0 : index
    %129 = vector.load %arg8[%c3_128, %c3_129, %c0_130] : memref<12x12x4xf32, #tpu.memory_space<vmem>>, vector<8x8x4xf32>
    %130 = vector.shape_cast %129 : vector<8x8x4xf32> to vector<64x4xf32>
    %c18 = arith.constant 18 : index
    %c0_131 = arith.constant 0 : index
    %c0_132 = arith.constant 0 : index
    %131 = vector.load %arg4[%c18, %c0_131, %c0_132] : memref<25x4x8xf32, #tpu.memory_space<vmem>>, vector<1x4x8xf32>
    %132 = vector.shape_cast %131 : vector<1x4x8xf32> to vector<4x8xf32>
    %cst_133 = arith.constant dense<0.000000e+00> : vector<64x8xf32>
    %133 = tpu.matmul %130, %132, %cst_133 {dimension_numbers = #tpu.dot_dimension_numbers<[1], [0], [0], [1], [0, 0, 1, 1], [], []>} : vector<64x4xf32>, vector<4x8xf32>, vector<64x8xf32> -> vector<64x8xf32>
    %134 = arith.addf %128, %133 : vector<64x8xf32>
    %c3_134 = arith.constant 3 : index
    %c4_135 = arith.constant 4 : index
    %c0_136 = arith.constant 0 : index
    %135 = vector.load %arg8[%c3_134, %c4_135, %c0_136] : memref<12x12x4xf32, #tpu.memory_space<vmem>>, vector<8x8x4xf32>
    %136 = vector.shape_cast %135 : vector<8x8x4xf32> to vector<64x4xf32>
    %c19 = arith.constant 19 : index
    %c0_137 = arith.constant 0 : index
    %c0_138 = arith.constant 0 : index
    %137 = vector.load %arg4[%c19, %c0_137, %c0_138] : memref<25x4x8xf32, #tpu.memory_space<vmem>>, vector<1x4x8xf32>
    %138 = vector.shape_cast %137 : vector<1x4x8xf32> to vector<4x8xf32>
    %cst_139 = arith.constant dense<0.000000e+00> : vector<64x8xf32>
    %139 = tpu.matmul %136, %138, %cst_139 {dimension_numbers = #tpu.dot_dimension_numbers<[1], [0], [0], [1], [0, 0, 1, 1], [], []>} : vector<64x4xf32>, vector<4x8xf32>, vector<64x8xf32> -> vector<64x8xf32>
    %140 = arith.addf %134, %139 : vector<64x8xf32>
    %c4_140 = arith.constant 4 : index
    %c0_141 = arith.constant 0 : index
    %c0_142 = arith.constant 0 : index
    %141 = vector.load %arg8[%c4_140, %c0_141, %c0_142] : memref<12x12x4xf32, #tpu.memory_space<vmem>>, vector<8x8x4xf32>
    %142 = vector.shape_cast %141 : vector<8x8x4xf32> to vector<64x4xf32>
    %c20 = arith.constant 20 : index
    %c0_143 = arith.constant 0 : index
    %c0_144 = arith.constant 0 : index
    %143 = vector.load %arg4[%c20, %c0_143, %c0_144] : memref<25x4x8xf32, #tpu.memory_space<vmem>>, vector<1x4x8xf32>
    %144 = vector.shape_cast %143 : vector<1x4x8xf32> to vector<4x8xf32>
    %cst_145 = arith.constant dense<0.000000e+00> : vector<64x8xf32>
    %145 = tpu.matmul %142, %144, %cst_145 {dimension_numbers = #tpu.dot_dimension_numbers<[1], [0], [0], [1], [0, 0, 1, 1], [], []>} : vector<64x4xf32>, vector<4x8xf32>, vector<64x8xf32> -> vector<64x8xf32>
    %146 = arith.addf %140, %145 : vector<64x8xf32>
    %c4_146 = arith.constant 4 : index
    %c1_147 = arith.constant 1 : index
    %c0_148 = arith.constant 0 : index
    %147 = vector.load %arg8[%c4_146, %c1_147, %c0_148] : memref<12x12x4xf32, #tpu.memory_space<vmem>>, vector<8x8x4xf32>
    %148 = vector.shape_cast %147 : vector<8x8x4xf32> to vector<64x4xf32>
    %c21 = arith.constant 21 : index
    %c0_149 = arith.constant 0 : index
    %c0_150 = arith.constant 0 : index
    %149 = vector.load %arg4[%c21, %c0_149, %c0_150] : memref<25x4x8xf32, #tpu.memory_space<vmem>>, vector<1x4x8xf32>
    %150 = vector.shape_cast %149 : vector<1x4x8xf32> to vector<4x8xf32>
    %cst_151 = arith.constant dense<0.000000e+00> : vector<64x8xf32>
    %151 = tpu.matmul %148, %150, %cst_151 {dimension_numbers = #tpu.dot_dimension_numbers<[1], [0], [0], [1], [0, 0, 1, 1], [], []>} : vector<64x4xf32>, vector<4x8xf32>, vector<64x8xf32> -> vector<64x8xf32>
    %152 = arith.addf %146, %151 : vector<64x8xf32>
    %c4_152 = arith.constant 4 : index
    %c2_153 = arith.constant 2 : index
    %c0_154 = arith.constant 0 : index
    %153 = vector.load %arg8[%c4_152, %c2_153, %c0_154] : memref<12x12x4xf32, #tpu.memory_space<vmem>>, vector<8x8x4xf32>
    %154 = vector.shape_cast %153 : vector<8x8x4xf32> to vector<64x4xf32>
    %c22 = arith.constant 22 : index
    %c0_155 = arith.constant 0 : index
    %c0_156 = arith.constant 0 : index
    %155 = vector.load %arg4[%c22, %c0_155, %c0_156] : memref<25x4x8xf32, #tpu.memory_space<vmem>>, vector<1x4x8xf32>
    %156 = vector.shape_cast %155 : vector<1x4x8xf32> to vector<4x8xf32>
    %cst_157 = arith.constant dense<0.000000e+00> : vector<64x8xf32>
    %157 = tpu.matmul %154, %156, %cst_157 {dimension_numbers = #tpu.dot_dimension_numbers<[1], [0], [0], [1], [0, 0, 1, 1], [], []>} : vector<64x4xf32>, vector<4x8xf32>, vector<64x8xf32> -> vector<64x8xf32>
    %158 = arith.addf %152, %157 : vector<64x8xf32>
    %c4_158 = arith.constant 4 : index
    %c3_159 = arith.constant 3 : index
    %c0_160 = arith.constant 0 : index
    %159 = vector.load %arg8[%c4_158, %c3_159, %c0_160] : memref<12x12x4xf32, #tpu.memory_space<vmem>>, vector<8x8x4xf32>
    %160 = vector.shape_cast %159 : vector<8x8x4xf32> to vector<64x4xf32>
    %c23 = arith.constant 23 : index
    %c0_161 = arith.constant 0 : index
    %c0_162 = arith.constant 0 : index
    %161 = vector.load %arg4[%c23, %c0_161, %c0_162] : memref<25x4x8xf32, #tpu.memory_space<vmem>>, vector<1x4x8xf32>
    %162 = vector.shape_cast %161 : vector<1x4x8xf32> to vector<4x8xf32>
    %cst_163 = arith.constant dense<0.000000e+00> : vector<64x8xf32>
    %163 = tpu.matmul %160, %162, %cst_163 {dimension_numbers = #tpu.dot_dimension_numbers<[1], [0], [0], [1], [0, 0, 1, 1], [], []>} : vector<64x4xf32>, vector<4x8xf32>, vector<64x8xf32> -> vector<64x8xf32>
    %164 = arith.addf %158, %163 : vector<64x8xf32>
    %c4_164 = arith.constant 4 : index
    %c4_165 = arith.constant 4 : index
    %c0_166 = arith.constant 0 : index
    %165 = vector.load %arg8[%c4_164, %c4_165, %c0_166] : memref<12x12x4xf32, #tpu.memory_space<vmem>>, vector<8x8x4xf32>
    %166 = vector.shape_cast %165 : vector<8x8x4xf32> to vector<64x4xf32>
    %c24 = arith.constant 24 : index
    %c0_167 = arith.constant 0 : index
    %c0_168 = arith.constant 0 : index
    %167 = vector.load %arg4[%c24, %c0_167, %c0_168] : memref<25x4x8xf32, #tpu.memory_space<vmem>>, vector<1x4x8xf32>
    %168 = vector.shape_cast %167 : vector<1x4x8xf32> to vector<4x8xf32>
    %cst_169 = arith.constant dense<0.000000e+00> : vector<64x8xf32>
    %169 = tpu.matmul %166, %168, %cst_169 {dimension_numbers = #tpu.dot_dimension_numbers<[1], [0], [0], [1], [0, 0, 1, 1], [], []>} : vector<64x4xf32>, vector<4x8xf32>, vector<64x8xf32> -> vector<64x8xf32>
    %170 = arith.addf %164, %169 : vector<64x8xf32>
    %171 = vector.shape_cast %170 : vector<64x8xf32> to vector<8x8x8xf32>
    %c0_170 = arith.constant 0 : index
    %c0_171 = arith.constant 0 : index
    %c0_172 = arith.constant 0 : index
    %c0_173 = arith.constant 0 : index
    %172 = vector.load %arg6[%c0_170, %c0_171, %c0_172, %c0_173] : memref<1x8x8x8xf32, #tpu.memory_space<vmem>>, vector<1x8x8x8xf32>
    %173 = vector.shape_cast %172 : vector<1x8x8x8xf32> to vector<8x8x8xf32>
    %174 = vector.shape_cast %171 : vector<8x8x8xf32> to vector<1x8x8x8xf32>
    tpu.vector_store %arg6[%c0_170, %c0_171, %c0_172, %c0_173], %174 {strides = array<i32>} : memref<1x8x8x8xf32, #tpu.memory_space<vmem>>, vector<1x8x8x8xf32>,
    %cst_174 = arith.constant dense<0.000000e+00> : vector<8xf32>
    %175 = vector.multi_reduction <add>, %170, %cst_174 [0] : vector<64x8xf32> to vector<8xf32>
    %176 = vector.shape_cast %175 : vector<8xf32> to vector<1x8xf32>
    %177 = arith.mulf %170, %170 : vector<64x8xf32>
    %cst_175 = arith.constant dense<0.000000e+00> : vector<8xf32>
    %178 = vector.multi_reduction <add>, %177, %cst_175 [0] : vector<64x8xf32> to vector<8xf32>
    %179 = vector.shape_cast %178 : vector<8xf32> to vector<1x8xf32>
    %180 = tpu.concatenate %176, %179 in 0 : vector<1x8xf32>, vector<1x8xf32> -> vector<2x8xf32>
    %c0_176 = arith.constant 0 : index
    %c0_177 = arith.constant 0 : index
    %c0_178 = arith.constant 0 : index
    %181 = vector.load %arg7[%c0_176, %c0_177, %c0_178] : memref<1x2x8xf32, #tpu.memory_space<vmem>>, vector<1x2x8xf32>
    %182 = vector.shape_cast %181 : vector<1x2x8xf32> to vector<2x8xf32>
    %183 = vector.shape_cast %180 : vector<2x8xf32> to vector<1x2x8xf32>
    tpu.vector_store %arg7[%c0_176, %c0_177, %c0_178], %183 {strides = array<i32>} : memref<1x2x8xf32, #tpu.memory_space<vmem>>, vector<1x2x8xf32>,
    return
  }
  func.func @transform_0(%arg0: i32) -> (i32, i32, i32) {
    %c0_i32 = arith.constant 0 : i32
    %c0_i32_0 = arith.constant 0 : i32
    %c0_i32_1 = arith.constant 0 : i32
    %c0_i32_2 = arith.constant 0 : i32
    return %c0_i32, %c0_i32_0, %c0_i32_1 : i32, i32, i32
  }
  func.func @transform_1(%arg0: i32) -> (i32, i32, i32) {
    %c0_i32 = arith.constant 0 : i32
    %c0_i32_0 = arith.constant 0 : i32
    %c0_i32_1 = arith.constant 0 : i32
    %c0_i32_2 = arith.constant 0 : i32
    return %c0_i32, %c0_i32_0, %c0_i32_1 : i32, i32, i32
  }
  func.func @transform_2(%arg0: i32) -> (i32, i32, i32, i32) {
    %c0_i32 = arith.constant 0 : i32
    %c0_i32_0 = arith.constant 0 : i32
    %c0_i32_1 = arith.constant 0 : i32
    %c0_i32_2 = arith.constant 0 : i32
    return %arg0, %c0_i32, %c0_i32_0, %c0_i32_1 : i32, i32, i32, i32
  }
  func.func @transform_3(%arg0: i32) -> (i32, i32, i32) {
    %c0_i32 = arith.constant 0 : i32
    %c0_i32_0 = arith.constant 0 : i32
    %c0_i32_1 = arith.constant 0 : i32
    %c0_i32_2 = arith.constant 0 : i32
    return %c0_i32, %c0_i32_0, %c0_i32_1 : i32, i32, i32
  }
  func.func @transform_4(%arg0: i32) -> (i32, i32) {
    %c0_i32 = arith.constant 0 : i32
    %c0_i32_0 = arith.constant 0 : i32
    %c0_i32_1 = arith.constant 0 : i32
    return %c0_i32, %c0_i32_0 : i32, i32
  }
  func.func @transform_5(%arg0: i32) -> (i32, i32, i32, i32) {
    %c0_i32 = arith.constant 0 : i32
    %c0_i32_0 = arith.constant 0 : i32
    %c0_i32_1 = arith.constant 0 : i32
    %c0_i32_2 = arith.constant 0 : i32
    return %arg0, %c0_i32, %c0_i32_0, %c0_i32_1 : i32, i32, i32, i32
  }
  func.func @transform_6(%arg0: i32) -> (i32, i32, i32) {
    %c0_i32 = arith.constant 0 : i32
    %c0_i32_0 = arith.constant 0 : i32
    %c0_i32_1 = arith.constant 0 : i32
    return %arg0, %c0_i32, %c0_i32_0 : i32, i32, i32
  }
}

module attributes {stable_mosaic.version = 11 : i64} {
  func.func @_bn_swish_residual_kernel(%arg0: i32, %arg1: memref<1x1x8xf32, #tpu.memory_space<vmem>>, %arg2: memref<1x1x8xf32, #tpu.memory_space<vmem>>, %arg3: memref<1x1x8xf32, #tpu.memory_space<vmem>>, %arg4: memref<1x1x8xf32, #tpu.memory_space<vmem>>, %arg5: memref<1x8x8x8xf32, #tpu.memory_space<vmem>>, %arg6: memref<1x8x8x8xf32, #tpu.memory_space<vmem>>, %arg7: memref<1x8x8x8xf32, #tpu.memory_space<vmem>>) attributes {dimension_semantics = [#tpu.dimension_semantics<parallel>], iteration_bounds = array<i64: 2>, scalar_prefetch = 0 : i64, scratch_operands = 0 : i64, tpu.core_type = #tpu.core_type<tc>, window_params = [{pipeline_mode = #tpu.pipeline_mode<synchronous>, transform_indices = @transform_0, window_bounds = array<i64: 1, 1, 8>}, {pipeline_mode = #tpu.pipeline_mode<synchronous>, transform_indices = @transform_1, window_bounds = array<i64: 1, 1, 8>}, {pipeline_mode = #tpu.pipeline_mode<synchronous>, transform_indices = @transform_2, window_bounds = array<i64: 1, 1, 8>}, {pipeline_mode = #tpu.pipeline_mode<synchronous>, transform_indices = @transform_3, window_bounds = array<i64: 1, 1, 8>}, {transform_indices = @transform_4, window_bounds = array<i64: 1, 8, 8, 8>}, {transform_indices = @transform_5, window_bounds = array<i64: 1, 8, 8, 8>}, {transform_indices = @transform_6, window_bounds = array<i64: 1, 8, 8, 8>}]} {
    %c0 = arith.constant 0 : index
    %c0_0 = arith.constant 0 : index
    %c0_1 = arith.constant 0 : index
    %c0_2 = arith.constant 0 : index
    %0 = vector.load %arg5[%c0, %c0_0, %c0_1, %c0_2] : memref<1x8x8x8xf32, #tpu.memory_space<vmem>>, vector<1x8x8x8xf32>
    %1 = vector.shape_cast %0 : vector<1x8x8x8xf32> to vector<8x8x8xf32>
    %c0_3 = arith.constant 0 : index
    %c0_4 = arith.constant 0 : index
    %c0_5 = arith.constant 0 : index
    %2 = vector.load %arg1[%c0_3, %c0_4, %c0_5] : memref<1x1x8xf32, #tpu.memory_space<vmem>>, vector<1x1x8xf32>
    %3 = vector.broadcast %2 : vector<1x1x8xf32> to vector<8x8x8xf32>
    %4 = arith.mulf %1, %3 : vector<8x8x8xf32>
    %c0_6 = arith.constant 0 : index
    %c0_7 = arith.constant 0 : index
    %c0_8 = arith.constant 0 : index
    %5 = vector.load %arg2[%c0_6, %c0_7, %c0_8] : memref<1x1x8xf32, #tpu.memory_space<vmem>>, vector<1x1x8xf32>
    %6 = vector.broadcast %5 : vector<1x1x8xf32> to vector<8x8x8xf32>
    %7 = arith.addf %4, %6 : vector<8x8x8xf32>
    %8 = arith.negf %7 : vector<8x8x8xf32>
    %9 = math.exp %8 : vector<8x8x8xf32>
    %cst = arith.constant 1.000000e+00 : f32
    %10 = vector.broadcast %cst : f32 to vector<8x8x8xf32>
    %11 = arith.addf %10, %9 : vector<8x8x8xf32>
    %12 = arith.divf %10, %11 : vector<8x8x8xf32>
    %13 = arith.mulf %7, %12 : vector<8x8x8xf32>
    %c0_9 = arith.constant 0 : index
    %c0_10 = arith.constant 0 : index
    %c0_11 = arith.constant 0 : index
    %c0_12 = arith.constant 0 : index
    %14 = vector.load %arg6[%c0_9, %c0_10, %c0_11, %c0_12] : memref<1x8x8x8xf32, #tpu.memory_space<vmem>>, vector<1x8x8x8xf32>
    %15 = vector.shape_cast %14 : vector<1x8x8x8xf32> to vector<8x8x8xf32>
    %c0_13 = arith.constant 0 : index
    %c0_14 = arith.constant 0 : index
    %c0_15 = arith.constant 0 : index
    %16 = vector.load %arg3[%c0_13, %c0_14, %c0_15] : memref<1x1x8xf32, #tpu.memory_space<vmem>>, vector<1x1x8xf32>
    %17 = vector.broadcast %16 : vector<1x1x8xf32> to vector<8x8x8xf32>
    %18 = arith.mulf %15, %17 : vector<8x8x8xf32>
    %c0_16 = arith.constant 0 : index
    %c0_17 = arith.constant 0 : index
    %c0_18 = arith.constant 0 : index
    %19 = vector.load %arg4[%c0_16, %c0_17, %c0_18] : memref<1x1x8xf32, #tpu.memory_space<vmem>>, vector<1x1x8xf32>
    %20 = vector.broadcast %19 : vector<1x1x8xf32> to vector<8x8x8xf32>
    %21 = arith.addf %18, %20 : vector<8x8x8xf32>
    %22 = arith.negf %21 : vector<8x8x8xf32>
    %23 = math.exp %22 : vector<8x8x8xf32>
    %cst_19 = arith.constant 1.000000e+00 : f32
    %24 = vector.broadcast %cst_19 : f32 to vector<8x8x8xf32>
    %25 = arith.addf %24, %23 : vector<8x8x8xf32>
    %26 = arith.divf %24, %25 : vector<8x8x8xf32>
    %27 = arith.mulf %21, %26 : vector<8x8x8xf32>
    %cst_20 = arith.constant 1.000000e-01 : f32
    %28 = vector.broadcast %cst_20 : f32 to vector<8x8x8xf32>
    %29 = arith.mulf %28, %27 : vector<8x8x8xf32>
    %30 = arith.addf %13, %29 : vector<8x8x8xf32>
    %c0_21 = arith.constant 0 : index
    %c0_22 = arith.constant 0 : index
    %c0_23 = arith.constant 0 : index
    %c0_24 = arith.constant 0 : index
    %31 = vector.load %arg7[%c0_21, %c0_22, %c0_23, %c0_24] : memref<1x8x8x8xf32, #tpu.memory_space<vmem>>, vector<1x8x8x8xf32>
    %32 = vector.shape_cast %31 : vector<1x8x8x8xf32> to vector<8x8x8xf32>
    %33 = vector.shape_cast %30 : vector<8x8x8xf32> to vector<1x8x8x8xf32>
    tpu.vector_store %arg7[%c0_21, %c0_22, %c0_23, %c0_24], %33 {strides = array<i32>} : memref<1x8x8x8xf32, #tpu.memory_space<vmem>>, vector<1x8x8x8xf32>,
    return
  }
  func.func @transform_0(%arg0: i32) -> (i32, i32, i32) {
    %c0_i32 = arith.constant 0 : i32
    %c0_i32_0 = arith.constant 0 : i32
    %c0_i32_1 = arith.constant 0 : i32
    %c0_i32_2 = arith.constant 0 : i32
    return %c0_i32, %c0_i32_0, %c0_i32_1 : i32, i32, i32
  }
  func.func @transform_1(%arg0: i32) -> (i32, i32, i32) {
    %c0_i32 = arith.constant 0 : i32
    %c0_i32_0 = arith.constant 0 : i32
    %c0_i32_1 = arith.constant 0 : i32
    %c0_i32_2 = arith.constant 0 : i32
    return %c0_i32, %c0_i32_0, %c0_i32_1 : i32, i32, i32
  }
  func.func @transform_2(%arg0: i32) -> (i32, i32, i32) {
    %c0_i32 = arith.constant 0 : i32
    %c0_i32_0 = arith.constant 0 : i32
    %c0_i32_1 = arith.constant 0 : i32
    %c0_i32_2 = arith.constant 0 : i32
    return %c0_i32, %c0_i32_0, %c0_i32_1 : i32, i32, i32
  }
  func.func @transform_3(%arg0: i32) -> (i32, i32, i32) {
    %c0_i32 = arith.constant 0 : i32
    %c0_i32_0 = arith.constant 0 : i32
    %c0_i32_1 = arith.constant 0 : i32
    %c0_i32_2 = arith.constant 0 : i32
    return %c0_i32, %c0_i32_0, %c0_i32_1 : i32, i32, i32
  }
  func.func @transform_4(%arg0: i32) -> (i32, i32, i32, i32) {
    %c0_i32 = arith.constant 0 : i32
    %c0_i32_0 = arith.constant 0 : i32
    %c0_i32_1 = arith.constant 0 : i32
    %c0_i32_2 = arith.constant 0 : i32
    return %arg0, %c0_i32, %c0_i32_0, %c0_i32_1 : i32, i32, i32, i32
  }
  func.func @transform_5(%arg0: i32) -> (i32, i32, i32, i32) {
    %c0_i32 = arith.constant 0 : i32
    %c0_i32_0 = arith.constant 0 : i32
    %c0_i32_1 = arith.constant 0 : i32
    %c0_i32_2 = arith.constant 0 : i32
    return %arg0, %c0_i32, %c0_i32_0, %c0_i32_1 : i32, i32, i32, i32
  }
  func.func @transform_6(%arg0: i32) -> (i32, i32, i32, i32) {
    %c0_i32 = arith.constant 0 : i32
    %c0_i32_0 = arith.constant 0 : i32
    %c0_i32_1 = arith.constant 0 : i32
    %c0_i32_2 = arith.constant 0 : i32
    return %arg0, %c0_i32, %c0_i32_0, %c0_i32_1 : i32, i32, i32, i32
  }
}

</mosaic_0001>

<llo_original>
// kernel: conv_block_forward.7
$region0: #{conv_block_forward.7}
  #allocation0 [shape = 'u32[]', space=smem, size = 0x4, offset = 0x4, fixed_abs, tag = 'smem constant byte address 0x4 - core index']
  #allocation1 [shape = 'u32[72,128]{1,0:T(1,128)}', space=vmem, size = 0x9000, scoped, tag = 'internal scratch']
  #allocation2 [shape = 'f32[8,8,8]{2,1,0:T(8,128)}', space=vmem, size = 0x8000, scoped, tag = 'scratch operand']
  %s0 = inlined_call_operand.vmem [shape: f32[1,1,8], index: 0, kind: input, shape index: {}]
  %s1 = inlined_call_operand.vmem [shape: f32[1,1,8], index: 1, kind: input, shape index: {}]
  %s2 = inlined_call_operand.vmem [shape: f32[2,8,8,8], index: 2, kind: input, shape index: {}]
  %s3 = inlined_call_operand.vmem [shape: f32[1,8,4], index: 3, kind: input, shape index: {}]
  %s4 = inlined_call_operand.vmem [shape: f32[1,4], index: 4, kind: input, shape index: {}]
  %s5 = inlined_call_operand.vmem [shape: f32[2,8,8,4], index: 5, kind: output, shape index: {0}]
  %s6 = inlined_call_operand.vmem [shape: f32[2,2,4], index: 6, kind: output, shape index: {1}]
  %7 = xla_tuple %s5, %s6
  %s8 = sld [smem:[#allocation0]]
  $region61: #{conv_block_forward.7} parent=0
    _
  %s10 = ssub.s32 1, %s8
  %s11 = scalar_select 0, %s10, %s8
  loop: start=0, step=1, limit=4
  $region2: #{conv_block_forward.7} parent=0 // loop_pre_header
    _
  $region3: #{conv_block_forward.7} parent=0 // loop_header
    %s13 = sphi 0, %s17
    %p14 = scmp.ge.s32.totalorder %s13, 4
    %s21 = sphi 0, %s21
    %s23 = sphi 0, %s21
    %s24 = sphi 0, %s23
    %s38 = sphi 0, %s24
    %s42 = sphi 0, %s42
    %s44 = sphi 0, %s42
    %s45 = sphi 0, %s44
    %s59 = sphi 0, %s45
    %s65 = sphi 0, %s67
    %s68 = sphi 0, %s65
    %s69 = sphi 0, %s68
    %s85 = sphi 0, %s69
    %s89 = sphi 0, %s89
    %s91 = sphi 0, %s89
    %s92 = sphi 0, %s91
    %s106 = sphi 0, %s92
    %s110 = sphi 0, %s110
    %s112 = sphi 0, %s110
    %s113 = sphi 0, %s112
    %s127 = sphi 0, %s113
    %s133 = sphi 0, %s135
    %s136 = sphi 0, %s133
    %s137 = sphi 0, %s136
    %s153 = sphi 0, %s137
    %s159 = sphi 0, %s161
    %s162 = sphi 0, %s159
    %s163 = sphi 0, %s162
    %s179 = sphi 0, %s163
  $region4: #{conv_block_forward.7} parent=0 // loop_header_branch
    %16 = sbr.rel (%p14) target = $region8
  $region5: #{conv_block_forward.7} parent=0 // loop_body
    %s18 = ssub.s32 %s13, 1
    %s19 = ssub.s32 %s13, 2
    %s20 = sadd.s32 %s13, 1
    %s22 = sadd.s32 %s21, 1
    %p25 = scmp.eq.s32.totalorder %s13, 1
    %p26 = scmp.ne.s32.totalorder %s21, %s23
    %p27 = scmp.eq.s32.totalorder %s13, 0
    %p28 = por %p26, %p27
    %p29 = scmp.ne.s32.totalorder %s21, %s23
    %p30 = scmp.eq.s32.totalorder %s18, 1
    %p31 = por %p29, %p30
    %p32 = scmp.ne.s32.totalorder %s23, %s24
    %p33 = scmp.eq.s32.totalorder %s18, 0
    %p34 = por %p32, %p33
    %p35 = scmp.ne.s32.totalorder %s23, %s24
    %p36 = scmp.eq.s32.totalorder %s19, 1
    %p37 = por %p35, %p36
    %p39 = scmp.ne.s32.totalorder %s24, %s38
    %p40 = scmp.eq.s32.totalorder %s19, 0
    %p41 = por %p39, %p40
    %s43 = sadd.s32 %s42, 1
    %p46 = scmp.eq.s32.totalorder %s13, 1
    %p47 = scmp.ne.s32.totalorder %s42, %s44
    %p48 = scmp.eq.s32.totalorder %s13, 0
    %p49 = por %p47, %p48
    %p50 = scmp.ne.s32.totalorder %s42, %s44
    %p51 = scmp.eq.s32.totalorder %s18, 1
    %p52 = por %p50, %p51
    %p53 = scmp.ne.s32.totalorder %s44, %s45
    %p54 = scmp.eq.s32.totalorder %s18, 0
    %p55 = por %p53, %p54
    %p56 = scmp.ne.s32.totalorder %s44, %s45
    %p57 = scmp.eq.s32.totalorder %s19, 1
    %p58 = por %p56, %p57
    %p60 = scmp.ne.s32.totalorder %s45, %s59
    %p61 = scmp.eq.s32.totalorder %s19, 0
    %p62 = por %p60, %p61
    %s63 = ssub.s32 %s13, %s20
    %p64 = scmp.eq.s32.totalorder %s63, 0
    %s66 = sadd.s32 %s65, 1
    %s67 = scalar_select %p64, %s65, %s66
    %p70 = pneg %p64
    %p71 = scmp.eq.s32.totalorder %s13, 1
    %p72 = por %p70, %p71
    %p73 = scmp.ne.s32.totalorder %s65, %s68
    %p74 = scmp.eq.s32.totalorder %s13, 0
    %p75 = por %p73, %p74
    %p76 = scmp.ne.s32.totalorder %s65, %s68
    %p77 = scmp.eq.s32.totalorder %s18, 1
    %p78 = por %p76, %p77
    %p79 = scmp.ne.s32.totalorder %s68, %s69
    %p80 = scmp.eq.s32.totalorder %s18, 0
    %p81 = por %p79, %p80
    %p82 = scmp.ne.s32.totalorder %s68, %s69
    %p83 = scmp.eq.s32.totalorder %s19, 1
    %p84 = por %p82, %p83
    %p86 = scmp.ne.s32.totalorder %s69, %s85
    %p87 = scmp.eq.s32.totalorder %s19, 0
    %p88 = por %p86, %p87
    %s90 = sadd.s32 %s89, 1
    %p93 = scmp.eq.s32.totalorder %s13, 1
    %p94 = scmp.ne.s32.totalorder %s89, %s91
    %p95 = scmp.eq.s32.totalorder %s13, 0
    %p96 = por %p94, %p95
    %p97 = scmp.ne.s32.totalorder %s89, %s91
    %p98 = scmp.eq.s32.totalorder %s18, 1
    %p99 = por %p97, %p98
    %p100 = scmp.ne.s32.totalorder %s91, %s92
    %p101 = scmp.eq.s32.totalorder %s18, 0
    %p102 = por %p100, %p101
    %p103 = scmp.ne.s32.totalorder %s91, %s92
    %p104 = scmp.eq.s32.totalorder %s19, 1
    %p105 = por %p103, %p104
    %p107 = scmp.ne.s32.totalorder %s92, %s106
    %p108 = scmp.eq.s32.totalorder %s19, 0
    %p109 = por %p107, %p108
    %s111 = sadd.s32 %s110, 1
    %p114 = scmp.eq.s32.totalorder %s13, 1
    %p115 = scmp.ne.s32.totalorder %s110, %s112
    %p116 = scmp.eq.s32.totalorder %s13, 0
    %p117 = por %p115, %p116
    %p118 = scmp.ne.s32.totalorder %s110, %s112
    %p119 = scmp.eq.s32.totalorder %s18, 1
    %p120 = por %p118, %p119
    %p121 = scmp.ne.s32.totalorder %s112, %s113
    %p122 = scmp.eq.s32.totalorder %s18, 0
    %p123 = por %p121, %p122
    %p124 = scmp.ne.s32.totalorder %s112, %s113
    %p125 = scmp.eq.s32.totalorder %s19, 1
    %p126 = por %p124, %p125
    %p128 = scmp.ne.s32.totalorder %s113, %s127
    %p129 = scmp.eq.s32.totalorder %s19, 0
    %p130 = por %p128, %p129
    %s131 = ssub.s32 %s13, %s20
    %p132 = scmp.eq.s32.totalorder %s131, 0
    %s134 = sadd.s32 %s133, 1
    %s135 = scalar_select %p132, %s133, %s134
    %p138 = pneg %p132
    %p139 = scmp.eq.s32.totalorder %s13, 1
    %p140 = por %p138, %p139
    %p141 = scmp.ne.s32.totalorder %s133, %s136
    %p142 = scmp.eq.s32.totalorder %s13, 0
    %p143 = por %p141, %p142
    %p144 = scmp.ne.s32.totalorder %s133, %s136
    %p145 = scmp.eq.s32.totalorder %s18, 1
    %p146 = por %p144, %p145
    %p147 = scmp.ne.s32.totalorder %s136, %s137
    %p148 = scmp.eq.s32.totalorder %s18, 0
    %p149 = por %p147, %p148
    %p150 = scmp.ne.s32.totalorder %s136, %s137
    %p151 = scmp.eq.s32.totalorder %s19, 1
    %p152 = por %p150, %p151
    %p154 = scmp.ne.s32.totalorder %s137, %s153
    %p155 = scmp.eq.s32.totalorder %s19, 0
    %p156 = por %p154, %p155
    %s157 = ssub.s32 %s13, %s20
    %p158 = scmp.eq.s32.totalorder %s157, 0
    %s160 = sadd.s32 %s159, 1
    %s161 = scalar_select %p158, %s159, %s160
    %p164 = pneg %p158
    %p165 = scmp.eq.s32.totalorder %s13, 1
    %p166 = por %p164, %p165
    %p167 = scmp.ne.s32.totalorder %s159, %s162
    %p168 = scmp.eq.s32.totalorder %s13, 0
    %p169 = por %p167, %p168
    %p170 = scmp.ne.s32.totalorder %s159, %s162
    %p171 = scmp.eq.s32.totalorder %s18, 1
    %p172 = por %p170, %p171
    %p173 = scmp.ne.s32.totalorder %s162, %s163
    %p174 = scmp.eq.s32.totalorder %s18, 0
    %p175 = por %p173, %p174
    %p176 = scmp.ne.s32.totalorder %s162, %s163
    %p177 = scmp.eq.s32.totalorder %s19, 1
    %p178 = por %p176, %p177
    %p180 = scmp.ne.s32.totalorder %s163, %s179
    %p181 = scmp.eq.s32.totalorder %s19, 0
    %p182 = por %p180, %p181
    %p183 = scmp.le.s32.totalorder 1, %s13
    %p184 = scmp.lt.s32.totalorder %s13, 3
    %p185 = pnand %p183, %p184
    %p186 = pneg %p185
    // Predicated region
    $region9: #{conv_block_forward.7} parent=5 // pred_check
      _
    $region10: #{conv_block_forward.7} parent=5 // pred_check_branch
      %188 = sbr.rel (%p185) target = $region12
    $region11: #{conv_block_forward.7} parent=5 // pred_region
      %s189 = ssub.s32 %s13, 1
      // Predicated region
      $region13: #{conv_block_forward.7} parent=11 // pred_check
        %p190 = pneg %p34
      $region14: #{conv_block_forward.7} parent=11 // pred_check_branch
        %192 = sbr.rel (%p190) target = $region16
      $region15: #{conv_block_forward.7} parent=11 // pred_region
        _
      $region16: #{conv_block_forward.7} parent=11 // pred_fallthru
        _
      // Predicated region
      $region17: #{conv_block_forward.7} parent=11 // pred_check
        %p193 = pneg %p55
      $region18: #{conv_block_forward.7} parent=11 // pred_check_branch
        %195 = sbr.rel (%p193) target = $region20
      $region19: #{conv_block_forward.7} parent=11 // pred_region
        _
      $region20: #{conv_block_forward.7} parent=11 // pred_fallthru
        _
      // Predicated region
      $region21: #{conv_block_forward.7} parent=11 // pred_check
        %p196 = pneg %p102
      $region22: #{conv_block_forward.7} parent=11 // pred_check_branch
        %198 = sbr.rel (%p196) target = $region24
      $region23: #{conv_block_forward.7} parent=11 // pred_region
        _
      $region24: #{conv_block_forward.7} parent=11 // pred_fallthru
        _
      // Predicated region
      $region25: #{conv_block_forward.7} parent=11 // pred_check
        %p199 = pneg %p123
      $region26: #{conv_block_forward.7} parent=11 // pred_check_branch
        %201 = sbr.rel (%p199) target = $region28
      $region27: #{conv_block_forward.7} parent=11 // pred_region
        _
      $region28: #{conv_block_forward.7} parent=11 // pred_fallthru
        _
    $region12: #{conv_block_forward.7} parent=5 // pred_fallthru
      _
    %p202 = scmp.lt.s32.totalorder %s13, 2
    // Predicated region
    $region29: #{conv_block_forward.7} parent=5 // pred_check
      %p203 = pneg %p202
    $region30: #{conv_block_forward.7} parent=5 // pred_check_branch
      %205 = sbr.rel (%p203) target = $region32
    $region31: #{conv_block_forward.7} parent=5 // pred_region
      // Predicated region
      $region33: #{conv_block_forward.7} parent=31 // pred_check
        %p206 = pneg %p75
      $region34: #{conv_block_forward.7} parent=31 // pred_check_branch
        %208 = sbr.rel (%p206) target = $region36
      $region35: #{conv_block_forward.7} parent=31 // pred_region
        %p209 = scmp.lt.s32.totalorder %s13, 1
        %s210 = scalar_select %p209, %s13, 1
        %s211 = smul.addr %s210, 8
        %s212 = smul.addr %s211, 8
        %s213 = scalar_lea.vmem %s2, %s212
      $region36: #{conv_block_forward.7} parent=31 // pred_fallthru
        _
    $region32: #{conv_block_forward.7} parent=5 // pred_fallthru
      _
    %p214 = scmp.le.s32.totalorder 1, %s13
    %p215 = scmp.lt.s32.totalorder %s13, 3
    %p216 = pnand %p214, %p215
    %p217 = pneg %p216
    // Predicated region
    $region37: #{conv_block_forward.7} parent=5 // pred_check
      _
    $region38: #{conv_block_forward.7} parent=5 // pred_check_branch
      %219 = sbr.rel (%p216) target = $region40
    $region39: #{conv_block_forward.7} parent=5 // pred_region
      %s220 = ssub.s32 %s13, 1
      %p221 = pneg %p34
      %p222 = pneg %p31
      %p223 = pneg %p55
      %p224 = pneg %p52
      %p225 = scmp.lt.s32.totalorder %s18, 1
      %s226 = scalar_select %p225, %s18, 1
      %s227 = smul.addr %s226, 8
      %s228 = smul.addr %s227, 8
      %s229 = scalar_lea.vmem %s2, %s228
      %p230 = pneg %p81
      %p231 = pneg %p78
      %p232 = pneg %p102
      %p233 = pneg %p99
      %p234 = pneg %p123
      %p235 = pneg %p120
      %p236 = pneg %p149
      %p237 = pneg %p146
      %p238 = scmp.lt.s32.totalorder %s18, 1
      %s239 = scalar_select %p238, %s18, 1
      %s240 = smul.addr %s239, 8
      %s241 = smul.addr %s240, 8
      %s242 = scalar_lea.vmem %s5, %s241
      %p243 = pneg %p175
      %p244 = pneg %p172
      %p245 = scmp.lt.s32.totalorder %s18, 1
      %s246 = scalar_select %p245, %s18, 1
      %s247 = smul.addr %s246, 2
      %s248 = scalar_lea.vmem %s6, %s247
      %p249 = scmp.lt.s32.totalorder %s18, 1
      %s250 = scalar_select %p249, %s18, 1
      %s251 = smul.addr %s250, 8
      %s252 = smul.addr %s251, 8
      %s253 = scalar_lea.vmem %s2, %s252
      %p254 = scmp.lt.s32.totalorder %s18, 1
      %s255 = scalar_select %p254, %s18, 1
      %s256 = smul.addr %s255, 8
      %s257 = smul.addr %s256, 8
      %s258 = scalar_lea.vmem %s5, %s257
      %p259 = scmp.lt.s32.totalorder %s18, 1
      %s260 = scalar_select %p259, %s18, 1
      %s261 = smul.addr %s260, 2
      %s262 = scalar_lea.vmem %s6, %s261
      %v263 = vld [vmem:[%s253] sm:$0xff]
      %v264 = vld [vmem:[%s253 + $0x8] sm:$0xff]
      %v265 = vld [vmem:[%s253 + $0x10] sm:$0xff]
      %v266 = vld [vmem:[%s253 + $0x18] sm:$0xff]
      %v267 = vld [vmem:[%s253 + $0x20] sm:$0xff]
      %v268 = vld [vmem:[%s253 + $0x28] sm:$0xff]
      %v269 = vld [vmem:[%s253 + $0x30] sm:$0xff]
      %v270 = vld [vmem:[%s253 + $0x38] sm:$0xff]
      %v271 = vld [vmem:[%s0] sm:$0x1]
      %v273 = vperm.slane %v271, 0
      %v275 = vmul.f32 %v263, %v273
      %v276 = vmul.f32 %v264, %v273
      %v277 = vmul.f32 %v265, %v273
      %v278 = vmul.f32 %v266, %v273
      %v279 = vmul.f32 %v267, %v273
      %v280 = vmul.f32 %v268, %v273
      %v281 = vmul.f32 %v269, %v273
      %v282 = vmul.f32 %v270, %v273
      %v283 = vld [vmem:[%s1] sm:$0x1]
      %v285 = vperm.slane %v283, 0
      %v287 = vadd.f32 %v275, %v285
      %v288 = vadd.f32 %v276, %v285
      %v289 = vadd.f32 %v277, %v285
      %v290 = vadd.f32 %v278, %v285
      %v291 = vadd.f32 %v279, %v285
      %v292 = vadd.f32 %v280, %v285
      %v293 = vadd.f32 %v281, %v285
      %v294 = vadd.f32 %v282, %v285
      %v295 = vxor.u32 %v287, 2147483648
      %v296 = vxor.u32 %v288, 2147483648
      %v297 = vxor.u32 %v289, 2147483648
      %v298 = vxor.u32 %v290, 2147483648
      %v299 = vxor.u32 %v291, 2147483648
      %v300 = vxor.u32 %v292, 2147483648
      %v301 = vxor.u32 %v293, 2147483648
      %v302 = vxor.u32 %v294, 2147483648
      %v303 = vmul.f32 %v295, 1.442695
      %v304 = vpow.pop %v303
      %v305 = vmul.f32 %v296, 1.442695
      %v306 = vpow.pop %v305
      %v307 = vmul.f32 %v297, 1.442695
      %v308 = vpow.pop %v307
      %v309 = vmul.f32 %v298, 1.442695
      %v310 = vpow.pop %v309
      %v311 = vmul.f32 %v299, 1.442695
      %v312 = vpow.pop %v311
      %v313 = vmul.f32 %v300, 1.442695
      %v314 = vpow.pop %v313
      %v315 = vmul.f32 %v301, 1.442695
      %v316 = vpow.pop %v315
      %v317 = vmul.f32 %v302, 1.442695
      %v318 = vpow.pop %v317
      %v319 = vadd.f32 %v304, 1.0
      %v320 = vadd.f32 %v306, 1.0
      %v321 = vadd.f32 %v308, 1.0
      %v322 = vadd.f32 %v310, 1.0
      %v323 = vadd.f32 %v312, 1.0
      %v324 = vadd.f32 %v314, 1.0
      %v325 = vadd.f32 %v316, 1.0
      %v326 = vadd.f32 %v318, 1.0
      %v327 = vrcp.pop %v319
      %v328 = vmul.f32 %v319, %v327
      %v329 = vsub.f32 1.0, %v328
      %v330 = vmul.f32 %v327, %v329
      %v331 = vadd.f32 %v327, %v330
      %vm332 = vweird.f32 %v319
      %vm333 = vweird.f32 %v327
      %vm334 = vmor %vm332, %vm333
      %v335 = vsel %vm334, %v327, %v331
      %v336 = vand.u32 2147483647, %v319
      %vm337 = vcmp.eq.f32.partialorder %v336, 8.507059e+37
      %v338 = vand.u32 %v319, 2147483648
      %v339 = vor.u32 1.1754944e-38, %v338
      %v340 = vsel %vm337, %v339, %v335
      %v341 = vmul.f32 1.0, %v340
      %v342 = vrcp.pop %v320
      %v343 = vmul.f32 %v320, %v342
      %v344 = vsub.f32 1.0, %v343
      %v345 = vmul.f32 %v342, %v344
      %v346 = vadd.f32 %v342, %v345
      %vm347 = vweird.f32 %v320
      %vm348 = vweird.f32 %v342
      %vm349 = vmor %vm347, %vm348
      %v350 = vsel %vm349, %v342, %v346
      %v351 = vand.u32 2147483647, %v320
      %vm352 = vcmp.eq.f32.partialorder %v351, 8.507059e+37
      %v353 = vand.u32 %v320, 2147483648
      %v354 = vor.u32 1.1754944e-38, %v353
      %v355 = vsel %vm352, %v354, %v350
      %v356 = vmul.f32 1.0, %v355
      %v357 = vrcp.pop %v321
      %v358 = vmul.f32 %v321, %v357
      %v359 = vsub.f32 1.0, %v358
      %v360 = vmul.f32 %v357, %v359
      %v361 = vadd.f32 %v357, %v360
      %vm362 = vweird.f32 %v321
      %vm363 = vweird.f32 %v357
      %vm364 = vmor %vm362, %vm363
      %v365 = vsel %vm364, %v357, %v361
      %v366 = vand.u32 2147483647, %v321
      %vm367 = vcmp.eq.f32.partialorder %v366, 8.507059e+37
      %v368 = vand.u32 %v321, 2147483648
      %v369 = vor.u32 1.1754944e-38, %v368
      %v370 = vsel %vm367, %v369, %v365
      %v371 = vmul.f32 1.0, %v370
      %v372 = vrcp.pop %v322
      %v373 = vmul.f32 %v322, %v372
      %v374 = vsub.f32 1.0, %v373
      %v375 = vmul.f32 %v372, %v374
      %v376 = vadd.f32 %v372, %v375
      %vm377 = vweird.f32 %v322
      %vm378 = vweird.f32 %v372
      %vm379 = vmor %vm377, %vm378
      %v380 = vsel %vm379, %v372, %v376
      %v381 = vand.u32 2147483647, %v322
      %vm382 = vcmp.eq.f32.partialorder %v381, 8.507059e+37
      %v383 = vand.u32 %v322, 2147483648
      %v384 = vor.u32 1.1754944e-38, %v383
      %v385 = vsel %vm382, %v384, %v380
      %v386 = vmul.f32 1.0, %v385
      %v387 = vrcp.pop %v323
      %v388 = vmul.f32 %v323, %v387
      %v389 = vsub.f32 1.0, %v388
      %v390 = vmul.f32 %v387, %v389
      %v391 = vadd.f32 %v387, %v390
      %vm392 = vweird.f32 %v323
      %vm393 = vweird.f32 %v387
      %vm394 = vmor %vm392, %vm393
      %v395 = vsel %vm394, %v387, %v391
      %v396 = vand.u32 2147483647, %v323
      %vm397 = vcmp.eq.f32.partialorder %v396, 8.507059e+37
      %v398 = vand.u32 %v323, 2147483648
      %v399 = vor.u32 1.1754944e-38, %v398
      %v400 = vsel %vm397, %v399, %v395
      %v401 = vmul.f32 1.0, %v400
      %v402 = vrcp.pop %v324
      %v403 = vmul.f32 %v324, %v402
      %v404 = vsub.f32 1.0, %v403
      %v405 = vmul.f32 %v402, %v404
      %v406 = vadd.f32 %v402, %v405
      %vm407 = vweird.f32 %v324
      %vm408 = vweird.f32 %v402
      %vm409 = vmor %vm407, %vm408
      %v410 = vsel %vm409, %v402, %v406
      %v411 = vand.u32 2147483647, %v324
      %vm412 = vcmp.eq.f32.partialorder %v411, 8.507059e+37
      %v413 = vand.u32 %v324, 2147483648
      %v414 = vor.u32 1.1754944e-38, %v413
      %v415 = vsel %vm412, %v414, %v410
      %v416 = vmul.f32 1.0, %v415
      %v417 = vrcp.pop %v325
      %v418 = vmul.f32 %v325, %v417
      %v419 = vsub.f32 1.0, %v418
      %v420 = vmul.f32 %v417, %v419
      %v421 = vadd.f32 %v417, %v420
      %vm422 = vweird.f32 %v325
      %vm423 = vweird.f32 %v417
      %vm424 = vmor %vm422, %vm423
      %v425 = vsel %vm424, %v417, %v421
      %v426 = vand.u32 2147483647, %v325
      %vm427 = vcmp.eq.f32.partialorder %v426, 8.507059e+37
      %v428 = vand.u32 %v325, 2147483648
      %v429 = vor.u32 1.1754944e-38, %v428
      %v430 = vsel %vm427, %v429, %v425
      %v431 = vmul.f32 1.0, %v430
      %v432 = vrcp.pop %v326
      %v433 = vmul.f32 %v326, %v432
      %v434 = vsub.f32 1.0, %v433
      %v435 = vmul.f32 %v432, %v434
      %v436 = vadd.f32 %v432, %v435
      %vm437 = vweird.f32 %v326
      %vm438 = vweird.f32 %v432
      %vm439 = vmor %vm437, %vm438
      %v440 = vsel %vm439, %v432, %v436
      %v441 = vand.u32 2147483647, %v326
      %vm442 = vcmp.eq.f32.partialorder %v441, 8.507059e+37
      %v443 = vand.u32 %v326, 2147483648
      %v444 = vor.u32 1.1754944e-38, %v443
      %v445 = vsel %vm442, %v444, %v440
      %v446 = vmul.f32 1.0, %v445
      %v447 = vmul.f32 %v287, %v341
      %v448 = vmul.f32 %v288, %v356
      %v449 = vmul.f32 %v289, %v371
      %v450 = vmul.f32 %v290, %v386
      %v451 = vmul.f32 %v291, %v401
      %v452 = vmul.f32 %v292, %v416
      %v453 = vmul.f32 %v293, %v431
      %v454 = vmul.f32 %v294, %v446
      %vm455 = vcmask 64512
      %456 = vst.msk [vmem:[#allocation2] sm:$0xff] %vm455, %v447
      %457 = vst.msk [vmem:[#allocation2 + $0x8] sm:$0xff] %vm455, %v448
      %458 = vst.msk [vmem:[#allocation2 + $0x10] sm:$0xff] %vm455, %v449
      %459 = vst.msk [vmem:[#allocation2 + $0x18] sm:$0xff] %vm455, %v450
      %460 = vst.msk [vmem:[#allocation2 + $0x20] sm:$0xff] %vm455, %v451
      %461 = vst.msk [vmem:[#allocation2 + $0x28] sm:$0xff] %vm455, %v452
      %462 = vst.msk [vmem:[#allocation2 + $0x30] sm:$0xff] %vm455, %v453
      %463 = vst.msk [vmem:[#allocation2 + $0x38] sm:$0xff] %vm455, %v454
      %v464 = vld [vmem:[%s4] sm:$0x1]
      %v466 = vperm.slane %v464, 0
      %v468 = vadd.f32 %v466, 0.0
      %v469 = vld [vmem:[#allocation2] sm:$0xff]
      %v470 = vld [vmem:[#allocation2 + $0x8] sm:$0xff]
      %v471 = vld [vmem:[#allocation2 + $0x10] sm:$0xff]
      %v472 = vld [vmem:[#allocation2 + $0x18] sm:$0xff]
      %v473 = vld [vmem:[#allocation2 + $0x20] sm:$0xff]
      %v474 = vld [vmem:[#allocation2 + $0x28] sm:$0xff]
      %v475 = vld [vmem:[#allocation2 + $0x30] sm:$0xff]
      %v476 = vld [vmem:[#allocation2 + $0x38] sm:$0xff]
      %v477 = vld [vmem:[%s3] sm:$0xff]
      %v479 = vsel %vm455, %v469, 0
      %v482 = vsel %vm455, %v470, 0
      %v485 = vsel %vm455, %v471, 0
      %v488 = vsel %vm455, %v472, 0
      %v491 = vsel %vm455, %v473, 0
      %v494 = vsel %vm455, %v474, 0
      %v497 = vsel %vm455, %v475, 0
      %v500 = vsel %vm455, %v476, 0
      %502 = vmatpush.msra.mxu0 0.0
      %503 = vmatpush.msra.mxu0 0.0
      %504 = vmatpush.msra.mxu0 0.0
      %505 = vmatpush.msra.mxu0 0.0
      %506 = vmatpush.msra.mxu0 0.0
      %507 = vmatpush.msra.mxu0 0.0
      %508 = vmatpush.msra.mxu0 0.0
      %509 = vmatpush.msra.mxu0 0.0
      %510 = vmatpush.msra.mxu0 0.0
      %511 = vmatpush.msra.mxu0 0.0
      %512 = vmatpush.msra.mxu0 0.0
      %513 = vmatpush.msra.mxu0 0.0
      %514 = vmatpush.msra.mxu0 0.0
      %515 = vmatpush.msra.mxu0 0.0
      %516 = vmatpush.msra.mxu0 0.0
      %517 = vmatpush.msra.mxu0 %v477
      %518 = vmatmul.f32.gmra.mxu0 %v479
      %v519 = vpop.f32.mrf.mxu0
      %v520 = vadd.f32 0.0, %v519
      %521 = vmatmul.f32.gmra.mxu0 %v482
      %v522 = vpop.f32.mrf.mxu0
      %v523 = vadd.f32 0.0, %v522
      %524 = vmatmul.f32.gmra.mxu0 %v485
      %v525 = vpop.f32.mrf.mxu0
      %v526 = vadd.f32 0.0, %v525
      %527 = vmatmul.f32.gmra.mxu0 %v488
      %v528 = vpop.f32.mrf.mxu0
      %v529 = vadd.f32 0.0, %v528
      %530 = vmatmul.f32.gmra.mxu0 %v491
      %v531 = vpop.f32.mrf.mxu0
      %v532 = vadd.f32 0.0, %v531
      %533 = vmatmul.f32.gmra.mxu0 %v494
      %v534 = vpop.f32.mrf.mxu0
      %v535 = vadd.f32 0.0, %v534
      %536 = vmatmul.f32.gmra.mxu0 %v497
      %v537 = vpop.f32.mrf.mxu0
      %v538 = vadd.f32 0.0, %v537
      %539 = vmatmul.f32.gmra.mxu0 %v500
      %v540 = vpop.f32.mrf.mxu0
      %v541 = vadd.f32 0.0, %v540
      %542 = vdwg.mxu0
      %v543 = vadd.f32 %v468, %v520
      %v544 = vadd.f32 %v468, %v523
      %v545 = vadd.f32 %v468, %v526
      %v546 = vadd.f32 %v468, %v529
      %v547 = vadd.f32 %v468, %v532
      %v548 = vadd.f32 %v468, %v535
      %v549 = vadd.f32 %v468, %v538
      %v550 = vadd.f32 %v468, %v541
      %vm551 = vcmask 31744
      %552 = vst.msk [vmem:[%s258] sm:$0xff] %vm551, %v543
      %553 = vst.msk [vmem:[%s258 + $0x8] sm:$0xff] %vm551, %v544
      %554 = vst.msk [vmem:[%s258 + $0x10] sm:$0xff] %vm551, %v545
      %555 = vst.msk [vmem:[%s258 + $0x18] sm:$0xff] %vm551, %v546
      %556 = vst.msk [vmem:[%s258 + $0x20] sm:$0xff] %vm551, %v547
      %557 = vst.msk [vmem:[%s258 + $0x28] sm:$0xff] %vm551, %v548
      %558 = vst.msk [vmem:[%s258 + $0x30] sm:$0xff] %vm551, %v549
      %559 = vst.msk [vmem:[%s258 + $0x38] sm:$0xff] %vm551, %v550
      %v560 = vsel %vm551, %v543, 0.0
      %v561 = vsel %vm551, %v544, 0.0
      %v562 = vadd.f32 %v560, %v561
      %v563 = vsel %vm551, %v545, 0.0
      %v564 = vadd.f32 %v562, %v563
      %v565 = vsel %vm551, %v546, 0.0
      %v566 = vadd.f32 %v564, %v565
      %v567 = vsel %vm551, %v547, 0.0
      %v568 = vadd.f32 %v566, %v567
      %v569 = vsel %vm551, %v548, 0.0
      %v570 = vadd.f32 %v568, %v569
      %v571 = vsel %vm551, %v549, 0.0
      %v572 = vadd.f32 %v570, %v571
      %v573 = vsel %vm551, %v550, 0.0
      %v574 = vadd.f32 %v572, %v573
      %v575 = vrot.slane %v574, 4
      %v576 = vadd.f32 %v574, %v575
      %v577 = vrot.slane %v576, 2
      %v578 = vadd.f32 %v576, %v577
      %v579 = vrot.slane %v578, 1
      %v580 = vadd.f32 %v578, %v579
      %v581 = vmul.f32 %v543, %v543
      %v582 = vmul.f32 %v544, %v544
      %v583 = vmul.f32 %v545, %v545
      %v584 = vmul.f32 %v546, %v546
      %v585 = vmul.f32 %v547, %v547
      %v586 = vmul.f32 %v548, %v548
      %v587 = vmul.f32 %v549, %v549
      %v588 = vmul.f32 %v550, %v550
      %v589 = vsel %vm551, %v581, 0.0
      %v590 = vsel %vm551, %v582, 0.0
      %v591 = vadd.f32 %v589, %v590
      %v592 = vsel %vm551, %v583, 0.0
      %v593 = vadd.f32 %v591, %v592
      %v594 = vsel %vm551, %v584, 0.0
      %v595 = vadd.f32 %v593, %v594
      %v596 = vsel %vm551, %v585, 0.0
      %v597 = vadd.f32 %v595, %v596
      %v598 = vsel %vm551, %v586, 0.0
      %v599 = vadd.f32 %v597, %v598
      %v600 = vsel %vm551, %v587, 0.0
      %v601 = vadd.f32 %v599, %v600
      %v602 = vsel %vm551, %v588, 0.0
      %v603 = vadd.f32 %v601, %v602
      %v604 = vrot.slane %v603, 4
      %v605 = vadd.f32 %v603, %v604
      %v606 = vrot.slane %v605, 2
      %v607 = vadd.f32 %v605, %v606
      %v608 = vrot.slane %v607, 1
      %v609 = vadd.f32 %v607, %v608
      %vm610 = vcmask 1040384
      %v611 = vsel %vm610, %v580, %v609
      %vm612 = vcmask 25600
      %613 = vst.msk [vmem:[%s262] sm:$0x3] %vm612, %v611
      %p614 = scmp.lt.s32.totalorder %s18, 1
      %s615 = scalar_select %p614, %s18, 1
      %s616 = smul.addr %s615, 8
      %s617 = smul.addr %s616, 8
      %s618 = scalar_lea.vmem %s5, %s617
      %p619 = scmp.lt.s32.totalorder %s18, 1
      %s620 = scalar_select %p619, %s18, 1
      %s621 = smul.addr %s620, 2
      %s622 = scalar_lea.vmem %s6, %s621
      // Predicated region
      $region41: #{conv_block_forward.7} parent=39 // pred_check
        %p623 = pneg %p146
      $region42: #{conv_block_forward.7} parent=39 // pred_check_branch
        %625 = sbr.rel (%p623) target = $region44
      $region43: #{conv_block_forward.7} parent=39 // pred_region
        _
      $region44: #{conv_block_forward.7} parent=39 // pred_fallthru
        _
      // Predicated region
      $region45: #{conv_block_forward.7} parent=39 // pred_check
        %p626 = pneg %p172
      $region46: #{conv_block_forward.7} parent=39 // pred_check_branch
        %628 = sbr.rel (%p626) target = $region48
      $region47: #{conv_block_forward.7} parent=39 // pred_region
        _
      $region48: #{conv_block_forward.7} parent=39 // pred_fallthru
        _
    $region40: #{conv_block_forward.7} parent=5 // pred_fallthru
      _
    %p629 = scmp.le.s32.totalorder 2, %s13
    // Predicated region
    $region49: #{conv_block_forward.7} parent=5 // pred_check
      %p630 = pneg %p629
    $region50: #{conv_block_forward.7} parent=5 // pred_check_branch
      %632 = sbr.rel (%p630) target = $region52
    $region51: #{conv_block_forward.7} parent=5 // pred_region
      %s633 = ssub.s32 %s13, 2
      // Predicated region
      $region53: #{conv_block_forward.7} parent=51 // pred_check
        %p634 = pneg %p152
      $region54: #{conv_block_forward.7} parent=51 // pred_check_branch
        %636 = sbr.rel (%p634) target = $region56
      $region55: #{conv_block_forward.7} parent=51 // pred_region
        %p637 = scmp.lt.s32.totalorder %s19, 1
        %s638 = scalar_select %p637, %s19, 1
        %s639 = smul.addr %s638, 8
        %s640 = smul.addr %s639, 8
        %s641 = scalar_lea.vmem %s5, %s640
      $region56: #{conv_block_forward.7} parent=51 // pred_fallthru
        _
      // Predicated region
      $region57: #{conv_block_forward.7} parent=51 // pred_check
        %p642 = pneg %p178
      $region58: #{conv_block_forward.7} parent=51 // pred_check_branch
        %644 = sbr.rel (%p642) target = $region60
      $region59: #{conv_block_forward.7} parent=51 // pred_region
        %p645 = scmp.lt.s32.totalorder %s19, 1
        %s646 = scalar_select %p645, %s19, 1
        %s647 = smul.addr %s646, 2
        %s648 = scalar_lea.vmem %s6, %s647
      $region60: #{conv_block_forward.7} parent=51 // pred_fallthru
        _
    $region52: #{conv_block_forward.7} parent=5 // pred_fallthru
      _
  $region6: #{conv_block_forward.7} parent=0 // loop_footer
    %s17 = sadd.s32 1, %s13
  $region7: #{conv_block_forward.7} parent=0 // loop_footer_branch
    %12 = sbr.rel target = $region3
  $region8: #{conv_block_forward.7} parent=0 // loop_exit
    _

// kernel: conv_block_forward.6
$region0: #{conv_block_forward.6}
  #allocation0 [shape = 'u32[]', space=smem, size = 0x4, offset = 0x4, fixed_abs, tag = 'smem constant byte address 0x4 - core index']
  #allocation1 [shape = 'u32[72,128]{1,0:T(1,128)}', space=vmem, size = 0x9000, scoped, tag = 'internal scratch']
  #allocation2 [shape = 'f32[12,12,8]{2,1,0:T(8,128)}', space=vmem, size = 0x18000, scoped, tag = 'scratch operand']
  %s0 = inlined_call_operand.vmem [shape: f32[1,1,8], index: 0, kind: input, shape index: {}]
  %s1 = inlined_call_operand.vmem [shape: f32[1,1,8], index: 1, kind: input, shape index: {}]
  %s2 = inlined_call_operand.vmem [shape: f32[2,8,8,8], index: 2, kind: input, shape index: {}]
  %s3 = inlined_call_operand.vmem [shape: f32[25,8,8], index: 3, kind: input, shape index: {}]
  %s4 = inlined_call_operand.vmem [shape: f32[1,8], index: 4, kind: input, shape index: {}]
  %s5 = inlined_call_operand.vmem [shape: f32[2,8,8,8], index: 5, kind: output, shape index: {0}]
  %s6 = inlined_call_operand.vmem [shape: f32[2,2,8], index: 6, kind: output, shape index: {1}]
  %7 = xla_tuple %s5, %s6
  %s8 = sld [smem:[#allocation0]]
  $region61: #{conv_block_forward.6} parent=0
    _
  %s10 = ssub.s32 1, %s8
  %s11 = scalar_select 0, %s10, %s8
  loop: start=0, step=1, limit=4
  $region2: #{conv_block_forward.6} parent=0 // loop_pre_header
    _
  $region3: #{conv_block_forward.6} parent=0 // loop_header
    %s13 = sphi 0, %s17
    %p14 = scmp.ge.s32.totalorder %s13, 4
    %s21 = sphi 0, %s21
    %s23 = sphi 0, %s21
    %s24 = sphi 0, %s23
    %s38 = sphi 0, %s24
    %s42 = sphi 0, %s42
    %s44 = sphi 0, %s42
    %s45 = sphi 0, %s44
    %s59 = sphi 0, %s45
    %s65 = sphi 0, %s67
    %s68 = sphi 0, %s65
    %s69 = sphi 0, %s68
    %s85 = sphi 0, %s69
    %s89 = sphi 0, %s89
    %s91 = sphi 0, %s89
    %s92 = sphi 0, %s91
    %s106 = sphi 0, %s92
    %s110 = sphi 0, %s110
    %s112 = sphi 0, %s110
    %s113 = sphi 0, %s112
    %s127 = sphi 0, %s113
    %s133 = sphi 0, %s135
    %s136 = sphi 0, %s133
    %s137 = sphi 0, %s136
    %s153 = sphi 0, %s137
    %s159 = sphi 0, %s161
    %s162 = sphi 0, %s159
    %s163 = sphi 0, %s162
    %s179 = sphi 0, %s163
  $region4: #{conv_block_forward.6} parent=0 // loop_header_branch
    %16 = sbr.rel (%p14) target = $region8
  $region5: #{conv_block_forward.6} parent=0 // loop_body
    %s18 = ssub.s32 %s13, 1
    %s19 = ssub.s32 %s13, 2
    %s20 = sadd.s32 %s13, 1
    %s22 = sadd.s32 %s21, 1
    %p25 = scmp.eq.s32.totalorder %s13, 1
    %p26 = scmp.ne.s32.totalorder %s21, %s23
    %p27 = scmp.eq.s32.totalorder %s13, 0
    %p28 = por %p26, %p27
    %p29 = scmp.ne.s32.totalorder %s21, %s23
    %p30 = scmp.eq.s32.totalorder %s18, 1
    %p31 = por %p29, %p30
    %p32 = scmp.ne.s32.totalorder %s23, %s24
    %p33 = scmp.eq.s32.totalorder %s18, 0
    %p34 = por %p32, %p33
    %p35 = scmp.ne.s32.totalorder %s23, %s24
    %p36 = scmp.eq.s32.totalorder %s19, 1
    %p37 = por %p35, %p36
    %p39 = scmp.ne.s32.totalorder %s24, %s38
    %p40 = scmp.eq.s32.totalorder %s19, 0
    %p41 = por %p39, %p40
    %s43 = sadd.s32 %s42, 1
    %p46 = scmp.eq.s32.totalorder %s13, 1
    %p47 = scmp.ne.s32.totalorder %s42, %s44
    %p48 = scmp.eq.s32.totalorder %s13, 0
    %p49 = por %p47, %p48
    %p50 = scmp.ne.s32.totalorder %s42, %s44
    %p51 = scmp.eq.s32.totalorder %s18, 1
    %p52 = por %p50, %p51
    %p53 = scmp.ne.s32.totalorder %s44, %s45
    %p54 = scmp.eq.s32.totalorder %s18, 0
    %p55 = por %p53, %p54
    %p56 = scmp.ne.s32.totalorder %s44, %s45
    %p57 = scmp.eq.s32.totalorder %s19, 1
    %p58 = por %p56, %p57
    %p60 = scmp.ne.s32.totalorder %s45, %s59
    %p61 = scmp.eq.s32.totalorder %s19, 0
    %p62 = por %p60, %p61
    %s63 = ssub.s32 %s13, %s20
    %p64 = scmp.eq.s32.totalorder %s63, 0
    %s66 = sadd.s32 %s65, 1
    %s67 = scalar_select %p64, %s65, %s66
    %p70 = pneg %p64
    %p71 = scmp.eq.s32.totalorder %s13, 1
    %p72 = por %p70, %p71
    %p73 = scmp.ne.s32.totalorder %s65, %s68
    %p74 = scmp.eq.s32.totalorder %s13, 0
    %p75 = por %p73, %p74
    %p76 = scmp.ne.s32.totalorder %s65, %s68
    %p77 = scmp.eq.s32.totalorder %s18, 1
    %p78 = por %p76, %p77
    %p79 = scmp.ne.s32.totalorder %s68, %s69
    %p80 = scmp.eq.s32.totalorder %s18, 0
    %p81 = por %p79, %p80
    %p82 = scmp.ne.s32.totalorder %s68, %s69
    %p83 = scmp.eq.s32.totalorder %s19, 1
    %p84 = por %p82, %p83
    %p86 = scmp.ne.s32.totalorder %s69, %s85
    %p87 = scmp.eq.s32.totalorder %s19, 0
    %p88 = por %p86, %p87
    %s90 = sadd.s32 %s89, 1
    %p93 = scmp.eq.s32.totalorder %s13, 1
    %p94 = scmp.ne.s32.totalorder %s89, %s91
    %p95 = scmp.eq.s32.totalorder %s13, 0
    %p96 = por %p94, %p95
    %p97 = scmp.ne.s32.totalorder %s89, %s91
    %p98 = scmp.eq.s32.totalorder %s18, 1
    %p99 = por %p97, %p98
    %p100 = scmp.ne.s32.totalorder %s91, %s92
    %p101 = scmp.eq.s32.totalorder %s18, 0
    %p102 = por %p100, %p101
    %p103 = scmp.ne.s32.totalorder %s91, %s92
    %p104 = scmp.eq.s32.totalorder %s19, 1
    %p105 = por %p103, %p104
    %p107 = scmp.ne.s32.totalorder %s92, %s106
    %p108 = scmp.eq.s32.totalorder %s19, 0
    %p109 = por %p107, %p108
    %s111 = sadd.s32 %s110, 1
    %p114 = scmp.eq.s32.totalorder %s13, 1
    %p115 = scmp.ne.s32.totalorder %s110, %s112
    %p116 = scmp.eq.s32.totalorder %s13, 0
    %p117 = por %p115, %p116
    %p118 = scmp.ne.s32.totalorder %s110, %s112
    %p119 = scmp.eq.s32.totalorder %s18, 1
    %p120 = por %p118, %p119
    %p121 = scmp.ne.s32.totalorder %s112, %s113
    %p122 = scmp.eq.s32.totalorder %s18, 0
    %p123 = por %p121, %p122
    %p124 = scmp.ne.s32.totalorder %s112, %s113
    %p125 = scmp.eq.s32.totalorder %s19, 1
    %p126 = por %p124, %p125
    %p128 = scmp.ne.s32.totalorder %s113, %s127
    %p129 = scmp.eq.s32.totalorder %s19, 0
    %p130 = por %p128, %p129
    %s131 = ssub.s32 %s13, %s20
    %p132 = scmp.eq.s32.totalorder %s131, 0
    %s134 = sadd.s32 %s133, 1
    %s135 = scalar_select %p132, %s133, %s134
    %p138 = pneg %p132
    %p139 = scmp.eq.s32.totalorder %s13, 1
    %p140 = por %p138, %p139
    %p141 = scmp.ne.s32.totalorder %s133, %s136
    %p142 = scmp.eq.s32.totalorder %s13, 0
    %p143 = por %p141, %p142
    %p144 = scmp.ne.s32.totalorder %s133, %s136
    %p145 = scmp.eq.s32.totalorder %s18, 1
    %p146 = por %p144, %p145
    %p147 = scmp.ne.s32.totalorder %s136, %s137
    %p148 = scmp.eq.s32.totalorder %s18, 0
    %p149 = por %p147, %p148
    %p150 = scmp.ne.s32.totalorder %s136, %s137
    %p151 = scmp.eq.s32.totalorder %s19, 1
    %p152 = por %p150, %p151
    %p154 = scmp.ne.s32.totalorder %s137, %s153
    %p155 = scmp.eq.s32.totalorder %s19, 0
    %p156 = por %p154, %p155
    %s157 = ssub.s32 %s13, %s20
    %p158 = scmp.eq.s32.totalorder %s157, 0
    %s160 = sadd.s32 %s159, 1
    %s161 = scalar_select %p158, %s159, %s160
    %p164 = pneg %p158
    %p165 = scmp.eq.s32.totalorder %s13, 1
    %p166 = por %p164, %p165
    %p167 = scmp.ne.s32.totalorder %s159, %s162
    %p168 = scmp.eq.s32.totalorder %s13, 0
    %p169 = por %p167, %p168
    %p170 = scmp.ne.s32.totalorder %s159, %s162
    %p171 = scmp.eq.s32.totalorder %s18, 1
    %p172 = por %p170, %p171
    %p173 = scmp.ne.s32.totalorder %s162, %s163
    %p174 = scmp.eq.s32.totalorder %s18, 0
    %p175 = por %p173, %p174
    %p176 = scmp.ne.s32.totalorder %s162, %s163
    %p177 = scmp.eq.s32.totalorder %s19, 1
    %p178 = por %p176, %p177
    %p180 = scmp.ne.s32.totalorder %s163, %s179
    %p181 = scmp.eq.s32.totalorder %s19, 0
    %p182 = por %p180, %p181
    %p183 = scmp.le.s32.totalorder 1, %s13
    %p184 = scmp.lt.s32.totalorder %s13, 3
    %p185 = pnand %p183, %p184
    %p186 = pneg %p185
    // Predicated region
    $region9: #{conv_block_forward.6} parent=5 // pred_check
      _
    $region10: #{conv_block_forward.6} parent=5 // pred_check_branch
      %188 = sbr.rel (%p185) target = $region12
    $region11: #{conv_block_forward.6} parent=5 // pred_region
      %s189 = ssub.s32 %s13, 1
      // Predicated region
      $region13: #{conv_block_forward.6} parent=11 // pred_check
        %p190 = pneg %p34
      $region14: #{conv_block_forward.6} parent=11 // pred_check_branch
        %192 = sbr.rel (%p190) target = $region16
      $region15: #{conv_block_forward.6} parent=11 // pred_region
        _
      $region16: #{conv_block_forward.6} parent=11 // pred_fallthru
        _
      // Predicated region
      $region17: #{conv_block_forward.6} parent=11 // pred_check
        %p193 = pneg %p55
      $region18: #{conv_block_forward.6} parent=11 // pred_check_branch
        %195 = sbr.rel (%p193) target = $region20
      $region19: #{conv_block_forward.6} parent=11 // pred_region
        _
      $region20: #{conv_block_forward.6} parent=11 // pred_fallthru
        _
      // Predicated region
      $region21: #{conv_block_forward.6} parent=11 // pred_check
        %p196 = pneg %p102
      $region22: #{conv_block_forward.6} parent=11 // pred_check_branch
        %198 = sbr.rel (%p196) target = $region24
      $region23: #{conv_block_forward.6} parent=11 // pred_region
        _
      $region24: #{conv_block_forward.6} parent=11 // pred_fallthru
        _
      // Predicated region
      $region25: #{conv_block_forward.6} parent=11 // pred_check
        %p199 = pneg %p123
      $region26: #{conv_block_forward.6} parent=11 // pred_check_branch
        %201 = sbr.rel (%p199) target = $region28
      $region27: #{conv_block_forward.6} parent=11 // pred_region
        _
      $region28: #{conv_block_forward.6} parent=11 // pred_fallthru
        _
    $region12: #{conv_block_forward.6} parent=5 // pred_fallthru
      _
    %p202 = scmp.lt.s32.totalorder %s13, 2
    // Predicated region
    $region29: #{conv_block_forward.6} parent=5 // pred_check
      %p203 = pneg %p202
    $region30: #{conv_block_forward.6} parent=5 // pred_check_branch
      %205 = sbr.rel (%p203) target = $region32
    $region31: #{conv_block_forward.6} parent=5 // pred_region
      // Predicated region
      $region33: #{conv_block_forward.6} parent=31 // pred_check
        %p206 = pneg %p75
      $region34: #{conv_block_forward.6} parent=31 // pred_check_branch
        %208 = sbr.rel (%p206) target = $region36
      $region35: #{conv_block_forward.6} parent=31 // pred_region
        %p209 = scmp.lt.s32.totalorder %s13, 1
        %s210 = scalar_select %p209, %s13, 1
        %s211 = smul.addr %s210, 8
        %s212 = smul.addr %s211, 8
        %s213 = scalar_lea.vmem %s2, %s212
      $region36: #{conv_block_forward.6} parent=31 // pred_fallthru
        _
    $region32: #{conv_block_forward.6} parent=5 // pred_fallthru
      _
    %p214 = scmp.le.s32.totalorder 1, %s13
    %p215 = scmp.lt.s32.totalorder %s13, 3
    %p216 = pnand %p214, %p215
    %p217 = pneg %p216
    // Predicated region
    $region37: #{conv_block_forward.6} parent=5 // pred_check
      _
    $region38: #{conv_block_forward.6} parent=5 // pred_check_branch
      %219 = sbr.rel (%p216) target = $region40
    $region39: #{conv_block_forward.6} parent=5 // pred_region
      %s220 = ssub.s32 %s13, 1
      %p221 = pneg %p34
      %p222 = pneg %p31
      %p223 = pneg %p55
      %p224 = pneg %p52
      %p225 = scmp.lt.s32.totalorder %s18, 1
      %s226 = scalar_select %p225, %s18, 1
      %s227 = smul.addr %s226, 8
      %s228 = smul.addr %s227, 8
      %s229 = scalar_lea.vmem %s2, %s228
      %p230 = pneg %p81
      %p231 = pneg %p78
      %p232 = pneg %p102
      %p233 = pneg %p99
      %p234 = pneg %p123
      %p235 = pneg %p120
      %p236 = pneg %p149
      %p237 = pneg %p146
      %p238 = scmp.lt.s32.totalorder %s18, 1
      %s239 = scalar_select %p238, %s18, 1
      %s240 = smul.addr %s239, 8
      %s241 = smul.addr %s240, 8
      %s242 = scalar_lea.vmem %s5, %s241
      %p243 = pneg %p175
      %p244 = pneg %p172
      %p245 = scmp.lt.s32.totalorder %s18, 1
      %s246 = scalar_select %p245, %s18, 1
      %s247 = smul.addr %s246, 2
      %s248 = scalar_lea.vmem %s6, %s247
      %p249 = scmp.lt.s32.totalorder %s18, 1
      %s250 = scalar_select %p249, %s18, 1
      %s251 = smul.addr %s250, 8
      %s252 = smul.addr %s251, 8
      %s253 = scalar_lea.vmem %s2, %s252
      %p254 = scmp.lt.s32.totalorder %s18, 1
      %s255 = scalar_select %p254, %s18, 1
      %s256 = smul.addr %s255, 8
      %s257 = smul.addr %s256, 8
      %s258 = scalar_lea.vmem %s5, %s257
      %p259 = scmp.lt.s32.totalorder %s18, 1
      %s260 = scalar_select %p259, %s18, 1
      %s261 = smul.addr %s260, 2
      %s262 = scalar_lea.vmem %s6, %s261
      %v263 = vld [vmem:[%s253] sm:$0xff]
      %v264 = vld [vmem:[%s253 + $0x8] sm:$0xff]
      %v265 = vld [vmem:[%s253 + $0x10] sm:$0xff]
      %v266 = vld [vmem:[%s253 + $0x18] sm:$0xff]
      %v267 = vld [vmem:[%s253 + $0x20] sm:$0xff]
      %v268 = vld [vmem:[%s253 + $0x28] sm:$0xff]
      %v269 = vld [vmem:[%s253 + $0x30] sm:$0xff]
      %v270 = vld [vmem:[%s253 + $0x38] sm:$0xff]
      %v271 = vld [vmem:[%s0] sm:$0x1]
      %v273 = vperm.slane %v271, 0
      %v275 = vmul.f32 %v263, %v273
      %v276 = vmul.f32 %v264, %v273
      %v277 = vmul.f32 %v265, %v273
      %v278 = vmul.f32 %v266, %v273
      %v279 = vmul.f32 %v267, %v273
      %v280 = vmul.f32 %v268, %v273
      %v281 = vmul.f32 %v269, %v273
      %v282 = vmul.f32 %v270, %v273
      %v283 = vld [vmem:[%s1] sm:$0x1]
      %v285 = vperm.slane %v283, 0
      %v287 = vadd.f32 %v275, %v285
      %v288 = vadd.f32 %v276, %v285
      %v289 = vadd.f32 %v277, %v285
      %v290 = vadd.f32 %v278, %v285
      %v291 = vadd.f32 %v279, %v285
      %v292 = vadd.f32 %v280, %v285
      %v293 = vadd.f32 %v281, %v285
      %v294 = vadd.f32 %v282, %v285
      %v295 = vxor.u32 %v287, 2147483648
      %v296 = vxor.u32 %v288, 2147483648
      %v297 = vxor.u32 %v289, 2147483648
      %v298 = vxor.u32 %v290, 2147483648
      %v299 = vxor.u32 %v291, 2147483648
      %v300 = vxor.u32 %v292, 2147483648
      %v301 = vxor.u32 %v293, 2147483648
      %v302 = vxor.u32 %v294, 2147483648
      %v303 = vmul.f32 %v295, 1.442695
      %v304 = vpow.pop %v303
      %v305 = vmul.f32 %v296, 1.442695
      %v306 = vpow.pop %v305
      %v307 = vmul.f32 %v297, 1.442695
      %v308 = vpow.pop %v307
      %v309 = vmul.f32 %v298, 1.442695
      %v310 = vpow.pop %v309
      %v311 = vmul.f32 %v299, 1.442695
      %v312 = vpow.pop %v311
      %v313 = vmul.f32 %v300, 1.442695
      %v314 = vpow.pop %v313
      %v315 = vmul.f32 %v301, 1.442695
      %v316 = vpow.pop %v315
      %v317 = vmul.f32 %v302, 1.442695
      %v318 = vpow.pop %v317
      %v319 = vadd.f32 %v304, 1.0
      %v320 = vadd.f32 %v306, 1.0
      %v321 = vadd.f32 %v308, 1.0
      %v322 = vadd.f32 %v310, 1.0
      %v323 = vadd.f32 %v312, 1.0
      %v324 = vadd.f32 %v314, 1.0
      %v325 = vadd.f32 %v316, 1.0
      %v326 = vadd.f32 %v318, 1.0
      %v327 = vrcp.pop %v319
      %v328 = vmul.f32 %v319, %v327
      %v329 = vsub.f32 1.0, %v328
      %v330 = vmul.f32 %v327, %v329
      %v331 = vadd.f32 %v327, %v330
      %vm332 = vweird.f32 %v319
      %vm333 = vweird.f32 %v327
      %vm334 = vmor %vm332, %vm333
      %v335 = vsel %vm334, %v327, %v331
      %v336 = vand.u32 2147483647, %v319
      %vm337 = vcmp.eq.f32.partialorder %v336, 8.507059e+37
      %v338 = vand.u32 %v319, 2147483648
      %v339 = vor.u32 1.1754944e-38, %v338
      %v340 = vsel %vm337, %v339, %v335
      %v341 = vmul.f32 1.0, %v340
      %v342 = vrcp.pop %v320
      %v343 = vmul.f32 %v320, %v342
      %v344 = vsub.f32 1.0, %v343
      %v345 = vmul.f32 %v342, %v344
      %v346 = vadd.f32 %v342, %v345
      %vm347 = vweird.f32 %v320
      %vm348 = vweird.f32 %v342
      %vm349 = vmor %vm347, %vm348
      %v350 = vsel %vm349, %v342, %v346
      %v351 = vand.u32 2147483647, %v320
      %vm352 = vcmp.eq.f32.partialorder %v351, 8.507059e+37
      %v353 = vand.u32 %v320, 2147483648
      %v354 = vor.u32 1.1754944e-38, %v353
      %v355 = vsel %vm352, %v354, %v350
      %v356 = vmul.f32 1.0, %v355
      %v357 = vrcp.pop %v321
      %v358 = vmul.f32 %v321, %v357
      %v359 = vsub.f32 1.0, %v358
      %v360 = vmul.f32 %v357, %v359
      %v361 = vadd.f32 %v357, %v360
      %vm362 = vweird.f32 %v321
      %vm363 = vweird.f32 %v357
      %vm364 = vmor %vm362, %vm363
      %v365 = vsel %vm364, %v357, %v361
      %v366 = vand.u32 2147483647, %v321
      %vm367 = vcmp.eq.f32.partialorder %v366, 8.507059e+37
      %v368 = vand.u32 %v321, 2147483648
      %v369 = vor.u32 1.1754944e-38, %v368
      %v370 = vsel %vm367, %v369, %v365
      %v371 = vmul.f32 1.0, %v370
      %v372 = vrcp.pop %v322
      %v373 = vmul.f32 %v322, %v372
      %v374 = vsub.f32 1.0, %v373
      %v375 = vmul.f32 %v372, %v374
      %v376 = vadd.f32 %v372, %v375
      %vm377 = vweird.f32 %v322
      %vm378 = vweird.f32 %v372
      %vm379 = vmor %vm377, %vm378
      %v380 = vsel %vm379, %v372, %v376
      %v381 = vand.u32 2147483647, %v322
      %vm382 = vcmp.eq.f32.partialorder %v381, 8.507059e+37
      %v383 = vand.u32 %v322, 2147483648
      %v384 = vor.u32 1.1754944e-38, %v383
      %v385 = vsel %vm382, %v384, %v380
      %v386 = vmul.f32 1.0, %v385
      %v387 = vrcp.pop %v323
      %v388 = vmul.f32 %v323, %v387
      %v389 = vsub.f32 1.0, %v388
      %v390 = vmul.f32 %v387, %v389
      %v391 = vadd.f32 %v387, %v390
      %vm392 = vweird.f32 %v323
      %vm393 = vweird.f32 %v387
      %vm394 = vmor %vm392, %vm393
      %v395 = vsel %vm394, %v387, %v391
      %v396 = vand.u32 2147483647, %v323
      %vm397 = vcmp.eq.f32.partialorder %v396, 8.507059e+37
      %v398 = vand.u32 %v323, 2147483648
      %v399 = vor.u32 1.1754944e-38, %v398
      %v400 = vsel %vm397, %v399, %v395
      %v401 = vmul.f32 1.0, %v400
      %v402 = vrcp.pop %v324
      %v403 = vmul.f32 %v324, %v402
      %v404 = vsub.f32 1.0, %v403
      %v405 = vmul.f32 %v402, %v404
      %v406 = vadd.f32 %v402, %v405
      %vm407 = vweird.f32 %v324
      %vm408 = vweird.f32 %v402
      %vm409 = vmor %vm407, %vm408
      %v410 = vsel %vm409, %v402, %v406
      %v411 = vand.u32 2147483647, %v324
      %vm412 = vcmp.eq.f32.partialorder %v411, 8.507059e+37
      %v413 = vand.u32 %v324, 2147483648
      %v414 = vor.u32 1.1754944e-38, %v413
      %v415 = vsel %vm412, %v414, %v410
      %v416 = vmul.f32 1.0, %v415
      %v417 = vrcp.pop %v325
      %v418 = vmul.f32 %v325, %v417
      %v419 = vsub.f32 1.0, %v418
      %v420 = vmul.f32 %v417, %v419
      %v421 = vadd.f32 %v417, %v420
      %vm422 = vweird.f32 %v325
      %vm423 = vweird.f32 %v417
      %vm424 = vmor %vm422, %vm423
      %v425 = vsel %vm424, %v417, %v421
      %v426 = vand.u32 2147483647, %v325
      %vm427 = vcmp.eq.f32.partialorder %v426, 8.507059e+37
      %v428 = vand.u32 %v325, 2147483648
      %v429 = vor.u32 1.1754944e-38, %v428
      %v430 = vsel %vm427, %v429, %v425
      %v431 = vmul.f32 1.0, %v430
      %v432 = vrcp.pop %v326
      %v433 = vmul.f32 %v326, %v432
      %v434 = vsub.f32 1.0, %v433
      %v435 = vmul.f32 %v432, %v434
      %v436 = vadd.f32 %v432, %v435
      %vm437 = vweird.f32 %v326
      %vm438 = vweird.f32 %v432
      %vm439 = vmor %vm437, %vm438
      %v440 = vsel %vm439, %v432, %v436
      %v441 = vand.u32 2147483647, %v326
      %vm442 = vcmp.eq.f32.partialorder %v441, 8.507059e+37
      %v443 = vand.u32 %v326, 2147483648
      %v444 = vor.u32 1.1754944e-38, %v443
      %v445 = vsel %vm442, %v444, %v440
      %v446 = vmul.f32 1.0, %v445
      %v447 = vmul.f32 %v287, %v341
      %v448 = vmul.f32 %v288, %v356
      %v449 = vmul.f32 %v289, %v371
      %v450 = vmul.f32 %v290, %v386
      %v451 = vmul.f32 %v291, %v401
      %v452 = vmul.f32 %v292, %v416
      %v453 = vmul.f32 %v293, %v431
      %v454 = vmul.f32 %v294, %v446
      %vm455 = vcmask 64512
      %456 = vst.msk [vmem:[#allocation2] sm:$0xff] %vm455, 0.0
      %vm457 = vcmask 60416
      %458 = vst.msk [vmem:[#allocation2 + $0x8] sm:$0xf] %vm457, 0.0
      %459 = vst.msk [vmem:[#allocation2 + $0x10] sm:$0xff] %vm455, 0.0
      %460 = vst.msk [vmem:[#allocation2 + $0x18] sm:$0xf] %vm457, 0.0
      %461 = vst.msk [vmem:[#allocation2 + $0x20] sm:$0xff] %vm455, 0.0
      %462 = vst.msk [vmem:[#allocation2 + $0x28] sm:$0xf] %vm457, 0.0
      %463 = vst.msk [vmem:[#allocation2 + $0x30] sm:$0xff] %vm455, 0.0
      %464 = vst.msk [vmem:[#allocation2 + $0x38] sm:$0xf] %vm457, 0.0
      %465 = vst.msk [vmem:[#allocation2 + $0x40] sm:$0xff] %vm455, 0.0
      %466 = vst.msk [vmem:[#allocation2 + $0x48] sm:$0xf] %vm457, 0.0
      %467 = vst.msk [vmem:[#allocation2 + $0x50] sm:$0xff] %vm455, 0.0
      %468 = vst.msk [vmem:[#allocation2 + $0x58] sm:$0xf] %vm457, 0.0
      %469 = vst.msk [vmem:[#allocation2 + $0x60] sm:$0xff] %vm455, 0.0
      %470 = vst.msk [vmem:[#allocation2 + $0x68] sm:$0xf] %vm457, 0.0
      %471 = vst.msk [vmem:[#allocation2 + $0x70] sm:$0xff] %vm455, 0.0
      %472 = vst.msk [vmem:[#allocation2 + $0x78] sm:$0xf] %vm457, 0.0
      %473 = vst.msk [vmem:[#allocation2 + $0x80] sm:$0xff] %vm455, 0.0
      %474 = vst.msk [vmem:[#allocation2 + $0x88] sm:$0xf] %vm457, 0.0
      %475 = vst.msk [vmem:[#allocation2 + $0x90] sm:$0xff] %vm455, 0.0
      %476 = vst.msk [vmem:[#allocation2 + $0x98] sm:$0xf] %vm457, 0.0
      %477 = vst.msk [vmem:[#allocation2 + $0xa0] sm:$0xff] %vm455, 0.0
      %478 = vst.msk [vmem:[#allocation2 + $0xa8] sm:$0xf] %vm457, 0.0
      %479 = vst.msk [vmem:[#allocation2 + $0xb0] sm:$0xff] %vm455, 0.0
      %480 = vst.msk [vmem:[#allocation2 + $0xb8] sm:$0xf] %vm457, 0.0
      %s481 = scalar_lea.vmem [#allocation2], 32
      %482 = vst.msk [vmem:[%s481 + $0x2] sm:$0xff] %vm455, %v447
      %483 = vst.msk [vmem:[%s481 + $0x12] sm:$0xff] %vm455, %v448
      %484 = vst.msk [vmem:[%s481 + $0x22] sm:$0xff] %vm455, %v449
      %485 = vst.msk [vmem:[%s481 + $0x32] sm:$0xff] %vm455, %v450
      %486 = vst.msk [vmem:[%s481 + $0x42] sm:$0xff] %vm455, %v451
      %487 = vst.msk [vmem:[%s481 + $0x52] sm:$0xff] %vm455, %v452
      %488 = vst.msk [vmem:[%s481 + $0x62] sm:$0xff] %vm455, %v453
      %489 = vst.msk [vmem:[%s481 + $0x72] sm:$0xff] %vm455, %v454
      %v490 = vld [vmem:[%s4] sm:$0x1]
      %v492 = vperm.slane %v490, 0
      %v494 = vadd.f32 %v492, 0.0
      %v495 = vld [vmem:[#allocation2] sm:$0xff]
      %v496 = vld [vmem:[#allocation2 + $0x10] sm:$0xff]
      %v497 = vld [vmem:[#allocation2 + $0x20] sm:$0xff]
      %v498 = vld [vmem:[#allocation2 + $0x30] sm:$0xff]
      %v499 = vld [vmem:[#allocation2 + $0x40] sm:$0xff]
      %v500 = vld [vmem:[#allocation2 + $0x50] sm:$0xff]
      %v501 = vld [vmem:[#allocation2 + $0x60] sm:$0xff]
      %v502 = vld [vmem:[#allocation2 + $0x70] sm:$0xff]
      %v503 = vld [vmem:[%s3] sm:$0xff]
      %v505 = vsel %vm455, %v495, 0
      %v508 = vsel %vm455, %v496, 0
      %v511 = vsel %vm455, %v497, 0
      %v514 = vsel %vm455, %v498, 0
      %v517 = vsel %vm455, %v499, 0
      %v520 = vsel %vm455, %v500, 0
      %v523 = vsel %vm455, %v501, 0
      %v526 = vsel %vm455, %v502, 0
      %528 = vmatpush.msra.mxu0 0.0
      %529 = vmatpush.msra.mxu0 0.0
      %530 = vmatpush.msra.mxu0 0.0
      %531 = vmatpush.msra.mxu0 0.0
      %532 = vmatpush.msra.mxu0 0.0
      %533 = vmatpush.msra.mxu0 0.0
      %534 = vmatpush.msra.mxu0 0.0
      %535 = vmatpush.msra.mxu0 0.0
      %536 = vmatpush.msra.mxu0 0.0
      %537 = vmatpush.msra.mxu0 0.0
      %538 = vmatpush.msra.mxu0 0.0
      %539 = vmatpush.msra.mxu0 0.0
      %540 = vmatpush.msra.mxu0 0.0
      %541 = vmatpush.msra.mxu0 0.0
      %542 = vmatpush.msra.mxu0 0.0
      %543 = vmatpush.msra.mxu0 %v503
      %544 = vmatmul.f32.gmra.mxu0 %v505
      %v545 = vpop.f32.mrf.mxu0
      %v546 = vadd.f32 0.0, %v545
      %547 = vmatmul.f32.gmra.mxu0 %v508
      %v548 = vpop.f32.mrf.mxu0
      %v549 = vadd.f32 0.0, %v548
      %550 = vmatmul.f32.gmra.mxu0 %v511
      %v551 = vpop.f32.mrf.mxu0
      %v552 = vadd.f32 0.0, %v551
      %553 = vmatmul.f32.gmra.mxu0 %v514
      %v554 = vpop.f32.mrf.mxu0
      %v555 = vadd.f32 0.0, %v554
      %556 = vmatmul.f32.gmra.mxu0 %v517
      %v557 = vpop.f32.mrf.mxu0
      %v558 = vadd.f32 0.0, %v557
      %559 = vmatmul.f32.gmra.mxu0 %v520
      %v560 = vpop.f32.mrf.mxu0
      %v561 = vadd.f32 0.0, %v560
      %562 = vmatmul.f32.gmra.mxu0 %v523
      %v563 = vpop.f32.mrf.mxu0
      %v564 = vadd.f32 0.0, %v563
      %565 = vmatmul.f32.gmra.mxu0 %v526
      %v566 = vpop.f32.mrf.mxu0
      %v567 = vadd.f32 0.0, %v566
      %568 = vdwg.mxu0
      %v569 = vadd.f32 %v494, %v546
      %v570 = vadd.f32 %v494, %v549
      %v571 = vadd.f32 %v494, %v552
      %v572 = vadd.f32 %v494, %v555
      %v573 = vadd.f32 %v494, %v558
      %v574 = vadd.f32 %v494, %v561
      %v575 = vadd.f32 %v494, %v564
      %v576 = vadd.f32 %v494, %v567
      %v577 = vld [vmem:[#allocation2 + $0x1] sm:$0xff]
      %v578 = vld [vmem:[#allocation2 + $0x11] sm:$0xff]
      %v579 = vld [vmem:[#allocation2 + $0x21] sm:$0xff]
      %v580 = vld [vmem:[#allocation2 + $0x31] sm:$0xff]
      %v581 = vld [vmem:[#allocation2 + $0x41] sm:$0xff]
      %v582 = vld [vmem:[#allocation2 + $0x51] sm:$0xff]
      %v583 = vld [vmem:[#allocation2 + $0x61] sm:$0xff]
      %v584 = vld [vmem:[#allocation2 + $0x71] sm:$0xff]
      %s585 = scalar_lea.vmem %s3, 8
      %v586 = vld [vmem:[%s585] sm:$0xff]
      %v588 = vsel %vm455, %v577, 0
      %v591 = vsel %vm455, %v578, 0
      %v594 = vsel %vm455, %v579, 0
      %v597 = vsel %vm455, %v580, 0
      %v600 = vsel %vm455, %v581, 0
      %v603 = vsel %vm455, %v582, 0
      %v606 = vsel %vm455, %v583, 0
      %v609 = vsel %vm455, %v584, 0
      %611 = vmatpush.msra.mxu0 0.0
      %612 = vmatpush.msra.mxu0 0.0
      %613 = vmatpush.msra.mxu0 0.0
      %614 = vmatpush.msra.mxu0 0.0
      %615 = vmatpush.msra.mxu0 0.0
      %616 = vmatpush.msra.mxu0 0.0
      %617 = vmatpush.msra.mxu0 0.0
      %618 = vmatpush.msra.mxu0 0.0
      %619 = vmatpush.msra.mxu0 0.0
      %620 = vmatpush.msra.mxu0 0.0
      %621 = vmatpush.msra.mxu0 0.0
      %622 = vmatpush.msra.mxu0 0.0
      %623 = vmatpush.msra.mxu0 0.0
      %624 = vmatpush.msra.mxu0 0.0
      %625 = vmatpush.msra.mxu0 0.0
      %626 = vmatpush.msra.mxu0 %v586
      %627 = vmatmul.f32.gmra.mxu0 %v588
      %v628 = vpop.f32.mrf.mxu0
      %v629 = vadd.f32 0.0, %v628
      %630 = vmatmul.f32.gmra.mxu0 %v591
      %v631 = vpop.f32.mrf.mxu0
      %v632 = vadd.f32 0.0, %v631
      %633 = vmatmul.f32.gmra.mxu0 %v594
      %v634 = vpop.f32.mrf.mxu0
      %v635 = vadd.f32 0.0, %v634
      %636 = vmatmul.f32.gmra.mxu0 %v597
      %v637 = vpop.f32.mrf.mxu0
      %v638 = vadd.f32 0.0, %v637
      %639 = vmatmul.f32.gmra.mxu0 %v600
      %v640 = vpop.f32.mrf.mxu0
      %v641 = vadd.f32 0.0, %v640
      %642 = vmatmul.f32.gmra.mxu0 %v603
      %v643 = vpop.f32.mrf.mxu0
      %v644 = vadd.f32 0.0, %v643
      %645 = vmatmul.f32.gmra.mxu0 %v606
      %v646 = vpop.f32.mrf.mxu0
      %v647 = vadd.f32 0.0, %v646
      %648 = vmatmul.f32.gmra.mxu0 %v609
      %v649 = vpop.f32.mrf.mxu0
      %v650 = vadd.f32 0.0, %v649
      %651 = vdwg.mxu0
      %v652 = vadd.f32 %v569, %v629
      %v653 = vadd.f32 %v570, %v632
      %v654 = vadd.f32 %v571, %v635
      %v655 = vadd.f32 %v572, %v638
      %v656 = vadd.f32 %v573, %v641
      %v657 = vadd.f32 %v574, %v644
      %v658 = vadd.f32 %v575, %v647
      %v659 = vadd.f32 %v576, %v650
      %v660 = vld [vmem:[#allocation2 + $0x2] sm:$0xff]
      %v661 = vld [vmem:[#allocation2 + $0x12] sm:$0xff]
      %v662 = vld [vmem:[#allocation2 + $0x22] sm:$0xff]
      %v663 = vld [vmem:[#allocation2 + $0x32] sm:$0xff]
      %v664 = vld [vmem:[#allocation2 + $0x42] sm:$0xff]
      %v665 = vld [vmem:[#allocation2 + $0x52] sm:$0xff]
      %v666 = vld [vmem:[#allocation2 + $0x62] sm:$0xff]
      %v667 = vld [vmem:[#allocation2 + $0x72] sm:$0xff]
      %s668 = scalar_lea.vmem %s3, 16
      %v669 = vld [vmem:[%s668] sm:$0xff]
      %v671 = vsel %vm455, %v660, 0
      %v674 = vsel %vm455, %v661, 0
      %v677 = vsel %vm455, %v662, 0
      %v680 = vsel %vm455, %v663, 0
      %v683 = vsel %vm455, %v664, 0
      %v686 = vsel %vm455, %v665, 0
      %v689 = vsel %vm455, %v666, 0
      %v692 = vsel %vm455, %v667, 0
      %694 = vmatpush.msra.mxu0 0.0
      %695 = vmatpush.msra.mxu0 0.0
      %696 = vmatpush.msra.mxu0 0.0
      %697 = vmatpush.msra.mxu0 0.0
      %698 = vmatpush.msra.mxu0 0.0
      %699 = vmatpush.msra.mxu0 0.0
      %700 = vmatpush.msra.mxu0 0.0
      %701 = vmatpush.msra.mxu0 0.0
      %702 = vmatpush.msra.mxu0 0.0
      %703 = vmatpush.msra.mxu0 0.0
      %704 = vmatpush.msra.mxu0 0.0
      %705 = vmatpush.msra.mxu0 0.0
      %706 = vmatpush.msra.mxu0 0.0
      %707 = vmatpush.msra.mxu0 0.0
      %708 = vmatpush.msra.mxu0 0.0
      %709 = vmatpush.msra.mxu0 %v669
      %710 = vmatmul.f32.gmra.mxu0 %v671
      %v711 = vpop.f32.mrf.mxu0
      %v712 = vadd.f32 0.0, %v711
      %713 = vmatmul.f32.gmra.mxu0 %v674
      %v714 = vpop.f32.mrf.mxu0
      %v715 = vadd.f32 0.0, %v714
      %716 = vmatmul.f32.gmra.mxu0 %v677
      %v717 = vpop.f32.mrf.mxu0
      %v718 = vadd.f32 0.0, %v717
      %719 = vmatmul.f32.gmra.mxu0 %v680
      %v720 = vpop.f32.mrf.mxu0
      %v721 = vadd.f32 0.0, %v720
      %722 = vmatmul.f32.gmra.mxu0 %v683
      %v723 = vpop.f32.mrf.mxu0
      %v724 = vadd.f32 0.0, %v723
      %725 = vmatmul.f32.gmra.mxu0 %v686
      %v726 = vpop.f32.mrf.mxu0
      %v727 = vadd.f32 0.0, %v726
      %728 = vmatmul.f32.gmra.mxu0 %v689
      %v729 = vpop.f32.mrf.mxu0
      %v730 = vadd.f32 0.0, %v729
      %731 = vmatmul.f32.gmra.mxu0 %v692
      %v732 = vpop.f32.mrf.mxu0
      %v733 = vadd.f32 0.0, %v732
      %734 = vdwg.mxu0
      %v735 = vadd.f32 %v652, %v712
      %v736 = vadd.f32 %v653, %v715
      %v737 = vadd.f32 %v654, %v718
      %v738 = vadd.f32 %v655, %v721
      %v739 = vadd.f32 %v656, %v724
      %v740 = vadd.f32 %v657, %v727
      %v741 = vadd.f32 %v658, %v730
      %v742 = vadd.f32 %v659, %v733
      %v743 = vld [vmem:[#allocation2 + $0x3] sm:$0xff]
      %v744 = vld [vmem:[#allocation2 + $0x13] sm:$0xff]
      %v745 = vld [vmem:[#allocation2 + $0x23] sm:$0xff]
      %v746 = vld [vmem:[#allocation2 + $0x33] sm:$0xff]
      %v747 = vld [vmem:[#allocation2 + $0x43] sm:$0xff]
      %v748 = vld [vmem:[#allocation2 + $0x53] sm:$0xff]
      %v749 = vld [vmem:[#allocation2 + $0x63] sm:$0xff]
      %v750 = vld [vmem:[#allocation2 + $0x73] sm:$0xff]
      %s751 = scalar_lea.vmem %s3, 24
      %v752 = vld [vmem:[%s751] sm:$0xff]
      %v754 = vsel %vm455, %v743, 0
      %v757 = vsel %vm455, %v744, 0
      %v760 = vsel %vm455, %v745, 0
      %v763 = vsel %vm455, %v746, 0
      %v766 = vsel %vm455, %v747, 0
      %v769 = vsel %vm455, %v748, 0
      %v772 = vsel %vm455, %v749, 0
      %v775 = vsel %vm455, %v750, 0
      %777 = vmatpush.msra.mxu0 0.0
      %778 = vmatpush.msra.mxu0 0.0
      %779 = vmatpush.msra.mxu0 0.0
      %780 = vmatpush.msra.mxu0 0.0
      %781 = vmatpush.msra.mxu0 0.0
      %782 = vmatpush.msra.mxu0 0.0
      %783 = vmatpush.msra.mxu0 0.0
      %784 = vmatpush.msra.mxu0 0.0
      %785 = vmatpush.msra.mxu0 0.0
      %786 = vmatpush.msra.mxu0 0.0
      %787 = vmatpush.msra.mxu0 0.0
      %788 = vmatpush.msra.mxu0 0.0
      %789 = vmatpush.msra.mxu0 0.0
      %790 = vmatpush.msra.mxu0 0.0
      %791 = vmatpush.msra.mxu0 0.0
      %792 = vmatpush.msra.mxu0 %v752
      %793 = vmatmul.f32.gmra.mxu0 %v754
      %v794 = vpop.f32.mrf.mxu0
      %v795 = vadd.f32 0.0, %v794
      %796 = vmatmul.f32.gmra.mxu0 %v757
      %v797 = vpop.f32.mrf.mxu0
      %v798 = vadd.f32 0.0, %v797
      %799 = vmatmul.f32.gmra.mxu0 %v760
      %v800 = vpop.f32.mrf.mxu0
      %v801 = vadd.f32 0.0, %v800
      %802 = vmatmul.f32.gmra.mxu0 %v763
      %v803 = vpop.f32.mrf.mxu0
      %v804 = vadd.f32 0.0, %v803
      %805 = vmatmul.f32.gmra.mxu0 %v766
      %v806 = vpop.f32.mrf.mxu0
      %v807 = vadd.f32 0.0, %v806
      %808 = vmatmul.f32.gmra.mxu0 %v769
      %v809 = vpop.f32.mrf.mxu0
      %v810 = vadd.f32 0.0, %v809
      %811 = vmatmul.f32.gmra.mxu0 %v772
      %v812 = vpop.f32.mrf.mxu0
      %v813 = vadd.f32 0.0, %v812
      %814 = vmatmul.f32.gmra.mxu0 %v775
      %v815 = vpop.f32.mrf.mxu0
      %v816 = vadd.f32 0.0, %v815
      %817 = vdwg.mxu0
      %v818 = vadd.f32 %v735, %v795
      %v819 = vadd.f32 %v736, %v798
      %v820 = vadd.f32 %v737, %v801
      %v821 = vadd.f32 %v738, %v804
      %v822 = vadd.f32 %v739, %v807
      %v823 = vadd.f32 %v740, %v810
      %v824 = vadd.f32 %v741, %v813
      %v825 = vadd.f32 %v742, %v816
      %v826 = vld [vmem:[#allocation2 + $0x4] sm:$0xff]
      %v827 = vld [vmem:[#allocation2 + $0x14] sm:$0xff]
      %v828 = vld [vmem:[#allocation2 + $0x24] sm:$0xff]
      %v829 = vld [vmem:[#allocation2 + $0x34] sm:$0xff]
      %v830 = vld [vmem:[#allocation2 + $0x44] sm:$0xff]
      %v831 = vld [vmem:[#allocation2 + $0x54] sm:$0xff]
      %v832 = vld [vmem:[#allocation2 + $0x64] sm:$0xff]
      %v833 = vld [vmem:[#allocation2 + $0x74] sm:$0xff]
      %s834 = scalar_lea.vmem %s3, 32
      %v835 = vld [vmem:[%s834] sm:$0xff]
      %v837 = vsel %vm455, %v826, 0
      %v840 = vsel %vm455, %v827, 0
      %v843 = vsel %vm455, %v828, 0
      %v846 = vsel %vm455, %v829, 0
      %v849 = vsel %vm455, %v830, 0
      %v852 = vsel %vm455, %v831, 0
      %v855 = vsel %vm455, %v832, 0
      %v858 = vsel %vm455, %v833, 0
      %860 = vmatpush.msra.mxu0 0.0
      %861 = vmatpush.msra.mxu0 0.0
      %862 = vmatpush.msra.mxu0 0.0
      %863 = vmatpush.msra.mxu0 0.0
      %864 = vmatpush.msra.mxu0 0.0
      %865 = vmatpush.msra.mxu0 0.0
      %866 = vmatpush.msra.mxu0 0.0
      %867 = vmatpush.msra.mxu0 0.0
      %868 = vmatpush.msra.mxu0 0.0
      %869 = vmatpush.msra.mxu0 0.0
      %870 = vmatpush.msra.mxu0 0.0
      %871 = vmatpush.msra.mxu0 0.0
      %872 = vmatpush.msra.mxu0 0.0
      %873 = vmatpush.msra.mxu0 0.0
      %874 = vmatpush.msra.mxu0 0.0
      %875 = vmatpush.msra.mxu0 %v835
      %876 = vmatmul.f32.gmra.mxu0 %v837
      %v877 = vpop.f32.mrf.mxu0
      %v878 = vadd.f32 0.0, %v877
      %879 = vmatmul.f32.gmra.mxu0 %v840
      %v880 = vpop.f32.mrf.mxu0
      %v881 = vadd.f32 0.0, %v880
      %882 = vmatmul.f32.gmra.mxu0 %v843
      %v883 = vpop.f32.mrf.mxu0
      %v884 = vadd.f32 0.0, %v883
      %885 = vmatmul.f32.gmra.mxu0 %v846
      %v886 = vpop.f32.mrf.mxu0
      %v887 = vadd.f32 0.0, %v886
      %888 = vmatmul.f32.gmra.mxu0 %v849
      %v889 = vpop.f32.mrf.mxu0
      %v890 = vadd.f32 0.0, %v889
      %891 = vmatmul.f32.gmra.mxu0 %v852
      %v892 = vpop.f32.mrf.mxu0
      %v893 = vadd.f32 0.0, %v892
      %894 = vmatmul.f32.gmra.mxu0 %v855
      %v895 = vpop.f32.mrf.mxu0
      %v896 = vadd.f32 0.0, %v895
      %897 = vmatmul.f32.gmra.mxu0 %v858
      %v898 = vpop.f32.mrf.mxu0
      %v899 = vadd.f32 0.0, %v898
      %900 = vdwg.mxu0
      %v901 = vadd.f32 %v818, %v878
      %v902 = vadd.f32 %v819, %v881
      %v903 = vadd.f32 %v820, %v884
      %v904 = vadd.f32 %v821, %v887
      %v905 = vadd.f32 %v822, %v890
      %v906 = vadd.f32 %v823, %v893
      %v907 = vadd.f32 %v824, %v896
      %v908 = vadd.f32 %v825, %v899
      %s909 = scalar_lea.vmem [#allocation2], 16
      %v910 = vld [vmem:[%s909] sm:$0xff]
      %v911 = vld [vmem:[%s909 + $0x10] sm:$0xff]
      %v912 = vld [vmem:[%s909 + $0x20] sm:$0xff]
      %v913 = vld [vmem:[%s909 + $0x30] sm:$0xff]
      %v914 = vld [vmem:[%s909 + $0x40] sm:$0xff]
      %v915 = vld [vmem:[%s909 + $0x50] sm:$0xff]
      %v916 = vld [vmem:[%s909 + $0x60] sm:$0xff]
      %v917 = vld [vmem:[%s909 + $0x70] sm:$0xff]
      %s918 = scalar_lea.vmem %s3, 40
      %v919 = vld [vmem:[%s918] sm:$0xff]
      %v921 = vsel %vm455, %v910, 0
      %v924 = vsel %vm455, %v911, 0
      %v927 = vsel %vm455, %v912, 0
      %v930 = vsel %vm455, %v913, 0
      %v933 = vsel %vm455, %v914, 0
      %v936 = vsel %vm455, %v915, 0
      %v939 = vsel %vm455, %v916, 0
      %v942 = vsel %vm455, %v917, 0
      %944 = vmatpush.msra.mxu0 0.0
      %945 = vmatpush.msra.mxu0 0.0
      %946 = vmatpush.msra.mxu0 0.0
      %947 = vmatpush.msra.mxu0 0.0
      %948 = vmatpush.msra.mxu0 0.0
      %949 = vmatpush.msra.mxu0 0.0
      %950 = vmatpush.msra.mxu0 0.0
      %951 = vmatpush.msra.mxu0 0.0
      %952 = vmatpush.msra.mxu0 0.0
      %953 = vmatpush.msra.mxu0 0.0
      %954 = vmatpush.msra.mxu0 0.0
      %955 = vmatpush.msra.mxu0 0.0
      %956 = vmatpush.msra.mxu0 0.0
      %957 = vmatpush.msra.mxu0 0.0
      %958 = vmatpush.msra.mxu0 0.0
      %959 = vmatpush.msra.mxu0 %v919
      %960 = vmatmul.f32.gmra.mxu0 %v921
      %v961 = vpop.f32.mrf.mxu0
      %v962 = vadd.f32 0.0, %v961
      %963 = vmatmul.f32.gmra.mxu0 %v924
      %v964 = vpop.f32.mrf.mxu0
      %v965 = vadd.f32 0.0, %v964
      %966 = vmatmul.f32.gmra.mxu0 %v927
      %v967 = vpop.f32.mrf.mxu0
      %v968 = vadd.f32 0.0, %v967
      %969 = vmatmul.f32.gmra.mxu0 %v930
      %v970 = vpop.f32.mrf.mxu0
      %v971 = vadd.f32 0.0, %v970
      %972 = vmatmul.f32.gmra.mxu0 %v933
      %v973 = vpop.f32.mrf.mxu0
      %v974 = vadd.f32 0.0, %v973
      %975 = vmatmul.f32.gmra.mxu0 %v936
      %v976 = vpop.f32.mrf.mxu0
      %v977 = vadd.f32 0.0, %v976
      %978 = vmatmul.f32.gmra.mxu0 %v939
      %v979 = vpop.f32.mrf.mxu0
      %v980 = vadd.f32 0.0, %v979
      %981 = vmatmul.f32.gmra.mxu0 %v942
      %v982 = vpop.f32.mrf.mxu0
      %v983 = vadd.f32 0.0, %v982
      %984 = vdwg.mxu0
      %v985 = vadd.f32 %v901, %v962
      %v986 = vadd.f32 %v902, %v965
      %v987 = vadd.f32 %v903, %v968
      %v988 = vadd.f32 %v904, %v971
      %v989 = vadd.f32 %v905, %v974
      %v990 = vadd.f32 %v906, %v977
      %v991 = vadd.f32 %v907, %v980
      %v992 = vadd.f32 %v908, %v983
      %v993 = vld [vmem:[%s909 + $0x1] sm:$0xff]
      %v994 = vld [vmem:[%s909 + $0x11] sm:$0xff]
      %v995 = vld [vmem:[%s909 + $0x21] sm:$0xff]
      %v996 = vld [vmem:[%s909 + $0x31] sm:$0xff]
      %v997 = vld [vmem:[%s909 + $0x41] sm:$0xff]
      %v998 = vld [vmem:[%s909 + $0x51] sm:$0xff]
      %v999 = vld [vmem:[%s909 + $0x61] sm:$0xff]
      %v1000 = vld [vmem:[%s909 + $0x71] sm:$0xff]
      %s1001 = scalar_lea.vmem %s3, 48
      %v1002 = vld [vmem:[%s1001] sm:$0xff]
      %v1004 = vsel %vm455, %v993, 0
      %v1007 = vsel %vm455, %v994, 0
      %v1010 = vsel %vm455, %v995, 0
      %v1013 = vsel %vm455, %v996, 0
      %v1016 = vsel %vm455, %v997, 0
      %v1019 = vsel %vm455, %v998, 0
      %v1022 = vsel %vm455, %v999, 0
      %v1025 = vsel %vm455, %v1000, 0
      %1027 = vmatpush.msra.mxu0 0.0
      %1028 = vmatpush.msra.mxu0 0.0
      %1029 = vmatpush.msra.mxu0 0.0
      %1030 = vmatpush.msra.mxu0 0.0
      %1031 = vmatpush.msra.mxu0 0.0
      %1032 = vmatpush.msra.mxu0 0.0
      %1033 = vmatpush.msra.mxu0 0.0
      %1034 = vmatpush.msra.mxu0 0.0
      %1035 = vmatpush.msra.mxu0 0.0
      %1036 = vmatpush.msra.mxu0 0.0
      %1037 = vmatpush.msra.mxu0 0.0
      %1038 = vmatpush.msra.mxu0 0.0
      %1039 = vmatpush.msra.mxu0 0.0
      %1040 = vmatpush.msra.mxu0 0.0
      %1041 = vmatpush.msra.mxu0 0.0
      %1042 = vmatpush.msra.mxu0 %v1002
      %1043 = vmatmul.f32.gmra.mxu0 %v1004
      %v1044 = vpop.f32.mrf.mxu0
      %v1045 = vadd.f32 0.0, %v1044
      %1046 = vmatmul.f32.gmra.mxu0 %v1007
      %v1047 = vpop.f32.mrf.mxu0
      %v1048 = vadd.f32 0.0, %v1047
      %1049 = vmatmul.f32.gmra.mxu0 %v1010
      %v1050 = vpop.f32.mrf.mxu0
      %v1051 = vadd.f32 0.0, %v1050
      %1052 = vmatmul.f32.gmra.mxu0 %v1013
      %v1053 = vpop.f32.mrf.mxu0
      %v1054 = vadd.f32 0.0, %v1053
      %1055 = vmatmul.f32.gmra.mxu0 %v1016
      %v1056 = vpop.f32.mrf.mxu0
      %v1057 = vadd.f32 0.0, %v1056
      %1058 = vmatmul.f32.gmra.mxu0 %v1019
      %v1059 = vpop.f32.mrf.mxu0
      %v1060 = vadd.f32 0.0, %v1059
      %1061 = vmatmul.f32.gmra.mxu0 %v1022
      %v1062 = vpop.f32.mrf.mxu0
      %v1063 = vadd.f32 0.0, %v1062
      %1064 = vmatmul.f32.gmra.mxu0 %v1025
      %v1065 = vpop.f32.mrf.mxu0
      %v1066 = vadd.f32 0.0, %v1065
      %1067 = vdwg.mxu0
      %v1068 = vadd.f32 %v985, %v1045
      %v1069 = vadd.f32 %v986, %v1048
      %v1070 = vadd.f32 %v987, %v1051
      %v1071 = vadd.f32 %v988, %v1054
      %v1072 = vadd.f32 %v989, %v1057
      %v1073 = vadd.f32 %v990, %v1060
      %v1074 = vadd.f32 %v991, %v1063
      %v1075 = vadd.f32 %v992, %v1066
      %v1076 = vld [vmem:[%s909 + $0x2] sm:$0xff]
      %v1077 = vld [vmem:[%s909 + $0x12] sm:$0xff]
      %v1078 = vld [vmem:[%s909 + $0x22] sm:$0xff]
      %v1079 = vld [vmem:[%s909 + $0x32] sm:$0xff]
      %v1080 = vld [vmem:[%s909 + $0x42] sm:$0xff]
      %v1081 = vld [vmem:[%s909 + $0x52] sm:$0xff]
      %v1082 = vld [vmem:[%s909 + $0x62] sm:$0xff]
      %v1083 = vld [vmem:[%s909 + $0x72] sm:$0xff]
      %s1084 = scalar_lea.vmem %s3, 56
      %v1085 = vld [vmem:[%s1084] sm:$0xff]
      %v1087 = vsel %vm455, %v1076, 0
      %v1090 = vsel %vm455, %v1077, 0
      %v1093 = vsel %vm455, %v1078, 0
      %v1096 = vsel %vm455, %v1079, 0
      %v1099 = vsel %vm455, %v1080, 0
      %v1102 = vsel %vm455, %v1081, 0
      %v1105 = vsel %vm455, %v1082, 0
      %v1108 = vsel %vm455, %v1083, 0
      %1110 = vmatpush.msra.mxu0 0.0
      %1111 = vmatpush.msra.mxu0 0.0
      %1112 = vmatpush.msra.mxu0 0.0
      %1113 = vmatpush.msra.mxu0 0.0
      %1114 = vmatpush.msra.mxu0 0.0
      %1115 = vmatpush.msra.mxu0 0.0
      %1116 = vmatpush.msra.mxu0 0.0
      %1117 = vmatpush.msra.mxu0 0.0
      %1118 = vmatpush.msra.mxu0 0.0
      %1119 = vmatpush.msra.mxu0 0.0
      %1120 = vmatpush.msra.mxu0 0.0
      %1121 = vmatpush.msra.mxu0 0.0
      %1122 = vmatpush.msra.mxu0 0.0
      %1123 = vmatpush.msra.mxu0 0.0
      %1124 = vmatpush.msra.mxu0 0.0
      %1125 = vmatpush.msra.mxu0 %v1085
      %1126 = vmatmul.f32.gmra.mxu0 %v1087
      %v1127 = vpop.f32.mrf.mxu0
      %v1128 = vadd.f32 0.0, %v1127
      %1129 = vmatmul.f32.gmra.mxu0 %v1090
      %v1130 = vpop.f32.mrf.mxu0
      %v1131 = vadd.f32 0.0, %v1130
      %1132 = vmatmul.f32.gmra.mxu0 %v1093
      %v1133 = vpop.f32.mrf.mxu0
      %v1134 = vadd.f32 0.0, %v1133
      %1135 = vmatmul.f32.gmra.mxu0 %v1096
      %v1136 = vpop.f32.mrf.mxu0
      %v1137 = vadd.f32 0.0, %v1136
      %1138 = vmatmul.f32.gmra.mxu0 %v1099
      %v1139 = vpop.f32.mrf.mxu0
      %v1140 = vadd.f32 0.0, %v1139
      %1141 = vmatmul.f32.gmra.mxu0 %v1102
      %v1142 = vpop.f32.mrf.mxu0
      %v1143 = vadd.f32 0.0, %v1142
      %1144 = vmatmul.f32.gmra.mxu0 %v1105
      %v1145 = vpop.f32.mrf.mxu0
      %v1146 = vadd.f32 0.0, %v1145
      %1147 = vmatmul.f32.gmra.mxu0 %v1108
      %v1148 = vpop.f32.mrf.mxu0
      %v1149 = vadd.f32 0.0, %v1148
      %1150 = vdwg.mxu0
      %v1151 = vadd.f32 %v1068, %v1128
      %v1152 = vadd.f32 %v1069, %v1131
      %v1153 = vadd.f32 %v1070, %v1134
      %v1154 = vadd.f32 %v1071, %v1137
      %v1155 = vadd.f32 %v1072, %v1140
      %v1156 = vadd.f32 %v1073, %v1143
      %v1157 = vadd.f32 %v1074, %v1146
      %v1158 = vadd.f32 %v1075, %v1149
      %v1159 = vld [vmem:[%s909 + $0x3] sm:$0xff]
      %v1160 = vld [vmem:[%s909 + $0x13] sm:$0xff]
      %v1161 = vld [vmem:[%s909 + $0x23] sm:$0xff]
      %v1162 = vld [vmem:[%s909 + $0x33] sm:$0xff]
      %v1163 = vld [vmem:[%s909 + $0x43] sm:$0xff]
      %v1164 = vld [vmem:[%s909 + $0x53] sm:$0xff]
      %v1165 = vld [vmem:[%s909 + $0x63] sm:$0xff]
      %v1166 = vld [vmem:[%s909 + $0x73] sm:$0xff]
      %s1167 = scalar_lea.vmem %s3, 64
      %v1168 = vld [vmem:[%s1167] sm:$0xff]
      %v1170 = vsel %vm455, %v1159, 0
      %v1173 = vsel %vm455, %v1160, 0
      %v1176 = vsel %vm455, %v1161, 0
      %v1179 = vsel %vm455, %v1162, 0
      %v1182 = vsel %vm455, %v1163, 0
      %v1185 = vsel %vm455, %v1164, 0
      %v1188 = vsel %vm455, %v1165, 0
      %v1191 = vsel %vm455, %v1166, 0
      %1193 = vmatpush.msra.mxu0 0.0
      %1194 = vmatpush.msra.mxu0 0.0
      %1195 = vmatpush.msra.mxu0 0.0
      %1196 = vmatpush.msra.mxu0 0.0
      %1197 = vmatpush.msra.mxu0 0.0
      %1198 = vmatpush.msra.mxu0 0.0
      %1199 = vmatpush.msra.mxu0 0.0
      %1200 = vmatpush.msra.mxu0 0.0
      %1201 = vmatpush.msra.mxu0 0.0
      %1202 = vmatpush.msra.mxu0 0.0
      %1203 = vmatpush.msra.mxu0 0.0
      %1204 = vmatpush.msra.mxu0 0.0
      %1205 = vmatpush.msra.mxu0 0.0
      %1206 = vmatpush.msra.mxu0 0.0
      %1207 = vmatpush.msra.mxu0 0.0
      %1208 = vmatpush.msra.mxu0 %v1168
      %1209 = vmatmul.f32.gmra.mxu0 %v1170
      %v1210 = vpop.f32.mrf.mxu0
      %v1211 = vadd.f32 0.0, %v1210
      %1212 = vmatmul.f32.gmra.mxu0 %v1173
      %v1213 = vpop.f32.mrf.mxu0
      %v1214 = vadd.f32 0.0, %v1213
      %1215 = vmatmul.f32.gmra.mxu0 %v1176
      %v1216 = vpop.f32.mrf.mxu0
      %v1217 = vadd.f32 0.0, %v1216
      %1218 = vmatmul.f32.gmra.mxu0 %v1179
      %v1219 = vpop.f32.mrf.mxu0
      %v1220 = vadd.f32 0.0, %v1219
      %1221 = vmatmul.f32.gmra.mxu0 %v1182
      %v1222 = vpop.f32.mrf.mxu0
      %v1223 = vadd.f32 0.0, %v1222
      %1224 = vmatmul.f32.gmra.mxu0 %v1185
      %v1225 = vpop.f32.mrf.mxu0
      %v1226 = vadd.f32 0.0, %v1225
      %1227 = vmatmul.f32.gmra.mxu0 %v1188
      %v1228 = vpop.f32.mrf.mxu0
      %v1229 = vadd.f32 0.0, %v1228
      %1230 = vmatmul.f32.gmra.mxu0 %v1191
      %v1231 = vpop.f32.mrf.mxu0
      %v1232 = vadd.f32 0.0, %v1231
      %1233 = vdwg.mxu0
      %v1234 = vadd.f32 %v1151, %v1211
      %v1235 = vadd.f32 %v1152, %v1214
      %v1236 = vadd.f32 %v1153, %v1217
      %v1237 = vadd.f32 %v1154, %v1220
      %v1238 = vadd.f32 %v1155, %v1223
      %v1239 = vadd.f32 %v1156, %v1226
      %v1240 = vadd.f32 %v1157, %v1229
      %v1241 = vadd.f32 %v1158, %v1232
      %v1242 = vld [vmem:[%s909 + $0x4] sm:$0xff]
      %v1243 = vld [vmem:[%s909 + $0x14] sm:$0xff]
      %v1244 = vld [vmem:[%s909 + $0x24] sm:$0xff]
      %v1245 = vld [vmem:[%s909 + $0x34] sm:$0xff]
      %v1246 = vld [vmem:[%s909 + $0x44] sm:$0xff]
      %v1247 = vld [vmem:[%s909 + $0x54] sm:$0xff]
      %v1248 = vld [vmem:[%s909 + $0x64] sm:$0xff]
      %v1249 = vld [vmem:[%s909 + $0x74] sm:$0xff]
      %s1250 = scalar_lea.vmem %s3, 72
      %v1251 = vld [vmem:[%s1250] sm:$0xff]
      %v1253 = vsel %vm455, %v1242, 0
      %v1256 = vsel %vm455, %v1243, 0
      %v1259 = vsel %vm455, %v1244, 0
      %v1262 = vsel %vm455, %v1245, 0
      %v1265 = vsel %vm455, %v1246, 0
      %v1268 = vsel %vm455, %v1247, 0
      %v1271 = vsel %vm455, %v1248, 0
      %v1274 = vsel %vm455, %v1249, 0
      %1276 = vmatpush.msra.mxu0 0.0
      %1277 = vmatpush.msra.mxu0 0.0
      %1278 = vmatpush.msra.mxu0 0.0
      %1279 = vmatpush.msra.mxu0 0.0
      %1280 = vmatpush.msra.mxu0 0.0
      %1281 = vmatpush.msra.mxu0 0.0
      %1282 = vmatpush.msra.mxu0 0.0
      %1283 = vmatpush.msra.mxu0 0.0
      %1284 = vmatpush.msra.mxu0 0.0
      %1285 = vmatpush.msra.mxu0 0.0
      %1286 = vmatpush.msra.mxu0 0.0
      %1287 = vmatpush.msra.mxu0 0.0
      %1288 = vmatpush.msra.mxu0 0.0
      %1289 = vmatpush.msra.mxu0 0.0
      %1290 = vmatpush.msra.mxu0 0.0
      %1291 = vmatpush.msra.mxu0 %v1251
      %1292 = vmatmul.f32.gmra.mxu0 %v1253
      %v1293 = vpop.f32.mrf.mxu0
      %v1294 = vadd.f32 0.0, %v1293
      %1295 = vmatmul.f32.gmra.mxu0 %v1256
      %v1296 = vpop.f32.mrf.mxu0
      %v1297 = vadd.f32 0.0, %v1296
      %1298 = vmatmul.f32.gmra.mxu0 %v1259
      %v1299 = vpop.f32.mrf.mxu0
      %v1300 = vadd.f32 0.0, %v1299
      %1301 = vmatmul.f32.gmra.mxu0 %v1262
      %v1302 = vpop.f32.mrf.mxu0
      %v1303 = vadd.f32 0.0, %v1302
      %1304 = vmatmul.f32.gmra.mxu0 %v1265
      %v1305 = vpop.f32.mrf.mxu0
      %v1306 = vadd.f32 0.0, %v1305
      %1307 = vmatmul.f32.gmra.mxu0 %v1268
      %v1308 = vpop.f32.mrf.mxu0
      %v1309 = vadd.f32 0.0, %v1308
      %1310 = vmatmul.f32.gmra.mxu0 %v1271
      %v1311 = vpop.f32.mrf.mxu0
      %v1312 = vadd.f32 0.0, %v1311
      %1313 = vmatmul.f32.gmra.mxu0 %v1274
      %v1314 = vpop.f32.mrf.mxu0
      %v1315 = vadd.f32 0.0, %v1314
      %1316 = vdwg.mxu0
      %v1317 = vadd.f32 %v1234, %v1294
      %v1318 = vadd.f32 %v1235, %v1297
      %v1319 = vadd.f32 %v1236, %v1300
      %v1320 = vadd.f32 %v1237, %v1303
      %v1321 = vadd.f32 %v1238, %v1306
      %v1322 = vadd.f32 %v1239, %v1309
      %v1323 = vadd.f32 %v1240, %v1312
      %v1324 = vadd.f32 %v1241, %v1315
      %v1325 = vld [vmem:[%s481] sm:$0xff]
      %v1326 = vld [vmem:[%s481 + $0x10] sm:$0xff]
      %v1327 = vld [vmem:[%s481 + $0x20] sm:$0xff]
      %v1328 = vld [vmem:[%s481 + $0x30] sm:$0xff]
      %v1329 = vld [vmem:[%s481 + $0x40] sm:$0xff]
      %v1330 = vld [vmem:[%s481 + $0x50] sm:$0xff]
      %v1331 = vld [vmem:[%s481 + $0x60] sm:$0xff]
      %v1332 = vld [vmem:[%s481 + $0x70] sm:$0xff]
      %s1333 = scalar_lea.vmem %s3, 80
      %v1334 = vld [vmem:[%s1333] sm:$0xff]
      %v1336 = vsel %vm455, %v1325, 0
      %v1339 = vsel %vm455, %v1326, 0
      %v1342 = vsel %vm455, %v1327, 0
      %v1345 = vsel %vm455, %v1328, 0
      %v1348 = vsel %vm455, %v1329, 0
      %v1351 = vsel %vm455, %v1330, 0
      %v1354 = vsel %vm455, %v1331, 0
      %v1357 = vsel %vm455, %v1332, 0
      %1359 = vmatpush.msra.mxu0 0.0
      %1360 = vmatpush.msra.mxu0 0.0
      %1361 = vmatpush.msra.mxu0 0.0
      %1362 = vmatpush.msra.mxu0 0.0
      %1363 = vmatpush.msra.mxu0 0.0
      %1364 = vmatpush.msra.mxu0 0.0
      %1365 = vmatpush.msra.mxu0 0.0
      %1366 = vmatpush.msra.mxu0 0.0
      %1367 = vmatpush.msra.mxu0 0.0
      %1368 = vmatpush.msra.mxu0 0.0
      %1369 = vmatpush.msra.mxu0 0.0
      %1370 = vmatpush.msra.mxu0 0.0
      %1371 = vmatpush.msra.mxu0 0.0
      %1372 = vmatpush.msra.mxu0 0.0
      %1373 = vmatpush.msra.mxu0 0.0
      %1374 = vmatpush.msra.mxu0 %v1334
      %1375 = vmatmul.f32.gmra.mxu0 %v1336
      %v1376 = vpop.f32.mrf.mxu0
      %v1377 = vadd.f32 0.0, %v1376
      %1378 = vmatmul.f32.gmra.mxu0 %v1339
      %v1379 = vpop.f32.mrf.mxu0
      %v1380 = vadd.f32 0.0, %v1379
      %1381 = vmatmul.f32.gmra.mxu0 %v1342
      %v1382 = vpop.f32.mrf.mxu0
      %v1383 = vadd.f32 0.0, %v1382
      %1384 = vmatmul.f32.gmra.mxu0 %v1345
      %v1385 = vpop.f32.mrf.mxu0
      %v1386 = vadd.f32 0.0, %v1385
      %1387 = vmatmul.f32.gmra.mxu0 %v1348
      %v1388 = vpop.f32.mrf.mxu0
      %v1389 = vadd.f32 0.0, %v1388
      %1390 = vmatmul.f32.gmra.mxu0 %v1351
      %v1391 = vpop.f32.mrf.mxu0
      %v1392 = vadd.f32 0.0, %v1391
      %1393 = vmatmul.f32.gmra.mxu0 %v1354
      %v1394 = vpop.f32.mrf.mxu0
      %v1395 = vadd.f32 0.0, %v1394
      %1396 = vmatmul.f32.gmra.mxu0 %v1357
      %v1397 = vpop.f32.mrf.mxu0
      %v1398 = vadd.f32 0.0, %v1397
      %1399 = vdwg.mxu0
      %v1400 = vadd.f32 %v1317, %v1377
      %v1401 = vadd.f32 %v1318, %v1380
      %v1402 = vadd.f32 %v1319, %v1383
      %v1403 = vadd.f32 %v1320, %v1386
      %v1404 = vadd.f32 %v1321, %v1389
      %v1405 = vadd.f32 %v1322, %v1392
      %v1406 = vadd.f32 %v1323, %v1395
      %v1407 = vadd.f32 %v1324, %v1398
      %v1408 = vld [vmem:[%s481 + $0x1] sm:$0xff]
      %v1409 = vld [vmem:[%s481 + $0x11] sm:$0xff]
      %v1410 = vld [vmem:[%s481 + $0x21] sm:$0xff]
      %v1411 = vld [vmem:[%s481 + $0x31] sm:$0xff]
      %v1412 = vld [vmem:[%s481 + $0x41] sm:$0xff]
      %v1413 = vld [vmem:[%s481 + $0x51] sm:$0xff]
      %v1414 = vld [vmem:[%s481 + $0x61] sm:$0xff]
      %v1415 = vld [vmem:[%s481 + $0x71] sm:$0xff]
      %s1416 = scalar_lea.vmem %s3, 88
      %v1417 = vld [vmem:[%s1416] sm:$0xff]
      %v1419 = vsel %vm455, %v1408, 0
      %v1422 = vsel %vm455, %v1409, 0
      %v1425 = vsel %vm455, %v1410, 0
      %v1428 = vsel %vm455, %v1411, 0
      %v1431 = vsel %vm455, %v1412, 0
      %v1434 = vsel %vm455, %v1413, 0
      %v1437 = vsel %vm455, %v1414, 0
      %v1440 = vsel %vm455, %v1415, 0
      %1442 = vmatpush.msra.mxu0 0.0
      %1443 = vmatpush.msra.mxu0 0.0
      %1444 = vmatpush.msra.mxu0 0.0
      %1445 = vmatpush.msra.mxu0 0.0
      %1446 = vmatpush.msra.mxu0 0.0
      %1447 = vmatpush.msra.mxu0 0.0
      %1448 = vmatpush.msra.mxu0 0.0
      %1449 = vmatpush.msra.mxu0 0.0
      %1450 = vmatpush.msra.mxu0 0.0
      %1451 = vmatpush.msra.mxu0 0.0
      %1452 = vmatpush.msra.mxu0 0.0
      %1453 = vmatpush.msra.mxu0 0.0
      %1454 = vmatpush.msra.mxu0 0.0
      %1455 = vmatpush.msra.mxu0 0.0
      %1456 = vmatpush.msra.mxu0 0.0
      %1457 = vmatpush.msra.mxu0 %v1417
      %1458 = vmatmul.f32.gmra.mxu0 %v1419
      %v1459 = vpop.f32.mrf.mxu0
      %v1460 = vadd.f32 0.0, %v1459
      %1461 = vmatmul.f32.gmra.mxu0 %v1422
      %v1462 = vpop.f32.mrf.mxu0
      %v1463 = vadd.f32 0.0, %v1462
      %1464 = vmatmul.f32.gmra.mxu0 %v1425
      %v1465 = vpop.f32.mrf.mxu0
      %v1466 = vadd.f32 0.0, %v1465
      %1467 = vmatmul.f32.gmra.mxu0 %v1428
      %v1468 = vpop.f32.mrf.mxu0
      %v1469 = vadd.f32 0.0, %v1468
      %1470 = vmatmul.f32.gmra.mxu0 %v1431
      %v1471 = vpop.f32.mrf.mxu0
      %v1472 = vadd.f32 0.0, %v1471
      %1473 = vmatmul.f32.gmra.mxu0 %v1434
      %v1474 = vpop.f32.mrf.mxu0
      %v1475 = vadd.f32 0.0, %v1474
      %1476 = vmatmul.f32.gmra.mxu0 %v1437
      %v1477 = vpop.f32.mrf.mxu0
      %v1478 = vadd.f32 0.0, %v1477
      %1479 = vmatmul.f32.gmra.mxu0 %v1440
      %v1480 = vpop.f32.mrf.mxu0
      %v1481 = vadd.f32 0.0, %v1480
      %1482 = vdwg.mxu0
      %v1483 = vadd.f32 %v1400, %v1460
      %v1484 = vadd.f32 %v1401, %v1463
      %v1485 = vadd.f32 %v1402, %v1466
      %v1486 = vadd.f32 %v1403, %v1469
      %v1487 = vadd.f32 %v1404, %v1472
      %v1488 = vadd.f32 %v1405, %v1475
      %v1489 = vadd.f32 %v1406, %v1478
      %v1490 = vadd.f32 %v1407, %v1481
      %v1491 = vld [vmem:[%s481 + $0x2] sm:$0xff]
      %v1492 = vld [vmem:[%s481 + $0x12] sm:$0xff]
      %v1493 = vld [vmem:[%s481 + $0x22] sm:$0xff]
      %v1494 = vld [vmem:[%s481 + $0x32] sm:$0xff]
      %v1495 = vld [vmem:[%s481 + $0x42] sm:$0xff]
      %v1496 = vld [vmem:[%s481 + $0x52] sm:$0xff]
      %v1497 = vld [vmem:[%s481 + $0x62] sm:$0xff]
      %v1498 = vld [vmem:[%s481 + $0x72] sm:$0xff]
      %s1499 = scalar_lea.vmem %s3, 96
      %v1500 = vld [vmem:[%s1499] sm:$0xff]
      %v1502 = vsel %vm455, %v1491, 0
      %v1505 = vsel %vm455, %v1492, 0
      %v1508 = vsel %vm455, %v1493, 0
      %v1511 = vsel %vm455, %v1494, 0
      %v1514 = vsel %vm455, %v1495, 0
      %v1517 = vsel %vm455, %v1496, 0
      %v1520 = vsel %vm455, %v1497, 0
      %v1523 = vsel %vm455, %v1498, 0
      %1525 = vmatpush.msra.mxu0 0.0
      %1526 = vmatpush.msra.mxu0 0.0
      %1527 = vmatpush.msra.mxu0 0.0
      %1528 = vmatpush.msra.mxu0 0.0
      %1529 = vmatpush.msra.mxu0 0.0
      %1530 = vmatpush.msra.mxu0 0.0
      %1531 = vmatpush.msra.mxu0 0.0
      %1532 = vmatpush.msra.mxu0 0.0
      %1533 = vmatpush.msra.mxu0 0.0
      %1534 = vmatpush.msra.mxu0 0.0
      %1535 = vmatpush.msra.mxu0 0.0
      %1536 = vmatpush.msra.mxu0 0.0
      %1537 = vmatpush.msra.mxu0 0.0
      %1538 = vmatpush.msra.mxu0 0.0
      %1539 = vmatpush.msra.mxu0 0.0
      %1540 = vmatpush.msra.mxu0 %v1500
      %1541 = vmatmul.f32.gmra.mxu0 %v1502
      %v1542 = vpop.f32.mrf.mxu0
      %v1543 = vadd.f32 0.0, %v1542
      %1544 = vmatmul.f32.gmra.mxu0 %v1505
      %v1545 = vpop.f32.mrf.mxu0
      %v1546 = vadd.f32 0.0, %v1545
      %1547 = vmatmul.f32.gmra.mxu0 %v1508
      %v1548 = vpop.f32.mrf.mxu0
      %v1549 = vadd.f32 0.0, %v1548
      %1550 = vmatmul.f32.gmra.mxu0 %v1511
      %v1551 = vpop.f32.mrf.mxu0
      %v1552 = vadd.f32 0.0, %v1551
      %1553 = vmatmul.f32.gmra.mxu0 %v1514
      %v1554 = vpop.f32.mrf.mxu0
      %v1555 = vadd.f32 0.0, %v1554
      %1556 = vmatmul.f32.gmra.mxu0 %v1517
      %v1557 = vpop.f32.mrf.mxu0
      %v1558 = vadd.f32 0.0, %v1557
      %1559 = vmatmul.f32.gmra.mxu0 %v1520
      %v1560 = vpop.f32.mrf.mxu0
      %v1561 = vadd.f32 0.0, %v1560
      %1562 = vmatmul.f32.gmra.mxu0 %v1523
      %v1563 = vpop.f32.mrf.mxu0
      %v1564 = vadd.f32 0.0, %v1563
      %1565 = vdwg.mxu0
      %v1566 = vadd.f32 %v1483, %v1543
      %v1567 = vadd.f32 %v1484, %v1546
      %v1568 = vadd.f32 %v1485, %v1549
      %v1569 = vadd.f32 %v1486, %v1552
      %v1570 = vadd.f32 %v1487, %v1555
      %v1571 = vadd.f32 %v1488, %v1558
      %v1572 = vadd.f32 %v1489, %v1561
      %v1573 = vadd.f32 %v1490, %v1564
      %v1574 = vld [vmem:[%s481 + $0x3] sm:$0xff]
      %v1575 = vld [vmem:[%s481 + $0x13] sm:$0xff]
      %v1576 = vld [vmem:[%s481 + $0x23] sm:$0xff]
      %v1577 = vld [vmem:[%s481 + $0x33] sm:$0xff]
      %v1578 = vld [vmem:[%s481 + $0x43] sm:$0xff]
      %v1579 = vld [vmem:[%s481 + $0x53] sm:$0xff]
      %v1580 = vld [vmem:[%s481 + $0x63] sm:$0xff]
      %v1581 = vld [vmem:[%s481 + $0x73] sm:$0xff]
      %s1582 = scalar_lea.vmem %s3, 104
      %v1583 = vld [vmem:[%s1582] sm:$0xff]
      %v1585 = vsel %vm455, %v1574, 0
      %v1588 = vsel %vm455, %v1575, 0
      %v1591 = vsel %vm455, %v1576, 0
      %v1594 = vsel %vm455, %v1577, 0
      %v1597 = vsel %vm455, %v1578, 0
      %v1600 = vsel %vm455, %v1579, 0
      %v1603 = vsel %vm455, %v1580, 0
      %v1606 = vsel %vm455, %v1581, 0
      %1608 = vmatpush.msra.mxu0 0.0
      %1609 = vmatpush.msra.mxu0 0.0
      %1610 = vmatpush.msra.mxu0 0.0
      %1611 = vmatpush.msra.mxu0 0.0
      %1612 = vmatpush.msra.mxu0 0.0
      %1613 = vmatpush.msra.mxu0 0.0
      %1614 = vmatpush.msra.mxu0 0.0
      %1615 = vmatpush.msra.mxu0 0.0
      %1616 = vmatpush.msra.mxu0 0.0
      %1617 = vmatpush.msra.mxu0 0.0
      %1618 = vmatpush.msra.mxu0 0.0
      %1619 = vmatpush.msra.mxu0 0.0
      %1620 = vmatpush.msra.mxu0 0.0
      %1621 = vmatpush.msra.mxu0 0.0
      %1622 = vmatpush.msra.mxu0 0.0
      %1623 = vmatpush.msra.mxu0 %v1583
      %1624 = vmatmul.f32.gmra.mxu0 %v1585
      %v1625 = vpop.f32.mrf.mxu0
      %v1626 = vadd.f32 0.0, %v1625
      %1627 = vmatmul.f32.gmra.mxu0 %v1588
      %v1628 = vpop.f32.mrf.mxu0
      %v1629 = vadd.f32 0.0, %v1628
      %1630 = vmatmul.f32.gmra.mxu0 %v1591
      %v1631 = vpop.f32.mrf.mxu0
      %v1632 = vadd.f32 0.0, %v1631
      %1633 = vmatmul.f32.gmra.mxu0 %v1594
      %v1634 = vpop.f32.mrf.mxu0
      %v1635 = vadd.f32 0.0, %v1634
      %1636 = vmatmul.f32.gmra.mxu0 %v1597
      %v1637 = vpop.f32.mrf.mxu0
      %v1638 = vadd.f32 0.0, %v1637
      %1639 = vmatmul.f32.gmra.mxu0 %v1600
      %v1640 = vpop.f32.mrf.mxu0
      %v1641 = vadd.f32 0.0, %v1640
      %1642 = vmatmul.f32.gmra.mxu0 %v1603
      %v1643 = vpop.f32.mrf.mxu0
      %v1644 = vadd.f32 0.0, %v1643
      %1645 = vmatmul.f32.gmra.mxu0 %v1606
      %v1646 = vpop.f32.mrf.mxu0
      %v1647 = vadd.f32 0.0, %v1646
      %1648 = vdwg.mxu0
      %v1649 = vadd.f32 %v1566, %v1626
      %v1650 = vadd.f32 %v1567, %v1629
      %v1651 = vadd.f32 %v1568, %v1632
      %v1652 = vadd.f32 %v1569, %v1635
      %v1653 = vadd.f32 %v1570, %v1638
      %v1654 = vadd.f32 %v1571, %v1641
      %v1655 = vadd.f32 %v1572, %v1644
      %v1656 = vadd.f32 %v1573, %v1647
      %v1657 = vld [vmem:[%s481 + $0x4] sm:$0xff]
      %v1658 = vld [vmem:[%s481 + $0x14] sm:$0xff]
      %v1659 = vld [vmem:[%s481 + $0x24] sm:$0xff]
      %v1660 = vld [vmem:[%s481 + $0x34] sm:$0xff]
      %v1661 = vld [vmem:[%s481 + $0x44] sm:$0xff]
      %v1662 = vld [vmem:[%s481 + $0x54] sm:$0xff]
      %v1663 = vld [vmem:[%s481 + $0x64] sm:$0xff]
      %v1664 = vld [vmem:[%s481 + $0x74] sm:$0xff]
      %s1665 = scalar_lea.vmem %s3, 112
      %v1666 = vld [vmem:[%s1665] sm:$0xff]
      %v1668 = vsel %vm455, %v1657, 0
      %v1671 = vsel %vm455, %v1658, 0
      %v1674 = vsel %vm455, %v1659, 0
      %v1677 = vsel %vm455, %v1660, 0
      %v1680 = vsel %vm455, %v1661, 0
      %v1683 = vsel %vm455, %v1662, 0
      %v1686 = vsel %vm455, %v1663, 0
      %v1689 = vsel %vm455, %v1664, 0
      %1691 = vmatpush.msra.mxu0 0.0
      %1692 = vmatpush.msra.mxu0 0.0
      %1693 = vmatpush.msra.mxu0 0.0
      %1694 = vmatpush.msra.mxu0 0.0
      %1695 = vmatpush.msra.mxu0 0.0
      %1696 = vmatpush.msra.mxu0 0.0
      %1697 = vmatpush.msra.mxu0 0.0
      %1698 = vmatpush.msra.mxu0 0.0
      %1699 = vmatpush.msra.mxu0 0.0
      %1700 = vmatpush.msra.mxu0 0.0
      %1701 = vmatpush.msra.mxu0 0.0
      %1702 = vmatpush.msra.mxu0 0.0
      %1703 = vmatpush.msra.mxu0 0.0
      %1704 = vmatpush.msra.mxu0 0.0
      %1705 = vmatpush.msra.mxu0 0.0
      %1706 = vmatpush.msra.mxu0 %v1666
      %1707 = vmatmul.f32.gmra.mxu0 %v1668
      %v1708 = vpop.f32.mrf.mxu0
      %v1709 = vadd.f32 0.0, %v1708
      %1710 = vmatmul.f32.gmra.mxu0 %v1671
      %v1711 = vpop.f32.mrf.mxu0
      %v1712 = vadd.f32 0.0, %v1711
      %1713 = vmatmul.f32.gmra.mxu0 %v1674
      %v1714 = vpop.f32.mrf.mxu0
      %v1715 = vadd.f32 0.0, %v1714
      %1716 = vmatmul.f32.gmra.mxu0 %v1677
      %v1717 = vpop.f32.mrf.mxu0
      %v1718 = vadd.f32 0.0, %v1717
      %1719 = vmatmul.f32.gmra.mxu0 %v1680
      %v1720 = vpop.f32.mrf.mxu0
      %v1721 = vadd.f32 0.0, %v1720
      %1722 = vmatmul.f32.gmra.mxu0 %v1683
      %v1723 = vpop.f32.mrf.mxu0
      %v1724 = vadd.f32 0.0, %v1723
      %1725 = vmatmul.f32.gmra.mxu0 %v1686
      %v1726 = vpop.f32.mrf.mxu0
      %v1727 = vadd.f32 0.0, %v1726
      %1728 = vmatmul.f32.gmra.mxu0 %v1689
      %v1729 = vpop.f32.mrf.mxu0
      %v1730 = vadd.f32 0.0, %v1729
      %1731 = vdwg.mxu0
      %v1732 = vadd.f32 %v1649, %v1709
      %v1733 = vadd.f32 %v1650, %v1712
      %v1734 = vadd.f32 %v1651, %v1715
      %v1735 = vadd.f32 %v1652, %v1718
      %v1736 = vadd.f32 %v1653, %v1721
      %v1737 = vadd.f32 %v1654, %v1724
      %v1738 = vadd.f32 %v1655, %v1727
      %v1739 = vadd.f32 %v1656, %v1730
      %s1740 = scalar_lea.vmem [#allocation2], 48
      %v1741 = vld [vmem:[%s1740] sm:$0xff]
      %v1742 = vld [vmem:[%s1740 + $0x10] sm:$0xff]
      %v1743 = vld [vmem:[%s1740 + $0x20] sm:$0xff]
      %v1744 = vld [vmem:[%s1740 + $0x30] sm:$0xff]
      %v1745 = vld [vmem:[%s1740 + $0x40] sm:$0xff]
      %v1746 = vld [vmem:[%s1740 + $0x50] sm:$0xff]
      %v1747 = vld [vmem:[%s1740 + $0x60] sm:$0xff]
      %v1748 = vld [vmem:[%s1740 + $0x70] sm:$0xff]
      %s1749 = scalar_lea.vmem %s3, 120
      %v1750 = vld [vmem:[%s1749] sm:$0xff]
      %v1752 = vsel %vm455, %v1741, 0
      %v1755 = vsel %vm455, %v1742, 0
      %v1758 = vsel %vm455, %v1743, 0
      %v1761 = vsel %vm455, %v1744, 0
      %v1764 = vsel %vm455, %v1745, 0
      %v1767 = vsel %vm455, %v1746, 0
      %v1770 = vsel %vm455, %v1747, 0
      %v1773 = vsel %vm455, %v1748, 0
      %1775 = vmatpush.msra.mxu0 0.0
      %1776 = vmatpush.msra.mxu0 0.0
      %1777 = vmatpush.msra.mxu0 0.0
      %1778 = vmatpush.msra.mxu0 0.0
      %1779 = vmatpush.msra.mxu0 0.0
      %1780 = vmatpush.msra.mxu0 0.0
      %1781 = vmatpush.msra.mxu0 0.0
      %1782 = vmatpush.msra.mxu0 0.0
      %1783 = vmatpush.msra.mxu0 0.0
      %1784 = vmatpush.msra.mxu0 0.0
      %1785 = vmatpush.msra.mxu0 0.0
      %1786 = vmatpush.msra.mxu0 0.0
      %1787 = vmatpush.msra.mxu0 0.0
      %1788 = vmatpush.msra.mxu0 0.0
      %1789 = vmatpush.msra.mxu0 0.0
      %1790 = vmatpush.msra.mxu0 %v1750
      %1791 = vmatmul.f32.gmra.mxu0 %v1752
      %v1792 = vpop.f32.mrf.mxu0
      %v1793 = vadd.f32 0.0, %v1792
      %1794 = vmatmul.f32.gmra.mxu0 %v1755
      %v1795 = vpop.f32.mrf.mxu0
      %v1796 = vadd.f32 0.0, %v1795
      %1797 = vmatmul.f32.gmra.mxu0 %v1758
      %v1798 = vpop.f32.mrf.mxu0
      %v1799 = vadd.f32 0.0, %v1798
      %1800 = vmatmul.f32.gmra.mxu0 %v1761
      %v1801 = vpop.f32.mrf.mxu0
      %v1802 = vadd.f32 0.0, %v1801
      %1803 = vmatmul.f32.gmra.mxu0 %v1764
      %v1804 = vpop.f32.mrf.mxu0
      %v1805 = vadd.f32 0.0, %v1804
      %1806 = vmatmul.f32.gmra.mxu0 %v1767
      %v1807 = vpop.f32.mrf.mxu0
      %v1808 = vadd.f32 0.0, %v1807
      %1809 = vmatmul.f32.gmra.mxu0 %v1770
      %v1810 = vpop.f32.mrf.mxu0
      %v1811 = vadd.f32 0.0, %v1810
      %1812 = vmatmul.f32.gmra.mxu0 %v1773
      %v1813 = vpop.f32.mrf.mxu0
      %v1814 = vadd.f32 0.0, %v1813
      %1815 = vdwg.mxu0
      %v1816 = vadd.f32 %v1732, %v1793
      %v1817 = vadd.f32 %v1733, %v1796
      %v1818 = vadd.f32 %v1734, %v1799
      %v1819 = vadd.f32 %v1735, %v1802
      %v1820 = vadd.f32 %v1736, %v1805
      %v1821 = vadd.f32 %v1737, %v1808
      %v1822 = vadd.f32 %v1738, %v1811
      %v1823 = vadd.f32 %v1739, %v1814
      %v1824 = vld [vmem:[%s1740 + $0x1] sm:$0xff]
      %v1825 = vld [vmem:[%s1740 + $0x11] sm:$0xff]
      %v1826 = vld [vmem:[%s1740 + $0x21] sm:$0xff]
      %v1827 = vld [vmem:[%s1740 + $0x31] sm:$0xff]
      %v1828 = vld [vmem:[%s1740 + $0x41] sm:$0xff]
      %v1829 = vld [vmem:[%s1740 + $0x51] sm:$0xff]
      %v1830 = vld [vmem:[%s1740 + $0x61] sm:$0xff]
      %v1831 = vld [vmem:[%s1740 + $0x71] sm:$0xff]
      %s1832 = scalar_lea.vmem %s3, 128
      %v1833 = vld [vmem:[%s1832] sm:$0xff]
      %v1835 = vsel %vm455, %v1824, 0
      %v1838 = vsel %vm455, %v1825, 0
      %v1841 = vsel %vm455, %v1826, 0
      %v1844 = vsel %vm455, %v1827, 0
      %v1847 = vsel %vm455, %v1828, 0
      %v1850 = vsel %vm455, %v1829, 0
      %v1853 = vsel %vm455, %v1830, 0
      %v1856 = vsel %vm455, %v1831, 0
      %1858 = vmatpush.msra.mxu0 0.0
      %1859 = vmatpush.msra.mxu0 0.0
      %1860 = vmatpush.msra.mxu0 0.0
      %1861 = vmatpush.msra.mxu0 0.0
      %1862 = vmatpush.msra.mxu0 0.0
      %1863 = vmatpush.msra.mxu0 0.0
      %1864 = vmatpush.msra.mxu0 0.0
      %1865 = vmatpush.msra.mxu0 0.0
      %1866 = vmatpush.msra.mxu0 0.0
      %1867 = vmatpush.msra.mxu0 0.0
      %1868 = vmatpush.msra.mxu0 0.0
      %1869 = vmatpush.msra.mxu0 0.0
      %1870 = vmatpush.msra.mxu0 0.0
      %1871 = vmatpush.msra.mxu0 0.0
      %1872 = vmatpush.msra.mxu0 0.0
      %1873 = vmatpush.msra.mxu0 %v1833
      %1874 = vmatmul.f32.gmra.mxu0 %v1835
      %v1875 = vpop.f32.mrf.mxu0
      %v1876 = vadd.f32 0.0, %v1875
      %1877 = vmatmul.f32.gmra.mxu0 %v1838
      %v1878 = vpop.f32.mrf.mxu0
      %v1879 = vadd.f32 0.0, %v1878
      %1880 = vmatmul.f32.gmra.mxu0 %v1841
      %v1881 = vpop.f32.mrf.mxu0
      %v1882 = vadd.f32 0.0, %v1881
      %1883 = vmatmul.f32.gmra.mxu0 %v1844
      %v1884 = vpop.f32.mrf.mxu0
      %v1885 = vadd.f32 0.0, %v1884
      %1886 = vmatmul.f32.gmra.mxu0 %v1847
      %v1887 = vpop.f32.mrf.mxu0
      %v1888 = vadd.f32 0.0, %v1887
      %1889 = vmatmul.f32.gmra.mxu0 %v1850
      %v1890 = vpop.f32.mrf.mxu0
      %v1891 = vadd.f32 0.0, %v1890
      %1892 = vmatmul.f32.gmra.mxu0 %v1853
      %v1893 = vpop.f32.mrf.mxu0
      %v1894 = vadd.f32 0.0, %v1893
      %1895 = vmatmul.f32.gmra.mxu0 %v1856
      %v1896 = vpop.f32.mrf.mxu0
      %v1897 = vadd.f32 0.0, %v1896
      %1898 = vdwg.mxu0
      %v1899 = vadd.f32 %v1816, %v1876
      %v1900 = vadd.f32 %v1817, %v1879
      %v1901 = vadd.f32 %v1818, %v1882
      %v1902 = vadd.f32 %v1819, %v1885
      %v1903 = vadd.f32 %v1820, %v1888
      %v1904 = vadd.f32 %v1821, %v1891
      %v1905 = vadd.f32 %v1822, %v1894
      %v1906 = vadd.f32 %v1823, %v1897
      %v1907 = vld [vmem:[%s1740 + $0x2] sm:$0xff]
      %v1908 = vld [vmem:[%s1740 + $0x12] sm:$0xff]
      %v1909 = vld [vmem:[%s1740 + $0x22] sm:$0xff]
      %v1910 = vld [vmem:[%s1740 + $0x32] sm:$0xff]
      %v1911 = vld [vmem:[%s1740 + $0x42] sm:$0xff]
      %v1912 = vld [vmem:[%s1740 + $0x52] sm:$0xff]
      %v1913 = vld [vmem:[%s1740 + $0x62] sm:$0xff]
      %v1914 = vld [vmem:[%s1740 + $0x72] sm:$0xff]
      %s1915 = scalar_lea.vmem %s3, 136
      %v1916 = vld [vmem:[%s1915] sm:$0xff]
      %v1918 = vsel %vm455, %v1907, 0
      %v1921 = vsel %vm455, %v1908, 0
      %v1924 = vsel %vm455, %v1909, 0
      %v1927 = vsel %vm455, %v1910, 0
      %v1930 = vsel %vm455, %v1911, 0
      %v1933 = vsel %vm455, %v1912, 0
      %v1936 = vsel %vm455, %v1913, 0
      %v1939 = vsel %vm455, %v1914, 0
      %1941 = vmatpush.msra.mxu0 0.0
      %1942 = vmatpush.msra.mxu0 0.0
      %1943 = vmatpush.msra.mxu0 0.0
      %1944 = vmatpush.msra.mxu0 0.0
      %1945 = vmatpush.msra.mxu0 0.0
      %1946 = vmatpush.msra.mxu0 0.0
      %1947 = vmatpush.msra.mxu0 0.0
      %1948 = vmatpush.msra.mxu0 0.0
      %1949 = vmatpush.msra.mxu0 0.0
      %1950 = vmatpush.msra.mxu0 0.0
      %1951 = vmatpush.msra.mxu0 0.0
      %1952 = vmatpush.msra.mxu0 0.0
      %1953 = vmatpush.msra.mxu0 0.0
      %1954 = vmatpush.msra.mxu0 0.0
      %1955 = vmatpush.msra.mxu0 0.0
      %1956 = vmatpush.msra.mxu0 %v1916
      %1957 = vmatmul.f32.gmra.mxu0 %v1918
      %v1958 = vpop.f32.mrf.mxu0
      %v1959 = vadd.f32 0.0, %v1958
      %1960 = vmatmul.f32.gmra.mxu0 %v1921
      %v1961 = vpop.f32.mrf.mxu0
      %v1962 = vadd.f32 0.0, %v1961
      %1963 = vmatmul.f32.gmra.mxu0 %v1924
      %v1964 = vpop.f32.mrf.mxu0
      %v1965 = vadd.f32 0.0, %v1964
      %1966 = vmatmul.f32.gmra.mxu0 %v1927
      %v1967 = vpop.f32.mrf.mxu0
      %v1968 = vadd.f32 0.0, %v1967
      %1969 = vmatmul.f32.gmra.mxu0 %v1930
      %v1970 = vpop.f32.mrf.mxu0
      %v1971 = vadd.f32 0.0, %v1970
      %1972 = vmatmul.f32.gmra.mxu0 %v1933
      %v1973 = vpop.f32.mrf.mxu0
      %v1974 = vadd.f32 0.0, %v1973
      %1975 = vmatmul.f32.gmra.mxu0 %v1936
      %v1976 = vpop.f32.mrf.mxu0
      %v1977 = vadd.f32 0.0, %v1976
      %1978 = vmatmul.f32.gmra.mxu0 %v1939
      %v1979 = vpop.f32.mrf.mxu0
      %v1980 = vadd.f32 0.0, %v1979
      %1981 = vdwg.mxu0
      %v1982 = vadd.f32 %v1899, %v1959
      %v1983 = vadd.f32 %v1900, %v1962
      %v1984 = vadd.f32 %v1901, %v1965
      %v1985 = vadd.f32 %v1902, %v1968
      %v1986 = vadd.f32 %v1903, %v1971
      %v1987 = vadd.f32 %v1904, %v1974
      %v1988 = vadd.f32 %v1905, %v1977
      %v1989 = vadd.f32 %v1906, %v1980
      %v1990 = vld [vmem:[%s1740 + $0x3] sm:$0xff]
      %v1991 = vld [vmem:[%s1740 + $0x13] sm:$0xff]
      %v1992 = vld [vmem:[%s1740 + $0x23] sm:$0xff]
      %v1993 = vld [vmem:[%s1740 + $0x33] sm:$0xff]
      %v1994 = vld [vmem:[%s1740 + $0x43] sm:$0xff]
      %v1995 = vld [vmem:[%s1740 + $0x53] sm:$0xff]
      %v1996 = vld [vmem:[%s1740 + $0x63] sm:$0xff]
      %v1997 = vld [vmem:[%s1740 + $0x73] sm:$0xff]
      %s1998 = scalar_lea.vmem %s3, 144
      %v1999 = vld [vmem:[%s1998] sm:$0xff]
      %v2001 = vsel %vm455, %v1990, 0
      %v2004 = vsel %vm455, %v1991, 0
      %v2007 = vsel %vm455, %v1992, 0
      %v2010 = vsel %vm455, %v1993, 0
      %v2013 = vsel %vm455, %v1994, 0
      %v2016 = vsel %vm455, %v1995, 0
      %v2019 = vsel %vm455, %v1996, 0
      %v2022 = vsel %vm455, %v1997, 0
      %2024 = vmatpush.msra.mxu0 0.0
      %2025 = vmatpush.msra.mxu0 0.0
      %2026 = vmatpush.msra.mxu0 0.0
      %2027 = vmatpush.msra.mxu0 0.0
      %2028 = vmatpush.msra.mxu0 0.0
      %2029 = vmatpush.msra.mxu0 0.0
      %2030 = vmatpush.msra.mxu0 0.0
      %2031 = vmatpush.msra.mxu0 0.0
      %2032 = vmatpush.msra.mxu0 0.0
      %2033 = vmatpush.msra.mxu0 0.0
      %2034 = vmatpush.msra.mxu0 0.0
      %2035 = vmatpush.msra.mxu0 0.0
      %2036 = vmatpush.msra.mxu0 0.0
      %2037 = vmatpush.msra.mxu0 0.0
      %2038 = vmatpush.msra.mxu0 0.0
      %2039 = vmatpush.msra.mxu0 %v1999
      %2040 = vmatmul.f32.gmra.mxu0 %v2001
      %v2041 = vpop.f32.mrf.mxu0
      %v2042 = vadd.f32 0.0, %v2041
      %2043 = vmatmul.f32.gmra.mxu0 %v2004
      %v2044 = vpop.f32.mrf.mxu0
      %v2045 = vadd.f32 0.0, %v2044
      %2046 = vmatmul.f32.gmra.mxu0 %v2007
      %v2047 = vpop.f32.mrf.mxu0
      %v2048 = vadd.f32 0.0, %v2047
      %2049 = vmatmul.f32.gmra.mxu0 %v2010
      %v2050 = vpop.f32.mrf.mxu0
      %v2051 = vadd.f32 0.0, %v2050
      %2052 = vmatmul.f32.gmra.mxu0 %v2013
      %v2053 = vpop.f32.mrf.mxu0
      %v2054 = vadd.f32 0.0, %v2053
      %2055 = vmatmul.f32.gmra.mxu0 %v2016
      %v2056 = vpop.f32.mrf.mxu0
      %v2057 = vadd.f32 0.0, %v2056
      %2058 = vmatmul.f32.gmra.mxu0 %v2019
      %v2059 = vpop.f32.mrf.mxu0
      %v2060 = vadd.f32 0.0, %v2059
      %2061 = vmatmul.f32.gmra.mxu0 %v2022
      %v2062 = vpop.f32.mrf.mxu0
      %v2063 = vadd.f32 0.0, %v2062
      %2064 = vdwg.mxu0
      %v2065 = vadd.f32 %v1982, %v2042
      %v2066 = vadd.f32 %v1983, %v2045
      %v2067 = vadd.f32 %v1984, %v2048
      %v2068 = vadd.f32 %v1985, %v2051
      %v2069 = vadd.f32 %v1986, %v2054
      %v2070 = vadd.f32 %v1987, %v2057
      %v2071 = vadd.f32 %v1988, %v2060
      %v2072 = vadd.f32 %v1989, %v2063
      %v2073 = vld [vmem:[%s1740 + $0x4] sm:$0xff]
      %v2074 = vld [vmem:[%s1740 + $0x14] sm:$0xff]
      %v2075 = vld [vmem:[%s1740 + $0x24] sm:$0xff]
      %v2076 = vld [vmem:[%s1740 + $0x34] sm:$0xff]
      %v2077 = vld [vmem:[%s1740 + $0x44] sm:$0xff]
      %v2078 = vld [vmem:[%s1740 + $0x54] sm:$0xff]
      %v2079 = vld [vmem:[%s1740 + $0x64] sm:$0xff]
      %v2080 = vld [vmem:[%s1740 + $0x74] sm:$0xff]
      %s2081 = scalar_lea.vmem %s3, 152
      %v2082 = vld [vmem:[%s2081] sm:$0xff]
      %v2084 = vsel %vm455, %v2073, 0
      %v2087 = vsel %vm455, %v2074, 0
      %v2090 = vsel %vm455, %v2075, 0
      %v2093 = vsel %vm455, %v2076, 0
      %v2096 = vsel %vm455, %v2077, 0
      %v2099 = vsel %vm455, %v2078, 0
      %v2102 = vsel %vm455, %v2079, 0
      %v2105 = vsel %vm455, %v2080, 0
      %2107 = vmatpush.msra.mxu0 0.0
      %2108 = vmatpush.msra.mxu0 0.0
      %2109 = vmatpush.msra.mxu0 0.0
      %2110 = vmatpush.msra.mxu0 0.0
      %2111 = vmatpush.msra.mxu0 0.0
      %2112 = vmatpush.msra.mxu0 0.0
      %2113 = vmatpush.msra.mxu0 0.0
      %2114 = vmatpush.msra.mxu0 0.0
      %2115 = vmatpush.msra.mxu0 0.0
      %2116 = vmatpush.msra.mxu0 0.0
      %2117 = vmatpush.msra.mxu0 0.0
      %2118 = vmatpush.msra.mxu0 0.0
      %2119 = vmatpush.msra.mxu0 0.0
      %2120 = vmatpush.msra.mxu0 0.0
      %2121 = vmatpush.msra.mxu0 0.0
      %2122 = vmatpush.msra.mxu0 %v2082
      %2123 = vmatmul.f32.gmra.mxu0 %v2084
      %v2124 = vpop.f32.mrf.mxu0
      %v2125 = vadd.f32 0.0, %v2124
      %2126 = vmatmul.f32.gmra.mxu0 %v2087
      %v2127 = vpop.f32.mrf.mxu0
      %v2128 = vadd.f32 0.0, %v2127
      %2129 = vmatmul.f32.gmra.mxu0 %v2090
      %v2130 = vpop.f32.mrf.mxu0
      %v2131 = vadd.f32 0.0, %v2130
      %2132 = vmatmul.f32.gmra.mxu0 %v2093
      %v2133 = vpop.f32.mrf.mxu0
      %v2134 = vadd.f32 0.0, %v2133
      %2135 = vmatmul.f32.gmra.mxu0 %v2096
      %v2136 = vpop.f32.mrf.mxu0
      %v2137 = vadd.f32 0.0, %v2136
      %2138 = vmatmul.f32.gmra.mxu0 %v2099
      %v2139 = vpop.f32.mrf.mxu0
      %v2140 = vadd.f32 0.0, %v2139
      %2141 = vmatmul.f32.gmra.mxu0 %v2102
      %v2142 = vpop.f32.mrf.mxu0
      %v2143 = vadd.f32 0.0, %v2142
      %2144 = vmatmul.f32.gmra.mxu0 %v2105
      %v2145 = vpop.f32.mrf.mxu0
      %v2146 = vadd.f32 0.0, %v2145
      %2147 = vdwg.mxu0
      %v2148 = vadd.f32 %v2065, %v2125
      %v2149 = vadd.f32 %v2066, %v2128
      %v2150 = vadd.f32 %v2067, %v2131
      %v2151 = vadd.f32 %v2068, %v2134
      %v2152 = vadd.f32 %v2069, %v2137
      %v2153 = vadd.f32 %v2070, %v2140
      %v2154 = vadd.f32 %v2071, %v2143
      %v2155 = vadd.f32 %v2072, %v2146
      %s2156 = scalar_lea.vmem [#allocation2], 64
      %v2157 = vld [vmem:[%s2156] sm:$0xff]
      %v2158 = vld [vmem:[%s2156 + $0x10] sm:$0xff]
      %v2159 = vld [vmem:[%s2156 + $0x20] sm:$0xff]
      %v2160 = vld [vmem:[%s2156 + $0x30] sm:$0xff]
      %v2161 = vld [vmem:[%s2156 + $0x40] sm:$0xff]
      %v2162 = vld [vmem:[%s2156 + $0x50] sm:$0xff]
      %v2163 = vld [vmem:[%s2156 + $0x60] sm:$0xff]
      %v2164 = vld [vmem:[%s2156 + $0x70] sm:$0xff]
      %s2165 = scalar_lea.vmem %s3, 160
      %v2166 = vld [vmem:[%s2165] sm:$0xff]
      %v2168 = vsel %vm455, %v2157, 0
      %v2171 = vsel %vm455, %v2158, 0
      %v2174 = vsel %vm455, %v2159, 0
      %v2177 = vsel %vm455, %v2160, 0
      %v2180 = vsel %vm455, %v2161, 0
      %v2183 = vsel %vm455, %v2162, 0
      %v2186 = vsel %vm455, %v2163, 0
      %v2189 = vsel %vm455, %v2164, 0
      %2191 = vmatpush.msra.mxu0 0.0
      %2192 = vmatpush.msra.mxu0 0.0
      %2193 = vmatpush.msra.mxu0 0.0
      %2194 = vmatpush.msra.mxu0 0.0
      %2195 = vmatpush.msra.mxu0 0.0
      %2196 = vmatpush.msra.mxu0 0.0
      %2197 = vmatpush.msra.mxu0 0.0
      %2198 = vmatpush.msra.mxu0 0.0
      %2199 = vmatpush.msra.mxu0 0.0
      %2200 = vmatpush.msra.mxu0 0.0
      %2201 = vmatpush.msra.mxu0 0.0
      %2202 = vmatpush.msra.mxu0 0.0
      %2203 = vmatpush.msra.mxu0 0.0
      %2204 = vmatpush.msra.mxu0 0.0
      %2205 = vmatpush.msra.mxu0 0.0
      %2206 = vmatpush.msra.mxu0 %v2166
      %2207 = vmatmul.f32.gmra.mxu0 %v2168
      %v2208 = vpop.f32.mrf.mxu0
      %v2209 = vadd.f32 0.0, %v2208
      %2210 = vmatmul.f32.gmra.mxu0 %v2171
      %v2211 = vpop.f32.mrf.mxu0
      %v2212 = vadd.f32 0.0, %v2211
      %2213 = vmatmul.f32.gmra.mxu0 %v2174
      %v2214 = vpop.f32.mrf.mxu0
      %v2215 = vadd.f32 0.0, %v2214
      %2216 = vmatmul.f32.gmra.mxu0 %v2177
      %v2217 = vpop.f32.mrf.mxu0
      %v2218 = vadd.f32 0.0, %v2217
      %2219 = vmatmul.f32.gmra.mxu0 %v2180
      %v2220 = vpop.f32.mrf.mxu0
      %v2221 = vadd.f32 0.0, %v2220
      %2222 = vmatmul.f32.gmra.mxu0 %v2183
      %v2223 = vpop.f32.mrf.mxu0
      %v2224 = vadd.f32 0.0, %v2223
      %2225 = vmatmul.f32.gmra.mxu0 %v2186
      %v2226 = vpop.f32.mrf.mxu0
      %v2227 = vadd.f32 0.0, %v2226
      %2228 = vmatmul.f32.gmra.mxu0 %v2189
      %v2229 = vpop.f32.mrf.mxu0
      %v2230 = vadd.f32 0.0, %v2229
      %2231 = vdwg.mxu0
      %v2232 = vadd.f32 %v2148, %v2209
      %v2233 = vadd.f32 %v2149, %v2212
      %v2234 = vadd.f32 %v2150, %v2215
      %v2235 = vadd.f32 %v2151, %v2218
      %v2236 = vadd.f32 %v2152, %v2221
      %v2237 = vadd.f32 %v2153, %v2224
      %v2238 = vadd.f32 %v2154, %v2227
      %v2239 = vadd.f32 %v2155, %v2230
      %v2240 = vld [vmem:[%s2156 + $0x1] sm:$0xff]
      %v2241 = vld [vmem:[%s2156 + $0x11] sm:$0xff]
      %v2242 = vld [vmem:[%s2156 + $0x21] sm:$0xff]
      %v2243 = vld [vmem:[%s2156 + $0x31] sm:$0xff]
      %v2244 = vld [vmem:[%s2156 + $0x41] sm:$0xff]
      %v2245 = vld [vmem:[%s2156 + $0x51] sm:$0xff]
      %v2246 = vld [vmem:[%s2156 + $0x61] sm:$0xff]
      %v2247 = vld [vmem:[%s2156 + $0x71] sm:$0xff]
      %s2248 = scalar_lea.vmem %s3, 168
      %v2249 = vld [vmem:[%s2248] sm:$0xff]
      %v2251 = vsel %vm455, %v2240, 0
      %v2254 = vsel %vm455, %v2241, 0
      %v2257 = vsel %vm455, %v2242, 0
      %v2260 = vsel %vm455, %v2243, 0
      %v2263 = vsel %vm455, %v2244, 0
      %v2266 = vsel %vm455, %v2245, 0
      %v2269 = vsel %vm455, %v2246, 0
      %v2272 = vsel %vm455, %v2247, 0
      %2274 = vmatpush.msra.mxu0 0.0
      %2275 = vmatpush.msra.mxu0 0.0
      %2276 = vmatpush.msra.mxu0 0.0
      %2277 = vmatpush.msra.mxu0 0.0
      %2278 = vmatpush.msra.mxu0 0.0
      %2279 = vmatpush.msra.mxu0 0.0
      %2280 = vmatpush.msra.mxu0 0.0
      %2281 = vmatpush.msra.mxu0 0.0
      %2282 = vmatpush.msra.mxu0 0.0
      %2283 = vmatpush.msra.mxu0 0.0
      %2284 = vmatpush.msra.mxu0 0.0
      %2285 = vmatpush.msra.mxu0 0.0
      %2286 = vmatpush.msra.mxu0 0.0
      %2287 = vmatpush.msra.mxu0 0.0
      %2288 = vmatpush.msra.mxu0 0.0
      %2289 = vmatpush.msra.mxu0 %v2249
      %2290 = vmatmul.f32.gmra.mxu0 %v2251
      %v2291 = vpop.f32.mrf.mxu0
      %v2292 = vadd.f32 0.0, %v2291
      %2293 = vmatmul.f32.gmra.mxu0 %v2254
      %v2294 = vpop.f32.mrf.mxu0
      %v2295 = vadd.f32 0.0, %v2294
      %2296 = vmatmul.f32.gmra.mxu0 %v2257
      %v2297 = vpop.f32.mrf.mxu0
      %v2298 = vadd.f32 0.0, %v2297
      %2299 = vmatmul.f32.gmra.mxu0 %v2260
      %v2300 = vpop.f32.mrf.mxu0
      %v2301 = vadd.f32 0.0, %v2300
      %2302 = vmatmul.f32.gmra.mxu0 %v2263
      %v2303 = vpop.f32.mrf.mxu0
      %v2304 = vadd.f32 0.0, %v2303
      %2305 = vmatmul.f32.gmra.mxu0 %v2266
      %v2306 = vpop.f32.mrf.mxu0
      %v2307 = vadd.f32 0.0, %v2306
      %2308 = vmatmul.f32.gmra.mxu0 %v2269
      %v2309 = vpop.f32.mrf.mxu0
      %v2310 = vadd.f32 0.0, %v2309
      %2311 = vmatmul.f32.gmra.mxu0 %v2272
      %v2312 = vpop.f32.mrf.mxu0
      %v2313 = vadd.f32 0.0, %v2312
      %2314 = vdwg.mxu0
      %v2315 = vadd.f32 %v2232, %v2292
      %v2316 = vadd.f32 %v2233, %v2295
      %v2317 = vadd.f32 %v2234, %v2298
      %v2318 = vadd.f32 %v2235, %v2301
      %v2319 = vadd.f32 %v2236, %v2304
      %v2320 = vadd.f32 %v2237, %v2307
      %v2321 = vadd.f32 %v2238, %v2310
      %v2322 = vadd.f32 %v2239, %v2313
      %v2323 = vld [vmem:[%s2156 + $0x2] sm:$0xff]
      %v2324 = vld [vmem:[%s2156 + $0x12] sm:$0xff]
      %v2325 = vld [vmem:[%s2156 + $0x22] sm:$0xff]
      %v2326 = vld [vmem:[%s2156 + $0x32] sm:$0xff]
      %v2327 = vld [vmem:[%s2156 + $0x42] sm:$0xff]
      %v2328 = vld [vmem:[%s2156 + $0x52] sm:$0xff]
      %v2329 = vld [vmem:[%s2156 + $0x62] sm:$0xff]
      %v2330 = vld [vmem:[%s2156 + $0x72] sm:$0xff]
      %s2331 = scalar_lea.vmem %s3, 176
      %v2332 = vld [vmem:[%s2331] sm:$0xff]
      %v2334 = vsel %vm455, %v2323, 0
      %v2337 = vsel %vm455, %v2324, 0
      %v2340 = vsel %vm455, %v2325, 0
      %v2343 = vsel %vm455, %v2326, 0
      %v2346 = vsel %vm455, %v2327, 0
      %v2349 = vsel %vm455, %v2328, 0
      %v2352 = vsel %vm455, %v2329, 0
      %v2355 = vsel %vm455, %v2330, 0
      %2357 = vmatpush.msra.mxu0 0.0
      %2358 = vmatpush.msra.mxu0 0.0
      %2359 = vmatpush.msra.mxu0 0.0
      %2360 = vmatpush.msra.mxu0 0.0
      %2361 = vmatpush.msra.mxu0 0.0
      %2362 = vmatpush.msra.mxu0 0.0
      %2363 = vmatpush.msra.mxu0 0.0
      %2364 = vmatpush.msra.mxu0 0.0
      %2365 = vmatpush.msra.mxu0 0.0
      %2366 = vmatpush.msra.mxu0 0.0
      %2367 = vmatpush.msra.mxu0 0.0
      %2368 = vmatpush.msra.mxu0 0.0
      %2369 = vmatpush.msra.mxu0 0.0
      %2370 = vmatpush.msra.mxu0 0.0
      %2371 = vmatpush.msra.mxu0 0.0
      %2372 = vmatpush.msra.mxu0 %v2332
      %2373 = vmatmul.f32.gmra.mxu0 %v2334
      %v2374 = vpop.f32.mrf.mxu0
      %v2375 = vadd.f32 0.0, %v2374
      %2376 = vmatmul.f32.gmra.mxu0 %v2337
      %v2377 = vpop.f32.mrf.mxu0
      %v2378 = vadd.f32 0.0, %v2377
      %2379 = vmatmul.f32.gmra.mxu0 %v2340
      %v2380 = vpop.f32.mrf.mxu0
      %v2381 = vadd.f32 0.0, %v2380
      %2382 = vmatmul.f32.gmra.mxu0 %v2343
      %v2383 = vpop.f32.mrf.mxu0
      %v2384 = vadd.f32 0.0, %v2383
      %2385 = vmatmul.f32.gmra.mxu0 %v2346
      %v2386 = vpop.f32.mrf.mxu0
      %v2387 = vadd.f32 0.0, %v2386
      %2388 = vmatmul.f32.gmra.mxu0 %v2349
      %v2389 = vpop.f32.mrf.mxu0
      %v2390 = vadd.f32 0.0, %v2389
      %2391 = vmatmul.f32.gmra.mxu0 %v2352
      %v2392 = vpop.f32.mrf.mxu0
      %v2393 = vadd.f32 0.0, %v2392
      %2394 = vmatmul.f32.gmra.mxu0 %v2355
      %v2395 = vpop.f32.mrf.mxu0
      %v2396 = vadd.f32 0.0, %v2395
      %2397 = vdwg.mxu0
      %v2398 = vadd.f32 %v2315, %v2375
      %v2399 = vadd.f32 %v2316, %v2378
      %v2400 = vadd.f32 %v2317, %v2381
      %v2401 = vadd.f32 %v2318, %v2384
      %v2402 = vadd.f32 %v2319, %v2387
      %v2403 = vadd.f32 %v2320, %v2390
      %v2404 = vadd.f32 %v2321, %v2393
      %v2405 = vadd.f32 %v2322, %v2396
      %v2406 = vld [vmem:[%s2156 + $0x3] sm:$0xff]
      %v2407 = vld [vmem:[%s2156 + $0x13] sm:$0xff]
      %v2408 = vld [vmem:[%s2156 + $0x23] sm:$0xff]
      %v2409 = vld [vmem:[%s2156 + $0x33] sm:$0xff]
      %v2410 = vld [vmem:[%s2156 + $0x43] sm:$0xff]
      %v2411 = vld [vmem:[%s2156 + $0x53] sm:$0xff]
      %v2412 = vld [vmem:[%s2156 + $0x63] sm:$0xff]
      %v2413 = vld [vmem:[%s2156 + $0x73] sm:$0xff]
      %s2414 = scalar_lea.vmem %s3, 184
      %v2415 = vld [vmem:[%s2414] sm:$0xff]
      %v2417 = vsel %vm455, %v2406, 0
      %v2420 = vsel %vm455, %v2407, 0
      %v2423 = vsel %vm455, %v2408, 0
      %v2426 = vsel %vm455, %v2409, 0
      %v2429 = vsel %vm455, %v2410, 0
      %v2432 = vsel %vm455, %v2411, 0
      %v2435 = vsel %vm455, %v2412, 0
      %v2438 = vsel %vm455, %v2413, 0
      %2440 = vmatpush.msra.mxu0 0.0
      %2441 = vmatpush.msra.mxu0 0.0
      %2442 = vmatpush.msra.mxu0 0.0
      %2443 = vmatpush.msra.mxu0 0.0
      %2444 = vmatpush.msra.mxu0 0.0
      %2445 = vmatpush.msra.mxu0 0.0
      %2446 = vmatpush.msra.mxu0 0.0
      %2447 = vmatpush.msra.mxu0 0.0
      %2448 = vmatpush.msra.mxu0 0.0
      %2449 = vmatpush.msra.mxu0 0.0
      %2450 = vmatpush.msra.mxu0 0.0
      %2451 = vmatpush.msra.mxu0 0.0
      %2452 = vmatpush.msra.mxu0 0.0
      %2453 = vmatpush.msra.mxu0 0.0
      %2454 = vmatpush.msra.mxu0 0.0
      %2455 = vmatpush.msra.mxu0 %v2415
      %2456 = vmatmul.f32.gmra.mxu0 %v2417
      %v2457 = vpop.f32.mrf.mxu0
      %v2458 = vadd.f32 0.0, %v2457
      %2459 = vmatmul.f32.gmra.mxu0 %v2420
      %v2460 = vpop.f32.mrf.mxu0
      %v2461 = vadd.f32 0.0, %v2460
      %2462 = vmatmul.f32.gmra.mxu0 %v2423
      %v2463 = vpop.f32.mrf.mxu0
      %v2464 = vadd.f32 0.0, %v2463
      %2465 = vmatmul.f32.gmra.mxu0 %v2426
      %v2466 = vpop.f32.mrf.mxu0
      %v2467 = vadd.f32 0.0, %v2466
      %2468 = vmatmul.f32.gmra.mxu0 %v2429
      %v2469 = vpop.f32.mrf.mxu0
      %v2470 = vadd.f32 0.0, %v2469
      %2471 = vmatmul.f32.gmra.mxu0 %v2432
      %v2472 = vpop.f32.mrf.mxu0
      %v2473 = vadd.f32 0.0, %v2472
      %2474 = vmatmul.f32.gmra.mxu0 %v2435
      %v2475 = vpop.f32.mrf.mxu0
      %v2476 = vadd.f32 0.0, %v2475
      %2477 = vmatmul.f32.gmra.mxu0 %v2438
      %v2478 = vpop.f32.mrf.mxu0
      %v2479 = vadd.f32 0.0, %v2478
      %2480 = vdwg.mxu0
      %v2481 = vadd.f32 %v2398, %v2458
      %v2482 = vadd.f32 %v2399, %v2461
      %v2483 = vadd.f32 %v2400, %v2464
      %v2484 = vadd.f32 %v2401, %v2467
      %v2485 = vadd.f32 %v2402, %v2470
      %v2486 = vadd.f32 %v2403, %v2473
      %v2487 = vadd.f32 %v2404, %v2476
      %v2488 = vadd.f32 %v2405, %v2479
      %v2489 = vld [vmem:[%s2156 + $0x4] sm:$0xff]
      %v2490 = vld [vmem:[%s2156 + $0x14] sm:$0xff]
      %v2491 = vld [vmem:[%s2156 + $0x24] sm:$0xff]
      %v2492 = vld [vmem:[%s2156 + $0x34] sm:$0xff]
      %v2493 = vld [vmem:[%s2156 + $0x44] sm:$0xff]
      %v2494 = vld [vmem:[%s2156 + $0x54] sm:$0xff]
      %v2495 = vld [vmem:[%s2156 + $0x64] sm:$0xff]
      %v2496 = vld [vmem:[%s2156 + $0x74] sm:$0xff]
      %s2497 = scalar_lea.vmem %s3, 192
      %v2498 = vld [vmem:[%s2497] sm:$0xff]
      %v2500 = vsel %vm455, %v2489, 0
      %v2503 = vsel %vm455, %v2490, 0
      %v2506 = vsel %vm455, %v2491, 0
      %v2509 = vsel %vm455, %v2492, 0
      %v2512 = vsel %vm455, %v2493, 0
      %v2515 = vsel %vm455, %v2494, 0
      %v2518 = vsel %vm455, %v2495, 0
      %v2521 = vsel %vm455, %v2496, 0
      %2523 = vmatpush.msra.mxu0 0.0
      %2524 = vmatpush.msra.mxu0 0.0
      %2525 = vmatpush.msra.mxu0 0.0
      %2526 = vmatpush.msra.mxu0 0.0
      %2527 = vmatpush.msra.mxu0 0.0
      %2528 = vmatpush.msra.mxu0 0.0
      %2529 = vmatpush.msra.mxu0 0.0
      %2530 = vmatpush.msra.mxu0 0.0
      %2531 = vmatpush.msra.mxu0 0.0
      %2532 = vmatpush.msra.mxu0 0.0
      %2533 = vmatpush.msra.mxu0 0.0
      %2534 = vmatpush.msra.mxu0 0.0
      %2535 = vmatpush.msra.mxu0 0.0
      %2536 = vmatpush.msra.mxu0 0.0
      %2537 = vmatpush.msra.mxu0 0.0
      %2538 = vmatpush.msra.mxu0 %v2498
      %2539 = vmatmul.f32.gmra.mxu0 %v2500
      %v2540 = vpop.f32.mrf.mxu0
      %v2541 = vadd.f32 0.0, %v2540
      %2542 = vmatmul.f32.gmra.mxu0 %v2503
      %v2543 = vpop.f32.mrf.mxu0
      %v2544 = vadd.f32 0.0, %v2543
      %2545 = vmatmul.f32.gmra.mxu0 %v2506
      %v2546 = vpop.f32.mrf.mxu0
      %v2547 = vadd.f32 0.0, %v2546
      %2548 = vmatmul.f32.gmra.mxu0 %v2509
      %v2549 = vpop.f32.mrf.mxu0
      %v2550 = vadd.f32 0.0, %v2549
      %2551 = vmatmul.f32.gmra.mxu0 %v2512
      %v2552 = vpop.f32.mrf.mxu0
      %v2553 = vadd.f32 0.0, %v2552
      %2554 = vmatmul.f32.gmra.mxu0 %v2515
      %v2555 = vpop.f32.mrf.mxu0
      %v2556 = vadd.f32 0.0, %v2555
      %2557 = vmatmul.f32.gmra.mxu0 %v2518
      %v2558 = vpop.f32.mrf.mxu0
      %v2559 = vadd.f32 0.0, %v2558
      %2560 = vmatmul.f32.gmra.mxu0 %v2521
      %v2561 = vpop.f32.mrf.mxu0
      %v2562 = vadd.f32 0.0, %v2561
      %2563 = vdwg.mxu0
      %v2564 = vadd.f32 %v2481, %v2541
      %v2565 = vadd.f32 %v2482, %v2544
      %v2566 = vadd.f32 %v2483, %v2547
      %v2567 = vadd.f32 %v2484, %v2550
      %v2568 = vadd.f32 %v2485, %v2553
      %v2569 = vadd.f32 %v2486, %v2556
      %v2570 = vadd.f32 %v2487, %v2559
      %v2571 = vadd.f32 %v2488, %v2562
      %2572 = vst.msk [vmem:[%s258] sm:$0xff] %vm455, %v2564
      %2573 = vst.msk [vmem:[%s258 + $0x8] sm:$0xff] %vm455, %v2565
      %2574 = vst.msk [vmem:[%s258 + $0x10] sm:$0xff] %vm455, %v2566
      %2575 = vst.msk [vmem:[%s258 + $0x18] sm:$0xff] %vm455, %v2567
      %2576 = vst.msk [vmem:[%s258 + $0x20] sm:$0xff] %vm455, %v2568
      %2577 = vst.msk [vmem:[%s258 + $0x28] sm:$0xff] %vm455, %v2569
      %2578 = vst.msk [vmem:[%s258 + $0x30] sm:$0xff] %vm455, %v2570
      %2579 = vst.msk [vmem:[%s258 + $0x38] sm:$0xff] %vm455, %v2571
      %v2580 = vsel %vm455, %v2564, 0.0
      %v2581 = vsel %vm455, %v2565, 0.0
      %v2582 = vadd.f32 %v2580, %v2581
      %v2583 = vsel %vm455, %v2566, 0.0
      %v2584 = vadd.f32 %v2582, %v2583
      %v2585 = vsel %vm455, %v2567, 0.0
      %v2586 = vadd.f32 %v2584, %v2585
      %v2587 = vsel %vm455, %v2568, 0.0
      %v2588 = vadd.f32 %v2586, %v2587
      %v2589 = vsel %vm455, %v2569, 0.0
      %v2590 = vadd.f32 %v2588, %v2589
      %v2591 = vsel %vm455, %v2570, 0.0
      %v2592 = vadd.f32 %v2590, %v2591
      %v2593 = vsel %vm455, %v2571, 0.0
      %v2594 = vadd.f32 %v2592, %v2593
      %v2595 = vrot.slane %v2594, 4
      %v2596 = vadd.f32 %v2594, %v2595
      %v2597 = vrot.slane %v2596, 2
      %v2598 = vadd.f32 %v2596, %v2597
      %v2599 = vrot.slane %v2598, 1
      %v2600 = vadd.f32 %v2598, %v2599
      %v2601 = vmul.f32 %v2564, %v2564
      %v2602 = vmul.f32 %v2565, %v2565
      %v2603 = vmul.f32 %v2566, %v2566
      %v2604 = vmul.f32 %v2567, %v2567
      %v2605 = vmul.f32 %v2568, %v2568
      %v2606 = vmul.f32 %v2569, %v2569
      %v2607 = vmul.f32 %v2570, %v2570
      %v2608 = vmul.f32 %v2571, %v2571
      %v2609 = vsel %vm455, %v2601, 0.0
      %v2610 = vsel %vm455, %v2602, 0.0
      %v2611 = vadd.f32 %v2609, %v2610
      %v2612 = vsel %vm455, %v2603, 0.0
      %v2613 = vadd.f32 %v2611, %v2612
      %v2614 = vsel %vm455, %v2604, 0.0
      %v2615 = vadd.f32 %v2613, %v2614
      %v2616 = vsel %vm455, %v2605, 0.0
      %v2617 = vadd.f32 %v2615, %v2616
      %v2618 = vsel %vm455, %v2606, 0.0
      %v2619 = vadd.f32 %v2617, %v2618
      %v2620 = vsel %vm455, %v2607, 0.0
      %v2621 = vadd.f32 %v2619, %v2620
      %v2622 = vsel %vm455, %v2608, 0.0
      %v2623 = vadd.f32 %v2621, %v2622
      %v2624 = vrot.slane %v2623, 4
      %v2625 = vadd.f32 %v2623, %v2624
      %v2626 = vrot.slane %v2625, 2
      %v2627 = vadd.f32 %v2625, %v2626
      %v2628 = vrot.slane %v2627, 1
      %v2629 = vadd.f32 %v2627, %v2628
      %vm2630 = vcmask 1040384
      %v2631 = vsel %vm2630, %v2600, %v2629
      %vm2632 = vcmask 58368
      %2633 = vst.msk [vmem:[%s262] sm:$0x3] %vm2632, %v2631
      %p2634 = scmp.lt.s32.totalorder %s18, 1
      %s2635 = scalar_select %p2634, %s18, 1
      %s2636 = smul.addr %s2635, 8
      %s2637 = smul.addr %s2636, 8
      %s2638 = scalar_lea.vmem %s5, %s2637
      %p2639 = scmp.lt.s32.totalorder %s18, 1
      %s2640 = scalar_select %p2639, %s18, 1
      %s2641 = smul.addr %s2640, 2
      %s2642 = scalar_lea.vmem %s6, %s2641
      // Predicated region
      $region41: #{conv_block_forward.6} parent=39 // pred_check
        %p2643 = pneg %p146
      $region42: #{conv_block_forward.6} parent=39 // pred_check_branch
        %2645 = sbr.rel (%p2643) target = $region44
      $region43: #{conv_block_forward.6} parent=39 // pred_region
        _
      $region44: #{conv_block_forward.6} parent=39 // pred_fallthru
        _
      // Predicated region
      $region45: #{conv_block_forward.6} parent=39 // pred_check
        %p2646 = pneg %p172
      $region46: #{conv_block_forward.6} parent=39 // pred_check_branch
        %2648 = sbr.rel (%p2646) target = $region48
      $region47: #{conv_block_forward.6} parent=39 // pred_region
        _
      $region48: #{conv_block_forward.6} parent=39 // pred_fallthru
        _
    $region40: #{conv_block_forward.6} parent=5 // pred_fallthru
      _
    %p2649 = scmp.le.s32.totalorder 2, %s13
    // Predicated region
    $region49: #{conv_block_forward.6} parent=5 // pred_check
      %p2650 = pneg %p2649
    $region50: #{conv_block_forward.6} parent=5 // pred_check_branch
      %2652 = sbr.rel (%p2650) target = $region52
    $region51: #{conv_block_forward.6} parent=5 // pred_region
      %s2653 = ssub.s32 %s13, 2
      // Predicated region
      $region53: #{conv_block_forward.6} parent=51 // pred_check
        %p2654 = pneg %p152
      $region54: #{conv_block_forward.6} parent=51 // pred_check_branch
        %2656 = sbr.rel (%p2654) target = $region56
      $region55: #{conv_block_forward.6} parent=51 // pred_region
        %p2657 = scmp.lt.s32.totalorder %s19, 1
        %s2658 = scalar_select %p2657, %s19, 1
        %s2659 = smul.addr %s2658, 8
        %s2660 = smul.addr %s2659, 8
        %s2661 = scalar_lea.vmem %s5, %s2660
      $region56: #{conv_block_forward.6} parent=51 // pred_fallthru
        _
      // Predicated region
      $region57: #{conv_block_forward.6} parent=51 // pred_check
        %p2662 = pneg %p178
      $region58: #{conv_block_forward.6} parent=51 // pred_check_branch
        %2664 = sbr.rel (%p2662) target = $region60
      $region59: #{conv_block_forward.6} parent=51 // pred_region
        %p2665 = scmp.lt.s32.totalorder %s19, 1
        %s2666 = scalar_select %p2665, %s19, 1
        %s2667 = smul.addr %s2666, 2
        %s2668 = scalar_lea.vmem %s6, %s2667
      $region60: #{conv_block_forward.6} parent=51 // pred_fallthru
        _
    $region52: #{conv_block_forward.6} parent=5 // pred_fallthru
      _
  $region6: #{conv_block_forward.6} parent=0 // loop_footer
    %s17 = sadd.s32 1, %s13
  $region7: #{conv_block_forward.6} parent=0 // loop_footer_branch
    %12 = sbr.rel target = $region3
  $region8: #{conv_block_forward.6} parent=0 // loop_exit
    _

// kernel: conv_block_forward.5
$region0: #{conv_block_forward.5}
  #allocation0 [shape = 'u32[]', space=smem, size = 0x4, offset = 0x4, fixed_abs, tag = 'smem constant byte address 0x4 - core index']
  #allocation1 [shape = 'u32[72,128]{1,0:T(1,128)}', space=vmem, size = 0x9000, scoped, tag = 'internal scratch']
  %s0 = inlined_call_operand.vmem [shape: f32[2,4,10,10,4], index: 0, kind: input, shape index: {}]
  %s1 = inlined_call_operand.vmem [shape: f32[25,4,8], index: 1, kind: input, shape index: {}]
  %s2 = inlined_call_operand.vmem [shape: f32[1,8], index: 2, kind: input, shape index: {}]
  %s3 = inlined_call_operand.vmem [shape: f32[2,8,8,8], index: 3, kind: output, shape index: {0}]
  %s4 = inlined_call_operand.vmem [shape: f32[2,2,8], index: 4, kind: output, shape index: {1}]
  %5 = xla_tuple %s3, %s4
  %s6 = sld [smem:[#allocation0]]
  $region53: #{conv_block_forward.5} parent=0
    _
  %s8 = ssub.s32 1, %s6
  %s9 = scalar_select 0, %s8, %s6
  loop: start=0, step=1, limit=4
  $region2: #{conv_block_forward.5} parent=0 // loop_pre_header
    _
  $region3: #{conv_block_forward.5} parent=0 // loop_header
    %s11 = sphi 0, %s15
    %p12 = scmp.ge.s32.totalorder %s11, 4
    %s21 = sphi 0, %s23
    %s24 = sphi 0, %s21
    %s25 = sphi 0, %s24
    %s41 = sphi 0, %s25
    %s45 = sphi 0, %s45
    %s47 = sphi 0, %s45
    %s48 = sphi 0, %s47
    %s62 = sphi 0, %s48
    %s66 = sphi 0, %s66
    %s68 = sphi 0, %s66
    %s69 = sphi 0, %s68
    %s83 = sphi 0, %s69
    %s89 = sphi 0, %s91
    %s92 = sphi 0, %s89
    %s93 = sphi 0, %s92
    %s109 = sphi 0, %s93
    %s115 = sphi 0, %s117
    %s118 = sphi 0, %s115
    %s119 = sphi 0, %s118
    %s135 = sphi 0, %s119
  $region4: #{conv_block_forward.5} parent=0 // loop_header_branch
    %14 = sbr.rel (%p12) target = $region8
  $region5: #{conv_block_forward.5} parent=0 // loop_body
    %s16 = ssub.s32 %s11, 1
    %s17 = ssub.s32 %s11, 2
    %s18 = sadd.s32 %s11, 1
    %s19 = ssub.s32 %s11, %s18
    %p20 = scmp.eq.s32.totalorder %s19, 0
    %s22 = sadd.s32 %s21, 1
    %s23 = scalar_select %p20, %s21, %s22
    %p26 = pneg %p20
    %p27 = scmp.eq.s32.totalorder %s11, 1
    %p28 = por %p26, %p27
    %p29 = scmp.ne.s32.totalorder %s21, %s24
    %p30 = scmp.eq.s32.totalorder %s11, 0
    %p31 = por %p29, %p30
    %p32 = scmp.ne.s32.totalorder %s21, %s24
    %p33 = scmp.eq.s32.totalorder %s16, 1
    %p34 = por %p32, %p33
    %p35 = scmp.ne.s32.totalorder %s24, %s25
    %p36 = scmp.eq.s32.totalorder %s16, 0
    %p37 = por %p35, %p36
    %p38 = scmp.ne.s32.totalorder %s24, %s25
    %p39 = scmp.eq.s32.totalorder %s17, 1
    %p40 = por %p38, %p39
    %p42 = scmp.ne.s32.totalorder %s25, %s41
    %p43 = scmp.eq.s32.totalorder %s17, 0
    %p44 = por %p42, %p43
    %s46 = sadd.s32 %s45, 1
    %p49 = scmp.eq.s32.totalorder %s11, 1
    %p50 = scmp.ne.s32.totalorder %s45, %s47
    %p51 = scmp.eq.s32.totalorder %s11, 0
    %p52 = por %p50, %p51
    %p53 = scmp.ne.s32.totalorder %s45, %s47
    %p54 = scmp.eq.s32.totalorder %s16, 1
    %p55 = por %p53, %p54
    %p56 = scmp.ne.s32.totalorder %s47, %s48
    %p57 = scmp.eq.s32.totalorder %s16, 0
    %p58 = por %p56, %p57
    %p59 = scmp.ne.s32.totalorder %s47, %s48
    %p60 = scmp.eq.s32.totalorder %s17, 1
    %p61 = por %p59, %p60
    %p63 = scmp.ne.s32.totalorder %s48, %s62
    %p64 = scmp.eq.s32.totalorder %s17, 0
    %p65 = por %p63, %p64
    %s67 = sadd.s32 %s66, 1
    %p70 = scmp.eq.s32.totalorder %s11, 1
    %p71 = scmp.ne.s32.totalorder %s66, %s68
    %p72 = scmp.eq.s32.totalorder %s11, 0
    %p73 = por %p71, %p72
    %p74 = scmp.ne.s32.totalorder %s66, %s68
    %p75 = scmp.eq.s32.totalorder %s16, 1
    %p76 = por %p74, %p75
    %p77 = scmp.ne.s32.totalorder %s68, %s69
    %p78 = scmp.eq.s32.totalorder %s16, 0
    %p79 = por %p77, %p78
    %p80 = scmp.ne.s32.totalorder %s68, %s69
    %p81 = scmp.eq.s32.totalorder %s17, 1
    %p82 = por %p80, %p81
    %p84 = scmp.ne.s32.totalorder %s69, %s83
    %p85 = scmp.eq.s32.totalorder %s17, 0
    %p86 = por %p84, %p85
    %s87 = ssub.s32 %s11, %s18
    %p88 = scmp.eq.s32.totalorder %s87, 0
    %s90 = sadd.s32 %s89, 1
    %s91 = scalar_select %p88, %s89, %s90
    %p94 = pneg %p88
    %p95 = scmp.eq.s32.totalorder %s11, 1
    %p96 = por %p94, %p95
    %p97 = scmp.ne.s32.totalorder %s89, %s92
    %p98 = scmp.eq.s32.totalorder %s11, 0
    %p99 = por %p97, %p98
    %p100 = scmp.ne.s32.totalorder %s89, %s92
    %p101 = scmp.eq.s32.totalorder %s16, 1
    %p102 = por %p100, %p101
    %p103 = scmp.ne.s32.totalorder %s92, %s93
    %p104 = scmp.eq.s32.totalorder %s16, 0
    %p105 = por %p103, %p104
    %p106 = scmp.ne.s32.totalorder %s92, %s93
    %p107 = scmp.eq.s32.totalorder %s17, 1
    %p108 = por %p106, %p107
    %p110 = scmp.ne.s32.totalorder %s93, %s109
    %p111 = scmp.eq.s32.totalorder %s17, 0
    %p112 = por %p110, %p111
    %s113 = ssub.s32 %s11, %s18
    %p114 = scmp.eq.s32.totalorder %s113, 0
    %s116 = sadd.s32 %s115, 1
    %s117 = scalar_select %p114, %s115, %s116
    %p120 = pneg %p114
    %p121 = scmp.eq.s32.totalorder %s11, 1
    %p122 = por %p120, %p121
    %p123 = scmp.ne.s32.totalorder %s115, %s118
    %p124 = scmp.eq.s32.totalorder %s11, 0
    %p125 = por %p123, %p124
    %p126 = scmp.ne.s32.totalorder %s115, %s118
    %p127 = scmp.eq.s32.totalorder %s16, 1
    %p128 = por %p126, %p127
    %p129 = scmp.ne.s32.totalorder %s118, %s119
    %p130 = scmp.eq.s32.totalorder %s16, 0
    %p131 = por %p129, %p130
    %p132 = scmp.ne.s32.totalorder %s118, %s119
    %p133 = scmp.eq.s32.totalorder %s17, 1
    %p134 = por %p132, %p133
    %p136 = scmp.ne.s32.totalorder %s119, %s135
    %p137 = scmp.eq.s32.totalorder %s17, 0
    %p138 = por %p136, %p137
    %p139 = scmp.le.s32.totalorder 1, %s11
    %p140 = scmp.lt.s32.totalorder %s11, 3
    %p141 = pnand %p139, %p140
    %p142 = pneg %p141
    // Predicated region
    $region9: #{conv_block_forward.5} parent=5 // pred_check
      _
    $region10: #{conv_block_forward.5} parent=5 // pred_check_branch
      %144 = sbr.rel (%p141) target = $region12
    $region11: #{conv_block_forward.5} parent=5 // pred_region
      %s145 = ssub.s32 %s11, 1
      // Predicated region
      $region13: #{conv_block_forward.5} parent=11 // pred_check
        %p146 = pneg %p58
      $region14: #{conv_block_forward.5} parent=11 // pred_check_branch
        %148 = sbr.rel (%p146) target = $region16
      $region15: #{conv_block_forward.5} parent=11 // pred_region
        _
      $region16: #{conv_block_forward.5} parent=11 // pred_fallthru
        _
      // Predicated region
      $region17: #{conv_block_forward.5} parent=11 // pred_check
        %p149 = pneg %p79
      $region18: #{conv_block_forward.5} parent=11 // pred_check_branch
        %151 = sbr.rel (%p149) target = $region20
      $region19: #{conv_block_forward.5} parent=11 // pred_region
        _
      $region20: #{conv_block_forward.5} parent=11 // pred_fallthru
        _
    $region12: #{conv_block_forward.5} parent=5 // pred_fallthru
      _
    %p152 = scmp.lt.s32.totalorder %s11, 2
    // Predicated region
    $region21: #{conv_block_forward.5} parent=5 // pred_check
      %p153 = pneg %p152
    $region22: #{conv_block_forward.5} parent=5 // pred_check_branch
      %155 = sbr.rel (%p153) target = $region24
    $region23: #{conv_block_forward.5} parent=5 // pred_region
      // Predicated region
      $region25: #{conv_block_forward.5} parent=23 // pred_check
        %p156 = pneg %p31
      $region26: #{conv_block_forward.5} parent=23 // pred_check_branch
        %158 = sbr.rel (%p156) target = $region28
      $region27: #{conv_block_forward.5} parent=23 // pred_region
        %p159 = scmp.lt.s32.totalorder %s11, 1
        %s160 = scalar_select %p159, %s11, 1
        %s161 = smul.addr %s160, 80
        %s162 = smul.addr %s161, 8
        %s163 = scalar_lea.vmem %s0, %s162
      $region28: #{conv_block_forward.5} parent=23 // pred_fallthru
        _
    $region24: #{conv_block_forward.5} parent=5 // pred_fallthru
      _
    %p164 = scmp.le.s32.totalorder 1, %s11
    %p165 = scmp.lt.s32.totalorder %s11, 3
    %p166 = pnand %p164, %p165
    %p167 = pneg %p166
    // Predicated region
    $region29: #{conv_block_forward.5} parent=5 // pred_check
      _
    $region30: #{conv_block_forward.5} parent=5 // pred_check_branch
      %169 = sbr.rel (%p166) target = $region32
    $region31: #{conv_block_forward.5} parent=5 // pred_region
      %s170 = ssub.s32 %s11, 1
      %p171 = scmp.lt.s32.totalorder %s16, 1
      %s172 = scalar_select %p171, %s16, 1
      %s173 = smul.addr %s172, 80
      %s174 = smul.addr %s173, 8
      %s175 = scalar_lea.vmem %s0, %s174
      %p176 = pneg %p37
      %p177 = pneg %p34
      %p178 = pneg %p58
      %p179 = pneg %p55
      %p180 = pneg %p79
      %p181 = pneg %p76
      %p182 = pneg %p105
      %p183 = pneg %p102
      %p184 = scmp.lt.s32.totalorder %s16, 1
      %s185 = scalar_select %p184, %s16, 1
      %s186 = smul.addr %s185, 8
      %s187 = smul.addr %s186, 8
      %s188 = scalar_lea.vmem %s3, %s187
      %p189 = pneg %p131
      %p190 = pneg %p128
      %p191 = scmp.lt.s32.totalorder %s16, 1
      %s192 = scalar_select %p191, %s16, 1
      %s193 = smul.addr %s192, 2
      %s194 = scalar_lea.vmem %s4, %s193
      %p195 = scmp.lt.s32.totalorder %s16, 1
      %s196 = scalar_select %p195, %s16, 1
      %s197 = smul.addr %s196, 80
      %s198 = smul.addr %s197, 8
      %s199 = scalar_lea.vmem %s0, %s198
      %p200 = scmp.lt.s32.totalorder %s16, 1
      %s201 = scalar_select %p200, %s16, 1
      %s202 = smul.addr %s201, 8
      %s203 = smul.addr %s202, 8
      %s204 = scalar_lea.vmem %s3, %s203
      %p205 = scmp.lt.s32.totalorder %s16, 1
      %s206 = scalar_select %p205, %s16, 1
      %s207 = smul.addr %s206, 2
      %s208 = scalar_lea.vmem %s4, %s207
      %v209 = vld [vmem:[%s2] sm:$0x1]
      %v211 = vperm.slane %v209, 0
      %v213 = vadd.f32 %v211, 0.0
      %v214 = vld [vmem:[%s199] sm:$0xff]
      %v215 = vld [vmem:[%s199 + $0x10] sm:$0xff]
      %v216 = vld [vmem:[%s199 + $0x20] sm:$0xff]
      %v217 = vld [vmem:[%s199 + $0x30] sm:$0xff]
      %v218 = vld [vmem:[%s199 + $0x40] sm:$0xff]
      %v219 = vld [vmem:[%s199 + $0x50] sm:$0xff]
      %v220 = vld [vmem:[%s199 + $0x60] sm:$0xff]
      %v221 = vld [vmem:[%s199 + $0x70] sm:$0xff]
      %v222 = vld [vmem:[%s1] sm:$0xf]
      %vm223 = vcmask 31744
      %v225 = vsel %vm223, %v214, 0
      %v228 = vsel %vm223, %v215, 0
      %v231 = vsel %vm223, %v216, 0
      %v234 = vsel %vm223, %v217, 0
      %v237 = vsel %vm223, %v218, 0
      %v240 = vsel %vm223, %v219, 0
      %v243 = vsel %vm223, %v220, 0
      %v246 = vsel %vm223, %v221, 0
      %vm248 = vcmask 1043456
      %v250 = vsel %vm248, %v222, 0
      %252 = vmatpush.msra.mxu0 0.0
      %253 = vmatpush.msra.mxu0 0.0
      %254 = vmatpush.msra.mxu0 0.0
      %255 = vmatpush.msra.mxu0 0.0
      %256 = vmatpush.msra.mxu0 0.0
      %257 = vmatpush.msra.mxu0 0.0
      %258 = vmatpush.msra.mxu0 0.0
      %259 = vmatpush.msra.mxu0 0.0
      %260 = vmatpush.msra.mxu0 0.0
      %261 = vmatpush.msra.mxu0 0.0
      %262 = vmatpush.msra.mxu0 0.0
      %263 = vmatpush.msra.mxu0 0.0
      %264 = vmatpush.msra.mxu0 0.0
      %265 = vmatpush.msra.mxu0 0.0
      %266 = vmatpush.msra.mxu0 0.0
      %267 = vmatpush.msra.mxu0 %v250
      %268 = vmatmul.f32.gmra.mxu0 %v225
      %v269 = vpop.f32.mrf.mxu0
      %v270 = vadd.f32 0.0, %v269
      %271 = vmatmul.f32.gmra.mxu0 %v228
      %v272 = vpop.f32.mrf.mxu0
      %v273 = vadd.f32 0.0, %v272
      %274 = vmatmul.f32.gmra.mxu0 %v231
      %v275 = vpop.f32.mrf.mxu0
      %v276 = vadd.f32 0.0, %v275
      %277 = vmatmul.f32.gmra.mxu0 %v234
      %v278 = vpop.f32.mrf.mxu0
      %v279 = vadd.f32 0.0, %v278
      %280 = vmatmul.f32.gmra.mxu0 %v237
      %v281 = vpop.f32.mrf.mxu0
      %v282 = vadd.f32 0.0, %v281
      %283 = vmatmul.f32.gmra.mxu0 %v240
      %v284 = vpop.f32.mrf.mxu0
      %v285 = vadd.f32 0.0, %v284
      %286 = vmatmul.f32.gmra.mxu0 %v243
      %v287 = vpop.f32.mrf.mxu0
      %v288 = vadd.f32 0.0, %v287
      %289 = vmatmul.f32.gmra.mxu0 %v246
      %v290 = vpop.f32.mrf.mxu0
      %v291 = vadd.f32 0.0, %v290
      %292 = vdwg.mxu0
      %v293 = vadd.f32 %v213, %v270
      %v294 = vadd.f32 %v213, %v273
      %v295 = vadd.f32 %v213, %v276
      %v296 = vadd.f32 %v213, %v279
      %v297 = vadd.f32 %v213, %v282
      %v298 = vadd.f32 %v213, %v285
      %v299 = vadd.f32 %v213, %v288
      %v300 = vadd.f32 %v213, %v291
      %s301 = scalar_lea.vmem %s199, 160
      %v302 = vld [vmem:[%s301] sm:$0xff]
      %v303 = vld [vmem:[%s301 + $0x10] sm:$0xff]
      %v304 = vld [vmem:[%s301 + $0x20] sm:$0xff]
      %v305 = vld [vmem:[%s301 + $0x30] sm:$0xff]
      %v306 = vld [vmem:[%s301 + $0x40] sm:$0xff]
      %v307 = vld [vmem:[%s301 + $0x50] sm:$0xff]
      %v308 = vld [vmem:[%s301 + $0x60] sm:$0xff]
      %v309 = vld [vmem:[%s301 + $0x70] sm:$0xff]
      %s310 = scalar_lea.vmem %s1, 4
      %v311 = vld [vmem:[%s310] sm:$0xf]
      %v313 = vsel %vm223, %v302, 0
      %v316 = vsel %vm223, %v303, 0
      %v319 = vsel %vm223, %v304, 0
      %v322 = vsel %vm223, %v305, 0
      %v325 = vsel %vm223, %v306, 0
      %v328 = vsel %vm223, %v307, 0
      %v331 = vsel %vm223, %v308, 0
      %v334 = vsel %vm223, %v309, 0
      %v337 = vsel %vm248, %v311, 0
      %339 = vmatpush.msra.mxu0 0.0
      %340 = vmatpush.msra.mxu0 0.0
      %341 = vmatpush.msra.mxu0 0.0
      %342 = vmatpush.msra.mxu0 0.0
      %343 = vmatpush.msra.mxu0 0.0
      %344 = vmatpush.msra.mxu0 0.0
      %345 = vmatpush.msra.mxu0 0.0
      %346 = vmatpush.msra.mxu0 0.0
      %347 = vmatpush.msra.mxu0 0.0
      %348 = vmatpush.msra.mxu0 0.0
      %349 = vmatpush.msra.mxu0 0.0
      %350 = vmatpush.msra.mxu0 0.0
      %351 = vmatpush.msra.mxu0 0.0
      %352 = vmatpush.msra.mxu0 0.0
      %353 = vmatpush.msra.mxu0 0.0
      %354 = vmatpush.msra.mxu0 %v337
      %355 = vmatmul.f32.gmra.mxu0 %v313
      %v356 = vpop.f32.mrf.mxu0
      %v357 = vadd.f32 0.0, %v356
      %358 = vmatmul.f32.gmra.mxu0 %v316
      %v359 = vpop.f32.mrf.mxu0
      %v360 = vadd.f32 0.0, %v359
      %361 = vmatmul.f32.gmra.mxu0 %v319
      %v362 = vpop.f32.mrf.mxu0
      %v363 = vadd.f32 0.0, %v362
      %364 = vmatmul.f32.gmra.mxu0 %v322
      %v365 = vpop.f32.mrf.mxu0
      %v366 = vadd.f32 0.0, %v365
      %367 = vmatmul.f32.gmra.mxu0 %v325
      %v368 = vpop.f32.mrf.mxu0
      %v369 = vadd.f32 0.0, %v368
      %370 = vmatmul.f32.gmra.mxu0 %v328
      %v371 = vpop.f32.mrf.mxu0
      %v372 = vadd.f32 0.0, %v371
      %373 = vmatmul.f32.gmra.mxu0 %v331
      %v374 = vpop.f32.mrf.mxu0
      %v375 = vadd.f32 0.0, %v374
      %376 = vmatmul.f32.gmra.mxu0 %v334
      %v377 = vpop.f32.mrf.mxu0
      %v378 = vadd.f32 0.0, %v377
      %379 = vdwg.mxu0
      %v380 = vadd.f32 %v293, %v357
      %v381 = vadd.f32 %v294, %v360
      %v382 = vadd.f32 %v295, %v363
      %v383 = vadd.f32 %v296, %v366
      %v384 = vadd.f32 %v297, %v369
      %v385 = vadd.f32 %v298, %v372
      %v386 = vadd.f32 %v299, %v375
      %v387 = vadd.f32 %v300, %v378
      %v388 = vld [vmem:[%s199 + $0x1] sm:$0xff]
      %v389 = vld [vmem:[%s199 + $0x11] sm:$0xff]
      %v390 = vld [vmem:[%s199 + $0x21] sm:$0xff]
      %v391 = vld [vmem:[%s199 + $0x31] sm:$0xff]
      %v392 = vld [vmem:[%s199 + $0x41] sm:$0xff]
      %v393 = vld [vmem:[%s199 + $0x51] sm:$0xff]
      %v394 = vld [vmem:[%s199 + $0x61] sm:$0xff]
      %v395 = vld [vmem:[%s199 + $0x71] sm:$0xff]
      %s396 = scalar_lea.vmem %s1, 8
      %v397 = vld [vmem:[%s396] sm:$0xf]
      %v399 = vsel %vm223, %v388, 0
      %v402 = vsel %vm223, %v389, 0
      %v405 = vsel %vm223, %v390, 0
      %v408 = vsel %vm223, %v391, 0
      %v411 = vsel %vm223, %v392, 0
      %v414 = vsel %vm223, %v393, 0
      %v417 = vsel %vm223, %v394, 0
      %v420 = vsel %vm223, %v395, 0
      %v423 = vsel %vm248, %v397, 0
      %425 = vmatpush.msra.mxu0 0.0
      %426 = vmatpush.msra.mxu0 0.0
      %427 = vmatpush.msra.mxu0 0.0
      %428 = vmatpush.msra.mxu0 0.0
      %429 = vmatpush.msra.mxu0 0.0
      %430 = vmatpush.msra.mxu0 0.0
      %431 = vmatpush.msra.mxu0 0.0
      %432 = vmatpush.msra.mxu0 0.0
      %433 = vmatpush.msra.mxu0 0.0
      %434 = vmatpush.msra.mxu0 0.0
      %435 = vmatpush.msra.mxu0 0.0
      %436 = vmatpush.msra.mxu0 0.0
      %437 = vmatpush.msra.mxu0 0.0
      %438 = vmatpush.msra.mxu0 0.0
      %439 = vmatpush.msra.mxu0 0.0
      %440 = vmatpush.msra.mxu0 %v423
      %441 = vmatmul.f32.gmra.mxu0 %v399
      %v442 = vpop.f32.mrf.mxu0
      %v443 = vadd.f32 0.0, %v442
      %444 = vmatmul.f32.gmra.mxu0 %v402
      %v445 = vpop.f32.mrf.mxu0
      %v446 = vadd.f32 0.0, %v445
      %447 = vmatmul.f32.gmra.mxu0 %v405
      %v448 = vpop.f32.mrf.mxu0
      %v449 = vadd.f32 0.0, %v448
      %450 = vmatmul.f32.gmra.mxu0 %v408
      %v451 = vpop.f32.mrf.mxu0
      %v452 = vadd.f32 0.0, %v451
      %453 = vmatmul.f32.gmra.mxu0 %v411
      %v454 = vpop.f32.mrf.mxu0
      %v455 = vadd.f32 0.0, %v454
      %456 = vmatmul.f32.gmra.mxu0 %v414
      %v457 = vpop.f32.mrf.mxu0
      %v458 = vadd.f32 0.0, %v457
      %459 = vmatmul.f32.gmra.mxu0 %v417
      %v460 = vpop.f32.mrf.mxu0
      %v461 = vadd.f32 0.0, %v460
      %462 = vmatmul.f32.gmra.mxu0 %v420
      %v463 = vpop.f32.mrf.mxu0
      %v464 = vadd.f32 0.0, %v463
      %465 = vdwg.mxu0
      %v466 = vadd.f32 %v380, %v443
      %v467 = vadd.f32 %v381, %v446
      %v468 = vadd.f32 %v382, %v449
      %v469 = vadd.f32 %v383, %v452
      %v470 = vadd.f32 %v384, %v455
      %v471 = vadd.f32 %v385, %v458
      %v472 = vadd.f32 %v386, %v461
      %v473 = vadd.f32 %v387, %v464
      %v474 = vld [vmem:[%s301 + $0x1] sm:$0xff]
      %v475 = vld [vmem:[%s301 + $0x11] sm:$0xff]
      %v476 = vld [vmem:[%s301 + $0x21] sm:$0xff]
      %v477 = vld [vmem:[%s301 + $0x31] sm:$0xff]
      %v478 = vld [vmem:[%s301 + $0x41] sm:$0xff]
      %v479 = vld [vmem:[%s301 + $0x51] sm:$0xff]
      %v480 = vld [vmem:[%s301 + $0x61] sm:$0xff]
      %v481 = vld [vmem:[%s301 + $0x71] sm:$0xff]
      %s482 = scalar_lea.vmem %s1, 12
      %v483 = vld [vmem:[%s482] sm:$0xf]
      %v485 = vsel %vm223, %v474, 0
      %v488 = vsel %vm223, %v475, 0
      %v491 = vsel %vm223, %v476, 0
      %v494 = vsel %vm223, %v477, 0
      %v497 = vsel %vm223, %v478, 0
      %v500 = vsel %vm223, %v479, 0
      %v503 = vsel %vm223, %v480, 0
      %v506 = vsel %vm223, %v481, 0
      %v509 = vsel %vm248, %v483, 0
      %511 = vmatpush.msra.mxu0 0.0
      %512 = vmatpush.msra.mxu0 0.0
      %513 = vmatpush.msra.mxu0 0.0
      %514 = vmatpush.msra.mxu0 0.0
      %515 = vmatpush.msra.mxu0 0.0
      %516 = vmatpush.msra.mxu0 0.0
      %517 = vmatpush.msra.mxu0 0.0
      %518 = vmatpush.msra.mxu0 0.0
      %519 = vmatpush.msra.mxu0 0.0
      %520 = vmatpush.msra.mxu0 0.0
      %521 = vmatpush.msra.mxu0 0.0
      %522 = vmatpush.msra.mxu0 0.0
      %523 = vmatpush.msra.mxu0 0.0
      %524 = vmatpush.msra.mxu0 0.0
      %525 = vmatpush.msra.mxu0 0.0
      %526 = vmatpush.msra.mxu0 %v509
      %527 = vmatmul.f32.gmra.mxu0 %v485
      %v528 = vpop.f32.mrf.mxu0
      %v529 = vadd.f32 0.0, %v528
      %530 = vmatmul.f32.gmra.mxu0 %v488
      %v531 = vpop.f32.mrf.mxu0
      %v532 = vadd.f32 0.0, %v531
      %533 = vmatmul.f32.gmra.mxu0 %v491
      %v534 = vpop.f32.mrf.mxu0
      %v535 = vadd.f32 0.0, %v534
      %536 = vmatmul.f32.gmra.mxu0 %v494
      %v537 = vpop.f32.mrf.mxu0
      %v538 = vadd.f32 0.0, %v537
      %539 = vmatmul.f32.gmra.mxu0 %v497
      %v540 = vpop.f32.mrf.mxu0
      %v541 = vadd.f32 0.0, %v540
      %542 = vmatmul.f32.gmra.mxu0 %v500
      %v543 = vpop.f32.mrf.mxu0
      %v544 = vadd.f32 0.0, %v543
      %545 = vmatmul.f32.gmra.mxu0 %v503
      %v546 = vpop.f32.mrf.mxu0
      %v547 = vadd.f32 0.0, %v546
      %548 = vmatmul.f32.gmra.mxu0 %v506
      %v549 = vpop.f32.mrf.mxu0
      %v550 = vadd.f32 0.0, %v549
      %551 = vdwg.mxu0
      %v552 = vadd.f32 %v466, %v529
      %v553 = vadd.f32 %v467, %v532
      %v554 = vadd.f32 %v468, %v535
      %v555 = vadd.f32 %v469, %v538
      %v556 = vadd.f32 %v470, %v541
      %v557 = vadd.f32 %v471, %v544
      %v558 = vadd.f32 %v472, %v547
      %v559 = vadd.f32 %v473, %v550
      %v560 = vld [vmem:[%s199 + $0x2] sm:$0xff]
      %v561 = vld [vmem:[%s199 + $0x12] sm:$0xff]
      %v562 = vld [vmem:[%s199 + $0x22] sm:$0xff]
      %v563 = vld [vmem:[%s199 + $0x32] sm:$0xff]
      %v564 = vld [vmem:[%s199 + $0x42] sm:$0xff]
      %v565 = vld [vmem:[%s199 + $0x52] sm:$0xff]
      %v566 = vld [vmem:[%s199 + $0x62] sm:$0xff]
      %v567 = vld [vmem:[%s199 + $0x72] sm:$0xff]
      %s568 = scalar_lea.vmem %s1, 16
      %v569 = vld [vmem:[%s568] sm:$0xf]
      %v571 = vsel %vm223, %v560, 0
      %v574 = vsel %vm223, %v561, 0
      %v577 = vsel %vm223, %v562, 0
      %v580 = vsel %vm223, %v563, 0
      %v583 = vsel %vm223, %v564, 0
      %v586 = vsel %vm223, %v565, 0
      %v589 = vsel %vm223, %v566, 0
      %v592 = vsel %vm223, %v567, 0
      %v595 = vsel %vm248, %v569, 0
      %597 = vmatpush.msra.mxu0 0.0
      %598 = vmatpush.msra.mxu0 0.0
      %599 = vmatpush.msra.mxu0 0.0
      %600 = vmatpush.msra.mxu0 0.0
      %601 = vmatpush.msra.mxu0 0.0
      %602 = vmatpush.msra.mxu0 0.0
      %603 = vmatpush.msra.mxu0 0.0
      %604 = vmatpush.msra.mxu0 0.0
      %605 = vmatpush.msra.mxu0 0.0
      %606 = vmatpush.msra.mxu0 0.0
      %607 = vmatpush.msra.mxu0 0.0
      %608 = vmatpush.msra.mxu0 0.0
      %609 = vmatpush.msra.mxu0 0.0
      %610 = vmatpush.msra.mxu0 0.0
      %611 = vmatpush.msra.mxu0 0.0
      %612 = vmatpush.msra.mxu0 %v595
      %613 = vmatmul.f32.gmra.mxu0 %v571
      %v614 = vpop.f32.mrf.mxu0
      %v615 = vadd.f32 0.0, %v614
      %616 = vmatmul.f32.gmra.mxu0 %v574
      %v617 = vpop.f32.mrf.mxu0
      %v618 = vadd.f32 0.0, %v617
      %619 = vmatmul.f32.gmra.mxu0 %v577
      %v620 = vpop.f32.mrf.mxu0
      %v621 = vadd.f32 0.0, %v620
      %622 = vmatmul.f32.gmra.mxu0 %v580
      %v623 = vpop.f32.mrf.mxu0
      %v624 = vadd.f32 0.0, %v623
      %625 = vmatmul.f32.gmra.mxu0 %v583
      %v626 = vpop.f32.mrf.mxu0
      %v627 = vadd.f32 0.0, %v626
      %628 = vmatmul.f32.gmra.mxu0 %v586
      %v629 = vpop.f32.mrf.mxu0
      %v630 = vadd.f32 0.0, %v629
      %631 = vmatmul.f32.gmra.mxu0 %v589
      %v632 = vpop.f32.mrf.mxu0
      %v633 = vadd.f32 0.0, %v632
      %634 = vmatmul.f32.gmra.mxu0 %v592
      %v635 = vpop.f32.mrf.mxu0
      %v636 = vadd.f32 0.0, %v635
      %637 = vdwg.mxu0
      %v638 = vadd.f32 %v552, %v615
      %v639 = vadd.f32 %v553, %v618
      %v640 = vadd.f32 %v554, %v621
      %v641 = vadd.f32 %v555, %v624
      %v642 = vadd.f32 %v556, %v627
      %v643 = vadd.f32 %v557, %v630
      %v644 = vadd.f32 %v558, %v633
      %v645 = vadd.f32 %v559, %v636
      %s646 = scalar_lea.vmem %s199, 320
      %v647 = vld [vmem:[%s646] sm:$0xff]
      %v648 = vld [vmem:[%s646 + $0x10] sm:$0xff]
      %v649 = vld [vmem:[%s646 + $0x20] sm:$0xff]
      %v650 = vld [vmem:[%s646 + $0x30] sm:$0xff]
      %v651 = vld [vmem:[%s646 + $0x40] sm:$0xff]
      %v652 = vld [vmem:[%s646 + $0x50] sm:$0xff]
      %v653 = vld [vmem:[%s646 + $0x60] sm:$0xff]
      %v654 = vld [vmem:[%s646 + $0x70] sm:$0xff]
      %s655 = scalar_lea.vmem %s1, 20
      %v656 = vld [vmem:[%s655] sm:$0xf]
      %v658 = vsel %vm223, %v647, 0
      %v661 = vsel %vm223, %v648, 0
      %v664 = vsel %vm223, %v649, 0
      %v667 = vsel %vm223, %v650, 0
      %v670 = vsel %vm223, %v651, 0
      %v673 = vsel %vm223, %v652, 0
      %v676 = vsel %vm223, %v653, 0
      %v679 = vsel %vm223, %v654, 0
      %v682 = vsel %vm248, %v656, 0
      %684 = vmatpush.msra.mxu0 0.0
      %685 = vmatpush.msra.mxu0 0.0
      %686 = vmatpush.msra.mxu0 0.0
      %687 = vmatpush.msra.mxu0 0.0
      %688 = vmatpush.msra.mxu0 0.0
      %689 = vmatpush.msra.mxu0 0.0
      %690 = vmatpush.msra.mxu0 0.0
      %691 = vmatpush.msra.mxu0 0.0
      %692 = vmatpush.msra.mxu0 0.0
      %693 = vmatpush.msra.mxu0 0.0
      %694 = vmatpush.msra.mxu0 0.0
      %695 = vmatpush.msra.mxu0 0.0
      %696 = vmatpush.msra.mxu0 0.0
      %697 = vmatpush.msra.mxu0 0.0
      %698 = vmatpush.msra.mxu0 0.0
      %699 = vmatpush.msra.mxu0 %v682
      %700 = vmatmul.f32.gmra.mxu0 %v658
      %v701 = vpop.f32.mrf.mxu0
      %v702 = vadd.f32 0.0, %v701
      %703 = vmatmul.f32.gmra.mxu0 %v661
      %v704 = vpop.f32.mrf.mxu0
      %v705 = vadd.f32 0.0, %v704
      %706 = vmatmul.f32.gmra.mxu0 %v664
      %v707 = vpop.f32.mrf.mxu0
      %v708 = vadd.f32 0.0, %v707
      %709 = vmatmul.f32.gmra.mxu0 %v667
      %v710 = vpop.f32.mrf.mxu0
      %v711 = vadd.f32 0.0, %v710
      %712 = vmatmul.f32.gmra.mxu0 %v670
      %v713 = vpop.f32.mrf.mxu0
      %v714 = vadd.f32 0.0, %v713
      %715 = vmatmul.f32.gmra.mxu0 %v673
      %v716 = vpop.f32.mrf.mxu0
      %v717 = vadd.f32 0.0, %v716
      %718 = vmatmul.f32.gmra.mxu0 %v676
      %v719 = vpop.f32.mrf.mxu0
      %v720 = vadd.f32 0.0, %v719
      %721 = vmatmul.f32.gmra.mxu0 %v679
      %v722 = vpop.f32.mrf.mxu0
      %v723 = vadd.f32 0.0, %v722
      %724 = vdwg.mxu0
      %v725 = vadd.f32 %v638, %v702
      %v726 = vadd.f32 %v639, %v705
      %v727 = vadd.f32 %v640, %v708
      %v728 = vadd.f32 %v641, %v711
      %v729 = vadd.f32 %v642, %v714
      %v730 = vadd.f32 %v643, %v717
      %v731 = vadd.f32 %v644, %v720
      %v732 = vadd.f32 %v645, %v723
      %s733 = scalar_lea.vmem %s199, 480
      %v734 = vld [vmem:[%s733] sm:$0xff]
      %v735 = vld [vmem:[%s733 + $0x10] sm:$0xff]
      %v736 = vld [vmem:[%s733 + $0x20] sm:$0xff]
      %v737 = vld [vmem:[%s733 + $0x30] sm:$0xff]
      %v738 = vld [vmem:[%s733 + $0x40] sm:$0xff]
      %v739 = vld [vmem:[%s733 + $0x50] sm:$0xff]
      %v740 = vld [vmem:[%s733 + $0x60] sm:$0xff]
      %v741 = vld [vmem:[%s733 + $0x70] sm:$0xff]
      %s742 = scalar_lea.vmem %s1, 24
      %v743 = vld [vmem:[%s742] sm:$0xf]
      %v745 = vsel %vm223, %v734, 0
      %v748 = vsel %vm223, %v735, 0
      %v751 = vsel %vm223, %v736, 0
      %v754 = vsel %vm223, %v737, 0
      %v757 = vsel %vm223, %v738, 0
      %v760 = vsel %vm223, %v739, 0
      %v763 = vsel %vm223, %v740, 0
      %v766 = vsel %vm223, %v741, 0
      %v769 = vsel %vm248, %v743, 0
      %771 = vmatpush.msra.mxu0 0.0
      %772 = vmatpush.msra.mxu0 0.0
      %773 = vmatpush.msra.mxu0 0.0
      %774 = vmatpush.msra.mxu0 0.0
      %775 = vmatpush.msra.mxu0 0.0
      %776 = vmatpush.msra.mxu0 0.0
      %777 = vmatpush.msra.mxu0 0.0
      %778 = vmatpush.msra.mxu0 0.0
      %779 = vmatpush.msra.mxu0 0.0
      %780 = vmatpush.msra.mxu0 0.0
      %781 = vmatpush.msra.mxu0 0.0
      %782 = vmatpush.msra.mxu0 0.0
      %783 = vmatpush.msra.mxu0 0.0
      %784 = vmatpush.msra.mxu0 0.0
      %785 = vmatpush.msra.mxu0 0.0
      %786 = vmatpush.msra.mxu0 %v769
      %787 = vmatmul.f32.gmra.mxu0 %v745
      %v788 = vpop.f32.mrf.mxu0
      %v789 = vadd.f32 0.0, %v788
      %790 = vmatmul.f32.gmra.mxu0 %v748
      %v791 = vpop.f32.mrf.mxu0
      %v792 = vadd.f32 0.0, %v791
      %793 = vmatmul.f32.gmra.mxu0 %v751
      %v794 = vpop.f32.mrf.mxu0
      %v795 = vadd.f32 0.0, %v794
      %796 = vmatmul.f32.gmra.mxu0 %v754
      %v797 = vpop.f32.mrf.mxu0
      %v798 = vadd.f32 0.0, %v797
      %799 = vmatmul.f32.gmra.mxu0 %v757
      %v800 = vpop.f32.mrf.mxu0
      %v801 = vadd.f32 0.0, %v800
      %802 = vmatmul.f32.gmra.mxu0 %v760
      %v803 = vpop.f32.mrf.mxu0
      %v804 = vadd.f32 0.0, %v803
      %805 = vmatmul.f32.gmra.mxu0 %v763
      %v806 = vpop.f32.mrf.mxu0
      %v807 = vadd.f32 0.0, %v806
      %808 = vmatmul.f32.gmra.mxu0 %v766
      %v809 = vpop.f32.mrf.mxu0
      %v810 = vadd.f32 0.0, %v809
      %811 = vdwg.mxu0
      %v812 = vadd.f32 %v725, %v789
      %v813 = vadd.f32 %v726, %v792
      %v814 = vadd.f32 %v727, %v795
      %v815 = vadd.f32 %v728, %v798
      %v816 = vadd.f32 %v729, %v801
      %v817 = vadd.f32 %v730, %v804
      %v818 = vadd.f32 %v731, %v807
      %v819 = vadd.f32 %v732, %v810
      %v820 = vld [vmem:[%s646 + $0x1] sm:$0xff]
      %v821 = vld [vmem:[%s646 + $0x11] sm:$0xff]
      %v822 = vld [vmem:[%s646 + $0x21] sm:$0xff]
      %v823 = vld [vmem:[%s646 + $0x31] sm:$0xff]
      %v824 = vld [vmem:[%s646 + $0x41] sm:$0xff]
      %v825 = vld [vmem:[%s646 + $0x51] sm:$0xff]
      %v826 = vld [vmem:[%s646 + $0x61] sm:$0xff]
      %v827 = vld [vmem:[%s646 + $0x71] sm:$0xff]
      %s828 = scalar_lea.vmem %s1, 28
      %v829 = vld [vmem:[%s828] sm:$0xf]
      %v831 = vsel %vm223, %v820, 0
      %v834 = vsel %vm223, %v821, 0
      %v837 = vsel %vm223, %v822, 0
      %v840 = vsel %vm223, %v823, 0
      %v843 = vsel %vm223, %v824, 0
      %v846 = vsel %vm223, %v825, 0
      %v849 = vsel %vm223, %v826, 0
      %v852 = vsel %vm223, %v827, 0
      %v855 = vsel %vm248, %v829, 0
      %857 = vmatpush.msra.mxu0 0.0
      %858 = vmatpush.msra.mxu0 0.0
      %859 = vmatpush.msra.mxu0 0.0
      %860 = vmatpush.msra.mxu0 0.0
      %861 = vmatpush.msra.mxu0 0.0
      %862 = vmatpush.msra.mxu0 0.0
      %863 = vmatpush.msra.mxu0 0.0
      %864 = vmatpush.msra.mxu0 0.0
      %865 = vmatpush.msra.mxu0 0.0
      %866 = vmatpush.msra.mxu0 0.0
      %867 = vmatpush.msra.mxu0 0.0
      %868 = vmatpush.msra.mxu0 0.0
      %869 = vmatpush.msra.mxu0 0.0
      %870 = vmatpush.msra.mxu0 0.0
      %871 = vmatpush.msra.mxu0 0.0
      %872 = vmatpush.msra.mxu0 %v855
      %873 = vmatmul.f32.gmra.mxu0 %v831
      %v874 = vpop.f32.mrf.mxu0
      %v875 = vadd.f32 0.0, %v874
      %876 = vmatmul.f32.gmra.mxu0 %v834
      %v877 = vpop.f32.mrf.mxu0
      %v878 = vadd.f32 0.0, %v877
      %879 = vmatmul.f32.gmra.mxu0 %v837
      %v880 = vpop.f32.mrf.mxu0
      %v881 = vadd.f32 0.0, %v880
      %882 = vmatmul.f32.gmra.mxu0 %v840
      %v883 = vpop.f32.mrf.mxu0
      %v884 = vadd.f32 0.0, %v883
      %885 = vmatmul.f32.gmra.mxu0 %v843
      %v886 = vpop.f32.mrf.mxu0
      %v887 = vadd.f32 0.0, %v886
      %888 = vmatmul.f32.gmra.mxu0 %v846
      %v889 = vpop.f32.mrf.mxu0
      %v890 = vadd.f32 0.0, %v889
      %891 = vmatmul.f32.gmra.mxu0 %v849
      %v892 = vpop.f32.mrf.mxu0
      %v893 = vadd.f32 0.0, %v892
      %894 = vmatmul.f32.gmra.mxu0 %v852
      %v895 = vpop.f32.mrf.mxu0
      %v896 = vadd.f32 0.0, %v895
      %897 = vdwg.mxu0
      %v898 = vadd.f32 %v812, %v875
      %v899 = vadd.f32 %v813, %v878
      %v900 = vadd.f32 %v814, %v881
      %v901 = vadd.f32 %v815, %v884
      %v902 = vadd.f32 %v816, %v887
      %v903 = vadd.f32 %v817, %v890
      %v904 = vadd.f32 %v818, %v893
      %v905 = vadd.f32 %v819, %v896
      %v906 = vld [vmem:[%s733 + $0x1] sm:$0xff]
      %v907 = vld [vmem:[%s733 + $0x11] sm:$0xff]
      %v908 = vld [vmem:[%s733 + $0x21] sm:$0xff]
      %v909 = vld [vmem:[%s733 + $0x31] sm:$0xff]
      %v910 = vld [vmem:[%s733 + $0x41] sm:$0xff]
      %v911 = vld [vmem:[%s733 + $0x51] sm:$0xff]
      %v912 = vld [vmem:[%s733 + $0x61] sm:$0xff]
      %v913 = vld [vmem:[%s733 + $0x71] sm:$0xff]
      %s914 = scalar_lea.vmem %s1, 32
      %v915 = vld [vmem:[%s914] sm:$0xf]
      %v917 = vsel %vm223, %v906, 0
      %v920 = vsel %vm223, %v907, 0
      %v923 = vsel %vm223, %v908, 0
      %v926 = vsel %vm223, %v909, 0
      %v929 = vsel %vm223, %v910, 0
      %v932 = vsel %vm223, %v911, 0
      %v935 = vsel %vm223, %v912, 0
      %v938 = vsel %vm223, %v913, 0
      %v941 = vsel %vm248, %v915, 0
      %943 = vmatpush.msra.mxu0 0.0
      %944 = vmatpush.msra.mxu0 0.0
      %945 = vmatpush.msra.mxu0 0.0
      %946 = vmatpush.msra.mxu0 0.0
      %947 = vmatpush.msra.mxu0 0.0
      %948 = vmatpush.msra.mxu0 0.0
      %949 = vmatpush.msra.mxu0 0.0
      %950 = vmatpush.msra.mxu0 0.0
      %951 = vmatpush.msra.mxu0 0.0
      %952 = vmatpush.msra.mxu0 0.0
      %953 = vmatpush.msra.mxu0 0.0
      %954 = vmatpush.msra.mxu0 0.0
      %955 = vmatpush.msra.mxu0 0.0
      %956 = vmatpush.msra.mxu0 0.0
      %957 = vmatpush.msra.mxu0 0.0
      %958 = vmatpush.msra.mxu0 %v941
      %959 = vmatmul.f32.gmra.mxu0 %v917
      %v960 = vpop.f32.mrf.mxu0
      %v961 = vadd.f32 0.0, %v960
      %962 = vmatmul.f32.gmra.mxu0 %v920
      %v963 = vpop.f32.mrf.mxu0
      %v964 = vadd.f32 0.0, %v963
      %965 = vmatmul.f32.gmra.mxu0 %v923
      %v966 = vpop.f32.mrf.mxu0
      %v967 = vadd.f32 0.0, %v966
      %968 = vmatmul.f32.gmra.mxu0 %v926
      %v969 = vpop.f32.mrf.mxu0
      %v970 = vadd.f32 0.0, %v969
      %971 = vmatmul.f32.gmra.mxu0 %v929
      %v972 = vpop.f32.mrf.mxu0
      %v973 = vadd.f32 0.0, %v972
      %974 = vmatmul.f32.gmra.mxu0 %v932
      %v975 = vpop.f32.mrf.mxu0
      %v976 = vadd.f32 0.0, %v975
      %977 = vmatmul.f32.gmra.mxu0 %v935
      %v978 = vpop.f32.mrf.mxu0
      %v979 = vadd.f32 0.0, %v978
      %980 = vmatmul.f32.gmra.mxu0 %v938
      %v981 = vpop.f32.mrf.mxu0
      %v982 = vadd.f32 0.0, %v981
      %983 = vdwg.mxu0
      %v984 = vadd.f32 %v898, %v961
      %v985 = vadd.f32 %v899, %v964
      %v986 = vadd.f32 %v900, %v967
      %v987 = vadd.f32 %v901, %v970
      %v988 = vadd.f32 %v902, %v973
      %v989 = vadd.f32 %v903, %v976
      %v990 = vadd.f32 %v904, %v979
      %v991 = vadd.f32 %v905, %v982
      %v992 = vld [vmem:[%s646 + $0x2] sm:$0xff]
      %v993 = vld [vmem:[%s646 + $0x12] sm:$0xff]
      %v994 = vld [vmem:[%s646 + $0x22] sm:$0xff]
      %v995 = vld [vmem:[%s646 + $0x32] sm:$0xff]
      %v996 = vld [vmem:[%s646 + $0x42] sm:$0xff]
      %v997 = vld [vmem:[%s646 + $0x52] sm:$0xff]
      %v998 = vld [vmem:[%s646 + $0x62] sm:$0xff]
      %v999 = vld [vmem:[%s646 + $0x72] sm:$0xff]
      %s1000 = scalar_lea.vmem %s1, 36
      %v1001 = vld [vmem:[%s1000] sm:$0xf]
      %v1003 = vsel %vm223, %v992, 0
      %v1006 = vsel %vm223, %v993, 0
      %v1009 = vsel %vm223, %v994, 0
      %v1012 = vsel %vm223, %v995, 0
      %v1015 = vsel %vm223, %v996, 0
      %v1018 = vsel %vm223, %v997, 0
      %v1021 = vsel %vm223, %v998, 0
      %v1024 = vsel %vm223, %v999, 0
      %v1027 = vsel %vm248, %v1001, 0
      %1029 = vmatpush.msra.mxu0 0.0
      %1030 = vmatpush.msra.mxu0 0.0
      %1031 = vmatpush.msra.mxu0 0.0
      %1032 = vmatpush.msra.mxu0 0.0
      %1033 = vmatpush.msra.mxu0 0.0
      %1034 = vmatpush.msra.mxu0 0.0
      %1035 = vmatpush.msra.mxu0 0.0
      %1036 = vmatpush.msra.mxu0 0.0
      %1037 = vmatpush.msra.mxu0 0.0
      %1038 = vmatpush.msra.mxu0 0.0
      %1039 = vmatpush.msra.mxu0 0.0
      %1040 = vmatpush.msra.mxu0 0.0
      %1041 = vmatpush.msra.mxu0 0.0
      %1042 = vmatpush.msra.mxu0 0.0
      %1043 = vmatpush.msra.mxu0 0.0
      %1044 = vmatpush.msra.mxu0 %v1027
      %1045 = vmatmul.f32.gmra.mxu0 %v1003
      %v1046 = vpop.f32.mrf.mxu0
      %v1047 = vadd.f32 0.0, %v1046
      %1048 = vmatmul.f32.gmra.mxu0 %v1006
      %v1049 = vpop.f32.mrf.mxu0
      %v1050 = vadd.f32 0.0, %v1049
      %1051 = vmatmul.f32.gmra.mxu0 %v1009
      %v1052 = vpop.f32.mrf.mxu0
      %v1053 = vadd.f32 0.0, %v1052
      %1054 = vmatmul.f32.gmra.mxu0 %v1012
      %v1055 = vpop.f32.mrf.mxu0
      %v1056 = vadd.f32 0.0, %v1055
      %1057 = vmatmul.f32.gmra.mxu0 %v1015
      %v1058 = vpop.f32.mrf.mxu0
      %v1059 = vadd.f32 0.0, %v1058
      %1060 = vmatmul.f32.gmra.mxu0 %v1018
      %v1061 = vpop.f32.mrf.mxu0
      %v1062 = vadd.f32 0.0, %v1061
      %1063 = vmatmul.f32.gmra.mxu0 %v1021
      %v1064 = vpop.f32.mrf.mxu0
      %v1065 = vadd.f32 0.0, %v1064
      %1066 = vmatmul.f32.gmra.mxu0 %v1024
      %v1067 = vpop.f32.mrf.mxu0
      %v1068 = vadd.f32 0.0, %v1067
      %1069 = vdwg.mxu0
      %v1070 = vadd.f32 %v984, %v1047
      %v1071 = vadd.f32 %v985, %v1050
      %v1072 = vadd.f32 %v986, %v1053
      %v1073 = vadd.f32 %v987, %v1056
      %v1074 = vadd.f32 %v988, %v1059
      %v1075 = vadd.f32 %v989, %v1062
      %v1076 = vadd.f32 %v990, %v1065
      %v1077 = vadd.f32 %v991, %v1068
      %s1078 = scalar_lea.vmem %s199, 16
      %v1079 = vld [vmem:[%s1078] sm:$0xff]
      %v1080 = vld [vmem:[%s1078 + $0x10] sm:$0xff]
      %v1081 = vld [vmem:[%s1078 + $0x20] sm:$0xff]
      %v1082 = vld [vmem:[%s1078 + $0x30] sm:$0xff]
      %v1083 = vld [vmem:[%s1078 + $0x40] sm:$0xff]
      %v1084 = vld [vmem:[%s1078 + $0x50] sm:$0xff]
      %v1085 = vld [vmem:[%s1078 + $0x60] sm:$0xff]
      %v1086 = vld [vmem:[%s1078 + $0x70] sm:$0xff]
      %s1087 = scalar_lea.vmem %s1, 40
      %v1088 = vld [vmem:[%s1087] sm:$0xf]
      %v1090 = vsel %vm223, %v1079, 0
      %v1093 = vsel %vm223, %v1080, 0
      %v1096 = vsel %vm223, %v1081, 0
      %v1099 = vsel %vm223, %v1082, 0
      %v1102 = vsel %vm223, %v1083, 0
      %v1105 = vsel %vm223, %v1084, 0
      %v1108 = vsel %vm223, %v1085, 0
      %v1111 = vsel %vm223, %v1086, 0
      %v1114 = vsel %vm248, %v1088, 0
      %1116 = vmatpush.msra.mxu0 0.0
      %1117 = vmatpush.msra.mxu0 0.0
      %1118 = vmatpush.msra.mxu0 0.0
      %1119 = vmatpush.msra.mxu0 0.0
      %1120 = vmatpush.msra.mxu0 0.0
      %1121 = vmatpush.msra.mxu0 0.0
      %1122 = vmatpush.msra.mxu0 0.0
      %1123 = vmatpush.msra.mxu0 0.0
      %1124 = vmatpush.msra.mxu0 0.0
      %1125 = vmatpush.msra.mxu0 0.0
      %1126 = vmatpush.msra.mxu0 0.0
      %1127 = vmatpush.msra.mxu0 0.0
      %1128 = vmatpush.msra.mxu0 0.0
      %1129 = vmatpush.msra.mxu0 0.0
      %1130 = vmatpush.msra.mxu0 0.0
      %1131 = vmatpush.msra.mxu0 %v1114
      %1132 = vmatmul.f32.gmra.mxu0 %v1090
      %v1133 = vpop.f32.mrf.mxu0
      %v1134 = vadd.f32 0.0, %v1133
      %1135 = vmatmul.f32.gmra.mxu0 %v1093
      %v1136 = vpop.f32.mrf.mxu0
      %v1137 = vadd.f32 0.0, %v1136
      %1138 = vmatmul.f32.gmra.mxu0 %v1096
      %v1139 = vpop.f32.mrf.mxu0
      %v1140 = vadd.f32 0.0, %v1139
      %1141 = vmatmul.f32.gmra.mxu0 %v1099
      %v1142 = vpop.f32.mrf.mxu0
      %v1143 = vadd.f32 0.0, %v1142
      %1144 = vmatmul.f32.gmra.mxu0 %v1102
      %v1145 = vpop.f32.mrf.mxu0
      %v1146 = vadd.f32 0.0, %v1145
      %1147 = vmatmul.f32.gmra.mxu0 %v1105
      %v1148 = vpop.f32.mrf.mxu0
      %v1149 = vadd.f32 0.0, %v1148
      %1150 = vmatmul.f32.gmra.mxu0 %v1108
      %v1151 = vpop.f32.mrf.mxu0
      %v1152 = vadd.f32 0.0, %v1151
      %1153 = vmatmul.f32.gmra.mxu0 %v1111
      %v1154 = vpop.f32.mrf.mxu0
      %v1155 = vadd.f32 0.0, %v1154
      %1156 = vdwg.mxu0
      %v1157 = vadd.f32 %v1070, %v1134
      %v1158 = vadd.f32 %v1071, %v1137
      %v1159 = vadd.f32 %v1072, %v1140
      %v1160 = vadd.f32 %v1073, %v1143
      %v1161 = vadd.f32 %v1074, %v1146
      %v1162 = vadd.f32 %v1075, %v1149
      %v1163 = vadd.f32 %v1076, %v1152
      %v1164 = vadd.f32 %v1077, %v1155
      %s1165 = scalar_lea.vmem %s199, 176
      %v1166 = vld [vmem:[%s1165] sm:$0xff]
      %v1167 = vld [vmem:[%s1165 + $0x10] sm:$0xff]
      %v1168 = vld [vmem:[%s1165 + $0x20] sm:$0xff]
      %v1169 = vld [vmem:[%s1165 + $0x30] sm:$0xff]
      %v1170 = vld [vmem:[%s1165 + $0x40] sm:$0xff]
      %v1171 = vld [vmem:[%s1165 + $0x50] sm:$0xff]
      %v1172 = vld [vmem:[%s1165 + $0x60] sm:$0xff]
      %v1173 = vld [vmem:[%s1165 + $0x70] sm:$0xff]
      %s1174 = scalar_lea.vmem %s1, 44
      %v1175 = vld [vmem:[%s1174] sm:$0xf]
      %v1177 = vsel %vm223, %v1166, 0
      %v1180 = vsel %vm223, %v1167, 0
      %v1183 = vsel %vm223, %v1168, 0
      %v1186 = vsel %vm223, %v1169, 0
      %v1189 = vsel %vm223, %v1170, 0
      %v1192 = vsel %vm223, %v1171, 0
      %v1195 = vsel %vm223, %v1172, 0
      %v1198 = vsel %vm223, %v1173, 0
      %v1201 = vsel %vm248, %v1175, 0
      %1203 = vmatpush.msra.mxu0 0.0
      %1204 = vmatpush.msra.mxu0 0.0
      %1205 = vmatpush.msra.mxu0 0.0
      %1206 = vmatpush.msra.mxu0 0.0
      %1207 = vmatpush.msra.mxu0 0.0
      %1208 = vmatpush.msra.mxu0 0.0
      %1209 = vmatpush.msra.mxu0 0.0
      %1210 = vmatpush.msra.mxu0 0.0
      %1211 = vmatpush.msra.mxu0 0.0
      %1212 = vmatpush.msra.mxu0 0.0
      %1213 = vmatpush.msra.mxu0 0.0
      %1214 = vmatpush.msra.mxu0 0.0
      %1215 = vmatpush.msra.mxu0 0.0
      %1216 = vmatpush.msra.mxu0 0.0
      %1217 = vmatpush.msra.mxu0 0.0
      %1218 = vmatpush.msra.mxu0 %v1201
      %1219 = vmatmul.f32.gmra.mxu0 %v1177
      %v1220 = vpop.f32.mrf.mxu0
      %v1221 = vadd.f32 0.0, %v1220
      %1222 = vmatmul.f32.gmra.mxu0 %v1180
      %v1223 = vpop.f32.mrf.mxu0
      %v1224 = vadd.f32 0.0, %v1223
      %1225 = vmatmul.f32.gmra.mxu0 %v1183
      %v1226 = vpop.f32.mrf.mxu0
      %v1227 = vadd.f32 0.0, %v1226
      %1228 = vmatmul.f32.gmra.mxu0 %v1186
      %v1229 = vpop.f32.mrf.mxu0
      %v1230 = vadd.f32 0.0, %v1229
      %1231 = vmatmul.f32.gmra.mxu0 %v1189
      %v1232 = vpop.f32.mrf.mxu0
      %v1233 = vadd.f32 0.0, %v1232
      %1234 = vmatmul.f32.gmra.mxu0 %v1192
      %v1235 = vpop.f32.mrf.mxu0
      %v1236 = vadd.f32 0.0, %v1235
      %1237 = vmatmul.f32.gmra.mxu0 %v1195
      %v1238 = vpop.f32.mrf.mxu0
      %v1239 = vadd.f32 0.0, %v1238
      %1240 = vmatmul.f32.gmra.mxu0 %v1198
      %v1241 = vpop.f32.mrf.mxu0
      %v1242 = vadd.f32 0.0, %v1241
      %1243 = vdwg.mxu0
      %v1244 = vadd.f32 %v1157, %v1221
      %v1245 = vadd.f32 %v1158, %v1224
      %v1246 = vadd.f32 %v1159, %v1227
      %v1247 = vadd.f32 %v1160, %v1230
      %v1248 = vadd.f32 %v1161, %v1233
      %v1249 = vadd.f32 %v1162, %v1236
      %v1250 = vadd.f32 %v1163, %v1239
      %v1251 = vadd.f32 %v1164, %v1242
      %v1252 = vld [vmem:[%s1078 + $0x1] sm:$0xff]
      %v1253 = vld [vmem:[%s1078 + $0x11] sm:$0xff]
      %v1254 = vld [vmem:[%s1078 + $0x21] sm:$0xff]
      %v1255 = vld [vmem:[%s1078 + $0x31] sm:$0xff]
      %v1256 = vld [vmem:[%s1078 + $0x41] sm:$0xff]
      %v1257 = vld [vmem:[%s1078 + $0x51] sm:$0xff]
      %v1258 = vld [vmem:[%s1078 + $0x61] sm:$0xff]
      %v1259 = vld [vmem:[%s1078 + $0x71] sm:$0xff]
      %s1260 = scalar_lea.vmem %s1, 48
      %v1261 = vld [vmem:[%s1260] sm:$0xf]
      %v1263 = vsel %vm223, %v1252, 0
      %v1266 = vsel %vm223, %v1253, 0
      %v1269 = vsel %vm223, %v1254, 0
      %v1272 = vsel %vm223, %v1255, 0
      %v1275 = vsel %vm223, %v1256, 0
      %v1278 = vsel %vm223, %v1257, 0
      %v1281 = vsel %vm223, %v1258, 0
      %v1284 = vsel %vm223, %v1259, 0
      %v1287 = vsel %vm248, %v1261, 0
      %1289 = vmatpush.msra.mxu0 0.0
      %1290 = vmatpush.msra.mxu0 0.0
      %1291 = vmatpush.msra.mxu0 0.0
      %1292 = vmatpush.msra.mxu0 0.0
      %1293 = vmatpush.msra.mxu0 0.0
      %1294 = vmatpush.msra.mxu0 0.0
      %1295 = vmatpush.msra.mxu0 0.0
      %1296 = vmatpush.msra.mxu0 0.0
      %1297 = vmatpush.msra.mxu0 0.0
      %1298 = vmatpush.msra.mxu0 0.0
      %1299 = vmatpush.msra.mxu0 0.0
      %1300 = vmatpush.msra.mxu0 0.0
      %1301 = vmatpush.msra.mxu0 0.0
      %1302 = vmatpush.msra.mxu0 0.0
      %1303 = vmatpush.msra.mxu0 0.0
      %1304 = vmatpush.msra.mxu0 %v1287
      %1305 = vmatmul.f32.gmra.mxu0 %v1263
      %v1306 = vpop.f32.mrf.mxu0
      %v1307 = vadd.f32 0.0, %v1306
      %1308 = vmatmul.f32.gmra.mxu0 %v1266
      %v1309 = vpop.f32.mrf.mxu0
      %v1310 = vadd.f32 0.0, %v1309
      %1311 = vmatmul.f32.gmra.mxu0 %v1269
      %v1312 = vpop.f32.mrf.mxu0
      %v1313 = vadd.f32 0.0, %v1312
      %1314 = vmatmul.f32.gmra.mxu0 %v1272
      %v1315 = vpop.f32.mrf.mxu0
      %v1316 = vadd.f32 0.0, %v1315
      %1317 = vmatmul.f32.gmra.mxu0 %v1275
      %v1318 = vpop.f32.mrf.mxu0
      %v1319 = vadd.f32 0.0, %v1318
      %1320 = vmatmul.f32.gmra.mxu0 %v1278
      %v1321 = vpop.f32.mrf.mxu0
      %v1322 = vadd.f32 0.0, %v1321
      %1323 = vmatmul.f32.gmra.mxu0 %v1281
      %v1324 = vpop.f32.mrf.mxu0
      %v1325 = vadd.f32 0.0, %v1324
      %1326 = vmatmul.f32.gmra.mxu0 %v1284
      %v1327 = vpop.f32.mrf.mxu0
      %v1328 = vadd.f32 0.0, %v1327
      %1329 = vdwg.mxu0
      %v1330 = vadd.f32 %v1244, %v1307
      %v1331 = vadd.f32 %v1245, %v1310
      %v1332 = vadd.f32 %v1246, %v1313
      %v1333 = vadd.f32 %v1247, %v1316
      %v1334 = vadd.f32 %v1248, %v1319
      %v1335 = vadd.f32 %v1249, %v1322
      %v1336 = vadd.f32 %v1250, %v1325
      %v1337 = vadd.f32 %v1251, %v1328
      %v1338 = vld [vmem:[%s1165 + $0x1] sm:$0xff]
      %v1339 = vld [vmem:[%s1165 + $0x11] sm:$0xff]
      %v1340 = vld [vmem:[%s1165 + $0x21] sm:$0xff]
      %v1341 = vld [vmem:[%s1165 + $0x31] sm:$0xff]
      %v1342 = vld [vmem:[%s1165 + $0x41] sm:$0xff]
      %v1343 = vld [vmem:[%s1165 + $0x51] sm:$0xff]
      %v1344 = vld [vmem:[%s1165 + $0x61] sm:$0xff]
      %v1345 = vld [vmem:[%s1165 + $0x71] sm:$0xff]
      %s1346 = scalar_lea.vmem %s1, 52
      %v1347 = vld [vmem:[%s1346] sm:$0xf]
      %v1349 = vsel %vm223, %v1338, 0
      %v1352 = vsel %vm223, %v1339, 0
      %v1355 = vsel %vm223, %v1340, 0
      %v1358 = vsel %vm223, %v1341, 0
      %v1361 = vsel %vm223, %v1342, 0
      %v1364 = vsel %vm223, %v1343, 0
      %v1367 = vsel %vm223, %v1344, 0
      %v1370 = vsel %vm223, %v1345, 0
      %v1373 = vsel %vm248, %v1347, 0
      %1375 = vmatpush.msra.mxu0 0.0
      %1376 = vmatpush.msra.mxu0 0.0
      %1377 = vmatpush.msra.mxu0 0.0
      %1378 = vmatpush.msra.mxu0 0.0
      %1379 = vmatpush.msra.mxu0 0.0
      %1380 = vmatpush.msra.mxu0 0.0
      %1381 = vmatpush.msra.mxu0 0.0
      %1382 = vmatpush.msra.mxu0 0.0
      %1383 = vmatpush.msra.mxu0 0.0
      %1384 = vmatpush.msra.mxu0 0.0
      %1385 = vmatpush.msra.mxu0 0.0
      %1386 = vmatpush.msra.mxu0 0.0
      %1387 = vmatpush.msra.mxu0 0.0
      %1388 = vmatpush.msra.mxu0 0.0
      %1389 = vmatpush.msra.mxu0 0.0
      %1390 = vmatpush.msra.mxu0 %v1373
      %1391 = vmatmul.f32.gmra.mxu0 %v1349
      %v1392 = vpop.f32.mrf.mxu0
      %v1393 = vadd.f32 0.0, %v1392
      %1394 = vmatmul.f32.gmra.mxu0 %v1352
      %v1395 = vpop.f32.mrf.mxu0
      %v1396 = vadd.f32 0.0, %v1395
      %1397 = vmatmul.f32.gmra.mxu0 %v1355
      %v1398 = vpop.f32.mrf.mxu0
      %v1399 = vadd.f32 0.0, %v1398
      %1400 = vmatmul.f32.gmra.mxu0 %v1358
      %v1401 = vpop.f32.mrf.mxu0
      %v1402 = vadd.f32 0.0, %v1401
      %1403 = vmatmul.f32.gmra.mxu0 %v1361
      %v1404 = vpop.f32.mrf.mxu0
      %v1405 = vadd.f32 0.0, %v1404
      %1406 = vmatmul.f32.gmra.mxu0 %v1364
      %v1407 = vpop.f32.mrf.mxu0
      %v1408 = vadd.f32 0.0, %v1407
      %1409 = vmatmul.f32.gmra.mxu0 %v1367
      %v1410 = vpop.f32.mrf.mxu0
      %v1411 = vadd.f32 0.0, %v1410
      %1412 = vmatmul.f32.gmra.mxu0 %v1370
      %v1413 = vpop.f32.mrf.mxu0
      %v1414 = vadd.f32 0.0, %v1413
      %1415 = vdwg.mxu0
      %v1416 = vadd.f32 %v1330, %v1393
      %v1417 = vadd.f32 %v1331, %v1396
      %v1418 = vadd.f32 %v1332, %v1399
      %v1419 = vadd.f32 %v1333, %v1402
      %v1420 = vadd.f32 %v1334, %v1405
      %v1421 = vadd.f32 %v1335, %v1408
      %v1422 = vadd.f32 %v1336, %v1411
      %v1423 = vadd.f32 %v1337, %v1414
      %v1424 = vld [vmem:[%s1078 + $0x2] sm:$0xff]
      %v1425 = vld [vmem:[%s1078 + $0x12] sm:$0xff]
      %v1426 = vld [vmem:[%s1078 + $0x22] sm:$0xff]
      %v1427 = vld [vmem:[%s1078 + $0x32] sm:$0xff]
      %v1428 = vld [vmem:[%s1078 + $0x42] sm:$0xff]
      %v1429 = vld [vmem:[%s1078 + $0x52] sm:$0xff]
      %v1430 = vld [vmem:[%s1078 + $0x62] sm:$0xff]
      %v1431 = vld [vmem:[%s1078 + $0x72] sm:$0xff]
      %s1432 = scalar_lea.vmem %s1, 56
      %v1433 = vld [vmem:[%s1432] sm:$0xf]
      %v1435 = vsel %vm223, %v1424, 0
      %v1438 = vsel %vm223, %v1425, 0
      %v1441 = vsel %vm223, %v1426, 0
      %v1444 = vsel %vm223, %v1427, 0
      %v1447 = vsel %vm223, %v1428, 0
      %v1450 = vsel %vm223, %v1429, 0
      %v1453 = vsel %vm223, %v1430, 0
      %v1456 = vsel %vm223, %v1431, 0
      %v1459 = vsel %vm248, %v1433, 0
      %1461 = vmatpush.msra.mxu0 0.0
      %1462 = vmatpush.msra.mxu0 0.0
      %1463 = vmatpush.msra.mxu0 0.0
      %1464 = vmatpush.msra.mxu0 0.0
      %1465 = vmatpush.msra.mxu0 0.0
      %1466 = vmatpush.msra.mxu0 0.0
      %1467 = vmatpush.msra.mxu0 0.0
      %1468 = vmatpush.msra.mxu0 0.0
      %1469 = vmatpush.msra.mxu0 0.0
      %1470 = vmatpush.msra.mxu0 0.0
      %1471 = vmatpush.msra.mxu0 0.0
      %1472 = vmatpush.msra.mxu0 0.0
      %1473 = vmatpush.msra.mxu0 0.0
      %1474 = vmatpush.msra.mxu0 0.0
      %1475 = vmatpush.msra.mxu0 0.0
      %1476 = vmatpush.msra.mxu0 %v1459
      %1477 = vmatmul.f32.gmra.mxu0 %v1435
      %v1478 = vpop.f32.mrf.mxu0
      %v1479 = vadd.f32 0.0, %v1478
      %1480 = vmatmul.f32.gmra.mxu0 %v1438
      %v1481 = vpop.f32.mrf.mxu0
      %v1482 = vadd.f32 0.0, %v1481
      %1483 = vmatmul.f32.gmra.mxu0 %v1441
      %v1484 = vpop.f32.mrf.mxu0
      %v1485 = vadd.f32 0.0, %v1484
      %1486 = vmatmul.f32.gmra.mxu0 %v1444
      %v1487 = vpop.f32.mrf.mxu0
      %v1488 = vadd.f32 0.0, %v1487
      %1489 = vmatmul.f32.gmra.mxu0 %v1447
      %v1490 = vpop.f32.mrf.mxu0
      %v1491 = vadd.f32 0.0, %v1490
      %1492 = vmatmul.f32.gmra.mxu0 %v1450
      %v1493 = vpop.f32.mrf.mxu0
      %v1494 = vadd.f32 0.0, %v1493
      %1495 = vmatmul.f32.gmra.mxu0 %v1453
      %v1496 = vpop.f32.mrf.mxu0
      %v1497 = vadd.f32 0.0, %v1496
      %1498 = vmatmul.f32.gmra.mxu0 %v1456
      %v1499 = vpop.f32.mrf.mxu0
      %v1500 = vadd.f32 0.0, %v1499
      %1501 = vdwg.mxu0
      %v1502 = vadd.f32 %v1416, %v1479
      %v1503 = vadd.f32 %v1417, %v1482
      %v1504 = vadd.f32 %v1418, %v1485
      %v1505 = vadd.f32 %v1419, %v1488
      %v1506 = vadd.f32 %v1420, %v1491
      %v1507 = vadd.f32 %v1421, %v1494
      %v1508 = vadd.f32 %v1422, %v1497
      %v1509 = vadd.f32 %v1423, %v1500
      %s1510 = scalar_lea.vmem %s199, 336
      %v1511 = vld [vmem:[%s1510] sm:$0xff]
      %v1512 = vld [vmem:[%s1510 + $0x10] sm:$0xff]
      %v1513 = vld [vmem:[%s1510 + $0x20] sm:$0xff]
      %v1514 = vld [vmem:[%s1510 + $0x30] sm:$0xff]
      %v1515 = vld [vmem:[%s1510 + $0x40] sm:$0xff]
      %v1516 = vld [vmem:[%s1510 + $0x50] sm:$0xff]
      %v1517 = vld [vmem:[%s1510 + $0x60] sm:$0xff]
      %v1518 = vld [vmem:[%s1510 + $0x70] sm:$0xff]
      %s1519 = scalar_lea.vmem %s1, 60
      %v1520 = vld [vmem:[%s1519] sm:$0xf]
      %v1522 = vsel %vm223, %v1511, 0
      %v1525 = vsel %vm223, %v1512, 0
      %v1528 = vsel %vm223, %v1513, 0
      %v1531 = vsel %vm223, %v1514, 0
      %v1534 = vsel %vm223, %v1515, 0
      %v1537 = vsel %vm223, %v1516, 0
      %v1540 = vsel %vm223, %v1517, 0
      %v1543 = vsel %vm223, %v1518, 0
      %v1546 = vsel %vm248, %v1520, 0
      %1548 = vmatpush.msra.mxu0 0.0
      %1549 = vmatpush.msra.mxu0 0.0
      %1550 = vmatpush.msra.mxu0 0.0
      %1551 = vmatpush.msra.mxu0 0.0
      %1552 = vmatpush.msra.mxu0 0.0
      %1553 = vmatpush.msra.mxu0 0.0
      %1554 = vmatpush.msra.mxu0 0.0
      %1555 = vmatpush.msra.mxu0 0.0
      %1556 = vmatpush.msra.mxu0 0.0
      %1557 = vmatpush.msra.mxu0 0.0
      %1558 = vmatpush.msra.mxu0 0.0
      %1559 = vmatpush.msra.mxu0 0.0
      %1560 = vmatpush.msra.mxu0 0.0
      %1561 = vmatpush.msra.mxu0 0.0
      %1562 = vmatpush.msra.mxu0 0.0
      %1563 = vmatpush.msra.mxu0 %v1546
      %1564 = vmatmul.f32.gmra.mxu0 %v1522
      %v1565 = vpop.f32.mrf.mxu0
      %v1566 = vadd.f32 0.0, %v1565
      %1567 = vmatmul.f32.gmra.mxu0 %v1525
      %v1568 = vpop.f32.mrf.mxu0
      %v1569 = vadd.f32 0.0, %v1568
      %1570 = vmatmul.f32.gmra.mxu0 %v1528
      %v1571 = vpop.f32.mrf.mxu0
      %v1572 = vadd.f32 0.0, %v1571
      %1573 = vmatmul.f32.gmra.mxu0 %v1531
      %v1574 = vpop.f32.mrf.mxu0
      %v1575 = vadd.f32 0.0, %v1574
      %1576 = vmatmul.f32.gmra.mxu0 %v1534
      %v1577 = vpop.f32.mrf.mxu0
      %v1578 = vadd.f32 0.0, %v1577
      %1579 = vmatmul.f32.gmra.mxu0 %v1537
      %v1580 = vpop.f32.mrf.mxu0
      %v1581 = vadd.f32 0.0, %v1580
      %1582 = vmatmul.f32.gmra.mxu0 %v1540
      %v1583 = vpop.f32.mrf.mxu0
      %v1584 = vadd.f32 0.0, %v1583
      %1585 = vmatmul.f32.gmra.mxu0 %v1543
      %v1586 = vpop.f32.mrf.mxu0
      %v1587 = vadd.f32 0.0, %v1586
      %1588 = vdwg.mxu0
      %v1589 = vadd.f32 %v1502, %v1566
      %v1590 = vadd.f32 %v1503, %v1569
      %v1591 = vadd.f32 %v1504, %v1572
      %v1592 = vadd.f32 %v1505, %v1575
      %v1593 = vadd.f32 %v1506, %v1578
      %v1594 = vadd.f32 %v1507, %v1581
      %v1595 = vadd.f32 %v1508, %v1584
      %v1596 = vadd.f32 %v1509, %v1587
      %s1597 = scalar_lea.vmem %s199, 496
      %v1598 = vld [vmem:[%s1597] sm:$0xff]
      %v1599 = vld [vmem:[%s1597 + $0x10] sm:$0xff]
      %v1600 = vld [vmem:[%s1597 + $0x20] sm:$0xff]
      %v1601 = vld [vmem:[%s1597 + $0x30] sm:$0xff]
      %v1602 = vld [vmem:[%s1597 + $0x40] sm:$0xff]
      %v1603 = vld [vmem:[%s1597 + $0x50] sm:$0xff]
      %v1604 = vld [vmem:[%s1597 + $0x60] sm:$0xff]
      %v1605 = vld [vmem:[%s1597 + $0x70] sm:$0xff]
      %s1606 = scalar_lea.vmem %s1, 64
      %v1607 = vld [vmem:[%s1606] sm:$0xf]
      %v1609 = vsel %vm223, %v1598, 0
      %v1612 = vsel %vm223, %v1599, 0
      %v1615 = vsel %vm223, %v1600, 0
      %v1618 = vsel %vm223, %v1601, 0
      %v1621 = vsel %vm223, %v1602, 0
      %v1624 = vsel %vm223, %v1603, 0
      %v1627 = vsel %vm223, %v1604, 0
      %v1630 = vsel %vm223, %v1605, 0
      %v1633 = vsel %vm248, %v1607, 0
      %1635 = vmatpush.msra.mxu0 0.0
      %1636 = vmatpush.msra.mxu0 0.0
      %1637 = vmatpush.msra.mxu0 0.0
      %1638 = vmatpush.msra.mxu0 0.0
      %1639 = vmatpush.msra.mxu0 0.0
      %1640 = vmatpush.msra.mxu0 0.0
      %1641 = vmatpush.msra.mxu0 0.0
      %1642 = vmatpush.msra.mxu0 0.0
      %1643 = vmatpush.msra.mxu0 0.0
      %1644 = vmatpush.msra.mxu0 0.0
      %1645 = vmatpush.msra.mxu0 0.0
      %1646 = vmatpush.msra.mxu0 0.0
      %1647 = vmatpush.msra.mxu0 0.0
      %1648 = vmatpush.msra.mxu0 0.0
      %1649 = vmatpush.msra.mxu0 0.0
      %1650 = vmatpush.msra.mxu0 %v1633
      %1651 = vmatmul.f32.gmra.mxu0 %v1609
      %v1652 = vpop.f32.mrf.mxu0
      %v1653 = vadd.f32 0.0, %v1652
      %1654 = vmatmul.f32.gmra.mxu0 %v1612
      %v1655 = vpop.f32.mrf.mxu0
      %v1656 = vadd.f32 0.0, %v1655
      %1657 = vmatmul.f32.gmra.mxu0 %v1615
      %v1658 = vpop.f32.mrf.mxu0
      %v1659 = vadd.f32 0.0, %v1658
      %1660 = vmatmul.f32.gmra.mxu0 %v1618
      %v1661 = vpop.f32.mrf.mxu0
      %v1662 = vadd.f32 0.0, %v1661
      %1663 = vmatmul.f32.gmra.mxu0 %v1621
      %v1664 = vpop.f32.mrf.mxu0
      %v1665 = vadd.f32 0.0, %v1664
      %1666 = vmatmul.f32.gmra.mxu0 %v1624
      %v1667 = vpop.f32.mrf.mxu0
      %v1668 = vadd.f32 0.0, %v1667
      %1669 = vmatmul.f32.gmra.mxu0 %v1627
      %v1670 = vpop.f32.mrf.mxu0
      %v1671 = vadd.f32 0.0, %v1670
      %1672 = vmatmul.f32.gmra.mxu0 %v1630
      %v1673 = vpop.f32.mrf.mxu0
      %v1674 = vadd.f32 0.0, %v1673
      %1675 = vdwg.mxu0
      %v1676 = vadd.f32 %v1589, %v1653
      %v1677 = vadd.f32 %v1590, %v1656
      %v1678 = vadd.f32 %v1591, %v1659
      %v1679 = vadd.f32 %v1592, %v1662
      %v1680 = vadd.f32 %v1593, %v1665
      %v1681 = vadd.f32 %v1594, %v1668
      %v1682 = vadd.f32 %v1595, %v1671
      %v1683 = vadd.f32 %v1596, %v1674
      %v1684 = vld [vmem:[%s1510 + $0x1] sm:$0xff]
      %v1685 = vld [vmem:[%s1510 + $0x11] sm:$0xff]
      %v1686 = vld [vmem:[%s1510 + $0x21] sm:$0xff]
      %v1687 = vld [vmem:[%s1510 + $0x31] sm:$0xff]
      %v1688 = vld [vmem:[%s1510 + $0x41] sm:$0xff]
      %v1689 = vld [vmem:[%s1510 + $0x51] sm:$0xff]
      %v1690 = vld [vmem:[%s1510 + $0x61] sm:$0xff]
      %v1691 = vld [vmem:[%s1510 + $0x71] sm:$0xff]
      %s1692 = scalar_lea.vmem %s1, 68
      %v1693 = vld [vmem:[%s1692] sm:$0xf]
      %v1695 = vsel %vm223, %v1684, 0
      %v1698 = vsel %vm223, %v1685, 0
      %v1701 = vsel %vm223, %v1686, 0
      %v1704 = vsel %vm223, %v1687, 0
      %v1707 = vsel %vm223, %v1688, 0
      %v1710 = vsel %vm223, %v1689, 0
      %v1713 = vsel %vm223, %v1690, 0
      %v1716 = vsel %vm223, %v1691, 0
      %v1719 = vsel %vm248, %v1693, 0
      %1721 = vmatpush.msra.mxu0 0.0
      %1722 = vmatpush.msra.mxu0 0.0
      %1723 = vmatpush.msra.mxu0 0.0
      %1724 = vmatpush.msra.mxu0 0.0
      %1725 = vmatpush.msra.mxu0 0.0
      %1726 = vmatpush.msra.mxu0 0.0
      %1727 = vmatpush.msra.mxu0 0.0
      %1728 = vmatpush.msra.mxu0 0.0
      %1729 = vmatpush.msra.mxu0 0.0
      %1730 = vmatpush.msra.mxu0 0.0
      %1731 = vmatpush.msra.mxu0 0.0
      %1732 = vmatpush.msra.mxu0 0.0
      %1733 = vmatpush.msra.mxu0 0.0
      %1734 = vmatpush.msra.mxu0 0.0
      %1735 = vmatpush.msra.mxu0 0.0
      %1736 = vmatpush.msra.mxu0 %v1719
      %1737 = vmatmul.f32.gmra.mxu0 %v1695
      %v1738 = vpop.f32.mrf.mxu0
      %v1739 = vadd.f32 0.0, %v1738
      %1740 = vmatmul.f32.gmra.mxu0 %v1698
      %v1741 = vpop.f32.mrf.mxu0
      %v1742 = vadd.f32 0.0, %v1741
      %1743 = vmatmul.f32.gmra.mxu0 %v1701
      %v1744 = vpop.f32.mrf.mxu0
      %v1745 = vadd.f32 0.0, %v1744
      %1746 = vmatmul.f32.gmra.mxu0 %v1704
      %v1747 = vpop.f32.mrf.mxu0
      %v1748 = vadd.f32 0.0, %v1747
      %1749 = vmatmul.f32.gmra.mxu0 %v1707
      %v1750 = vpop.f32.mrf.mxu0
      %v1751 = vadd.f32 0.0, %v1750
      %1752 = vmatmul.f32.gmra.mxu0 %v1710
      %v1753 = vpop.f32.mrf.mxu0
      %v1754 = vadd.f32 0.0, %v1753
      %1755 = vmatmul.f32.gmra.mxu0 %v1713
      %v1756 = vpop.f32.mrf.mxu0
      %v1757 = vadd.f32 0.0, %v1756
      %1758 = vmatmul.f32.gmra.mxu0 %v1716
      %v1759 = vpop.f32.mrf.mxu0
      %v1760 = vadd.f32 0.0, %v1759
      %1761 = vdwg.mxu0
      %v1762 = vadd.f32 %v1676, %v1739
      %v1763 = vadd.f32 %v1677, %v1742
      %v1764 = vadd.f32 %v1678, %v1745
      %v1765 = vadd.f32 %v1679, %v1748
      %v1766 = vadd.f32 %v1680, %v1751
      %v1767 = vadd.f32 %v1681, %v1754
      %v1768 = vadd.f32 %v1682, %v1757
      %v1769 = vadd.f32 %v1683, %v1760
      %v1770 = vld [vmem:[%s1597 + $0x1] sm:$0xff]
      %v1771 = vld [vmem:[%s1597 + $0x11] sm:$0xff]
      %v1772 = vld [vmem:[%s1597 + $0x21] sm:$0xff]
      %v1773 = vld [vmem:[%s1597 + $0x31] sm:$0xff]
      %v1774 = vld [vmem:[%s1597 + $0x41] sm:$0xff]
      %v1775 = vld [vmem:[%s1597 + $0x51] sm:$0xff]
      %v1776 = vld [vmem:[%s1597 + $0x61] sm:$0xff]
      %v1777 = vld [vmem:[%s1597 + $0x71] sm:$0xff]
      %s1778 = scalar_lea.vmem %s1, 72
      %v1779 = vld [vmem:[%s1778] sm:$0xf]
      %v1781 = vsel %vm223, %v1770, 0
      %v1784 = vsel %vm223, %v1771, 0
      %v1787 = vsel %vm223, %v1772, 0
      %v1790 = vsel %vm223, %v1773, 0
      %v1793 = vsel %vm223, %v1774, 0
      %v1796 = vsel %vm223, %v1775, 0
      %v1799 = vsel %vm223, %v1776, 0
      %v1802 = vsel %vm223, %v1777, 0
      %v1805 = vsel %vm248, %v1779, 0
      %1807 = vmatpush.msra.mxu0 0.0
      %1808 = vmatpush.msra.mxu0 0.0
      %1809 = vmatpush.msra.mxu0 0.0
      %1810 = vmatpush.msra.mxu0 0.0
      %1811 = vmatpush.msra.mxu0 0.0
      %1812 = vmatpush.msra.mxu0 0.0
      %1813 = vmatpush.msra.mxu0 0.0
      %1814 = vmatpush.msra.mxu0 0.0
      %1815 = vmatpush.msra.mxu0 0.0
      %1816 = vmatpush.msra.mxu0 0.0
      %1817 = vmatpush.msra.mxu0 0.0
      %1818 = vmatpush.msra.mxu0 0.0
      %1819 = vmatpush.msra.mxu0 0.0
      %1820 = vmatpush.msra.mxu0 0.0
      %1821 = vmatpush.msra.mxu0 0.0
      %1822 = vmatpush.msra.mxu0 %v1805
      %1823 = vmatmul.f32.gmra.mxu0 %v1781
      %v1824 = vpop.f32.mrf.mxu0
      %v1825 = vadd.f32 0.0, %v1824
      %1826 = vmatmul.f32.gmra.mxu0 %v1784
      %v1827 = vpop.f32.mrf.mxu0
      %v1828 = vadd.f32 0.0, %v1827
      %1829 = vmatmul.f32.gmra.mxu0 %v1787
      %v1830 = vpop.f32.mrf.mxu0
      %v1831 = vadd.f32 0.0, %v1830
      %1832 = vmatmul.f32.gmra.mxu0 %v1790
      %v1833 = vpop.f32.mrf.mxu0
      %v1834 = vadd.f32 0.0, %v1833
      %1835 = vmatmul.f32.gmra.mxu0 %v1793
      %v1836 = vpop.f32.mrf.mxu0
      %v1837 = vadd.f32 0.0, %v1836
      %1838 = vmatmul.f32.gmra.mxu0 %v1796
      %v1839 = vpop.f32.mrf.mxu0
      %v1840 = vadd.f32 0.0, %v1839
      %1841 = vmatmul.f32.gmra.mxu0 %v1799
      %v1842 = vpop.f32.mrf.mxu0
      %v1843 = vadd.f32 0.0, %v1842
      %1844 = vmatmul.f32.gmra.mxu0 %v1802
      %v1845 = vpop.f32.mrf.mxu0
      %v1846 = vadd.f32 0.0, %v1845
      %1847 = vdwg.mxu0
      %v1848 = vadd.f32 %v1762, %v1825
      %v1849 = vadd.f32 %v1763, %v1828
      %v1850 = vadd.f32 %v1764, %v1831
      %v1851 = vadd.f32 %v1765, %v1834
      %v1852 = vadd.f32 %v1766, %v1837
      %v1853 = vadd.f32 %v1767, %v1840
      %v1854 = vadd.f32 %v1768, %v1843
      %v1855 = vadd.f32 %v1769, %v1846
      %v1856 = vld [vmem:[%s1510 + $0x2] sm:$0xff]
      %v1857 = vld [vmem:[%s1510 + $0x12] sm:$0xff]
      %v1858 = vld [vmem:[%s1510 + $0x22] sm:$0xff]
      %v1859 = vld [vmem:[%s1510 + $0x32] sm:$0xff]
      %v1860 = vld [vmem:[%s1510 + $0x42] sm:$0xff]
      %v1861 = vld [vmem:[%s1510 + $0x52] sm:$0xff]
      %v1862 = vld [vmem:[%s1510 + $0x62] sm:$0xff]
      %v1863 = vld [vmem:[%s1510 + $0x72] sm:$0xff]
      %s1864 = scalar_lea.vmem %s1, 76
      %v1865 = vld [vmem:[%s1864] sm:$0xf]
      %v1867 = vsel %vm223, %v1856, 0
      %v1870 = vsel %vm223, %v1857, 0
      %v1873 = vsel %vm223, %v1858, 0
      %v1876 = vsel %vm223, %v1859, 0
      %v1879 = vsel %vm223, %v1860, 0
      %v1882 = vsel %vm223, %v1861, 0
      %v1885 = vsel %vm223, %v1862, 0
      %v1888 = vsel %vm223, %v1863, 0
      %v1891 = vsel %vm248, %v1865, 0
      %1893 = vmatpush.msra.mxu0 0.0
      %1894 = vmatpush.msra.mxu0 0.0
      %1895 = vmatpush.msra.mxu0 0.0
      %1896 = vmatpush.msra.mxu0 0.0
      %1897 = vmatpush.msra.mxu0 0.0
      %1898 = vmatpush.msra.mxu0 0.0
      %1899 = vmatpush.msra.mxu0 0.0
      %1900 = vmatpush.msra.mxu0 0.0
      %1901 = vmatpush.msra.mxu0 0.0
      %1902 = vmatpush.msra.mxu0 0.0
      %1903 = vmatpush.msra.mxu0 0.0
      %1904 = vmatpush.msra.mxu0 0.0
      %1905 = vmatpush.msra.mxu0 0.0
      %1906 = vmatpush.msra.mxu0 0.0
      %1907 = vmatpush.msra.mxu0 0.0
      %1908 = vmatpush.msra.mxu0 %v1891
      %1909 = vmatmul.f32.gmra.mxu0 %v1867
      %v1910 = vpop.f32.mrf.mxu0
      %v1911 = vadd.f32 0.0, %v1910
      %1912 = vmatmul.f32.gmra.mxu0 %v1870
      %v1913 = vpop.f32.mrf.mxu0
      %v1914 = vadd.f32 0.0, %v1913
      %1915 = vmatmul.f32.gmra.mxu0 %v1873
      %v1916 = vpop.f32.mrf.mxu0
      %v1917 = vadd.f32 0.0, %v1916
      %1918 = vmatmul.f32.gmra.mxu0 %v1876
      %v1919 = vpop.f32.mrf.mxu0
      %v1920 = vadd.f32 0.0, %v1919
      %1921 = vmatmul.f32.gmra.mxu0 %v1879
      %v1922 = vpop.f32.mrf.mxu0
      %v1923 = vadd.f32 0.0, %v1922
      %1924 = vmatmul.f32.gmra.mxu0 %v1882
      %v1925 = vpop.f32.mrf.mxu0
      %v1926 = vadd.f32 0.0, %v1925
      %1927 = vmatmul.f32.gmra.mxu0 %v1885
      %v1928 = vpop.f32.mrf.mxu0
      %v1929 = vadd.f32 0.0, %v1928
      %1930 = vmatmul.f32.gmra.mxu0 %v1888
      %v1931 = vpop.f32.mrf.mxu0
      %v1932 = vadd.f32 0.0, %v1931
      %1933 = vdwg.mxu0
      %v1934 = vadd.f32 %v1848, %v1911
      %v1935 = vadd.f32 %v1849, %v1914
      %v1936 = vadd.f32 %v1850, %v1917
      %v1937 = vadd.f32 %v1851, %v1920
      %v1938 = vadd.f32 %v1852, %v1923
      %v1939 = vadd.f32 %v1853, %v1926
      %v1940 = vadd.f32 %v1854, %v1929
      %v1941 = vadd.f32 %v1855, %v1932
      %s1942 = scalar_lea.vmem %s199, 32
      %v1943 = vld [vmem:[%s1942] sm:$0xff]
      %v1944 = vld [vmem:[%s1942 + $0x10] sm:$0xff]
      %v1945 = vld [vmem:[%s1942 + $0x20] sm:$0xff]
      %v1946 = vld [vmem:[%s1942 + $0x30] sm:$0xff]
      %v1947 = vld [vmem:[%s1942 + $0x40] sm:$0xff]
      %v1948 = vld [vmem:[%s1942 + $0x50] sm:$0xff]
      %v1949 = vld [vmem:[%s1942 + $0x60] sm:$0xff]
      %v1950 = vld [vmem:[%s1942 + $0x70] sm:$0xff]
      %s1951 = scalar_lea.vmem %s1, 80
      %v1952 = vld [vmem:[%s1951] sm:$0xf]
      %v1954 = vsel %vm223, %v1943, 0
      %v1957 = vsel %vm223, %v1944, 0
      %v1960 = vsel %vm223, %v1945, 0
      %v1963 = vsel %vm223, %v1946, 0
      %v1966 = vsel %vm223, %v1947, 0
      %v1969 = vsel %vm223, %v1948, 0
      %v1972 = vsel %vm223, %v1949, 0
      %v1975 = vsel %vm223, %v1950, 0
      %v1978 = vsel %vm248, %v1952, 0
      %1980 = vmatpush.msra.mxu0 0.0
      %1981 = vmatpush.msra.mxu0 0.0
      %1982 = vmatpush.msra.mxu0 0.0
      %1983 = vmatpush.msra.mxu0 0.0
      %1984 = vmatpush.msra.mxu0 0.0
      %1985 = vmatpush.msra.mxu0 0.0
      %1986 = vmatpush.msra.mxu0 0.0
      %1987 = vmatpush.msra.mxu0 0.0
      %1988 = vmatpush.msra.mxu0 0.0
      %1989 = vmatpush.msra.mxu0 0.0
      %1990 = vmatpush.msra.mxu0 0.0
      %1991 = vmatpush.msra.mxu0 0.0
      %1992 = vmatpush.msra.mxu0 0.0
      %1993 = vmatpush.msra.mxu0 0.0
      %1994 = vmatpush.msra.mxu0 0.0
      %1995 = vmatpush.msra.mxu0 %v1978
      %1996 = vmatmul.f32.gmra.mxu0 %v1954
      %v1997 = vpop.f32.mrf.mxu0
      %v1998 = vadd.f32 0.0, %v1997
      %1999 = vmatmul.f32.gmra.mxu0 %v1957
      %v2000 = vpop.f32.mrf.mxu0
      %v2001 = vadd.f32 0.0, %v2000
      %2002 = vmatmul.f32.gmra.mxu0 %v1960
      %v2003 = vpop.f32.mrf.mxu0
      %v2004 = vadd.f32 0.0, %v2003
      %2005 = vmatmul.f32.gmra.mxu0 %v1963
      %v2006 = vpop.f32.mrf.mxu0
      %v2007 = vadd.f32 0.0, %v2006
      %2008 = vmatmul.f32.gmra.mxu0 %v1966
      %v2009 = vpop.f32.mrf.mxu0
      %v2010 = vadd.f32 0.0, %v2009
      %2011 = vmatmul.f32.gmra.mxu0 %v1969
      %v2012 = vpop.f32.mrf.mxu0
      %v2013 = vadd.f32 0.0, %v2012
      %2014 = vmatmul.f32.gmra.mxu0 %v1972
      %v2015 = vpop.f32.mrf.mxu0
      %v2016 = vadd.f32 0.0, %v2015
      %2017 = vmatmul.f32.gmra.mxu0 %v1975
      %v2018 = vpop.f32.mrf.mxu0
      %v2019 = vadd.f32 0.0, %v2018
      %2020 = vdwg.mxu0
      %v2021 = vadd.f32 %v1934, %v1998
      %v2022 = vadd.f32 %v1935, %v2001
      %v2023 = vadd.f32 %v1936, %v2004
      %v2024 = vadd.f32 %v1937, %v2007
      %v2025 = vadd.f32 %v1938, %v2010
      %v2026 = vadd.f32 %v1939, %v2013
      %v2027 = vadd.f32 %v1940, %v2016
      %v2028 = vadd.f32 %v1941, %v2019
      %s2029 = scalar_lea.vmem %s199, 192
      %v2030 = vld [vmem:[%s2029] sm:$0xff]
      %v2031 = vld [vmem:[%s2029 + $0x10] sm:$0xff]
      %v2032 = vld [vmem:[%s2029 + $0x20] sm:$0xff]
      %v2033 = vld [vmem:[%s2029 + $0x30] sm:$0xff]
      %v2034 = vld [vmem:[%s2029 + $0x40] sm:$0xff]
      %v2035 = vld [vmem:[%s2029 + $0x50] sm:$0xff]
      %v2036 = vld [vmem:[%s2029 + $0x60] sm:$0xff]
      %v2037 = vld [vmem:[%s2029 + $0x70] sm:$0xff]
      %s2038 = scalar_lea.vmem %s1, 84
      %v2039 = vld [vmem:[%s2038] sm:$0xf]
      %v2041 = vsel %vm223, %v2030, 0
      %v2044 = vsel %vm223, %v2031, 0
      %v2047 = vsel %vm223, %v2032, 0
      %v2050 = vsel %vm223, %v2033, 0
      %v2053 = vsel %vm223, %v2034, 0
      %v2056 = vsel %vm223, %v2035, 0
      %v2059 = vsel %vm223, %v2036, 0
      %v2062 = vsel %vm223, %v2037, 0
      %v2065 = vsel %vm248, %v2039, 0
      %2067 = vmatpush.msra.mxu0 0.0
      %2068 = vmatpush.msra.mxu0 0.0
      %2069 = vmatpush.msra.mxu0 0.0
      %2070 = vmatpush.msra.mxu0 0.0
      %2071 = vmatpush.msra.mxu0 0.0
      %2072 = vmatpush.msra.mxu0 0.0
      %2073 = vmatpush.msra.mxu0 0.0
      %2074 = vmatpush.msra.mxu0 0.0
      %2075 = vmatpush.msra.mxu0 0.0
      %2076 = vmatpush.msra.mxu0 0.0
      %2077 = vmatpush.msra.mxu0 0.0
      %2078 = vmatpush.msra.mxu0 0.0
      %2079 = vmatpush.msra.mxu0 0.0
      %2080 = vmatpush.msra.mxu0 0.0
      %2081 = vmatpush.msra.mxu0 0.0
      %2082 = vmatpush.msra.mxu0 %v2065
      %2083 = vmatmul.f32.gmra.mxu0 %v2041
      %v2084 = vpop.f32.mrf.mxu0
      %v2085 = vadd.f32 0.0, %v2084
      %2086 = vmatmul.f32.gmra.mxu0 %v2044
      %v2087 = vpop.f32.mrf.mxu0
      %v2088 = vadd.f32 0.0, %v2087
      %2089 = vmatmul.f32.gmra.mxu0 %v2047
      %v2090 = vpop.f32.mrf.mxu0
      %v2091 = vadd.f32 0.0, %v2090
      %2092 = vmatmul.f32.gmra.mxu0 %v2050
      %v2093 = vpop.f32.mrf.mxu0
      %v2094 = vadd.f32 0.0, %v2093
      %2095 = vmatmul.f32.gmra.mxu0 %v2053
      %v2096 = vpop.f32.mrf.mxu0
      %v2097 = vadd.f32 0.0, %v2096
      %2098 = vmatmul.f32.gmra.mxu0 %v2056
      %v2099 = vpop.f32.mrf.mxu0
      %v2100 = vadd.f32 0.0, %v2099
      %2101 = vmatmul.f32.gmra.mxu0 %v2059
      %v2102 = vpop.f32.mrf.mxu0
      %v2103 = vadd.f32 0.0, %v2102
      %2104 = vmatmul.f32.gmra.mxu0 %v2062
      %v2105 = vpop.f32.mrf.mxu0
      %v2106 = vadd.f32 0.0, %v2105
      %2107 = vdwg.mxu0
      %v2108 = vadd.f32 %v2021, %v2085
      %v2109 = vadd.f32 %v2022, %v2088
      %v2110 = vadd.f32 %v2023, %v2091
      %v2111 = vadd.f32 %v2024, %v2094
      %v2112 = vadd.f32 %v2025, %v2097
      %v2113 = vadd.f32 %v2026, %v2100
      %v2114 = vadd.f32 %v2027, %v2103
      %v2115 = vadd.f32 %v2028, %v2106
      %v2116 = vld [vmem:[%s1942 + $0x1] sm:$0xff]
      %v2117 = vld [vmem:[%s1942 + $0x11] sm:$0xff]
      %v2118 = vld [vmem:[%s1942 + $0x21] sm:$0xff]
      %v2119 = vld [vmem:[%s1942 + $0x31] sm:$0xff]
      %v2120 = vld [vmem:[%s1942 + $0x41] sm:$0xff]
      %v2121 = vld [vmem:[%s1942 + $0x51] sm:$0xff]
      %v2122 = vld [vmem:[%s1942 + $0x61] sm:$0xff]
      %v2123 = vld [vmem:[%s1942 + $0x71] sm:$0xff]
      %s2124 = scalar_lea.vmem %s1, 88
      %v2125 = vld [vmem:[%s2124] sm:$0xf]
      %v2127 = vsel %vm223, %v2116, 0
      %v2130 = vsel %vm223, %v2117, 0
      %v2133 = vsel %vm223, %v2118, 0
      %v2136 = vsel %vm223, %v2119, 0
      %v2139 = vsel %vm223, %v2120, 0
      %v2142 = vsel %vm223, %v2121, 0
      %v2145 = vsel %vm223, %v2122, 0
      %v2148 = vsel %vm223, %v2123, 0
      %v2151 = vsel %vm248, %v2125, 0
      %2153 = vmatpush.msra.mxu0 0.0
      %2154 = vmatpush.msra.mxu0 0.0
      %2155 = vmatpush.msra.mxu0 0.0
      %2156 = vmatpush.msra.mxu0 0.0
      %2157 = vmatpush.msra.mxu0 0.0
      %2158 = vmatpush.msra.mxu0 0.0
      %2159 = vmatpush.msra.mxu0 0.0
      %2160 = vmatpush.msra.mxu0 0.0
      %2161 = vmatpush.msra.mxu0 0.0
      %2162 = vmatpush.msra.mxu0 0.0
      %2163 = vmatpush.msra.mxu0 0.0
      %2164 = vmatpush.msra.mxu0 0.0
      %2165 = vmatpush.msra.mxu0 0.0
      %2166 = vmatpush.msra.mxu0 0.0
      %2167 = vmatpush.msra.mxu0 0.0
      %2168 = vmatpush.msra.mxu0 %v2151
      %2169 = vmatmul.f32.gmra.mxu0 %v2127
      %v2170 = vpop.f32.mrf.mxu0
      %v2171 = vadd.f32 0.0, %v2170
      %2172 = vmatmul.f32.gmra.mxu0 %v2130
      %v2173 = vpop.f32.mrf.mxu0
      %v2174 = vadd.f32 0.0, %v2173
      %2175 = vmatmul.f32.gmra.mxu0 %v2133
      %v2176 = vpop.f32.mrf.mxu0
      %v2177 = vadd.f32 0.0, %v2176
      %2178 = vmatmul.f32.gmra.mxu0 %v2136
      %v2179 = vpop.f32.mrf.mxu0
      %v2180 = vadd.f32 0.0, %v2179
      %2181 = vmatmul.f32.gmra.mxu0 %v2139
      %v2182 = vpop.f32.mrf.mxu0
      %v2183 = vadd.f32 0.0, %v2182
      %2184 = vmatmul.f32.gmra.mxu0 %v2142
      %v2185 = vpop.f32.mrf.mxu0
      %v2186 = vadd.f32 0.0, %v2185
      %2187 = vmatmul.f32.gmra.mxu0 %v2145
      %v2188 = vpop.f32.mrf.mxu0
      %v2189 = vadd.f32 0.0, %v2188
      %2190 = vmatmul.f32.gmra.mxu0 %v2148
      %v2191 = vpop.f32.mrf.mxu0
      %v2192 = vadd.f32 0.0, %v2191
      %2193 = vdwg.mxu0
      %v2194 = vadd.f32 %v2108, %v2171
      %v2195 = vadd.f32 %v2109, %v2174
      %v2196 = vadd.f32 %v2110, %v2177
      %v2197 = vadd.f32 %v2111, %v2180
      %v2198 = vadd.f32 %v2112, %v2183
      %v2199 = vadd.f32 %v2113, %v2186
      %v2200 = vadd.f32 %v2114, %v2189
      %v2201 = vadd.f32 %v2115, %v2192
      %v2202 = vld [vmem:[%s2029 + $0x1] sm:$0xff]
      %v2203 = vld [vmem:[%s2029 + $0x11] sm:$0xff]
      %v2204 = vld [vmem:[%s2029 + $0x21] sm:$0xff]
      %v2205 = vld [vmem:[%s2029 + $0x31] sm:$0xff]
      %v2206 = vld [vmem:[%s2029 + $0x41] sm:$0xff]
      %v2207 = vld [vmem:[%s2029 + $0x51] sm:$0xff]
      %v2208 = vld [vmem:[%s2029 + $0x61] sm:$0xff]
      %v2209 = vld [vmem:[%s2029 + $0x71] sm:$0xff]
      %s2210 = scalar_lea.vmem %s1, 92
      %v2211 = vld [vmem:[%s2210] sm:$0xf]
      %v2213 = vsel %vm223, %v2202, 0
      %v2216 = vsel %vm223, %v2203, 0
      %v2219 = vsel %vm223, %v2204, 0
      %v2222 = vsel %vm223, %v2205, 0
      %v2225 = vsel %vm223, %v2206, 0
      %v2228 = vsel %vm223, %v2207, 0
      %v2231 = vsel %vm223, %v2208, 0
      %v2234 = vsel %vm223, %v2209, 0
      %v2237 = vsel %vm248, %v2211, 0
      %2239 = vmatpush.msra.mxu0 0.0
      %2240 = vmatpush.msra.mxu0 0.0
      %2241 = vmatpush.msra.mxu0 0.0
      %2242 = vmatpush.msra.mxu0 0.0
      %2243 = vmatpush.msra.mxu0 0.0
      %2244 = vmatpush.msra.mxu0 0.0
      %2245 = vmatpush.msra.mxu0 0.0
      %2246 = vmatpush.msra.mxu0 0.0
      %2247 = vmatpush.msra.mxu0 0.0
      %2248 = vmatpush.msra.mxu0 0.0
      %2249 = vmatpush.msra.mxu0 0.0
      %2250 = vmatpush.msra.mxu0 0.0
      %2251 = vmatpush.msra.mxu0 0.0
      %2252 = vmatpush.msra.mxu0 0.0
      %2253 = vmatpush.msra.mxu0 0.0
      %2254 = vmatpush.msra.mxu0 %v2237
      %2255 = vmatmul.f32.gmra.mxu0 %v2213
      %v2256 = vpop.f32.mrf.mxu0
      %v2257 = vadd.f32 0.0, %v2256
      %2258 = vmatmul.f32.gmra.mxu0 %v2216
      %v2259 = vpop.f32.mrf.mxu0
      %v2260 = vadd.f32 0.0, %v2259
      %2261 = vmatmul.f32.gmra.mxu0 %v2219
      %v2262 = vpop.f32.mrf.mxu0
      %v2263 = vadd.f32 0.0, %v2262
      %2264 = vmatmul.f32.gmra.mxu0 %v2222
      %v2265 = vpop.f32.mrf.mxu0
      %v2266 = vadd.f32 0.0, %v2265
      %2267 = vmatmul.f32.gmra.mxu0 %v2225
      %v2268 = vpop.f32.mrf.mxu0
      %v2269 = vadd.f32 0.0, %v2268
      %2270 = vmatmul.f32.gmra.mxu0 %v2228
      %v2271 = vpop.f32.mrf.mxu0
      %v2272 = vadd.f32 0.0, %v2271
      %2273 = vmatmul.f32.gmra.mxu0 %v2231
      %v2274 = vpop.f32.mrf.mxu0
      %v2275 = vadd.f32 0.0, %v2274
      %2276 = vmatmul.f32.gmra.mxu0 %v2234
      %v2277 = vpop.f32.mrf.mxu0
      %v2278 = vadd.f32 0.0, %v2277
      %2279 = vdwg.mxu0
      %v2280 = vadd.f32 %v2194, %v2257
      %v2281 = vadd.f32 %v2195, %v2260
      %v2282 = vadd.f32 %v2196, %v2263
      %v2283 = vadd.f32 %v2197, %v2266
      %v2284 = vadd.f32 %v2198, %v2269
      %v2285 = vadd.f32 %v2199, %v2272
      %v2286 = vadd.f32 %v2200, %v2275
      %v2287 = vadd.f32 %v2201, %v2278
      %v2288 = vld [vmem:[%s1942 + $0x2] sm:$0xff]
      %v2289 = vld [vmem:[%s1942 + $0x12] sm:$0xff]
      %v2290 = vld [vmem:[%s1942 + $0x22] sm:$0xff]
      %v2291 = vld [vmem:[%s1942 + $0x32] sm:$0xff]
      %v2292 = vld [vmem:[%s1942 + $0x42] sm:$0xff]
      %v2293 = vld [vmem:[%s1942 + $0x52] sm:$0xff]
      %v2294 = vld [vmem:[%s1942 + $0x62] sm:$0xff]
      %v2295 = vld [vmem:[%s1942 + $0x72] sm:$0xff]
      %s2296 = scalar_lea.vmem %s1, 96
      %v2297 = vld [vmem:[%s2296] sm:$0xf]
      %v2299 = vsel %vm223, %v2288, 0
      %v2302 = vsel %vm223, %v2289, 0
      %v2305 = vsel %vm223, %v2290, 0
      %v2308 = vsel %vm223, %v2291, 0
      %v2311 = vsel %vm223, %v2292, 0
      %v2314 = vsel %vm223, %v2293, 0
      %v2317 = vsel %vm223, %v2294, 0
      %v2320 = vsel %vm223, %v2295, 0
      %v2323 = vsel %vm248, %v2297, 0
      %2325 = vmatpush.msra.mxu0 0.0
      %2326 = vmatpush.msra.mxu0 0.0
      %2327 = vmatpush.msra.mxu0 0.0
      %2328 = vmatpush.msra.mxu0 0.0
      %2329 = vmatpush.msra.mxu0 0.0
      %2330 = vmatpush.msra.mxu0 0.0
      %2331 = vmatpush.msra.mxu0 0.0
      %2332 = vmatpush.msra.mxu0 0.0
      %2333 = vmatpush.msra.mxu0 0.0
      %2334 = vmatpush.msra.mxu0 0.0
      %2335 = vmatpush.msra.mxu0 0.0
      %2336 = vmatpush.msra.mxu0 0.0
      %2337 = vmatpush.msra.mxu0 0.0
      %2338 = vmatpush.msra.mxu0 0.0
      %2339 = vmatpush.msra.mxu0 0.0
      %2340 = vmatpush.msra.mxu0 %v2323
      %2341 = vmatmul.f32.gmra.mxu0 %v2299
      %v2342 = vpop.f32.mrf.mxu0
      %v2343 = vadd.f32 0.0, %v2342
      %2344 = vmatmul.f32.gmra.mxu0 %v2302
      %v2345 = vpop.f32.mrf.mxu0
      %v2346 = vadd.f32 0.0, %v2345
      %2347 = vmatmul.f32.gmra.mxu0 %v2305
      %v2348 = vpop.f32.mrf.mxu0
      %v2349 = vadd.f32 0.0, %v2348
      %2350 = vmatmul.f32.gmra.mxu0 %v2308
      %v2351 = vpop.f32.mrf.mxu0
      %v2352 = vadd.f32 0.0, %v2351
      %2353 = vmatmul.f32.gmra.mxu0 %v2311
      %v2354 = vpop.f32.mrf.mxu0
      %v2355 = vadd.f32 0.0, %v2354
      %2356 = vmatmul.f32.gmra.mxu0 %v2314
      %v2357 = vpop.f32.mrf.mxu0
      %v2358 = vadd.f32 0.0, %v2357
      %2359 = vmatmul.f32.gmra.mxu0 %v2317
      %v2360 = vpop.f32.mrf.mxu0
      %v2361 = vadd.f32 0.0, %v2360
      %2362 = vmatmul.f32.gmra.mxu0 %v2320
      %v2363 = vpop.f32.mrf.mxu0
      %v2364 = vadd.f32 0.0, %v2363
      %2365 = vdwg.mxu0
      %v2366 = vadd.f32 %v2280, %v2343
      %v2367 = vadd.f32 %v2281, %v2346
      %v2368 = vadd.f32 %v2282, %v2349
      %v2369 = vadd.f32 %v2283, %v2352
      %v2370 = vadd.f32 %v2284, %v2355
      %v2371 = vadd.f32 %v2285, %v2358
      %v2372 = vadd.f32 %v2286, %v2361
      %v2373 = vadd.f32 %v2287, %v2364
      %vm2374 = vcmask 64512
      %2375 = vst.msk [vmem:[%s204] sm:$0xff] %vm2374, %v2366
      %2376 = vst.msk [vmem:[%s204 + $0x8] sm:$0xff] %vm2374, %v2367
      %2377 = vst.msk [vmem:[%s204 + $0x10] sm:$0xff] %vm2374, %v2368
      %2378 = vst.msk [vmem:[%s204 + $0x18] sm:$0xff] %vm2374, %v2369
      %2379 = vst.msk [vmem:[%s204 + $0x20] sm:$0xff] %vm2374, %v2370
      %2380 = vst.msk [vmem:[%s204 + $0x28] sm:$0xff] %vm2374, %v2371
      %2381 = vst.msk [vmem:[%s204 + $0x30] sm:$0xff] %vm2374, %v2372
      %2382 = vst.msk [vmem:[%s204 + $0x38] sm:$0xff] %vm2374, %v2373
      %v2383 = vsel %vm2374, %v2366, 0.0
      %v2384 = vsel %vm2374, %v2367, 0.0
      %v2385 = vadd.f32 %v2383, %v2384
      %v2386 = vsel %vm2374, %v2368, 0.0
      %v2387 = vadd.f32 %v2385, %v2386
      %v2388 = vsel %vm2374, %v2369, 0.0
      %v2389 = vadd.f32 %v2387, %v2388
      %v2390 = vsel %vm2374, %v2370, 0.0
      %v2391 = vadd.f32 %v2389, %v2390
      %v2392 = vsel %vm2374, %v2371, 0.0
      %v2393 = vadd.f32 %v2391, %v2392
      %v2394 = vsel %vm2374, %v2372, 0.0
      %v2395 = vadd.f32 %v2393, %v2394
      %v2396 = vsel %vm2374, %v2373, 0.0
      %v2397 = vadd.f32 %v2395, %v2396
      %v2398 = vrot.slane %v2397, 4
      %v2399 = vadd.f32 %v2397, %v2398
      %v2400 = vrot.slane %v2399, 2
      %v2401 = vadd.f32 %v2399, %v2400
      %v2402 = vrot.slane %v2401, 1
      %v2403 = vadd.f32 %v2401, %v2402
      %v2404 = vmul.f32 %v2366, %v2366
      %v2405 = vmul.f32 %v2367, %v2367
      %v2406 = vmul.f32 %v2368, %v2368
      %v2407 = vmul.f32 %v2369, %v2369
      %v2408 = vmul.f32 %v2370, %v2370
      %v2409 = vmul.f32 %v2371, %v2371
      %v2410 = vmul.f32 %v2372, %v2372
      %v2411 = vmul.f32 %v2373, %v2373
      %v2412 = vsel %vm2374, %v2404, 0.0
      %v2413 = vsel %vm2374, %v2405, 0.0
      %v2414 = vadd.f32 %v2412, %v2413
      %v2415 = vsel %vm2374, %v2406, 0.0
      %v2416 = vadd.f32 %v2414, %v2415
      %v2417 = vsel %vm2374, %v2407, 0.0
      %v2418 = vadd.f32 %v2416, %v2417
      %v2419 = vsel %vm2374, %v2408, 0.0
      %v2420 = vadd.f32 %v2418, %v2419
      %v2421 = vsel %vm2374, %v2409, 0.0
      %v2422 = vadd.f32 %v2420, %v2421
      %v2423 = vsel %vm2374, %v2410, 0.0
      %v2424 = vadd.f32 %v2422, %v2423
      %v2425 = vsel %vm2374, %v2411, 0.0
      %v2426 = vadd.f32 %v2424, %v2425
      %v2427 = vrot.slane %v2426, 4
      %v2428 = vadd.f32 %v2426, %v2427
      %v2429 = vrot.slane %v2428, 2
      %v2430 = vadd.f32 %v2428, %v2429
      %v2431 = vrot.slane %v2430, 1
      %v2432 = vadd.f32 %v2430, %v2431
      %vm2433 = vcmask 1040384
      %v2434 = vsel %vm2433, %v2403, %v2432
      %vm2435 = vcmask 58368
      %2436 = vst.msk [vmem:[%s208] sm:$0x3] %vm2435, %v2434
      %p2437 = scmp.lt.s32.totalorder %s16, 1
      %s2438 = scalar_select %p2437, %s16, 1
      %s2439 = smul.addr %s2438, 8
      %s2440 = smul.addr %s2439, 8
      %s2441 = scalar_lea.vmem %s3, %s2440
      %p2442 = scmp.lt.s32.totalorder %s16, 1
      %s2443 = scalar_select %p2442, %s16, 1
      %s2444 = smul.addr %s2443, 2
      %s2445 = scalar_lea.vmem %s4, %s2444
      // Predicated region
      $region33: #{conv_block_forward.5} parent=31 // pred_check
        %p2446 = pneg %p102
      $region34: #{conv_block_forward.5} parent=31 // pred_check_branch
        %2448 = sbr.rel (%p2446) target = $region36
      $region35: #{conv_block_forward.5} parent=31 // pred_region
        _
      $region36: #{conv_block_forward.5} parent=31 // pred_fallthru
        _
      // Predicated region
      $region37: #{conv_block_forward.5} parent=31 // pred_check
        %p2449 = pneg %p128
      $region38: #{conv_block_forward.5} parent=31 // pred_check_branch
        %2451 = sbr.rel (%p2449) target = $region40
      $region39: #{conv_block_forward.5} parent=31 // pred_region
        _
      $region40: #{conv_block_forward.5} parent=31 // pred_fallthru
        _
    $region32: #{conv_block_forward.5} parent=5 // pred_fallthru
      _
    %p2452 = scmp.le.s32.totalorder 2, %s11
    // Predicated region
    $region41: #{conv_block_forward.5} parent=5 // pred_check
      %p2453 = pneg %p2452
    $region42: #{conv_block_forward.5} parent=5 // pred_check_branch
      %2455 = sbr.rel (%p2453) target = $region44
    $region43: #{conv_block_forward.5} parent=5 // pred_region
      %s2456 = ssub.s32 %s11, 2
      // Predicated region
      $region45: #{conv_block_forward.5} parent=43 // pred_check
        %p2457 = pneg %p108
      $region46: #{conv_block_forward.5} parent=43 // pred_check_branch
        %2459 = sbr.rel (%p2457) target = $region48
      $region47: #{conv_block_forward.5} parent=43 // pred_region
        %p2460 = scmp.lt.s32.totalorder %s17, 1
        %s2461 = scalar_select %p2460, %s17, 1
        %s2462 = smul.addr %s2461, 8
        %s2463 = smul.addr %s2462, 8
        %s2464 = scalar_lea.vmem %s3, %s2463
      $region48: #{conv_block_forward.5} parent=43 // pred_fallthru
        _
      // Predicated region
      $region49: #{conv_block_forward.5} parent=43 // pred_check
        %p2465 = pneg %p134
      $region50: #{conv_block_forward.5} parent=43 // pred_check_branch
        %2467 = sbr.rel (%p2465) target = $region52
      $region51: #{conv_block_forward.5} parent=43 // pred_region
        %p2468 = scmp.lt.s32.totalorder %s17, 1
        %s2469 = scalar_select %p2468, %s17, 1
        %s2470 = smul.addr %s2469, 2
        %s2471 = scalar_lea.vmem %s4, %s2470
      $region52: #{conv_block_forward.5} parent=43 // pred_fallthru
        _
    $region44: #{conv_block_forward.5} parent=5 // pred_fallthru
      _
  $region6: #{conv_block_forward.5} parent=0 // loop_footer
    %s15 = sadd.s32 1, %s11
  $region7: #{conv_block_forward.5} parent=0 // loop_footer_branch
    %10 = sbr.rel target = $region3
  $region8: #{conv_block_forward.5} parent=0 // loop_exit
    _

// kernel: conv_block_forward.9
$region0: #{conv_block_forward.9}
  #allocation0 [shape = 'u32[]', space=smem, size = 0x4, offset = 0x4, fixed_abs, tag = 'smem constant byte address 0x4 - core index']
  #allocation1 [shape = 'u32[72,128]{1,0:T(1,128)}', space=vmem, size = 0x9000, scoped, tag = 'internal scratch']
  %s0 = inlined_call_operand.vmem [shape: f32[1,1,8], index: 0, kind: input, shape index: {}]
  %s1 = inlined_call_operand.vmem [shape: f32[1,1,8], index: 1, kind: input, shape index: {}]
  %s2 = inlined_call_operand.vmem [shape: f32[1,1,8], index: 2, kind: input, shape index: {}]
  %s3 = inlined_call_operand.vmem [shape: f32[1,1,8], index: 3, kind: input, shape index: {}]
  %s4 = inlined_call_operand.vmem [shape: f32[2,8,8,8], index: 4, kind: input, shape index: {}]
  %s5 = inlined_call_operand.vmem [shape: f32[2,8,8,8], index: 5, kind: input, shape index: {}]
  %s6 = inlined_call_operand.vmem [shape: f32[2,8,8,8], index: 6, kind: output, shape index: {}]
  %s7 = sld [smem:[#allocation0]]
  $region57: #{conv_block_forward.9} parent=0
    _
  %s9 = ssub.s32 1, %s7
  %s10 = scalar_select 0, %s9, %s7
  loop: start=0, step=1, limit=4
  $region2: #{conv_block_forward.9} parent=0 // loop_pre_header
    _
  $region3: #{conv_block_forward.9} parent=0 // loop_header
    %s12 = sphi 0, %s16
    %p13 = scmp.ge.s32.totalorder %s12, 4
    %s20 = sphi 0, %s20
    %s22 = sphi 0, %s20
    %s23 = sphi 0, %s22
    %s37 = sphi 0, %s23
    %s41 = sphi 0, %s41
    %s43 = sphi 0, %s41
    %s44 = sphi 0, %s43
    %s58 = sphi 0, %s44
    %s62 = sphi 0, %s62
    %s64 = sphi 0, %s62
    %s65 = sphi 0, %s64
    %s79 = sphi 0, %s65
    %s83 = sphi 0, %s83
    %s85 = sphi 0, %s83
    %s86 = sphi 0, %s85
    %s100 = sphi 0, %s86
    %s106 = sphi 0, %s108
    %s109 = sphi 0, %s106
    %s110 = sphi 0, %s109
    %s126 = sphi 0, %s110
    %s132 = sphi 0, %s134
    %s135 = sphi 0, %s132
    %s136 = sphi 0, %s135
    %s152 = sphi 0, %s136
    %s158 = sphi 0, %s160
    %s161 = sphi 0, %s158
    %s162 = sphi 0, %s161
    %s178 = sphi 0, %s162
  $region4: #{conv_block_forward.9} parent=0 // loop_header_branch
    %15 = sbr.rel (%p13) target = $region8
  $region5: #{conv_block_forward.9} parent=0 // loop_body
    %s17 = ssub.s32 %s12, 1
    %s18 = ssub.s32 %s12, 2
    %s19 = sadd.s32 %s12, 1
    %s21 = sadd.s32 %s20, 1
    %p24 = scmp.eq.s32.totalorder %s12, 1
    %p25 = scmp.ne.s32.totalorder %s20, %s22
    %p26 = scmp.eq.s32.totalorder %s12, 0
    %p27 = por %p25, %p26
    %p28 = scmp.ne.s32.totalorder %s20, %s22
    %p29 = scmp.eq.s32.totalorder %s17, 1
    %p30 = por %p28, %p29
    %p31 = scmp.ne.s32.totalorder %s22, %s23
    %p32 = scmp.eq.s32.totalorder %s17, 0
    %p33 = por %p31, %p32
    %p34 = scmp.ne.s32.totalorder %s22, %s23
    %p35 = scmp.eq.s32.totalorder %s18, 1
    %p36 = por %p34, %p35
    %p38 = scmp.ne.s32.totalorder %s23, %s37
    %p39 = scmp.eq.s32.totalorder %s18, 0
    %p40 = por %p38, %p39
    %s42 = sadd.s32 %s41, 1
    %p45 = scmp.eq.s32.totalorder %s12, 1
    %p46 = scmp.ne.s32.totalorder %s41, %s43
    %p47 = scmp.eq.s32.totalorder %s12, 0
    %p48 = por %p46, %p47
    %p49 = scmp.ne.s32.totalorder %s41, %s43
    %p50 = scmp.eq.s32.totalorder %s17, 1
    %p51 = por %p49, %p50
    %p52 = scmp.ne.s32.totalorder %s43, %s44
    %p53 = scmp.eq.s32.totalorder %s17, 0
    %p54 = por %p52, %p53
    %p55 = scmp.ne.s32.totalorder %s43, %s44
    %p56 = scmp.eq.s32.totalorder %s18, 1
    %p57 = por %p55, %p56
    %p59 = scmp.ne.s32.totalorder %s44, %s58
    %p60 = scmp.eq.s32.totalorder %s18, 0
    %p61 = por %p59, %p60
    %s63 = sadd.s32 %s62, 1
    %p66 = scmp.eq.s32.totalorder %s12, 1
    %p67 = scmp.ne.s32.totalorder %s62, %s64
    %p68 = scmp.eq.s32.totalorder %s12, 0
    %p69 = por %p67, %p68
    %p70 = scmp.ne.s32.totalorder %s62, %s64
    %p71 = scmp.eq.s32.totalorder %s17, 1
    %p72 = por %p70, %p71
    %p73 = scmp.ne.s32.totalorder %s64, %s65
    %p74 = scmp.eq.s32.totalorder %s17, 0
    %p75 = por %p73, %p74
    %p76 = scmp.ne.s32.totalorder %s64, %s65
    %p77 = scmp.eq.s32.totalorder %s18, 1
    %p78 = por %p76, %p77
    %p80 = scmp.ne.s32.totalorder %s65, %s79
    %p81 = scmp.eq.s32.totalorder %s18, 0
    %p82 = por %p80, %p81
    %s84 = sadd.s32 %s83, 1
    %p87 = scmp.eq.s32.totalorder %s12, 1
    %p88 = scmp.ne.s32.totalorder %s83, %s85
    %p89 = scmp.eq.s32.totalorder %s12, 0
    %p90 = por %p88, %p89
    %p91 = scmp.ne.s32.totalorder %s83, %s85
    %p92 = scmp.eq.s32.totalorder %s17, 1
    %p93 = por %p91, %p92
    %p94 = scmp.ne.s32.totalorder %s85, %s86
    %p95 = scmp.eq.s32.totalorder %s17, 0
    %p96 = por %p94, %p95
    %p97 = scmp.ne.s32.totalorder %s85, %s86
    %p98 = scmp.eq.s32.totalorder %s18, 1
    %p99 = por %p97, %p98
    %p101 = scmp.ne.s32.totalorder %s86, %s100
    %p102 = scmp.eq.s32.totalorder %s18, 0
    %p103 = por %p101, %p102
    %s104 = ssub.s32 %s12, %s19
    %p105 = scmp.eq.s32.totalorder %s104, 0
    %s107 = sadd.s32 %s106, 1
    %s108 = scalar_select %p105, %s106, %s107
    %p111 = pneg %p105
    %p112 = scmp.eq.s32.totalorder %s12, 1
    %p113 = por %p111, %p112
    %p114 = scmp.ne.s32.totalorder %s106, %s109
    %p115 = scmp.eq.s32.totalorder %s12, 0
    %p116 = por %p114, %p115
    %p117 = scmp.ne.s32.totalorder %s106, %s109
    %p118 = scmp.eq.s32.totalorder %s17, 1
    %p119 = por %p117, %p118
    %p120 = scmp.ne.s32.totalorder %s109, %s110
    %p121 = scmp.eq.s32.totalorder %s17, 0
    %p122 = por %p120, %p121
    %p123 = scmp.ne.s32.totalorder %s109, %s110
    %p124 = scmp.eq.s32.totalorder %s18, 1
    %p125 = por %p123, %p124
    %p127 = scmp.ne.s32.totalorder %s110, %s126
    %p128 = scmp.eq.s32.totalorder %s18, 0
    %p129 = por %p127, %p128
    %s130 = ssub.s32 %s12, %s19
    %p131 = scmp.eq.s32.totalorder %s130, 0
    %s133 = sadd.s32 %s132, 1
    %s134 = scalar_select %p131, %s132, %s133
    %p137 = pneg %p131
    %p138 = scmp.eq.s32.totalorder %s12, 1
    %p139 = por %p137, %p138
    %p140 = scmp.ne.s32.totalorder %s132, %s135
    %p141 = scmp.eq.s32.totalorder %s12, 0
    %p142 = por %p140, %p141
    %p143 = scmp.ne.s32.totalorder %s132, %s135
    %p144 = scmp.eq.s32.totalorder %s17, 1
    %p145 = por %p143, %p144
    %p146 = scmp.ne.s32.totalorder %s135, %s136
    %p147 = scmp.eq.s32.totalorder %s17, 0
    %p148 = por %p146, %p147
    %p149 = scmp.ne.s32.totalorder %s135, %s136
    %p150 = scmp.eq.s32.totalorder %s18, 1
    %p151 = por %p149, %p150
    %p153 = scmp.ne.s32.totalorder %s136, %s152
    %p154 = scmp.eq.s32.totalorder %s18, 0
    %p155 = por %p153, %p154
    %s156 = ssub.s32 %s12, %s19
    %p157 = scmp.eq.s32.totalorder %s156, 0
    %s159 = sadd.s32 %s158, 1
    %s160 = scalar_select %p157, %s158, %s159
    %p163 = pneg %p157
    %p164 = scmp.eq.s32.totalorder %s12, 1
    %p165 = por %p163, %p164
    %p166 = scmp.ne.s32.totalorder %s158, %s161
    %p167 = scmp.eq.s32.totalorder %s12, 0
    %p168 = por %p166, %p167
    %p169 = scmp.ne.s32.totalorder %s158, %s161
    %p170 = scmp.eq.s32.totalorder %s17, 1
    %p171 = por %p169, %p170
    %p172 = scmp.ne.s32.totalorder %s161, %s162
    %p173 = scmp.eq.s32.totalorder %s17, 0
    %p174 = por %p172, %p173
    %p175 = scmp.ne.s32.totalorder %s161, %s162
    %p176 = scmp.eq.s32.totalorder %s18, 1
    %p177 = por %p175, %p176
    %p179 = scmp.ne.s32.totalorder %s162, %s178
    %p180 = scmp.eq.s32.totalorder %s18, 0
    %p181 = por %p179, %p180
    %p182 = scmp.le.s32.totalorder 1, %s12
    %p183 = scmp.lt.s32.totalorder %s12, 3
    %p184 = pnand %p182, %p183
    %p185 = pneg %p184
    // Predicated region
    $region9: #{conv_block_forward.9} parent=5 // pred_check
      _
    $region10: #{conv_block_forward.9} parent=5 // pred_check_branch
      %187 = sbr.rel (%p184) target = $region12
    $region11: #{conv_block_forward.9} parent=5 // pred_region
      %s188 = ssub.s32 %s12, 1
      // Predicated region
      $region13: #{conv_block_forward.9} parent=11 // pred_check
        %p189 = pneg %p33
      $region14: #{conv_block_forward.9} parent=11 // pred_check_branch
        %191 = sbr.rel (%p189) target = $region16
      $region15: #{conv_block_forward.9} parent=11 // pred_region
        _
      $region16: #{conv_block_forward.9} parent=11 // pred_fallthru
        _
      // Predicated region
      $region17: #{conv_block_forward.9} parent=11 // pred_check
        %p192 = pneg %p54
      $region18: #{conv_block_forward.9} parent=11 // pred_check_branch
        %194 = sbr.rel (%p192) target = $region20
      $region19: #{conv_block_forward.9} parent=11 // pred_region
        _
      $region20: #{conv_block_forward.9} parent=11 // pred_fallthru
        _
      // Predicated region
      $region21: #{conv_block_forward.9} parent=11 // pred_check
        %p195 = pneg %p75
      $region22: #{conv_block_forward.9} parent=11 // pred_check_branch
        %197 = sbr.rel (%p195) target = $region24
      $region23: #{conv_block_forward.9} parent=11 // pred_region
        _
      $region24: #{conv_block_forward.9} parent=11 // pred_fallthru
        _
      // Predicated region
      $region25: #{conv_block_forward.9} parent=11 // pred_check
        %p198 = pneg %p96
      $region26: #{conv_block_forward.9} parent=11 // pred_check_branch
        %200 = sbr.rel (%p198) target = $region28
      $region27: #{conv_block_forward.9} parent=11 // pred_region
        _
      $region28: #{conv_block_forward.9} parent=11 // pred_fallthru
        _
    $region12: #{conv_block_forward.9} parent=5 // pred_fallthru
      _
    %p201 = scmp.lt.s32.totalorder %s12, 2
    // Predicated region
    $region29: #{conv_block_forward.9} parent=5 // pred_check
      %p202 = pneg %p201
    $region30: #{conv_block_forward.9} parent=5 // pred_check_branch
      %204 = sbr.rel (%p202) target = $region32
    $region31: #{conv_block_forward.9} parent=5 // pred_region
      // Predicated region
      $region33: #{conv_block_forward.9} parent=31 // pred_check
        %p205 = pneg %p116
      $region34: #{conv_block_forward.9} parent=31 // pred_check_branch
        %207 = sbr.rel (%p205) target = $region36
      $region35: #{conv_block_forward.9} parent=31 // pred_region
        %p208 = scmp.lt.s32.totalorder %s12, 1
        %s209 = scalar_select %p208, %s12, 1
        %s210 = smul.addr %s209, 8
        %s211 = smul.addr %s210, 8
        %s212 = scalar_lea.vmem %s4, %s211
      $region36: #{conv_block_forward.9} parent=31 // pred_fallthru
        _
      // Predicated region
      $region37: #{conv_block_forward.9} parent=31 // pred_check
        %p213 = pneg %p142
      $region38: #{conv_block_forward.9} parent=31 // pred_check_branch
        %215 = sbr.rel (%p213) target = $region40
      $region39: #{conv_block_forward.9} parent=31 // pred_region
        %p216 = scmp.lt.s32.totalorder %s12, 1
        %s217 = scalar_select %p216, %s12, 1
        %s218 = smul.addr %s217, 8
        %s219 = smul.addr %s218, 8
        %s220 = scalar_lea.vmem %s5, %s219
      $region40: #{conv_block_forward.9} parent=31 // pred_fallthru
        _
    $region32: #{conv_block_forward.9} parent=5 // pred_fallthru
      _
    %p221 = scmp.le.s32.totalorder 1, %s12
    %p222 = scmp.lt.s32.totalorder %s12, 3
    %p223 = pnand %p221, %p222
    %p224 = pneg %p223
    // Predicated region
    $region41: #{conv_block_forward.9} parent=5 // pred_check
      _
    $region42: #{conv_block_forward.9} parent=5 // pred_check_branch
      %226 = sbr.rel (%p223) target = $region44
    $region43: #{conv_block_forward.9} parent=5 // pred_region
      %s227 = ssub.s32 %s12, 1
      %p228 = pneg %p33
      %p229 = pneg %p30
      %p230 = pneg %p54
      %p231 = pneg %p51
      %p232 = pneg %p75
      %p233 = pneg %p72
      %p234 = pneg %p96
      %p235 = pneg %p93
      %p236 = scmp.lt.s32.totalorder %s17, 1
      %s237 = scalar_select %p236, %s17, 1
      %s238 = smul.addr %s237, 8
      %s239 = smul.addr %s238, 8
      %s240 = scalar_lea.vmem %s4, %s239
      %p241 = pneg %p122
      %p242 = pneg %p119
      %p243 = scmp.lt.s32.totalorder %s17, 1
      %s244 = scalar_select %p243, %s17, 1
      %s245 = smul.addr %s244, 8
      %s246 = smul.addr %s245, 8
      %s247 = scalar_lea.vmem %s5, %s246
      %p248 = pneg %p148
      %p249 = pneg %p145
      %p250 = pneg %p174
      %p251 = pneg %p171
      %p252 = scmp.lt.s32.totalorder %s17, 1
      %s253 = scalar_select %p252, %s17, 1
      %s254 = smul.addr %s253, 8
      %s255 = smul.addr %s254, 8
      %s256 = scalar_lea.vmem %s6, %s255
      %p257 = scmp.lt.s32.totalorder %s17, 1
      %s258 = scalar_select %p257, %s17, 1
      %s259 = smul.addr %s258, 8
      %s260 = smul.addr %s259, 8
      %s261 = scalar_lea.vmem %s4, %s260
      %p262 = scmp.lt.s32.totalorder %s17, 1
      %s263 = scalar_select %p262, %s17, 1
      %s264 = smul.addr %s263, 8
      %s265 = smul.addr %s264, 8
      %s266 = scalar_lea.vmem %s5, %s265
      %p267 = scmp.lt.s32.totalorder %s17, 1
      %s268 = scalar_select %p267, %s17, 1
      %s269 = smul.addr %s268, 8
      %s270 = smul.addr %s269, 8
      %s271 = scalar_lea.vmem %s6, %s270
      %v272 = vld [vmem:[%s261] sm:$0xff]
      %v273 = vld [vmem:[%s261 + $0x8] sm:$0xff]
      %v274 = vld [vmem:[%s261 + $0x10] sm:$0xff]
      %v275 = vld [vmem:[%s261 + $0x18] sm:$0xff]
      %v276 = vld [vmem:[%s261 + $0x20] sm:$0xff]
      %v277 = vld [vmem:[%s261 + $0x28] sm:$0xff]
      %v278 = vld [vmem:[%s261 + $0x30] sm:$0xff]
      %v279 = vld [vmem:[%s261 + $0x38] sm:$0xff]
      %v280 = vld [vmem:[%s0] sm:$0x1]
      %v282 = vperm.slane %v280, 0
      %v284 = vmul.f32 %v272, %v282
      %v285 = vmul.f32 %v273, %v282
      %v286 = vmul.f32 %v274, %v282
      %v287 = vmul.f32 %v275, %v282
      %v288 = vmul.f32 %v276, %v282
      %v289 = vmul.f32 %v277, %v282
      %v290 = vmul.f32 %v278, %v282
      %v291 = vmul.f32 %v279, %v282
      %v292 = vld [vmem:[%s1] sm:$0x1]
      %v294 = vperm.slane %v292, 0
      %v296 = vadd.f32 %v284, %v294
      %v297 = vadd.f32 %v285, %v294
      %v298 = vadd.f32 %v286, %v294
      %v299 = vadd.f32 %v287, %v294
      %v300 = vadd.f32 %v288, %v294
      %v301 = vadd.f32 %v289, %v294
      %v302 = vadd.f32 %v290, %v294
      %v303 = vadd.f32 %v291, %v294
      %v304 = vxor.u32 %v296, 2147483648
      %v305 = vxor.u32 %v297, 2147483648
      %v306 = vxor.u32 %v298, 2147483648
      %v307 = vxor.u32 %v299, 2147483648
      %v308 = vxor.u32 %v300, 2147483648
      %v309 = vxor.u32 %v301, 2147483648
      %v310 = vxor.u32 %v302, 2147483648
      %v311 = vxor.u32 %v303, 2147483648
      %v312 = vmul.f32 %v304, 1.442695
      %v313 = vpow.pop %v312
      %v314 = vmul.f32 %v305, 1.442695
      %v315 = vpow.pop %v314
      %v316 = vmul.f32 %v306, 1.442695
      %v317 = vpow.pop %v316
      %v318 = vmul.f32 %v307, 1.442695
      %v319 = vpow.pop %v318
      %v320 = vmul.f32 %v308, 1.442695
      %v321 = vpow.pop %v320
      %v322 = vmul.f32 %v309, 1.442695
      %v323 = vpow.pop %v322
      %v324 = vmul.f32 %v310, 1.442695
      %v325 = vpow.pop %v324
      %v326 = vmul.f32 %v311, 1.442695
      %v327 = vpow.pop %v326
      %v328 = vadd.f32 %v313, 1.0
      %v329 = vadd.f32 %v315, 1.0
      %v330 = vadd.f32 %v317, 1.0
      %v331 = vadd.f32 %v319, 1.0
      %v332 = vadd.f32 %v321, 1.0
      %v333 = vadd.f32 %v323, 1.0
      %v334 = vadd.f32 %v325, 1.0
      %v335 = vadd.f32 %v327, 1.0
      %v336 = vrcp.pop %v328
      %v337 = vmul.f32 %v328, %v336
      %v338 = vsub.f32 1.0, %v337
      %v339 = vmul.f32 %v336, %v338
      %v340 = vadd.f32 %v336, %v339
      %vm341 = vweird.f32 %v328
      %vm342 = vweird.f32 %v336
      %vm343 = vmor %vm341, %vm342
      %v344 = vsel %vm343, %v336, %v340
      %v345 = vand.u32 2147483647, %v328
      %vm346 = vcmp.eq.f32.partialorder %v345, 8.507059e+37
      %v347 = vand.u32 %v328, 2147483648
      %v348 = vor.u32 1.1754944e-38, %v347
      %v349 = vsel %vm346, %v348, %v344
      %v350 = vmul.f32 1.0, %v349
      %v351 = vrcp.pop %v329
      %v352 = vmul.f32 %v329, %v351
      %v353 = vsub.f32 1.0, %v352
      %v354 = vmul.f32 %v351, %v353
      %v355 = vadd.f32 %v351, %v354
      %vm356 = vweird.f32 %v329
      %vm357 = vweird.f32 %v351
      %vm358 = vmor %vm356, %vm357
      %v359 = vsel %vm358, %v351, %v355
      %v360 = vand.u32 2147483647, %v329
      %vm361 = vcmp.eq.f32.partialorder %v360, 8.507059e+37
      %v362 = vand.u32 %v329, 2147483648
      %v363 = vor.u32 1.1754944e-38, %v362
      %v364 = vsel %vm361, %v363, %v359
      %v365 = vmul.f32 1.0, %v364
      %v366 = vrcp.pop %v330
      %v367 = vmul.f32 %v330, %v366
      %v368 = vsub.f32 1.0, %v367
      %v369 = vmul.f32 %v366, %v368
      %v370 = vadd.f32 %v366, %v369
      %vm371 = vweird.f32 %v330
      %vm372 = vweird.f32 %v366
      %vm373 = vmor %vm371, %vm372
      %v374 = vsel %vm373, %v366, %v370
      %v375 = vand.u32 2147483647, %v330
      %vm376 = vcmp.eq.f32.partialorder %v375, 8.507059e+37
      %v377 = vand.u32 %v330, 2147483648
      %v378 = vor.u32 1.1754944e-38, %v377
      %v379 = vsel %vm376, %v378, %v374
      %v380 = vmul.f32 1.0, %v379
      %v381 = vrcp.pop %v331
      %v382 = vmul.f32 %v331, %v381
      %v383 = vsub.f32 1.0, %v382
      %v384 = vmul.f32 %v381, %v383
      %v385 = vadd.f32 %v381, %v384
      %vm386 = vweird.f32 %v331
      %vm387 = vweird.f32 %v381
      %vm388 = vmor %vm386, %vm387
      %v389 = vsel %vm388, %v381, %v385
      %v390 = vand.u32 2147483647, %v331
      %vm391 = vcmp.eq.f32.partialorder %v390, 8.507059e+37
      %v392 = vand.u32 %v331, 2147483648
      %v393 = vor.u32 1.1754944e-38, %v392
      %v394 = vsel %vm391, %v393, %v389
      %v395 = vmul.f32 1.0, %v394
      %v396 = vrcp.pop %v332
      %v397 = vmul.f32 %v332, %v396
      %v398 = vsub.f32 1.0, %v397
      %v399 = vmul.f32 %v396, %v398
      %v400 = vadd.f32 %v396, %v399
      %vm401 = vweird.f32 %v332
      %vm402 = vweird.f32 %v396
      %vm403 = vmor %vm401, %vm402
      %v404 = vsel %vm403, %v396, %v400
      %v405 = vand.u32 2147483647, %v332
      %vm406 = vcmp.eq.f32.partialorder %v405, 8.507059e+37
      %v407 = vand.u32 %v332, 2147483648
      %v408 = vor.u32 1.1754944e-38, %v407
      %v409 = vsel %vm406, %v408, %v404
      %v410 = vmul.f32 1.0, %v409
      %v411 = vrcp.pop %v333
      %v412 = vmul.f32 %v333, %v411
      %v413 = vsub.f32 1.0, %v412
      %v414 = vmul.f32 %v411, %v413
      %v415 = vadd.f32 %v411, %v414
      %vm416 = vweird.f32 %v333
      %vm417 = vweird.f32 %v411
      %vm418 = vmor %vm416, %vm417
      %v419 = vsel %vm418, %v411, %v415
      %v420 = vand.u32 2147483647, %v333
      %vm421 = vcmp.eq.f32.partialorder %v420, 8.507059e+37
      %v422 = vand.u32 %v333, 2147483648
      %v423 = vor.u32 1.1754944e-38, %v422
      %v424 = vsel %vm421, %v423, %v419
      %v425 = vmul.f32 1.0, %v424
      %v426 = vrcp.pop %v334
      %v427 = vmul.f32 %v334, %v426
      %v428 = vsub.f32 1.0, %v427
      %v429 = vmul.f32 %v426, %v428
      %v430 = vadd.f32 %v426, %v429
      %vm431 = vweird.f32 %v334
      %vm432 = vweird.f32 %v426
      %vm433 = vmor %vm431, %vm432
      %v434 = vsel %vm433, %v426, %v430
      %v435 = vand.u32 2147483647, %v334
      %vm436 = vcmp.eq.f32.partialorder %v435, 8.507059e+37
      %v437 = vand.u32 %v334, 2147483648
      %v438 = vor.u32 1.1754944e-38, %v437
      %v439 = vsel %vm436, %v438, %v434
      %v440 = vmul.f32 1.0, %v439
      %v441 = vrcp.pop %v335
      %v442 = vmul.f32 %v335, %v441
      %v443 = vsub.f32 1.0, %v442
      %v444 = vmul.f32 %v441, %v443
      %v445 = vadd.f32 %v441, %v444
      %vm446 = vweird.f32 %v335
      %vm447 = vweird.f32 %v441
      %vm448 = vmor %vm446, %vm447
      %v449 = vsel %vm448, %v441, %v445
      %v450 = vand.u32 2147483647, %v335
      %vm451 = vcmp.eq.f32.partialorder %v450, 8.507059e+37
      %v452 = vand.u32 %v335, 2147483648
      %v453 = vor.u32 1.1754944e-38, %v452
      %v454 = vsel %vm451, %v453, %v449
      %v455 = vmul.f32 1.0, %v454
      %v456 = vmul.f32 %v296, %v350
      %v457 = vmul.f32 %v297, %v365
      %v458 = vmul.f32 %v298, %v380
      %v459 = vmul.f32 %v299, %v395
      %v460 = vmul.f32 %v300, %v410
      %v461 = vmul.f32 %v301, %v425
      %v462 = vmul.f32 %v302, %v440
      %v463 = vmul.f32 %v303, %v455
      %v464 = vld [vmem:[%s266] sm:$0xff]
      %v465 = vld [vmem:[%s266 + $0x8] sm:$0xff]
      %v466 = vld [vmem:[%s266 + $0x10] sm:$0xff]
      %v467 = vld [vmem:[%s266 + $0x18] sm:$0xff]
      %v468 = vld [vmem:[%s266 + $0x20] sm:$0xff]
      %v469 = vld [vmem:[%s266 + $0x28] sm:$0xff]
      %v470 = vld [vmem:[%s266 + $0x30] sm:$0xff]
      %v471 = vld [vmem:[%s266 + $0x38] sm:$0xff]
      %v472 = vld [vmem:[%s2] sm:$0x1]
      %v474 = vperm.slane %v472, 0
      %v476 = vmul.f32 %v464, %v474
      %v477 = vmul.f32 %v465, %v474
      %v478 = vmul.f32 %v466, %v474
      %v479 = vmul.f32 %v467, %v474
      %v480 = vmul.f32 %v468, %v474
      %v481 = vmul.f32 %v469, %v474
      %v482 = vmul.f32 %v470, %v474
      %v483 = vmul.f32 %v471, %v474
      %v484 = vld [vmem:[%s3] sm:$0x1]
      %v486 = vperm.slane %v484, 0
      %v488 = vadd.f32 %v476, %v486
      %v489 = vadd.f32 %v477, %v486
      %v490 = vadd.f32 %v478, %v486
      %v491 = vadd.f32 %v479, %v486
      %v492 = vadd.f32 %v480, %v486
      %v493 = vadd.f32 %v481, %v486
      %v494 = vadd.f32 %v482, %v486
      %v495 = vadd.f32 %v483, %v486
      %v496 = vxor.u32 %v488, 2147483648
      %v497 = vxor.u32 %v489, 2147483648
      %v498 = vxor.u32 %v490, 2147483648
      %v499 = vxor.u32 %v491, 2147483648
      %v500 = vxor.u32 %v492, 2147483648
      %v501 = vxor.u32 %v493, 2147483648
      %v502 = vxor.u32 %v494, 2147483648
      %v503 = vxor.u32 %v495, 2147483648
      %v504 = vmul.f32 %v496, 1.442695
      %v505 = vpow.pop %v504
      %v506 = vmul.f32 %v497, 1.442695
      %v507 = vpow.pop %v506
      %v508 = vmul.f32 %v498, 1.442695
      %v509 = vpow.pop %v508
      %v510 = vmul.f32 %v499, 1.442695
      %v511 = vpow.pop %v510
      %v512 = vmul.f32 %v500, 1.442695
      %v513 = vpow.pop %v512
      %v514 = vmul.f32 %v501, 1.442695
      %v515 = vpow.pop %v514
      %v516 = vmul.f32 %v502, 1.442695
      %v517 = vpow.pop %v516
      %v518 = vmul.f32 %v503, 1.442695
      %v519 = vpow.pop %v518
      %v520 = vadd.f32 %v505, 1.0
      %v521 = vadd.f32 %v507, 1.0
      %v522 = vadd.f32 %v509, 1.0
      %v523 = vadd.f32 %v511, 1.0
      %v524 = vadd.f32 %v513, 1.0
      %v525 = vadd.f32 %v515, 1.0
      %v526 = vadd.f32 %v517, 1.0
      %v527 = vadd.f32 %v519, 1.0
      %v528 = vrcp.pop %v520
      %v529 = vmul.f32 %v520, %v528
      %v530 = vsub.f32 1.0, %v529
      %v531 = vmul.f32 %v528, %v530
      %v532 = vadd.f32 %v528, %v531
      %vm533 = vweird.f32 %v520
      %vm534 = vweird.f32 %v528
      %vm535 = vmor %vm533, %vm534
      %v536 = vsel %vm535, %v528, %v532
      %v537 = vand.u32 2147483647, %v520
      %vm538 = vcmp.eq.f32.partialorder %v537, 8.507059e+37
      %v539 = vand.u32 %v520, 2147483648
      %v540 = vor.u32 1.1754944e-38, %v539
      %v541 = vsel %vm538, %v540, %v536
      %v542 = vmul.f32 1.0, %v541
      %v543 = vrcp.pop %v521
      %v544 = vmul.f32 %v521, %v543
      %v545 = vsub.f32 1.0, %v544
      %v546 = vmul.f32 %v543, %v545
      %v547 = vadd.f32 %v543, %v546
      %vm548 = vweird.f32 %v521
      %vm549 = vweird.f32 %v543
      %vm550 = vmor %vm548, %vm549
      %v551 = vsel %vm550, %v543, %v547
      %v552 = vand.u32 2147483647, %v521
      %vm553 = vcmp.eq.f32.partialorder %v552, 8.507059e+37
      %v554 = vand.u32 %v521, 2147483648
      %v555 = vor.u32 1.1754944e-38, %v554
      %v556 = vsel %vm553, %v555, %v551
      %v557 = vmul.f32 1.0, %v556
      %v558 = vrcp.pop %v522
      %v559 = vmul.f32 %v522, %v558
      %v560 = vsub.f32 1.0, %v559
      %v561 = vmul.f32 %v558, %v560
      %v562 = vadd.f32 %v558, %v561
      %vm563 = vweird.f32 %v522
      %vm564 = vweird.f32 %v558
      %vm565 = vmor %vm563, %vm564
      %v566 = vsel %vm565, %v558, %v562
      %v567 = vand.u32 2147483647, %v522
      %vm568 = vcmp.eq.f32.partialorder %v567, 8.507059e+37
      %v569 = vand.u32 %v522, 2147483648
      %v570 = vor.u32 1.1754944e-38, %v569
      %v571 = vsel %vm568, %v570, %v566
      %v572 = vmul.f32 1.0, %v571
      %v573 = vrcp.pop %v523
      %v574 = vmul.f32 %v523, %v573
      %v575 = vsub.f32 1.0, %v574
      %v576 = vmul.f32 %v573, %v575
      %v577 = vadd.f32 %v573, %v576
      %vm578 = vweird.f32 %v523
      %vm579 = vweird.f32 %v573
      %vm580 = vmor %vm578, %vm579
      %v581 = vsel %vm580, %v573, %v577
      %v582 = vand.u32 2147483647, %v523
      %vm583 = vcmp.eq.f32.partialorder %v582, 8.507059e+37
      %v584 = vand.u32 %v523, 2147483648
      %v585 = vor.u32 1.1754944e-38, %v584
      %v586 = vsel %vm583, %v585, %v581
      %v587 = vmul.f32 1.0, %v586
      %v588 = vrcp.pop %v524
      %v589 = vmul.f32 %v524, %v588
      %v590 = vsub.f32 1.0, %v589
      %v591 = vmul.f32 %v588, %v590
      %v592 = vadd.f32 %v588, %v591
      %vm593 = vweird.f32 %v524
      %vm594 = vweird.f32 %v588
      %vm595 = vmor %vm593, %vm594
      %v596 = vsel %vm595, %v588, %v592
      %v597 = vand.u32 2147483647, %v524
      %vm598 = vcmp.eq.f32.partialorder %v597, 8.507059e+37
      %v599 = vand.u32 %v524, 2147483648
      %v600 = vor.u32 1.1754944e-38, %v599
      %v601 = vsel %vm598, %v600, %v596
      %v602 = vmul.f32 1.0, %v601
      %v603 = vrcp.pop %v525
      %v604 = vmul.f32 %v525, %v603
      %v605 = vsub.f32 1.0, %v604
      %v606 = vmul.f32 %v603, %v605
      %v607 = vadd.f32 %v603, %v606
      %vm608 = vweird.f32 %v525
      %vm609 = vweird.f32 %v603
      %vm610 = vmor %vm608, %vm609
      %v611 = vsel %vm610, %v603, %v607
      %v612 = vand.u32 2147483647, %v525
      %vm613 = vcmp.eq.f32.partialorder %v612, 8.507059e+37
      %v614 = vand.u32 %v525, 2147483648
      %v615 = vor.u32 1.1754944e-38, %v614
      %v616 = vsel %vm613, %v615, %v611
      %v617 = vmul.f32 1.0, %v616
      %v618 = vrcp.pop %v526
      %v619 = vmul.f32 %v526, %v618
      %v620 = vsub.f32 1.0, %v619
      %v621 = vmul.f32 %v618, %v620
      %v622 = vadd.f32 %v618, %v621
      %vm623 = vweird.f32 %v526
      %vm624 = vweird.f32 %v618
      %vm625 = vmor %vm623, %vm624
      %v626 = vsel %vm625, %v618, %v622
      %v627 = vand.u32 2147483647, %v526
      %vm628 = vcmp.eq.f32.partialorder %v627, 8.507059e+37
      %v629 = vand.u32 %v526, 2147483648
      %v630 = vor.u32 1.1754944e-38, %v629
      %v631 = vsel %vm628, %v630, %v626
      %v632 = vmul.f32 1.0, %v631
      %v633 = vrcp.pop %v527
      %v634 = vmul.f32 %v527, %v633
      %v635 = vsub.f32 1.0, %v634
      %v636 = vmul.f32 %v633, %v635
      %v637 = vadd.f32 %v633, %v636
      %vm638 = vweird.f32 %v527
      %vm639 = vweird.f32 %v633
      %vm640 = vmor %vm638, %vm639
      %v641 = vsel %vm640, %v633, %v637
      %v642 = vand.u32 2147483647, %v527
      %vm643 = vcmp.eq.f32.partialorder %v642, 8.507059e+37
      %v644 = vand.u32 %v527, 2147483648
      %v645 = vor.u32 1.1754944e-38, %v644
      %v646 = vsel %vm643, %v645, %v641
      %v647 = vmul.f32 1.0, %v646
      %v648 = vmul.f32 %v488, %v542
      %v649 = vmul.f32 %v489, %v557
      %v650 = vmul.f32 %v490, %v572
      %v651 = vmul.f32 %v491, %v587
      %v652 = vmul.f32 %v492, %v602
      %v653 = vmul.f32 %v493, %v617
      %v654 = vmul.f32 %v494, %v632
      %v655 = vmul.f32 %v495, %v647
      %v656 = vmul.f32 %v648, 0.1
      %v657 = vmul.f32 %v649, 0.1
      %v658 = vmul.f32 %v650, 0.1
      %v659 = vmul.f32 %v651, 0.1
      %v660 = vmul.f32 %v652, 0.1
      %v661 = vmul.f32 %v653, 0.1
      %v662 = vmul.f32 %v654, 0.1
      %v663 = vmul.f32 %v655, 0.1
      %v664 = vadd.f32 %v456, %v656
      %v665 = vadd.f32 %v457, %v657
      %v666 = vadd.f32 %v458, %v658
      %v667 = vadd.f32 %v459, %v659
      %v668 = vadd.f32 %v460, %v660
      %v669 = vadd.f32 %v461, %v661
      %v670 = vadd.f32 %v462, %v662
      %v671 = vadd.f32 %v463, %v663
      %vm672 = vcmask 64512
      %673 = vst.msk [vmem:[%s271] sm:$0xff] %vm672, %v664
      %674 = vst.msk [vmem:[%s271 + $0x8] sm:$0xff] %vm672, %v665
      %675 = vst.msk [vmem:[%s271 + $0x10] sm:$0xff] %vm672, %v666
      %676 = vst.msk [vmem:[%s271 + $0x18] sm:$0xff] %vm672, %v667
      %677 = vst.msk [vmem:[%s271 + $0x20] sm:$0xff] %vm672, %v668
      %678 = vst.msk [vmem:[%s271 + $0x28] sm:$0xff] %vm672, %v669
      %679 = vst.msk [vmem:[%s271 + $0x30] sm:$0xff] %vm672, %v670
      %680 = vst.msk [vmem:[%s271 + $0x38] sm:$0xff] %vm672, %v671
      %p681 = scmp.lt.s32.totalorder %s17, 1
      %s682 = scalar_select %p681, %s17, 1
      %s683 = smul.addr %s682, 8
      %s684 = smul.addr %s683, 8
      %s685 = scalar_lea.vmem %s6, %s684
      // Predicated region
      $region45: #{conv_block_forward.9} parent=43 // pred_check
        %p686 = pneg %p171
      $region46: #{conv_block_forward.9} parent=43 // pred_check_branch
        %688 = sbr.rel (%p686) target = $region48
      $region47: #{conv_block_forward.9} parent=43 // pred_region
        _
      $region48: #{conv_block_forward.9} parent=43 // pred_fallthru
        _
    $region44: #{conv_block_forward.9} parent=5 // pred_fallthru
      _
    %p689 = scmp.le.s32.totalorder 2, %s12
    // Predicated region
    $region49: #{conv_block_forward.9} parent=5 // pred_check
      %p690 = pneg %p689
    $region50: #{conv_block_forward.9} parent=5 // pred_check_branch
      %692 = sbr.rel (%p690) target = $region52
    $region51: #{conv_block_forward.9} parent=5 // pred_region
      %s693 = ssub.s32 %s12, 2
      // Predicated region
      $region53: #{conv_block_forward.9} parent=51 // pred_check
        %p694 = pneg %p177
      $region54: #{conv_block_forward.9} parent=51 // pred_check_branch
        %696 = sbr.rel (%p694) target = $region56
      $region55: #{conv_block_forward.9} parent=51 // pred_region
        %p697 = scmp.lt.s32.totalorder %s18, 1
        %s698 = scalar_select %p697, %s18, 1
        %s699 = smul.addr %s698, 8
        %s700 = smul.addr %s699, 8
        %s701 = scalar_lea.vmem %s6, %s700
      $region56: #{conv_block_forward.9} parent=51 // pred_fallthru
        _
    $region52: #{conv_block_forward.9} parent=5 // pred_fallthru
      _
  $region6: #{conv_block_forward.9} parent=0 // loop_footer
    %s16 = sadd.s32 1, %s12
  $region7: #{conv_block_forward.9} parent=0 // loop_footer_branch
    %11 = sbr.rel target = $region3
  $region8: #{conv_block_forward.9} parent=0 // loop_exit
    _

// kernel: conv_block_forward.8
$region0: #{conv_block_forward.8}
  #allocation0 [shape = 'u32[]', space=smem, size = 0x4, offset = 0x4, fixed_abs, tag = 'smem constant byte address 0x4 - core index']
  #allocation1 [shape = 'u32[72,128]{1,0:T(1,128)}', space=vmem, size = 0x9000, scoped, tag = 'internal scratch']
  #allocation2 [shape = 'f32[12,12,4]{2,1,0:T(8,128)}', space=vmem, size = 0x18000, scoped, tag = 'scratch operand']
  %s0 = inlined_call_operand.vmem [shape: f32[1,1,4], index: 0, kind: input, shape index: {}]
  %s1 = inlined_call_operand.vmem [shape: f32[1,1,4], index: 1, kind: input, shape index: {}]
  %s2 = inlined_call_operand.vmem [shape: f32[2,8,8,4], index: 2, kind: input, shape index: {}]
  %s3 = inlined_call_operand.vmem [shape: f32[25,4,8], index: 3, kind: input, shape index: {}]
  %s4 = inlined_call_operand.vmem [shape: f32[1,8], index: 4, kind: input, shape index: {}]
  %s5 = inlined_call_operand.vmem [shape: f32[2,8,8,8], index: 5, kind: output, shape index: {0}]
  %s6 = inlined_call_operand.vmem [shape: f32[2,2,8], index: 6, kind: output, shape index: {1}]
  %7 = xla_tuple %s5, %s6
  %s8 = sld [smem:[#allocation0]]
  $region61: #{conv_block_forward.8} parent=0
    _
  %s10 = ssub.s32 1, %s8
  %s11 = scalar_select 0, %s10, %s8
  loop: start=0, step=1, limit=4
  $region2: #{conv_block_forward.8} parent=0 // loop_pre_header
    _
  $region3: #{conv_block_forward.8} parent=0 // loop_header
    %s13 = sphi 0, %s17
    %p14 = scmp.ge.s32.totalorder %s13, 4
    %s21 = sphi 0, %s21
    %s23 = sphi 0, %s21
    %s24 = sphi 0, %s23
    %s38 = sphi 0, %s24
    %s42 = sphi 0, %s42
    %s44 = sphi 0, %s42
    %s45 = sphi 0, %s44
    %s59 = sphi 0, %s45
    %s65 = sphi 0, %s67
    %s68 = sphi 0, %s65
    %s69 = sphi 0, %s68
    %s85 = sphi 0, %s69
    %s89 = sphi 0, %s89
    %s91 = sphi 0, %s89
    %s92 = sphi 0, %s91
    %s106 = sphi 0, %s92
    %s110 = sphi 0, %s110
    %s112 = sphi 0, %s110
    %s113 = sphi 0, %s112
    %s127 = sphi 0, %s113
    %s133 = sphi 0, %s135
    %s136 = sphi 0, %s133
    %s137 = sphi 0, %s136
    %s153 = sphi 0, %s137
    %s159 = sphi 0, %s161
    %s162 = sphi 0, %s159
    %s163 = sphi 0, %s162
    %s179 = sphi 0, %s163
  $region4: #{conv_block_forward.8} parent=0 // loop_header_branch
    %16 = sbr.rel (%p14) target = $region8
  $region5: #{conv_block_forward.8} parent=0 // loop_body
    %s18 = ssub.s32 %s13, 1
    %s19 = ssub.s32 %s13, 2
    %s20 = sadd.s32 %s13, 1
    %s22 = sadd.s32 %s21, 1
    %p25 = scmp.eq.s32.totalorder %s13, 1
    %p26 = scmp.ne.s32.totalorder %s21, %s23
    %p27 = scmp.eq.s32.totalorder %s13, 0
    %p28 = por %p26, %p27
    %p29 = scmp.ne.s32.totalorder %s21, %s23
    %p30 = scmp.eq.s32.totalorder %s18, 1
    %p31 = por %p29, %p30
    %p32 = scmp.ne.s32.totalorder %s23, %s24
    %p33 = scmp.eq.s32.totalorder %s18, 0
    %p34 = por %p32, %p33
    %p35 = scmp.ne.s32.totalorder %s23, %s24
    %p36 = scmp.eq.s32.totalorder %s19, 1
    %p37 = por %p35, %p36
    %p39 = scmp.ne.s32.totalorder %s24, %s38
    %p40 = scmp.eq.s32.totalorder %s19, 0
    %p41 = por %p39, %p40
    %s43 = sadd.s32 %s42, 1
    %p46 = scmp.eq.s32.totalorder %s13, 1
    %p47 = scmp.ne.s32.totalorder %s42, %s44
    %p48 = scmp.eq.s32.totalorder %s13, 0
    %p49 = por %p47, %p48
    %p50 = scmp.ne.s32.totalorder %s42, %s44
    %p51 = scmp.eq.s32.totalorder %s18, 1
    %p52 = por %p50, %p51
    %p53 = scmp.ne.s32.totalorder %s44, %s45
    %p54 = scmp.eq.s32.totalorder %s18, 0
    %p55 = por %p53, %p54
    %p56 = scmp.ne.s32.totalorder %s44, %s45
    %p57 = scmp.eq.s32.totalorder %s19, 1
    %p58 = por %p56, %p57
    %p60 = scmp.ne.s32.totalorder %s45, %s59
    %p61 = scmp.eq.s32.totalorder %s19, 0
    %p62 = por %p60, %p61
    %s63 = ssub.s32 %s13, %s20
    %p64 = scmp.eq.s32.totalorder %s63, 0
    %s66 = sadd.s32 %s65, 1
    %s67 = scalar_select %p64, %s65, %s66
    %p70 = pneg %p64
    %p71 = scmp.eq.s32.totalorder %s13, 1
    %p72 = por %p70, %p71
    %p73 = scmp.ne.s32.totalorder %s65, %s68
    %p74 = scmp.eq.s32.totalorder %s13, 0
    %p75 = por %p73, %p74
    %p76 = scmp.ne.s32.totalorder %s65, %s68
    %p77 = scmp.eq.s32.totalorder %s18, 1
    %p78 = por %p76, %p77
    %p79 = scmp.ne.s32.totalorder %s68, %s69
    %p80 = scmp.eq.s32.totalorder %s18, 0
    %p81 = por %p79, %p80
    %p82 = scmp.ne.s32.totalorder %s68, %s69
    %p83 = scmp.eq.s32.totalorder %s19, 1
    %p84 = por %p82, %p83
    %p86 = scmp.ne.s32.totalorder %s69, %s85
    %p87 = scmp.eq.s32.totalorder %s19, 0
    %p88 = por %p86, %p87
    %s90 = sadd.s32 %s89, 1
    %p93 = scmp.eq.s32.totalorder %s13, 1
    %p94 = scmp.ne.s32.totalorder %s89, %s91
    %p95 = scmp.eq.s32.totalorder %s13, 0
    %p96 = por %p94, %p95
    %p97 = scmp.ne.s32.totalorder %s89, %s91
    %p98 = scmp.eq.s32.totalorder %s18, 1
    %p99 = por %p97, %p98
    %p100 = scmp.ne.s32.totalorder %s91, %s92
    %p101 = scmp.eq.s32.totalorder %s18, 0
    %p102 = por %p100, %p101
    %p103 = scmp.ne.s32.totalorder %s91, %s92
    %p104 = scmp.eq.s32.totalorder %s19, 1
    %p105 = por %p103, %p104
    %p107 = scmp.ne.s32.totalorder %s92, %s106
    %p108 = scmp.eq.s32.totalorder %s19, 0
    %p109 = por %p107, %p108
    %s111 = sadd.s32 %s110, 1
    %p114 = scmp.eq.s32.totalorder %s13, 1
    %p115 = scmp.ne.s32.totalorder %s110, %s112
    %p116 = scmp.eq.s32.totalorder %s13, 0
    %p117 = por %p115, %p116
    %p118 = scmp.ne.s32.totalorder %s110, %s112
    %p119 = scmp.eq.s32.totalorder %s18, 1
    %p120 = por %p118, %p119
    %p121 = scmp.ne.s32.totalorder %s112, %s113
    %p122 = scmp.eq.s32.totalorder %s18, 0
    %p123 = por %p121, %p122
    %p124 = scmp.ne.s32.totalorder %s112, %s113
    %p125 = scmp.eq.s32.totalorder %s19, 1
    %p126 = por %p124, %p125
    %p128 = scmp.ne.s32.totalorder %s113, %s127
    %p129 = scmp.eq.s32.totalorder %s19, 0
    %p130 = por %p128, %p129
    %s131 = ssub.s32 %s13, %s20
    %p132 = scmp.eq.s32.totalorder %s131, 0
    %s134 = sadd.s32 %s133, 1
    %s135 = scalar_select %p132, %s133, %s134
    %p138 = pneg %p132
    %p139 = scmp.eq.s32.totalorder %s13, 1
    %p140 = por %p138, %p139
    %p141 = scmp.ne.s32.totalorder %s133, %s136
    %p142 = scmp.eq.s32.totalorder %s13, 0
    %p143 = por %p141, %p142
    %p144 = scmp.ne.s32.totalorder %s133, %s136
    %p145 = scmp.eq.s32.totalorder %s18, 1
    %p146 = por %p144, %p145
    %p147 = scmp.ne.s32.totalorder %s136, %s137
    %p148 = scmp.eq.s32.totalorder %s18, 0
    %p149 = por %p147, %p148
    %p150 = scmp.ne.s32.totalorder %s136, %s137
    %p151 = scmp.eq.s32.totalorder %s19, 1
    %p152 = por %p150, %p151
    %p154 = scmp.ne.s32.totalorder %s137, %s153
    %p155 = scmp.eq.s32.totalorder %s19, 0
    %p156 = por %p154, %p155
    %s157 = ssub.s32 %s13, %s20
    %p158 = scmp.eq.s32.totalorder %s157, 0
    %s160 = sadd.s32 %s159, 1
    %s161 = scalar_select %p158, %s159, %s160
    %p164 = pneg %p158
    %p165 = scmp.eq.s32.totalorder %s13, 1
    %p166 = por %p164, %p165
    %p167 = scmp.ne.s32.totalorder %s159, %s162
    %p168 = scmp.eq.s32.totalorder %s13, 0
    %p169 = por %p167, %p168
    %p170 = scmp.ne.s32.totalorder %s159, %s162
    %p171 = scmp.eq.s32.totalorder %s18, 1
    %p172 = por %p170, %p171
    %p173 = scmp.ne.s32.totalorder %s162, %s163
    %p174 = scmp.eq.s32.totalorder %s18, 0
    %p175 = por %p173, %p174
    %p176 = scmp.ne.s32.totalorder %s162, %s163
    %p177 = scmp.eq.s32.totalorder %s19, 1
    %p178 = por %p176, %p177
    %p180 = scmp.ne.s32.totalorder %s163, %s179
    %p181 = scmp.eq.s32.totalorder %s19, 0
    %p182 = por %p180, %p181
    %p183 = scmp.le.s32.totalorder 1, %s13
    %p184 = scmp.lt.s32.totalorder %s13, 3
    %p185 = pnand %p183, %p184
    %p186 = pneg %p185
    // Predicated region
    $region9: #{conv_block_forward.8} parent=5 // pred_check
      _
    $region10: #{conv_block_forward.8} parent=5 // pred_check_branch
      %188 = sbr.rel (%p185) target = $region12
    $region11: #{conv_block_forward.8} parent=5 // pred_region
      %s189 = ssub.s32 %s13, 1
      // Predicated region
      $region13: #{conv_block_forward.8} parent=11 // pred_check
        %p190 = pneg %p34
      $region14: #{conv_block_forward.8} parent=11 // pred_check_branch
        %192 = sbr.rel (%p190) target = $region16
      $region15: #{conv_block_forward.8} parent=11 // pred_region
        _
      $region16: #{conv_block_forward.8} parent=11 // pred_fallthru
        _
      // Predicated region
      $region17: #{conv_block_forward.8} parent=11 // pred_check
        %p193 = pneg %p55
      $region18: #{conv_block_forward.8} parent=11 // pred_check_branch
        %195 = sbr.rel (%p193) target = $region20
      $region19: #{conv_block_forward.8} parent=11 // pred_region
        _
      $region20: #{conv_block_forward.8} parent=11 // pred_fallthru
        _
      // Predicated region
      $region21: #{conv_block_forward.8} parent=11 // pred_check
        %p196 = pneg %p102
      $region22: #{conv_block_forward.8} parent=11 // pred_check_branch
        %198 = sbr.rel (%p196) target = $region24
      $region23: #{conv_block_forward.8} parent=11 // pred_region
        _
      $region24: #{conv_block_forward.8} parent=11 // pred_fallthru
        _
      // Predicated region
      $region25: #{conv_block_forward.8} parent=11 // pred_check
        %p199 = pneg %p123
      $region26: #{conv_block_forward.8} parent=11 // pred_check_branch
        %201 = sbr.rel (%p199) target = $region28
      $region27: #{conv_block_forward.8} parent=11 // pred_region
        _
      $region28: #{conv_block_forward.8} parent=11 // pred_fallthru
        _
    $region12: #{conv_block_forward.8} parent=5 // pred_fallthru
      _
    %p202 = scmp.lt.s32.totalorder %s13, 2
    // Predicated region
    $region29: #{conv_block_forward.8} parent=5 // pred_check
      %p203 = pneg %p202
    $region30: #{conv_block_forward.8} parent=5 // pred_check_branch
      %205 = sbr.rel (%p203) target = $region32
    $region31: #{conv_block_forward.8} parent=5 // pred_region
      // Predicated region
      $region33: #{conv_block_forward.8} parent=31 // pred_check
        %p206 = pneg %p75
      $region34: #{conv_block_forward.8} parent=31 // pred_check_branch
        %208 = sbr.rel (%p206) target = $region36
      $region35: #{conv_block_forward.8} parent=31 // pred_region
        %p209 = scmp.lt.s32.totalorder %s13, 1
        %s210 = scalar_select %p209, %s13, 1
        %s211 = smul.addr %s210, 8
        %s212 = smul.addr %s211, 8
        %s213 = scalar_lea.vmem %s2, %s212
      $region36: #{conv_block_forward.8} parent=31 // pred_fallthru
        _
    $region32: #{conv_block_forward.8} parent=5 // pred_fallthru
      _
    %p214 = scmp.le.s32.totalorder 1, %s13
    %p215 = scmp.lt.s32.totalorder %s13, 3
    %p216 = pnand %p214, %p215
    %p217 = pneg %p216
    // Predicated region
    $region37: #{conv_block_forward.8} parent=5 // pred_check
      _
    $region38: #{conv_block_forward.8} parent=5 // pred_check_branch
      %219 = sbr.rel (%p216) target = $region40
    $region39: #{conv_block_forward.8} parent=5 // pred_region
      %s220 = ssub.s32 %s13, 1
      %p221 = pneg %p34
      %p222 = pneg %p31
      %p223 = pneg %p55
      %p224 = pneg %p52
      %p225 = scmp.lt.s32.totalorder %s18, 1
      %s226 = scalar_select %p225, %s18, 1
      %s227 = smul.addr %s226, 8
      %s228 = smul.addr %s227, 8
      %s229 = scalar_lea.vmem %s2, %s228
      %p230 = pneg %p81
      %p231 = pneg %p78
      %p232 = pneg %p102
      %p233 = pneg %p99
      %p234 = pneg %p123
      %p235 = pneg %p120
      %p236 = pneg %p149
      %p237 = pneg %p146
      %p238 = scmp.lt.s32.totalorder %s18, 1
      %s239 = scalar_select %p238, %s18, 1
      %s240 = smul.addr %s239, 8
      %s241 = smul.addr %s240, 8
      %s242 = scalar_lea.vmem %s5, %s241
      %p243 = pneg %p175
      %p244 = pneg %p172
      %p245 = scmp.lt.s32.totalorder %s18, 1
      %s246 = scalar_select %p245, %s18, 1
      %s247 = smul.addr %s246, 2
      %s248 = scalar_lea.vmem %s6, %s247
      %p249 = scmp.lt.s32.totalorder %s18, 1
      %s250 = scalar_select %p249, %s18, 1
      %s251 = smul.addr %s250, 8
      %s252 = smul.addr %s251, 8
      %s253 = scalar_lea.vmem %s2, %s252
      %p254 = scmp.lt.s32.totalorder %s18, 1
      %s255 = scalar_select %p254, %s18, 1
      %s256 = smul.addr %s255, 8
      %s257 = smul.addr %s256, 8
      %s258 = scalar_lea.vmem %s5, %s257
      %p259 = scmp.lt.s32.totalorder %s18, 1
      %s260 = scalar_select %p259, %s18, 1
      %s261 = smul.addr %s260, 2
      %s262 = scalar_lea.vmem %s6, %s261
      %v263 = vld [vmem:[%s253] sm:$0xff]
      %v264 = vld [vmem:[%s253 + $0x8] sm:$0xff]
      %v265 = vld [vmem:[%s253 + $0x10] sm:$0xff]
      %v266 = vld [vmem:[%s253 + $0x18] sm:$0xff]
      %v267 = vld [vmem:[%s253 + $0x20] sm:$0xff]
      %v268 = vld [vmem:[%s253 + $0x28] sm:$0xff]
      %v269 = vld [vmem:[%s253 + $0x30] sm:$0xff]
      %v270 = vld [vmem:[%s253 + $0x38] sm:$0xff]
      %v271 = vld [vmem:[%s0] sm:$0x1]
      %v273 = vperm.slane %v271, 0
      %v275 = vmul.f32 %v263, %v273
      %v276 = vmul.f32 %v264, %v273
      %v277 = vmul.f32 %v265, %v273
      %v278 = vmul.f32 %v266, %v273
      %v279 = vmul.f32 %v267, %v273
      %v280 = vmul.f32 %v268, %v273
      %v281 = vmul.f32 %v269, %v273
      %v282 = vmul.f32 %v270, %v273
      %v283 = vld [vmem:[%s1] sm:$0x1]
      %v285 = vperm.slane %v283, 0
      %v287 = vadd.f32 %v275, %v285
      %v288 = vadd.f32 %v276, %v285
      %v289 = vadd.f32 %v277, %v285
      %v290 = vadd.f32 %v278, %v285
      %v291 = vadd.f32 %v279, %v285
      %v292 = vadd.f32 %v280, %v285
      %v293 = vadd.f32 %v281, %v285
      %v294 = vadd.f32 %v282, %v285
      %v295 = vxor.u32 %v287, 2147483648
      %v296 = vxor.u32 %v288, 2147483648
      %v297 = vxor.u32 %v289, 2147483648
      %v298 = vxor.u32 %v290, 2147483648
      %v299 = vxor.u32 %v291, 2147483648
      %v300 = vxor.u32 %v292, 2147483648
      %v301 = vxor.u32 %v293, 2147483648
      %v302 = vxor.u32 %v294, 2147483648
      %v303 = vmul.f32 %v295, 1.442695
      %v304 = vpow.pop %v303
      %v305 = vmul.f32 %v296, 1.442695
      %v306 = vpow.pop %v305
      %v307 = vmul.f32 %v297, 1.442695
      %v308 = vpow.pop %v307
      %v309 = vmul.f32 %v298, 1.442695
      %v310 = vpow.pop %v309
      %v311 = vmul.f32 %v299, 1.442695
      %v312 = vpow.pop %v311
      %v313 = vmul.f32 %v300, 1.442695
      %v314 = vpow.pop %v313
      %v315 = vmul.f32 %v301, 1.442695
      %v316 = vpow.pop %v315
      %v317 = vmul.f32 %v302, 1.442695
      %v318 = vpow.pop %v317
      %v319 = vadd.f32 %v304, 1.0
      %v320 = vadd.f32 %v306, 1.0
      %v321 = vadd.f32 %v308, 1.0
      %v322 = vadd.f32 %v310, 1.0
      %v323 = vadd.f32 %v312, 1.0
      %v324 = vadd.f32 %v314, 1.0
      %v325 = vadd.f32 %v316, 1.0
      %v326 = vadd.f32 %v318, 1.0
      %v327 = vrcp.pop %v319
      %v328 = vmul.f32 %v319, %v327
      %v329 = vsub.f32 1.0, %v328
      %v330 = vmul.f32 %v327, %v329
      %v331 = vadd.f32 %v327, %v330
      %vm332 = vweird.f32 %v319
      %vm333 = vweird.f32 %v327
      %vm334 = vmor %vm332, %vm333
      %v335 = vsel %vm334, %v327, %v331
      %v336 = vand.u32 2147483647, %v319
      %vm337 = vcmp.eq.f32.partialorder %v336, 8.507059e+37
      %v338 = vand.u32 %v319, 2147483648
      %v339 = vor.u32 1.1754944e-38, %v338
      %v340 = vsel %vm337, %v339, %v335
      %v341 = vmul.f32 1.0, %v340
      %v342 = vrcp.pop %v320
      %v343 = vmul.f32 %v320, %v342
      %v344 = vsub.f32 1.0, %v343
      %v345 = vmul.f32 %v342, %v344
      %v346 = vadd.f32 %v342, %v345
      %vm347 = vweird.f32 %v320
      %vm348 = vweird.f32 %v342
      %vm349 = vmor %vm347, %vm348
      %v350 = vsel %vm349, %v342, %v346
      %v351 = vand.u32 2147483647, %v320
      %vm352 = vcmp.eq.f32.partialorder %v351, 8.507059e+37
      %v353 = vand.u32 %v320, 2147483648
      %v354 = vor.u32 1.1754944e-38, %v353
      %v355 = vsel %vm352, %v354, %v350
      %v356 = vmul.f32 1.0, %v355
      %v357 = vrcp.pop %v321
      %v358 = vmul.f32 %v321, %v357
      %v359 = vsub.f32 1.0, %v358
      %v360 = vmul.f32 %v357, %v359
      %v361 = vadd.f32 %v357, %v360
      %vm362 = vweird.f32 %v321
      %vm363 = vweird.f32 %v357
      %vm364 = vmor %vm362, %vm363
      %v365 = vsel %vm364, %v357, %v361
      %v366 = vand.u32 2147483647, %v321
      %vm367 = vcmp.eq.f32.partialorder %v366, 8.507059e+37
      %v368 = vand.u32 %v321, 2147483648
      %v369 = vor.u32 1.1754944e-38, %v368
      %v370 = vsel %vm367, %v369, %v365
      %v371 = vmul.f32 1.0, %v370
      %v372 = vrcp.pop %v322
      %v373 = vmul.f32 %v322, %v372
      %v374 = vsub.f32 1.0, %v373
      %v375 = vmul.f32 %v372, %v374
      %v376 = vadd.f32 %v372, %v375
      %vm377 = vweird.f32 %v322
      %vm378 = vweird.f32 %v372
      %vm379 = vmor %vm377, %vm378
      %v380 = vsel %vm379, %v372, %v376
      %v381 = vand.u32 2147483647, %v322
      %vm382 = vcmp.eq.f32.partialorder %v381, 8.507059e+37
      %v383 = vand.u32 %v322, 2147483648
      %v384 = vor.u32 1.1754944e-38, %v383
      %v385 = vsel %vm382, %v384, %v380
      %v386 = vmul.f32 1.0, %v385
      %v387 = vrcp.pop %v323
      %v388 = vmul.f32 %v323, %v387
      %v389 = vsub.f32 1.0, %v388
      %v390 = vmul.f32 %v387, %v389
      %v391 = vadd.f32 %v387, %v390
      %vm392 = vweird.f32 %v323
      %vm393 = vweird.f32 %v387
      %vm394 = vmor %vm392, %vm393
      %v395 = vsel %vm394, %v387, %v391
      %v396 = vand.u32 2147483647, %v323
      %vm397 = vcmp.eq.f32.partialorder %v396, 8.507059e+37
      %v398 = vand.u32 %v323, 2147483648
      %v399 = vor.u32 1.1754944e-38, %v398
      %v400 = vsel %vm397, %v399, %v395
      %v401 = vmul.f32 1.0, %v400
      %v402 = vrcp.pop %v324
      %v403 = vmul.f32 %v324, %v402
      %v404 = vsub.f32 1.0, %v403
      %v405 = vmul.f32 %v402, %v404
      %v406 = vadd.f32 %v402, %v405
      %vm407 = vweird.f32 %v324
      %vm408 = vweird.f32 %v402
      %vm409 = vmor %vm407, %vm408
      %v410 = vsel %vm409, %v402, %v406
      %v411 = vand.u32 2147483647, %v324
      %vm412 = vcmp.eq.f32.partialorder %v411, 8.507059e+37
      %v413 = vand.u32 %v324, 2147483648
      %v414 = vor.u32 1.1754944e-38, %v413
      %v415 = vsel %vm412, %v414, %v410
      %v416 = vmul.f32 1.0, %v415
      %v417 = vrcp.pop %v325
      %v418 = vmul.f32 %v325, %v417
      %v419 = vsub.f32 1.0, %v418
      %v420 = vmul.f32 %v417, %v419
      %v421 = vadd.f32 %v417, %v420
      %vm422 = vweird.f32 %v325
      %vm423 = vweird.f32 %v417
      %vm424 = vmor %vm422, %vm423
      %v425 = vsel %vm424, %v417, %v421
      %v426 = vand.u32 2147483647, %v325
      %vm427 = vcmp.eq.f32.partialorder %v426, 8.507059e+37
      %v428 = vand.u32 %v325, 2147483648
      %v429 = vor.u32 1.1754944e-38, %v428
      %v430 = vsel %vm427, %v429, %v425
      %v431 = vmul.f32 1.0, %v430
      %v432 = vrcp.pop %v326
      %v433 = vmul.f32 %v326, %v432
      %v434 = vsub.f32 1.0, %v433
      %v435 = vmul.f32 %v432, %v434
      %v436 = vadd.f32 %v432, %v435
      %vm437 = vweird.f32 %v326
      %vm438 = vweird.f32 %v432
      %vm439 = vmor %vm437, %vm438
      %v440 = vsel %vm439, %v432, %v436
      %v441 = vand.u32 2147483647, %v326
      %vm442 = vcmp.eq.f32.partialorder %v441, 8.507059e+37
      %v443 = vand.u32 %v326, 2147483648
      %v444 = vor.u32 1.1754944e-38, %v443
      %v445 = vsel %vm442, %v444, %v440
      %v446 = vmul.f32 1.0, %v445
      %v447 = vmul.f32 %v287, %v341
      %v448 = vmul.f32 %v288, %v356
      %v449 = vmul.f32 %v289, %v371
      %v450 = vmul.f32 %v290, %v386
      %v451 = vmul.f32 %v291, %v401
      %v452 = vmul.f32 %v292, %v416
      %v453 = vmul.f32 %v293, %v431
      %v454 = vmul.f32 %v294, %v446
      %vm455 = vcmask 31744
      %456 = vst.msk [vmem:[#allocation2] sm:$0xff] %vm455, 0.0
      %vm457 = vcmask 27648
      %458 = vst.msk [vmem:[#allocation2 + $0x8] sm:$0xf] %vm457, 0.0
      %459 = vst.msk [vmem:[#allocation2 + $0x10] sm:$0xff] %vm455, 0.0
      %460 = vst.msk [vmem:[#allocation2 + $0x18] sm:$0xf] %vm457, 0.0
      %461 = vst.msk [vmem:[#allocation2 + $0x20] sm:$0xff] %vm455, 0.0
      %462 = vst.msk [vmem:[#allocation2 + $0x28] sm:$0xf] %vm457, 0.0
      %463 = vst.msk [vmem:[#allocation2 + $0x30] sm:$0xff] %vm455, 0.0
      %464 = vst.msk [vmem:[#allocation2 + $0x38] sm:$0xf] %vm457, 0.0
      %465 = vst.msk [vmem:[#allocation2 + $0x40] sm:$0xff] %vm455, 0.0
      %466 = vst.msk [vmem:[#allocation2 + $0x48] sm:$0xf] %vm457, 0.0
      %467 = vst.msk [vmem:[#allocation2 + $0x50] sm:$0xff] %vm455, 0.0
      %468 = vst.msk [vmem:[#allocation2 + $0x58] sm:$0xf] %vm457, 0.0
      %469 = vst.msk [vmem:[#allocation2 + $0x60] sm:$0xff] %vm455, 0.0
      %470 = vst.msk [vmem:[#allocation2 + $0x68] sm:$0xf] %vm457, 0.0
      %471 = vst.msk [vmem:[#allocation2 + $0x70] sm:$0xff] %vm455, 0.0
      %472 = vst.msk [vmem:[#allocation2 + $0x78] sm:$0xf] %vm457, 0.0
      %473 = vst.msk [vmem:[#allocation2 + $0x80] sm:$0xff] %vm455, 0.0
      %474 = vst.msk [vmem:[#allocation2 + $0x88] sm:$0xf] %vm457, 0.0
      %475 = vst.msk [vmem:[#allocation2 + $0x90] sm:$0xff] %vm455, 0.0
      %476 = vst.msk [vmem:[#allocation2 + $0x98] sm:$0xf] %vm457, 0.0
      %477 = vst.msk [vmem:[#allocation2 + $0xa0] sm:$0xff] %vm455, 0.0
      %478 = vst.msk [vmem:[#allocation2 + $0xa8] sm:$0xf] %vm457, 0.0
      %479 = vst.msk [vmem:[#allocation2 + $0xb0] sm:$0xff] %vm455, 0.0
      %480 = vst.msk [vmem:[#allocation2 + $0xb8] sm:$0xf] %vm457, 0.0
      %s481 = scalar_lea.vmem [#allocation2], 32
      %482 = vst.msk [vmem:[%s481 + $0x2] sm:$0xff] %vm455, %v447
      %483 = vst.msk [vmem:[%s481 + $0x12] sm:$0xff] %vm455, %v448
      %484 = vst.msk [vmem:[%s481 + $0x22] sm:$0xff] %vm455, %v449
      %485 = vst.msk [vmem:[%s481 + $0x32] sm:$0xff] %vm455, %v450
      %486 = vst.msk [vmem:[%s481 + $0x42] sm:$0xff] %vm455, %v451
      %487 = vst.msk [vmem:[%s481 + $0x52] sm:$0xff] %vm455, %v452
      %488 = vst.msk [vmem:[%s481 + $0x62] sm:$0xff] %vm455, %v453
      %489 = vst.msk [vmem:[%s481 + $0x72] sm:$0xff] %vm455, %v454
      %v490 = vld [vmem:[%s4] sm:$0x1]
      %v492 = vperm.slane %v490, 0
      %v494 = vadd.f32 %v492, 0.0
      %v495 = vld [vmem:[#allocation2] sm:$0xff]
      %v496 = vld [vmem:[#allocation2 + $0x10] sm:$0xff]
      %v497 = vld [vmem:[#allocation2 + $0x20] sm:$0xff]
      %v498 = vld [vmem:[#allocation2 + $0x30] sm:$0xff]
      %v499 = vld [vmem:[#allocation2 + $0x40] sm:$0xff]
      %v500 = vld [vmem:[#allocation2 + $0x50] sm:$0xff]
      %v501 = vld [vmem:[#allocation2 + $0x60] sm:$0xff]
      %v502 = vld [vmem:[#allocation2 + $0x70] sm:$0xff]
      %v503 = vld [vmem:[%s3] sm:$0xf]
      %v505 = vsel %vm455, %v495, 0
      %v508 = vsel %vm455, %v496, 0
      %v511 = vsel %vm455, %v497, 0
      %v514 = vsel %vm455, %v498, 0
      %v517 = vsel %vm455, %v499, 0
      %v520 = vsel %vm455, %v500, 0
      %v523 = vsel %vm455, %v501, 0
      %v526 = vsel %vm455, %v502, 0
      %vm528 = vcmask 1043456
      %v530 = vsel %vm528, %v503, 0
      %532 = vmatpush.msra.mxu0 0.0
      %533 = vmatpush.msra.mxu0 0.0
      %534 = vmatpush.msra.mxu0 0.0
      %535 = vmatpush.msra.mxu0 0.0
      %536 = vmatpush.msra.mxu0 0.0
      %537 = vmatpush.msra.mxu0 0.0
      %538 = vmatpush.msra.mxu0 0.0
      %539 = vmatpush.msra.mxu0 0.0
      %540 = vmatpush.msra.mxu0 0.0
      %541 = vmatpush.msra.mxu0 0.0
      %542 = vmatpush.msra.mxu0 0.0
      %543 = vmatpush.msra.mxu0 0.0
      %544 = vmatpush.msra.mxu0 0.0
      %545 = vmatpush.msra.mxu0 0.0
      %546 = vmatpush.msra.mxu0 0.0
      %547 = vmatpush.msra.mxu0 %v530
      %548 = vmatmul.f32.gmra.mxu0 %v505
      %v549 = vpop.f32.mrf.mxu0
      %v550 = vadd.f32 0.0, %v549
      %551 = vmatmul.f32.gmra.mxu0 %v508
      %v552 = vpop.f32.mrf.mxu0
      %v553 = vadd.f32 0.0, %v552
      %554 = vmatmul.f32.gmra.mxu0 %v511
      %v555 = vpop.f32.mrf.mxu0
      %v556 = vadd.f32 0.0, %v555
      %557 = vmatmul.f32.gmra.mxu0 %v514
      %v558 = vpop.f32.mrf.mxu0
      %v559 = vadd.f32 0.0, %v558
      %560 = vmatmul.f32.gmra.mxu0 %v517
      %v561 = vpop.f32.mrf.mxu0
      %v562 = vadd.f32 0.0, %v561
      %563 = vmatmul.f32.gmra.mxu0 %v520
      %v564 = vpop.f32.mrf.mxu0
      %v565 = vadd.f32 0.0, %v564
      %566 = vmatmul.f32.gmra.mxu0 %v523
      %v567 = vpop.f32.mrf.mxu0
      %v568 = vadd.f32 0.0, %v567
      %569 = vmatmul.f32.gmra.mxu0 %v526
      %v570 = vpop.f32.mrf.mxu0
      %v571 = vadd.f32 0.0, %v570
      %572 = vdwg.mxu0
      %v573 = vadd.f32 %v494, %v550
      %v574 = vadd.f32 %v494, %v553
      %v575 = vadd.f32 %v494, %v556
      %v576 = vadd.f32 %v494, %v559
      %v577 = vadd.f32 %v494, %v562
      %v578 = vadd.f32 %v494, %v565
      %v579 = vadd.f32 %v494, %v568
      %v580 = vadd.f32 %v494, %v571
      %v581 = vld [vmem:[#allocation2 + $0x1] sm:$0xff]
      %v582 = vld [vmem:[#allocation2 + $0x11] sm:$0xff]
      %v583 = vld [vmem:[#allocation2 + $0x21] sm:$0xff]
      %v584 = vld [vmem:[#allocation2 + $0x31] sm:$0xff]
      %v585 = vld [vmem:[#allocation2 + $0x41] sm:$0xff]
      %v586 = vld [vmem:[#allocation2 + $0x51] sm:$0xff]
      %v587 = vld [vmem:[#allocation2 + $0x61] sm:$0xff]
      %v588 = vld [vmem:[#allocation2 + $0x71] sm:$0xff]
      %s589 = scalar_lea.vmem %s3, 4
      %v590 = vld [vmem:[%s589] sm:$0xf]
      %v592 = vsel %vm455, %v581, 0
      %v595 = vsel %vm455, %v582, 0
      %v598 = vsel %vm455, %v583, 0
      %v601 = vsel %vm455, %v584, 0
      %v604 = vsel %vm455, %v585, 0
      %v607 = vsel %vm455, %v586, 0
      %v610 = vsel %vm455, %v587, 0
      %v613 = vsel %vm455, %v588, 0
      %v616 = vsel %vm528, %v590, 0
      %618 = vmatpush.msra.mxu0 0.0
      %619 = vmatpush.msra.mxu0 0.0
      %620 = vmatpush.msra.mxu0 0.0
      %621 = vmatpush.msra.mxu0 0.0
      %622 = vmatpush.msra.mxu0 0.0
      %623 = vmatpush.msra.mxu0 0.0
      %624 = vmatpush.msra.mxu0 0.0
      %625 = vmatpush.msra.mxu0 0.0
      %626 = vmatpush.msra.mxu0 0.0
      %627 = vmatpush.msra.mxu0 0.0
      %628 = vmatpush.msra.mxu0 0.0
      %629 = vmatpush.msra.mxu0 0.0
      %630 = vmatpush.msra.mxu0 0.0
      %631 = vmatpush.msra.mxu0 0.0
      %632 = vmatpush.msra.mxu0 0.0
      %633 = vmatpush.msra.mxu0 %v616
      %634 = vmatmul.f32.gmra.mxu0 %v592
      %v635 = vpop.f32.mrf.mxu0
      %v636 = vadd.f32 0.0, %v635
      %637 = vmatmul.f32.gmra.mxu0 %v595
      %v638 = vpop.f32.mrf.mxu0
      %v639 = vadd.f32 0.0, %v638
      %640 = vmatmul.f32.gmra.mxu0 %v598
      %v641 = vpop.f32.mrf.mxu0
      %v642 = vadd.f32 0.0, %v641
      %643 = vmatmul.f32.gmra.mxu0 %v601
      %v644 = vpop.f32.mrf.mxu0
      %v645 = vadd.f32 0.0, %v644
      %646 = vmatmul.f32.gmra.mxu0 %v604
      %v647 = vpop.f32.mrf.mxu0
      %v648 = vadd.f32 0.0, %v647
      %649 = vmatmul.f32.gmra.mxu0 %v607
      %v650 = vpop.f32.mrf.mxu0
      %v651 = vadd.f32 0.0, %v650
      %652 = vmatmul.f32.gmra.mxu0 %v610
      %v653 = vpop.f32.mrf.mxu0
      %v654 = vadd.f32 0.0, %v653
      %655 = vmatmul.f32.gmra.mxu0 %v613
      %v656 = vpop.f32.mrf.mxu0
      %v657 = vadd.f32 0.0, %v656
      %658 = vdwg.mxu0
      %v659 = vadd.f32 %v573, %v636
      %v660 = vadd.f32 %v574, %v639
      %v661 = vadd.f32 %v575, %v642
      %v662 = vadd.f32 %v576, %v645
      %v663 = vadd.f32 %v577, %v648
      %v664 = vadd.f32 %v578, %v651
      %v665 = vadd.f32 %v579, %v654
      %v666 = vadd.f32 %v580, %v657
      %v667 = vld [vmem:[#allocation2 + $0x2] sm:$0xff]
      %v668 = vld [vmem:[#allocation2 + $0x12] sm:$0xff]
      %v669 = vld [vmem:[#allocation2 + $0x22] sm:$0xff]
      %v670 = vld [vmem:[#allocation2 + $0x32] sm:$0xff]
      %v671 = vld [vmem:[#allocation2 + $0x42] sm:$0xff]
      %v672 = vld [vmem:[#allocation2 + $0x52] sm:$0xff]
      %v673 = vld [vmem:[#allocation2 + $0x62] sm:$0xff]
      %v674 = vld [vmem:[#allocation2 + $0x72] sm:$0xff]
      %s675 = scalar_lea.vmem %s3, 8
      %v676 = vld [vmem:[%s675] sm:$0xf]
      %v678 = vsel %vm455, %v667, 0
      %v681 = vsel %vm455, %v668, 0
      %v684 = vsel %vm455, %v669, 0
      %v687 = vsel %vm455, %v670, 0
      %v690 = vsel %vm455, %v671, 0
      %v693 = vsel %vm455, %v672, 0
      %v696 = vsel %vm455, %v673, 0
      %v699 = vsel %vm455, %v674, 0
      %v702 = vsel %vm528, %v676, 0
      %704 = vmatpush.msra.mxu0 0.0
      %705 = vmatpush.msra.mxu0 0.0
      %706 = vmatpush.msra.mxu0 0.0
      %707 = vmatpush.msra.mxu0 0.0
      %708 = vmatpush.msra.mxu0 0.0
      %709 = vmatpush.msra.mxu0 0.0
      %710 = vmatpush.msra.mxu0 0.0
      %711 = vmatpush.msra.mxu0 0.0
      %712 = vmatpush.msra.mxu0 0.0
      %713 = vmatpush.msra.mxu0 0.0
      %714 = vmatpush.msra.mxu0 0.0
      %715 = vmatpush.msra.mxu0 0.0
      %716 = vmatpush.msra.mxu0 0.0
      %717 = vmatpush.msra.mxu0 0.0
      %718 = vmatpush.msra.mxu0 0.0
      %719 = vmatpush.msra.mxu0 %v702
      %720 = vmatmul.f32.gmra.mxu0 %v678
      %v721 = vpop.f32.mrf.mxu0
      %v722 = vadd.f32 0.0, %v721
      %723 = vmatmul.f32.gmra.mxu0 %v681
      %v724 = vpop.f32.mrf.mxu0
      %v725 = vadd.f32 0.0, %v724
      %726 = vmatmul.f32.gmra.mxu0 %v684
      %v727 = vpop.f32.mrf.mxu0
      %v728 = vadd.f32 0.0, %v727
      %729 = vmatmul.f32.gmra.mxu0 %v687
      %v730 = vpop.f32.mrf.mxu0
      %v731 = vadd.f32 0.0, %v730
      %732 = vmatmul.f32.gmra.mxu0 %v690
      %v733 = vpop.f32.mrf.mxu0
      %v734 = vadd.f32 0.0, %v733
      %735 = vmatmul.f32.gmra.mxu0 %v693
      %v736 = vpop.f32.mrf.mxu0
      %v737 = vadd.f32 0.0, %v736
      %738 = vmatmul.f32.gmra.mxu0 %v696
      %v739 = vpop.f32.mrf.mxu0
      %v740 = vadd.f32 0.0, %v739
      %741 = vmatmul.f32.gmra.mxu0 %v699
      %v742 = vpop.f32.mrf.mxu0
      %v743 = vadd.f32 0.0, %v742
      %744 = vdwg.mxu0
      %v745 = vadd.f32 %v659, %v722
      %v746 = vadd.f32 %v660, %v725
      %v747 = vadd.f32 %v661, %v728
      %v748 = vadd.f32 %v662, %v731
      %v749 = vadd.f32 %v663, %v734
      %v750 = vadd.f32 %v664, %v737
      %v751 = vadd.f32 %v665, %v740
      %v752 = vadd.f32 %v666, %v743
      %v753 = vld [vmem:[#allocation2 + $0x3] sm:$0xff]
      %v754 = vld [vmem:[#allocation2 + $0x13] sm:$0xff]
      %v755 = vld [vmem:[#allocation2 + $0x23] sm:$0xff]
      %v756 = vld [vmem:[#allocation2 + $0x33] sm:$0xff]
      %v757 = vld [vmem:[#allocation2 + $0x43] sm:$0xff]
      %v758 = vld [vmem:[#allocation2 + $0x53] sm:$0xff]
      %v759 = vld [vmem:[#allocation2 + $0x63] sm:$0xff]
      %v760 = vld [vmem:[#allocation2 + $0x73] sm:$0xff]
      %s761 = scalar_lea.vmem %s3, 12
      %v762 = vld [vmem:[%s761] sm:$0xf]
      %v764 = vsel %vm455, %v753, 0
      %v767 = vsel %vm455, %v754, 0
      %v770 = vsel %vm455, %v755, 0
      %v773 = vsel %vm455, %v756, 0
      %v776 = vsel %vm455, %v757, 0
      %v779 = vsel %vm455, %v758, 0
      %v782 = vsel %vm455, %v759, 0
      %v785 = vsel %vm455, %v760, 0
      %v788 = vsel %vm528, %v762, 0
      %790 = vmatpush.msra.mxu0 0.0
      %791 = vmatpush.msra.mxu0 0.0
      %792 = vmatpush.msra.mxu0 0.0
      %793 = vmatpush.msra.mxu0 0.0
      %794 = vmatpush.msra.mxu0 0.0
      %795 = vmatpush.msra.mxu0 0.0
      %796 = vmatpush.msra.mxu0 0.0
      %797 = vmatpush.msra.mxu0 0.0
      %798 = vmatpush.msra.mxu0 0.0
      %799 = vmatpush.msra.mxu0 0.0
      %800 = vmatpush.msra.mxu0 0.0
      %801 = vmatpush.msra.mxu0 0.0
      %802 = vmatpush.msra.mxu0 0.0
      %803 = vmatpush.msra.mxu0 0.0
      %804 = vmatpush.msra.mxu0 0.0
      %805 = vmatpush.msra.mxu0 %v788
      %806 = vmatmul.f32.gmra.mxu0 %v764
      %v807 = vpop.f32.mrf.mxu0
      %v808 = vadd.f32 0.0, %v807
      %809 = vmatmul.f32.gmra.mxu0 %v767
      %v810 = vpop.f32.mrf.mxu0
      %v811 = vadd.f32 0.0, %v810
      %812 = vmatmul.f32.gmra.mxu0 %v770
      %v813 = vpop.f32.mrf.mxu0
      %v814 = vadd.f32 0.0, %v813
      %815 = vmatmul.f32.gmra.mxu0 %v773
      %v816 = vpop.f32.mrf.mxu0
      %v817 = vadd.f32 0.0, %v816
      %818 = vmatmul.f32.gmra.mxu0 %v776
      %v819 = vpop.f32.mrf.mxu0
      %v820 = vadd.f32 0.0, %v819
      %821 = vmatmul.f32.gmra.mxu0 %v779
      %v822 = vpop.f32.mrf.mxu0
      %v823 = vadd.f32 0.0, %v822
      %824 = vmatmul.f32.gmra.mxu0 %v782
      %v825 = vpop.f32.mrf.mxu0
      %v826 = vadd.f32 0.0, %v825
      %827 = vmatmul.f32.gmra.mxu0 %v785
      %v828 = vpop.f32.mrf.mxu0
      %v829 = vadd.f32 0.0, %v828
      %830 = vdwg.mxu0
      %v831 = vadd.f32 %v745, %v808
      %v832 = vadd.f32 %v746, %v811
      %v833 = vadd.f32 %v747, %v814
      %v834 = vadd.f32 %v748, %v817
      %v835 = vadd.f32 %v749, %v820
      %v836 = vadd.f32 %v750, %v823
      %v837 = vadd.f32 %v751, %v826
      %v838 = vadd.f32 %v752, %v829
      %v839 = vld [vmem:[#allocation2 + $0x4] sm:$0xff]
      %v840 = vld [vmem:[#allocation2 + $0x14] sm:$0xff]
      %v841 = vld [vmem:[#allocation2 + $0x24] sm:$0xff]
      %v842 = vld [vmem:[#allocation2 + $0x34] sm:$0xff]
      %v843 = vld [vmem:[#allocation2 + $0x44] sm:$0xff]
      %v844 = vld [vmem:[#allocation2 + $0x54] sm:$0xff]
      %v845 = vld [vmem:[#allocation2 + $0x64] sm:$0xff]
      %v846 = vld [vmem:[#allocation2 + $0x74] sm:$0xff]
      %s847 = scalar_lea.vmem %s3, 16
      %v848 = vld [vmem:[%s847] sm:$0xf]
      %v850 = vsel %vm455, %v839, 0
      %v853 = vsel %vm455, %v840, 0
      %v856 = vsel %vm455, %v841, 0
      %v859 = vsel %vm455, %v842, 0
      %v862 = vsel %vm455, %v843, 0
      %v865 = vsel %vm455, %v844, 0
      %v868 = vsel %vm455, %v845, 0
      %v871 = vsel %vm455, %v846, 0
      %v874 = vsel %vm528, %v848, 0
      %876 = vmatpush.msra.mxu0 0.0
      %877 = vmatpush.msra.mxu0 0.0
      %878 = vmatpush.msra.mxu0 0.0
      %879 = vmatpush.msra.mxu0 0.0
      %880 = vmatpush.msra.mxu0 0.0
      %881 = vmatpush.msra.mxu0 0.0
      %882 = vmatpush.msra.mxu0 0.0
      %883 = vmatpush.msra.mxu0 0.0
      %884 = vmatpush.msra.mxu0 0.0
      %885 = vmatpush.msra.mxu0 0.0
      %886 = vmatpush.msra.mxu0 0.0
      %887 = vmatpush.msra.mxu0 0.0
      %888 = vmatpush.msra.mxu0 0.0
      %889 = vmatpush.msra.mxu0 0.0
      %890 = vmatpush.msra.mxu0 0.0
      %891 = vmatpush.msra.mxu0 %v874
      %892 = vmatmul.f32.gmra.mxu0 %v850
      %v893 = vpop.f32.mrf.mxu0
      %v894 = vadd.f32 0.0, %v893
      %895 = vmatmul.f32.gmra.mxu0 %v853
      %v896 = vpop.f32.mrf.mxu0
      %v897 = vadd.f32 0.0, %v896
      %898 = vmatmul.f32.gmra.mxu0 %v856
      %v899 = vpop.f32.mrf.mxu0
      %v900 = vadd.f32 0.0, %v899
      %901 = vmatmul.f32.gmra.mxu0 %v859
      %v902 = vpop.f32.mrf.mxu0
      %v903 = vadd.f32 0.0, %v902
      %904 = vmatmul.f32.gmra.mxu0 %v862
      %v905 = vpop.f32.mrf.mxu0
      %v906 = vadd.f32 0.0, %v905
      %907 = vmatmul.f32.gmra.mxu0 %v865
      %v908 = vpop.f32.mrf.mxu0
      %v909 = vadd.f32 0.0, %v908
      %910 = vmatmul.f32.gmra.mxu0 %v868
      %v911 = vpop.f32.mrf.mxu0
      %v912 = vadd.f32 0.0, %v911
      %913 = vmatmul.f32.gmra.mxu0 %v871
      %v914 = vpop.f32.mrf.mxu0
      %v915 = vadd.f32 0.0, %v914
      %916 = vdwg.mxu0
      %v917 = vadd.f32 %v831, %v894
      %v918 = vadd.f32 %v832, %v897
      %v919 = vadd.f32 %v833, %v900
      %v920 = vadd.f32 %v834, %v903
      %v921 = vadd.f32 %v835, %v906
      %v922 = vadd.f32 %v836, %v909
      %v923 = vadd.f32 %v837, %v912
      %v924 = vadd.f32 %v838, %v915
      %s925 = scalar_lea.vmem [#allocation2], 16
      %v926 = vld [vmem:[%s925] sm:$0xff]
      %v927 = vld [vmem:[%s925 + $0x10] sm:$0xff]
      %v928 = vld [vmem:[%s925 + $0x20] sm:$0xff]
      %v929 = vld [vmem:[%s925 + $0x30] sm:$0xff]
      %v930 = vld [vmem:[%s925 + $0x40] sm:$0xff]
      %v931 = vld [vmem:[%s925 + $0x50] sm:$0xff]
      %v932 = vld [vmem:[%s925 + $0x60] sm:$0xff]
      %v933 = vld [vmem:[%s925 + $0x70] sm:$0xff]
      %s934 = scalar_lea.vmem %s3, 20
      %v935 = vld [vmem:[%s934] sm:$0xf]
      %v937 = vsel %vm455, %v926, 0
      %v940 = vsel %vm455, %v927, 0
      %v943 = vsel %vm455, %v928, 0
      %v946 = vsel %vm455, %v929, 0
      %v949 = vsel %vm455, %v930, 0
      %v952 = vsel %vm455, %v931, 0
      %v955 = vsel %vm455, %v932, 0
      %v958 = vsel %vm455, %v933, 0
      %v961 = vsel %vm528, %v935, 0
      %963 = vmatpush.msra.mxu0 0.0
      %964 = vmatpush.msra.mxu0 0.0
      %965 = vmatpush.msra.mxu0 0.0
      %966 = vmatpush.msra.mxu0 0.0
      %967 = vmatpush.msra.mxu0 0.0
      %968 = vmatpush.msra.mxu0 0.0
      %969 = vmatpush.msra.mxu0 0.0
      %970 = vmatpush.msra.mxu0 0.0
      %971 = vmatpush.msra.mxu0 0.0
      %972 = vmatpush.msra.mxu0 0.0
      %973 = vmatpush.msra.mxu0 0.0
      %974 = vmatpush.msra.mxu0 0.0
      %975 = vmatpush.msra.mxu0 0.0
      %976 = vmatpush.msra.mxu0 0.0
      %977 = vmatpush.msra.mxu0 0.0
      %978 = vmatpush.msra.mxu0 %v961
      %979 = vmatmul.f32.gmra.mxu0 %v937
      %v980 = vpop.f32.mrf.mxu0
      %v981 = vadd.f32 0.0, %v980
      %982 = vmatmul.f32.gmra.mxu0 %v940
      %v983 = vpop.f32.mrf.mxu0
      %v984 = vadd.f32 0.0, %v983
      %985 = vmatmul.f32.gmra.mxu0 %v943
      %v986 = vpop.f32.mrf.mxu0
      %v987 = vadd.f32 0.0, %v986
      %988 = vmatmul.f32.gmra.mxu0 %v946
      %v989 = vpop.f32.mrf.mxu0
      %v990 = vadd.f32 0.0, %v989
      %991 = vmatmul.f32.gmra.mxu0 %v949
      %v992 = vpop.f32.mrf.mxu0
      %v993 = vadd.f32 0.0, %v992
      %994 = vmatmul.f32.gmra.mxu0 %v952
      %v995 = vpop.f32.mrf.mxu0
      %v996 = vadd.f32 0.0, %v995
      %997 = vmatmul.f32.gmra.mxu0 %v955
      %v998 = vpop.f32.mrf.mxu0
      %v999 = vadd.f32 0.0, %v998
      %1000 = vmatmul.f32.gmra.mxu0 %v958
      %v1001 = vpop.f32.mrf.mxu0
      %v1002 = vadd.f32 0.0, %v1001
      %1003 = vdwg.mxu0
      %v1004 = vadd.f32 %v917, %v981
      %v1005 = vadd.f32 %v918, %v984
      %v1006 = vadd.f32 %v919, %v987
      %v1007 = vadd.f32 %v920, %v990
      %v1008 = vadd.f32 %v921, %v993
      %v1009 = vadd.f32 %v922, %v996
      %v1010 = vadd.f32 %v923, %v999
      %v1011 = vadd.f32 %v924, %v1002
      %v1012 = vld [vmem:[%s925 + $0x1] sm:$0xff]
      %v1013 = vld [vmem:[%s925 + $0x11] sm:$0xff]
      %v1014 = vld [vmem:[%s925 + $0x21] sm:$0xff]
      %v1015 = vld [vmem:[%s925 + $0x31] sm:$0xff]
      %v1016 = vld [vmem:[%s925 + $0x41] sm:$0xff]
      %v1017 = vld [vmem:[%s925 + $0x51] sm:$0xff]
      %v1018 = vld [vmem:[%s925 + $0x61] sm:$0xff]
      %v1019 = vld [vmem:[%s925 + $0x71] sm:$0xff]
      %s1020 = scalar_lea.vmem %s3, 24
      %v1021 = vld [vmem:[%s1020] sm:$0xf]
      %v1023 = vsel %vm455, %v1012, 0
      %v1026 = vsel %vm455, %v1013, 0
      %v1029 = vsel %vm455, %v1014, 0
      %v1032 = vsel %vm455, %v1015, 0
      %v1035 = vsel %vm455, %v1016, 0
      %v1038 = vsel %vm455, %v1017, 0
      %v1041 = vsel %vm455, %v1018, 0
      %v1044 = vsel %vm455, %v1019, 0
      %v1047 = vsel %vm528, %v1021, 0
      %1049 = vmatpush.msra.mxu0 0.0
      %1050 = vmatpush.msra.mxu0 0.0
      %1051 = vmatpush.msra.mxu0 0.0
      %1052 = vmatpush.msra.mxu0 0.0
      %1053 = vmatpush.msra.mxu0 0.0
      %1054 = vmatpush.msra.mxu0 0.0
      %1055 = vmatpush.msra.mxu0 0.0
      %1056 = vmatpush.msra.mxu0 0.0
      %1057 = vmatpush.msra.mxu0 0.0
      %1058 = vmatpush.msra.mxu0 0.0
      %1059 = vmatpush.msra.mxu0 0.0
      %1060 = vmatpush.msra.mxu0 0.0
      %1061 = vmatpush.msra.mxu0 0.0
      %1062 = vmatpush.msra.mxu0 0.0
      %1063 = vmatpush.msra.mxu0 0.0
      %1064 = vmatpush.msra.mxu0 %v1047
      %1065 = vmatmul.f32.gmra.mxu0 %v1023
      %v1066 = vpop.f32.mrf.mxu0
      %v1067 = vadd.f32 0.0, %v1066
      %1068 = vmatmul.f32.gmra.mxu0 %v1026
      %v1069 = vpop.f32.mrf.mxu0
      %v1070 = vadd.f32 0.0, %v1069
      %1071 = vmatmul.f32.gmra.mxu0 %v1029
      %v1072 = vpop.f32.mrf.mxu0
      %v1073 = vadd.f32 0.0, %v1072
      %1074 = vmatmul.f32.gmra.mxu0 %v1032
      %v1075 = vpop.f32.mrf.mxu0
      %v1076 = vadd.f32 0.0, %v1075
      %1077 = vmatmul.f32.gmra.mxu0 %v1035
      %v1078 = vpop.f32.mrf.mxu0
      %v1079 = vadd.f32 0.0, %v1078
      %1080 = vmatmul.f32.gmra.mxu0 %v1038
      %v1081 = vpop.f32.mrf.mxu0
      %v1082 = vadd.f32 0.0, %v1081
      %1083 = vmatmul.f32.gmra.mxu0 %v1041
      %v1084 = vpop.f32.mrf.mxu0
      %v1085 = vadd.f32 0.0, %v1084
      %1086 = vmatmul.f32.gmra.mxu0 %v1044
      %v1087 = vpop.f32.mrf.mxu0
      %v1088 = vadd.f32 0.0, %v1087
      %1089 = vdwg.mxu0
      %v1090 = vadd.f32 %v1004, %v1067
      %v1091 = vadd.f32 %v1005, %v1070
      %v1092 = vadd.f32 %v1006, %v1073
      %v1093 = vadd.f32 %v1007, %v1076
      %v1094 = vadd.f32 %v1008, %v1079
      %v1095 = vadd.f32 %v1009, %v1082
      %v1096 = vadd.f32 %v1010, %v1085
      %v1097 = vadd.f32 %v1011, %v1088
      %v1098 = vld [vmem:[%s925 + $0x2] sm:$0xff]
      %v1099 = vld [vmem:[%s925 + $0x12] sm:$0xff]
      %v1100 = vld [vmem:[%s925 + $0x22] sm:$0xff]
      %v1101 = vld [vmem:[%s925 + $0x32] sm:$0xff]
      %v1102 = vld [vmem:[%s925 + $0x42] sm:$0xff]
      %v1103 = vld [vmem:[%s925 + $0x52] sm:$0xff]
      %v1104 = vld [vmem:[%s925 + $0x62] sm:$0xff]
      %v1105 = vld [vmem:[%s925 + $0x72] sm:$0xff]
      %s1106 = scalar_lea.vmem %s3, 28
      %v1107 = vld [vmem:[%s1106] sm:$0xf]
      %v1109 = vsel %vm455, %v1098, 0
      %v1112 = vsel %vm455, %v1099, 0
      %v1115 = vsel %vm455, %v1100, 0
      %v1118 = vsel %vm455, %v1101, 0
      %v1121 = vsel %vm455, %v1102, 0
      %v1124 = vsel %vm455, %v1103, 0
      %v1127 = vsel %vm455, %v1104, 0
      %v1130 = vsel %vm455, %v1105, 0
      %v1133 = vsel %vm528, %v1107, 0
      %1135 = vmatpush.msra.mxu0 0.0
      %1136 = vmatpush.msra.mxu0 0.0
      %1137 = vmatpush.msra.mxu0 0.0
      %1138 = vmatpush.msra.mxu0 0.0
      %1139 = vmatpush.msra.mxu0 0.0
      %1140 = vmatpush.msra.mxu0 0.0
      %1141 = vmatpush.msra.mxu0 0.0
      %1142 = vmatpush.msra.mxu0 0.0
      %1143 = vmatpush.msra.mxu0 0.0
      %1144 = vmatpush.msra.mxu0 0.0
      %1145 = vmatpush.msra.mxu0 0.0
      %1146 = vmatpush.msra.mxu0 0.0
      %1147 = vmatpush.msra.mxu0 0.0
      %1148 = vmatpush.msra.mxu0 0.0
      %1149 = vmatpush.msra.mxu0 0.0
      %1150 = vmatpush.msra.mxu0 %v1133
      %1151 = vmatmul.f32.gmra.mxu0 %v1109
      %v1152 = vpop.f32.mrf.mxu0
      %v1153 = vadd.f32 0.0, %v1152
      %1154 = vmatmul.f32.gmra.mxu0 %v1112
      %v1155 = vpop.f32.mrf.mxu0
      %v1156 = vadd.f32 0.0, %v1155
      %1157 = vmatmul.f32.gmra.mxu0 %v1115
      %v1158 = vpop.f32.mrf.mxu0
      %v1159 = vadd.f32 0.0, %v1158
      %1160 = vmatmul.f32.gmra.mxu0 %v1118
      %v1161 = vpop.f32.mrf.mxu0
      %v1162 = vadd.f32 0.0, %v1161
      %1163 = vmatmul.f32.gmra.mxu0 %v1121
      %v1164 = vpop.f32.mrf.mxu0
      %v1165 = vadd.f32 0.0, %v1164
      %1166 = vmatmul.f32.gmra.mxu0 %v1124
      %v1167 = vpop.f32.mrf.mxu0
      %v1168 = vadd.f32 0.0, %v1167
      %1169 = vmatmul.f32.gmra.mxu0 %v1127
      %v1170 = vpop.f32.mrf.mxu0
      %v1171 = vadd.f32 0.0, %v1170
      %1172 = vmatmul.f32.gmra.mxu0 %v1130
      %v1173 = vpop.f32.mrf.mxu0
      %v1174 = vadd.f32 0.0, %v1173
      %1175 = vdwg.mxu0
      %v1176 = vadd.f32 %v1090, %v1153
      %v1177 = vadd.f32 %v1091, %v1156
      %v1178 = vadd.f32 %v1092, %v1159
      %v1179 = vadd.f32 %v1093, %v1162
      %v1180 = vadd.f32 %v1094, %v1165
      %v1181 = vadd.f32 %v1095, %v1168
      %v1182 = vadd.f32 %v1096, %v1171
      %v1183 = vadd.f32 %v1097, %v1174
      %v1184 = vld [vmem:[%s925 + $0x3] sm:$0xff]
      %v1185 = vld [vmem:[%s925 + $0x13] sm:$0xff]
      %v1186 = vld [vmem:[%s925 + $0x23] sm:$0xff]
      %v1187 = vld [vmem:[%s925 + $0x33] sm:$0xff]
      %v1188 = vld [vmem:[%s925 + $0x43] sm:$0xff]
      %v1189 = vld [vmem:[%s925 + $0x53] sm:$0xff]
      %v1190 = vld [vmem:[%s925 + $0x63] sm:$0xff]
      %v1191 = vld [vmem:[%s925 + $0x73] sm:$0xff]
      %s1192 = scalar_lea.vmem %s3, 32
      %v1193 = vld [vmem:[%s1192] sm:$0xf]
      %v1195 = vsel %vm455, %v1184, 0
      %v1198 = vsel %vm455, %v1185, 0
      %v1201 = vsel %vm455, %v1186, 0
      %v1204 = vsel %vm455, %v1187, 0
      %v1207 = vsel %vm455, %v1188, 0
      %v1210 = vsel %vm455, %v1189, 0
      %v1213 = vsel %vm455, %v1190, 0
      %v1216 = vsel %vm455, %v1191, 0
      %v1219 = vsel %vm528, %v1193, 0
      %1221 = vmatpush.msra.mxu0 0.0
      %1222 = vmatpush.msra.mxu0 0.0
      %1223 = vmatpush.msra.mxu0 0.0
      %1224 = vmatpush.msra.mxu0 0.0
      %1225 = vmatpush.msra.mxu0 0.0
      %1226 = vmatpush.msra.mxu0 0.0
      %1227 = vmatpush.msra.mxu0 0.0
      %1228 = vmatpush.msra.mxu0 0.0
      %1229 = vmatpush.msra.mxu0 0.0
      %1230 = vmatpush.msra.mxu0 0.0
      %1231 = vmatpush.msra.mxu0 0.0
      %1232 = vmatpush.msra.mxu0 0.0
      %1233 = vmatpush.msra.mxu0 0.0
      %1234 = vmatpush.msra.mxu0 0.0
      %1235 = vmatpush.msra.mxu0 0.0
      %1236 = vmatpush.msra.mxu0 %v1219
      %1237 = vmatmul.f32.gmra.mxu0 %v1195
      %v1238 = vpop.f32.mrf.mxu0
      %v1239 = vadd.f32 0.0, %v1238
      %1240 = vmatmul.f32.gmra.mxu0 %v1198
      %v1241 = vpop.f32.mrf.mxu0
      %v1242 = vadd.f32 0.0, %v1241
      %1243 = vmatmul.f32.gmra.mxu0 %v1201
      %v1244 = vpop.f32.mrf.mxu0
      %v1245 = vadd.f32 0.0, %v1244
      %1246 = vmatmul.f32.gmra.mxu0 %v1204
      %v1247 = vpop.f32.mrf.mxu0
      %v1248 = vadd.f32 0.0, %v1247
      %1249 = vmatmul.f32.gmra.mxu0 %v1207
      %v1250 = vpop.f32.mrf.mxu0
      %v1251 = vadd.f32 0.0, %v1250
      %1252 = vmatmul.f32.gmra.mxu0 %v1210
      %v1253 = vpop.f32.mrf.mxu0
      %v1254 = vadd.f32 0.0, %v1253
      %1255 = vmatmul.f32.gmra.mxu0 %v1213
      %v1256 = vpop.f32.mrf.mxu0
      %v1257 = vadd.f32 0.0, %v1256
      %1258 = vmatmul.f32.gmra.mxu0 %v1216
      %v1259 = vpop.f32.mrf.mxu0
      %v1260 = vadd.f32 0.0, %v1259
      %1261 = vdwg.mxu0
      %v1262 = vadd.f32 %v1176, %v1239
      %v1263 = vadd.f32 %v1177, %v1242
      %v1264 = vadd.f32 %v1178, %v1245
      %v1265 = vadd.f32 %v1179, %v1248
      %v1266 = vadd.f32 %v1180, %v1251
      %v1267 = vadd.f32 %v1181, %v1254
      %v1268 = vadd.f32 %v1182, %v1257
      %v1269 = vadd.f32 %v1183, %v1260
      %v1270 = vld [vmem:[%s925 + $0x4] sm:$0xff]
      %v1271 = vld [vmem:[%s925 + $0x14] sm:$0xff]
      %v1272 = vld [vmem:[%s925 + $0x24] sm:$0xff]
      %v1273 = vld [vmem:[%s925 + $0x34] sm:$0xff]
      %v1274 = vld [vmem:[%s925 + $0x44] sm:$0xff]
      %v1275 = vld [vmem:[%s925 + $0x54] sm:$0xff]
      %v1276 = vld [vmem:[%s925 + $0x64] sm:$0xff]
      %v1277 = vld [vmem:[%s925 + $0x74] sm:$0xff]
      %s1278 = scalar_lea.vmem %s3, 36
      %v1279 = vld [vmem:[%s1278] sm:$0xf]
      %v1281 = vsel %vm455, %v1270, 0
      %v1284 = vsel %vm455, %v1271, 0
      %v1287 = vsel %vm455, %v1272, 0
      %v1290 = vsel %vm455, %v1273, 0
      %v1293 = vsel %vm455, %v1274, 0
      %v1296 = vsel %vm455, %v1275, 0
      %v1299 = vsel %vm455, %v1276, 0
      %v1302 = vsel %vm455, %v1277, 0
      %v1305 = vsel %vm528, %v1279, 0
      %1307 = vmatpush.msra.mxu0 0.0
      %1308 = vmatpush.msra.mxu0 0.0
      %1309 = vmatpush.msra.mxu0 0.0
      %1310 = vmatpush.msra.mxu0 0.0
      %1311 = vmatpush.msra.mxu0 0.0
      %1312 = vmatpush.msra.mxu0 0.0
      %1313 = vmatpush.msra.mxu0 0.0
      %1314 = vmatpush.msra.mxu0 0.0
      %1315 = vmatpush.msra.mxu0 0.0
      %1316 = vmatpush.msra.mxu0 0.0
      %1317 = vmatpush.msra.mxu0 0.0
      %1318 = vmatpush.msra.mxu0 0.0
      %1319 = vmatpush.msra.mxu0 0.0
      %1320 = vmatpush.msra.mxu0 0.0
      %1321 = vmatpush.msra.mxu0 0.0
      %1322 = vmatpush.msra.mxu0 %v1305
      %1323 = vmatmul.f32.gmra.mxu0 %v1281
      %v1324 = vpop.f32.mrf.mxu0
      %v1325 = vadd.f32 0.0, %v1324
      %1326 = vmatmul.f32.gmra.mxu0 %v1284
      %v1327 = vpop.f32.mrf.mxu0
      %v1328 = vadd.f32 0.0, %v1327
      %1329 = vmatmul.f32.gmra.mxu0 %v1287
      %v1330 = vpop.f32.mrf.mxu0
      %v1331 = vadd.f32 0.0, %v1330
      %1332 = vmatmul.f32.gmra.mxu0 %v1290
      %v1333 = vpop.f32.mrf.mxu0
      %v1334 = vadd.f32 0.0, %v1333
      %1335 = vmatmul.f32.gmra.mxu0 %v1293
      %v1336 = vpop.f32.mrf.mxu0
      %v1337 = vadd.f32 0.0, %v1336
      %1338 = vmatmul.f32.gmra.mxu0 %v1296
      %v1339 = vpop.f32.mrf.mxu0
      %v1340 = vadd.f32 0.0, %v1339
      %1341 = vmatmul.f32.gmra.mxu0 %v1299
      %v1342 = vpop.f32.mrf.mxu0
      %v1343 = vadd.f32 0.0, %v1342
      %1344 = vmatmul.f32.gmra.mxu0 %v1302
      %v1345 = vpop.f32.mrf.mxu0
      %v1346 = vadd.f32 0.0, %v1345
      %1347 = vdwg.mxu0
      %v1348 = vadd.f32 %v1262, %v1325
      %v1349 = vadd.f32 %v1263, %v1328
      %v1350 = vadd.f32 %v1264, %v1331
      %v1351 = vadd.f32 %v1265, %v1334
      %v1352 = vadd.f32 %v1266, %v1337
      %v1353 = vadd.f32 %v1267, %v1340
      %v1354 = vadd.f32 %v1268, %v1343
      %v1355 = vadd.f32 %v1269, %v1346
      %v1356 = vld [vmem:[%s481] sm:$0xff]
      %v1357 = vld [vmem:[%s481 + $0x10] sm:$0xff]
      %v1358 = vld [vmem:[%s481 + $0x20] sm:$0xff]
      %v1359 = vld [vmem:[%s481 + $0x30] sm:$0xff]
      %v1360 = vld [vmem:[%s481 + $0x40] sm:$0xff]
      %v1361 = vld [vmem:[%s481 + $0x50] sm:$0xff]
      %v1362 = vld [vmem:[%s481 + $0x60] sm:$0xff]
      %v1363 = vld [vmem:[%s481 + $0x70] sm:$0xff]
      %s1364 = scalar_lea.vmem %s3, 40
      %v1365 = vld [vmem:[%s1364] sm:$0xf]
      %v1367 = vsel %vm455, %v1356, 0
      %v1370 = vsel %vm455, %v1357, 0
      %v1373 = vsel %vm455, %v1358, 0
      %v1376 = vsel %vm455, %v1359, 0
      %v1379 = vsel %vm455, %v1360, 0
      %v1382 = vsel %vm455, %v1361, 0
      %v1385 = vsel %vm455, %v1362, 0
      %v1388 = vsel %vm455, %v1363, 0
      %v1391 = vsel %vm528, %v1365, 0
      %1393 = vmatpush.msra.mxu0 0.0
      %1394 = vmatpush.msra.mxu0 0.0
      %1395 = vmatpush.msra.mxu0 0.0
      %1396 = vmatpush.msra.mxu0 0.0
      %1397 = vmatpush.msra.mxu0 0.0
      %1398 = vmatpush.msra.mxu0 0.0
      %1399 = vmatpush.msra.mxu0 0.0
      %1400 = vmatpush.msra.mxu0 0.0
      %1401 = vmatpush.msra.mxu0 0.0
      %1402 = vmatpush.msra.mxu0 0.0
      %1403 = vmatpush.msra.mxu0 0.0
      %1404 = vmatpush.msra.mxu0 0.0
      %1405 = vmatpush.msra.mxu0 0.0
      %1406 = vmatpush.msra.mxu0 0.0
      %1407 = vmatpush.msra.mxu0 0.0
      %1408 = vmatpush.msra.mxu0 %v1391
      %1409 = vmatmul.f32.gmra.mxu0 %v1367
      %v1410 = vpop.f32.mrf.mxu0
      %v1411 = vadd.f32 0.0, %v1410
      %1412 = vmatmul.f32.gmra.mxu0 %v1370
      %v1413 = vpop.f32.mrf.mxu0
      %v1414 = vadd.f32 0.0, %v1413
      %1415 = vmatmul.f32.gmra.mxu0 %v1373
      %v1416 = vpop.f32.mrf.mxu0
      %v1417 = vadd.f32 0.0, %v1416
      %1418 = vmatmul.f32.gmra.mxu0 %v1376
      %v1419 = vpop.f32.mrf.mxu0
      %v1420 = vadd.f32 0.0, %v1419
      %1421 = vmatmul.f32.gmra.mxu0 %v1379
      %v1422 = vpop.f32.mrf.mxu0
      %v1423 = vadd.f32 0.0, %v1422
      %1424 = vmatmul.f32.gmra.mxu0 %v1382
      %v1425 = vpop.f32.mrf.mxu0
      %v1426 = vadd.f32 0.0, %v1425
      %1427 = vmatmul.f32.gmra.mxu0 %v1385
      %v1428 = vpop.f32.mrf.mxu0
      %v1429 = vadd.f32 0.0, %v1428
      %1430 = vmatmul.f32.gmra.mxu0 %v1388
      %v1431 = vpop.f32.mrf.mxu0
      %v1432 = vadd.f32 0.0, %v1431
      %1433 = vdwg.mxu0
      %v1434 = vadd.f32 %v1348, %v1411
      %v1435 = vadd.f32 %v1349, %v1414
      %v1436 = vadd.f32 %v1350, %v1417
      %v1437 = vadd.f32 %v1351, %v1420
      %v1438 = vadd.f32 %v1352, %v1423
      %v1439 = vadd.f32 %v1353, %v1426
      %v1440 = vadd.f32 %v1354, %v1429
      %v1441 = vadd.f32 %v1355, %v1432
      %v1442 = vld [vmem:[%s481 + $0x1] sm:$0xff]
      %v1443 = vld [vmem:[%s481 + $0x11] sm:$0xff]
      %v1444 = vld [vmem:[%s481 + $0x21] sm:$0xff]
      %v1445 = vld [vmem:[%s481 + $0x31] sm:$0xff]
      %v1446 = vld [vmem:[%s481 + $0x41] sm:$0xff]
      %v1447 = vld [vmem:[%s481 + $0x51] sm:$0xff]
      %v1448 = vld [vmem:[%s481 + $0x61] sm:$0xff]
      %v1449 = vld [vmem:[%s481 + $0x71] sm:$0xff]
      %s1450 = scalar_lea.vmem %s3, 44
      %v1451 = vld [vmem:[%s1450] sm:$0xf]
      %v1453 = vsel %vm455, %v1442, 0
      %v1456 = vsel %vm455, %v1443, 0
      %v1459 = vsel %vm455, %v1444, 0
      %v1462 = vsel %vm455, %v1445, 0
      %v1465 = vsel %vm455, %v1446, 0
      %v1468 = vsel %vm455, %v1447, 0
      %v1471 = vsel %vm455, %v1448, 0
      %v1474 = vsel %vm455, %v1449, 0
      %v1477 = vsel %vm528, %v1451, 0
      %1479 = vmatpush.msra.mxu0 0.0
      %1480 = vmatpush.msra.mxu0 0.0
      %1481 = vmatpush.msra.mxu0 0.0
      %1482 = vmatpush.msra.mxu0 0.0
      %1483 = vmatpush.msra.mxu0 0.0
      %1484 = vmatpush.msra.mxu0 0.0
      %1485 = vmatpush.msra.mxu0 0.0
      %1486 = vmatpush.msra.mxu0 0.0
      %1487 = vmatpush.msra.mxu0 0.0
      %1488 = vmatpush.msra.mxu0 0.0
      %1489 = vmatpush.msra.mxu0 0.0
      %1490 = vmatpush.msra.mxu0 0.0
      %1491 = vmatpush.msra.mxu0 0.0
      %1492 = vmatpush.msra.mxu0 0.0
      %1493 = vmatpush.msra.mxu0 0.0
      %1494 = vmatpush.msra.mxu0 %v1477
      %1495 = vmatmul.f32.gmra.mxu0 %v1453
      %v1496 = vpop.f32.mrf.mxu0
      %v1497 = vadd.f32 0.0, %v1496
      %1498 = vmatmul.f32.gmra.mxu0 %v1456
      %v1499 = vpop.f32.mrf.mxu0
      %v1500 = vadd.f32 0.0, %v1499
      %1501 = vmatmul.f32.gmra.mxu0 %v1459
      %v1502 = vpop.f32.mrf.mxu0
      %v1503 = vadd.f32 0.0, %v1502
      %1504 = vmatmul.f32.gmra.mxu0 %v1462
      %v1505 = vpop.f32.mrf.mxu0
      %v1506 = vadd.f32 0.0, %v1505
      %1507 = vmatmul.f32.gmra.mxu0 %v1465
      %v1508 = vpop.f32.mrf.mxu0
      %v1509 = vadd.f32 0.0, %v1508
      %1510 = vmatmul.f32.gmra.mxu0 %v1468
      %v1511 = vpop.f32.mrf.mxu0
      %v1512 = vadd.f32 0.0, %v1511
      %1513 = vmatmul.f32.gmra.mxu0 %v1471
      %v1514 = vpop.f32.mrf.mxu0
      %v1515 = vadd.f32 0.0, %v1514
      %1516 = vmatmul.f32.gmra.mxu0 %v1474
      %v1517 = vpop.f32.mrf.mxu0
      %v1518 = vadd.f32 0.0, %v1517
      %1519 = vdwg.mxu0
      %v1520 = vadd.f32 %v1434, %v1497
      %v1521 = vadd.f32 %v1435, %v1500
      %v1522 = vadd.f32 %v1436, %v1503
      %v1523 = vadd.f32 %v1437, %v1506
      %v1524 = vadd.f32 %v1438, %v1509
      %v1525 = vadd.f32 %v1439, %v1512
      %v1526 = vadd.f32 %v1440, %v1515
      %v1527 = vadd.f32 %v1441, %v1518
      %v1528 = vld [vmem:[%s481 + $0x2] sm:$0xff]
      %v1529 = vld [vmem:[%s481 + $0x12] sm:$0xff]
      %v1530 = vld [vmem:[%s481 + $0x22] sm:$0xff]
      %v1531 = vld [vmem:[%s481 + $0x32] sm:$0xff]
      %v1532 = vld [vmem:[%s481 + $0x42] sm:$0xff]
      %v1533 = vld [vmem:[%s481 + $0x52] sm:$0xff]
      %v1534 = vld [vmem:[%s481 + $0x62] sm:$0xff]
      %v1535 = vld [vmem:[%s481 + $0x72] sm:$0xff]
      %s1536 = scalar_lea.vmem %s3, 48
      %v1537 = vld [vmem:[%s1536] sm:$0xf]
      %v1539 = vsel %vm455, %v1528, 0
      %v1542 = vsel %vm455, %v1529, 0
      %v1545 = vsel %vm455, %v1530, 0
      %v1548 = vsel %vm455, %v1531, 0
      %v1551 = vsel %vm455, %v1532, 0
      %v1554 = vsel %vm455, %v1533, 0
      %v1557 = vsel %vm455, %v1534, 0
      %v1560 = vsel %vm455, %v1535, 0
      %v1563 = vsel %vm528, %v1537, 0
      %1565 = vmatpush.msra.mxu0 0.0
      %1566 = vmatpush.msra.mxu0 0.0
      %1567 = vmatpush.msra.mxu0 0.0
      %1568 = vmatpush.msra.mxu0 0.0
      %1569 = vmatpush.msra.mxu0 0.0
      %1570 = vmatpush.msra.mxu0 0.0
      %1571 = vmatpush.msra.mxu0 0.0
      %1572 = vmatpush.msra.mxu0 0.0
      %1573 = vmatpush.msra.mxu0 0.0
      %1574 = vmatpush.msra.mxu0 0.0
      %1575 = vmatpush.msra.mxu0 0.0
      %1576 = vmatpush.msra.mxu0 0.0
      %1577 = vmatpush.msra.mxu0 0.0
      %1578 = vmatpush.msra.mxu0 0.0
      %1579 = vmatpush.msra.mxu0 0.0
      %1580 = vmatpush.msra.mxu0 %v1563
      %1581 = vmatmul.f32.gmra.mxu0 %v1539
      %v1582 = vpop.f32.mrf.mxu0
      %v1583 = vadd.f32 0.0, %v1582
      %1584 = vmatmul.f32.gmra.mxu0 %v1542
      %v1585 = vpop.f32.mrf.mxu0
      %v1586 = vadd.f32 0.0, %v1585
      %1587 = vmatmul.f32.gmra.mxu0 %v1545
      %v1588 = vpop.f32.mrf.mxu0
      %v1589 = vadd.f32 0.0, %v1588
      %1590 = vmatmul.f32.gmra.mxu0 %v1548
      %v1591 = vpop.f32.mrf.mxu0
      %v1592 = vadd.f32 0.0, %v1591
      %1593 = vmatmul.f32.gmra.mxu0 %v1551
      %v1594 = vpop.f32.mrf.mxu0
      %v1595 = vadd.f32 0.0, %v1594
      %1596 = vmatmul.f32.gmra.mxu0 %v1554
      %v1597 = vpop.f32.mrf.mxu0
      %v1598 = vadd.f32 0.0, %v1597
      %1599 = vmatmul.f32.gmra.mxu0 %v1557
      %v1600 = vpop.f32.mrf.mxu0
      %v1601 = vadd.f32 0.0, %v1600
      %1602 = vmatmul.f32.gmra.mxu0 %v1560
      %v1603 = vpop.f32.mrf.mxu0
      %v1604 = vadd.f32 0.0, %v1603
      %1605 = vdwg.mxu0
      %v1606 = vadd.f32 %v1520, %v1583
      %v1607 = vadd.f32 %v1521, %v1586
      %v1608 = vadd.f32 %v1522, %v1589
      %v1609 = vadd.f32 %v1523, %v1592
      %v1610 = vadd.f32 %v1524, %v1595
      %v1611 = vadd.f32 %v1525, %v1598
      %v1612 = vadd.f32 %v1526, %v1601
      %v1613 = vadd.f32 %v1527, %v1604
      %v1614 = vld [vmem:[%s481 + $0x3] sm:$0xff]
      %v1615 = vld [vmem:[%s481 + $0x13] sm:$0xff]
      %v1616 = vld [vmem:[%s481 + $0x23] sm:$0xff]
      %v1617 = vld [vmem:[%s481 + $0x33] sm:$0xff]
      %v1618 = vld [vmem:[%s481 + $0x43] sm:$0xff]
      %v1619 = vld [vmem:[%s481 + $0x53] sm:$0xff]
      %v1620 = vld [vmem:[%s481 + $0x63] sm:$0xff]
      %v1621 = vld [vmem:[%s481 + $0x73] sm:$0xff]
      %s1622 = scalar_lea.vmem %s3, 52
      %v1623 = vld [vmem:[%s1622] sm:$0xf]
      %v1625 = vsel %vm455, %v1614, 0
      %v1628 = vsel %vm455, %v1615, 0
      %v1631 = vsel %vm455, %v1616, 0
      %v1634 = vsel %vm455, %v1617, 0
      %v1637 = vsel %vm455, %v1618, 0
      %v1640 = vsel %vm455, %v1619, 0
      %v1643 = vsel %vm455, %v1620, 0
      %v1646 = vsel %vm455, %v1621, 0
      %v1649 = vsel %vm528, %v1623, 0
      %1651 = vmatpush.msra.mxu0 0.0
      %1652 = vmatpush.msra.mxu0 0.0
      %1653 = vmatpush.msra.mxu0 0.0
      %1654 = vmatpush.msra.mxu0 0.0
      %1655 = vmatpush.msra.mxu0 0.0
      %1656 = vmatpush.msra.mxu0 0.0
      %1657 = vmatpush.msra.mxu0 0.0
      %1658 = vmatpush.msra.mxu0 0.0
      %1659 = vmatpush.msra.mxu0 0.0
      %1660 = vmatpush.msra.mxu0 0.0
      %1661 = vmatpush.msra.mxu0 0.0
      %1662 = vmatpush.msra.mxu0 0.0
      %1663 = vmatpush.msra.mxu0 0.0
      %1664 = vmatpush.msra.mxu0 0.0
      %1665 = vmatpush.msra.mxu0 0.0
      %1666 = vmatpush.msra.mxu0 %v1649
      %1667 = vmatmul.f32.gmra.mxu0 %v1625
      %v1668 = vpop.f32.mrf.mxu0
      %v1669 = vadd.f32 0.0, %v1668
      %1670 = vmatmul.f32.gmra.mxu0 %v1628
      %v1671 = vpop.f32.mrf.mxu0
      %v1672 = vadd.f32 0.0, %v1671
      %1673 = vmatmul.f32.gmra.mxu0 %v1631
      %v1674 = vpop.f32.mrf.mxu0
      %v1675 = vadd.f32 0.0, %v1674
      %1676 = vmatmul.f32.gmra.mxu0 %v1634
      %v1677 = vpop.f32.mrf.mxu0
      %v1678 = vadd.f32 0.0, %v1677
      %1679 = vmatmul.f32.gmra.mxu0 %v1637
      %v1680 = vpop.f32.mrf.mxu0
      %v1681 = vadd.f32 0.0, %v1680
      %1682 = vmatmul.f32.gmra.mxu0 %v1640
      %v1683 = vpop.f32.mrf.mxu0
      %v1684 = vadd.f32 0.0, %v1683
      %1685 = vmatmul.f32.gmra.mxu0 %v1643
      %v1686 = vpop.f32.mrf.mxu0
      %v1687 = vadd.f32 0.0, %v1686
      %1688 = vmatmul.f32.gmra.mxu0 %v1646
      %v1689 = vpop.f32.mrf.mxu0
      %v1690 = vadd.f32 0.0, %v1689
      %1691 = vdwg.mxu0
      %v1692 = vadd.f32 %v1606, %v1669
      %v1693 = vadd.f32 %v1607, %v1672
      %v1694 = vadd.f32 %v1608, %v1675
      %v1695 = vadd.f32 %v1609, %v1678
      %v1696 = vadd.f32 %v1610, %v1681
      %v1697 = vadd.f32 %v1611, %v1684
      %v1698 = vadd.f32 %v1612, %v1687
      %v1699 = vadd.f32 %v1613, %v1690
      %v1700 = vld [vmem:[%s481 + $0x4] sm:$0xff]
      %v1701 = vld [vmem:[%s481 + $0x14] sm:$0xff]
      %v1702 = vld [vmem:[%s481 + $0x24] sm:$0xff]
      %v1703 = vld [vmem:[%s481 + $0x34] sm:$0xff]
      %v1704 = vld [vmem:[%s481 + $0x44] sm:$0xff]
      %v1705 = vld [vmem:[%s481 + $0x54] sm:$0xff]
      %v1706 = vld [vmem:[%s481 + $0x64] sm:$0xff]
      %v1707 = vld [vmem:[%s481 + $0x74] sm:$0xff]
      %s1708 = scalar_lea.vmem %s3, 56
      %v1709 = vld [vmem:[%s1708] sm:$0xf]
      %v1711 = vsel %vm455, %v1700, 0
      %v1714 = vsel %vm455, %v1701, 0
      %v1717 = vsel %vm455, %v1702, 0
      %v1720 = vsel %vm455, %v1703, 0
      %v1723 = vsel %vm455, %v1704, 0
      %v1726 = vsel %vm455, %v1705, 0
      %v1729 = vsel %vm455, %v1706, 0
      %v1732 = vsel %vm455, %v1707, 0
      %v1735 = vsel %vm528, %v1709, 0
      %1737 = vmatpush.msra.mxu0 0.0
      %1738 = vmatpush.msra.mxu0 0.0
      %1739 = vmatpush.msra.mxu0 0.0
      %1740 = vmatpush.msra.mxu0 0.0
      %1741 = vmatpush.msra.mxu0 0.0
      %1742 = vmatpush.msra.mxu0 0.0
      %1743 = vmatpush.msra.mxu0 0.0
      %1744 = vmatpush.msra.mxu0 0.0
      %1745 = vmatpush.msra.mxu0 0.0
      %1746 = vmatpush.msra.mxu0 0.0
      %1747 = vmatpush.msra.mxu0 0.0
      %1748 = vmatpush.msra.mxu0 0.0
      %1749 = vmatpush.msra.mxu0 0.0
      %1750 = vmatpush.msra.mxu0 0.0
      %1751 = vmatpush.msra.mxu0 0.0
      %1752 = vmatpush.msra.mxu0 %v1735
      %1753 = vmatmul.f32.gmra.mxu0 %v1711
      %v1754 = vpop.f32.mrf.mxu0
      %v1755 = vadd.f32 0.0, %v1754
      %1756 = vmatmul.f32.gmra.mxu0 %v1714
      %v1757 = vpop.f32.mrf.mxu0
      %v1758 = vadd.f32 0.0, %v1757
      %1759 = vmatmul.f32.gmra.mxu0 %v1717
      %v1760 = vpop.f32.mrf.mxu0
      %v1761 = vadd.f32 0.0, %v1760
      %1762 = vmatmul.f32.gmra.mxu0 %v1720
      %v1763 = vpop.f32.mrf.mxu0
      %v1764 = vadd.f32 0.0, %v1763
      %1765 = vmatmul.f32.gmra.mxu0 %v1723
      %v1766 = vpop.f32.mrf.mxu0
      %v1767 = vadd.f32 0.0, %v1766
      %1768 = vmatmul.f32.gmra.mxu0 %v1726
      %v1769 = vpop.f32.mrf.mxu0
      %v1770 = vadd.f32 0.0, %v1769
      %1771 = vmatmul.f32.gmra.mxu0 %v1729
      %v1772 = vpop.f32.mrf.mxu0
      %v1773 = vadd.f32 0.0, %v1772
      %1774 = vmatmul.f32.gmra.mxu0 %v1732
      %v1775 = vpop.f32.mrf.mxu0
      %v1776 = vadd.f32 0.0, %v1775
      %1777 = vdwg.mxu0
      %v1778 = vadd.f32 %v1692, %v1755
      %v1779 = vadd.f32 %v1693, %v1758
      %v1780 = vadd.f32 %v1694, %v1761
      %v1781 = vadd.f32 %v1695, %v1764
      %v1782 = vadd.f32 %v1696, %v1767
      %v1783 = vadd.f32 %v1697, %v1770
      %v1784 = vadd.f32 %v1698, %v1773
      %v1785 = vadd.f32 %v1699, %v1776
      %s1786 = scalar_lea.vmem [#allocation2], 48
      %v1787 = vld [vmem:[%s1786] sm:$0xff]
      %v1788 = vld [vmem:[%s1786 + $0x10] sm:$0xff]
      %v1789 = vld [vmem:[%s1786 + $0x20] sm:$0xff]
      %v1790 = vld [vmem:[%s1786 + $0x30] sm:$0xff]
      %v1791 = vld [vmem:[%s1786 + $0x40] sm:$0xff]
      %v1792 = vld [vmem:[%s1786 + $0x50] sm:$0xff]
      %v1793 = vld [vmem:[%s1786 + $0x60] sm:$0xff]
      %v1794 = vld [vmem:[%s1786 + $0x70] sm:$0xff]
      %s1795 = scalar_lea.vmem %s3, 60
      %v1796 = vld [vmem:[%s1795] sm:$0xf]
      %v1798 = vsel %vm455, %v1787, 0
      %v1801 = vsel %vm455, %v1788, 0
      %v1804 = vsel %vm455, %v1789, 0
      %v1807 = vsel %vm455, %v1790, 0
      %v1810 = vsel %vm455, %v1791, 0
      %v1813 = vsel %vm455, %v1792, 0
      %v1816 = vsel %vm455, %v1793, 0
      %v1819 = vsel %vm455, %v1794, 0
      %v1822 = vsel %vm528, %v1796, 0
      %1824 = vmatpush.msra.mxu0 0.0
      %1825 = vmatpush.msra.mxu0 0.0
      %1826 = vmatpush.msra.mxu0 0.0
      %1827 = vmatpush.msra.mxu0 0.0
      %1828 = vmatpush.msra.mxu0 0.0
      %1829 = vmatpush.msra.mxu0 0.0
      %1830 = vmatpush.msra.mxu0 0.0
      %1831 = vmatpush.msra.mxu0 0.0
      %1832 = vmatpush.msra.mxu0 0.0
      %1833 = vmatpush.msra.mxu0 0.0
      %1834 = vmatpush.msra.mxu0 0.0
      %1835 = vmatpush.msra.mxu0 0.0
      %1836 = vmatpush.msra.mxu0 0.0
      %1837 = vmatpush.msra.mxu0 0.0
      %1838 = vmatpush.msra.mxu0 0.0
      %1839 = vmatpush.msra.mxu0 %v1822
      %1840 = vmatmul.f32.gmra.mxu0 %v1798
      %v1841 = vpop.f32.mrf.mxu0
      %v1842 = vadd.f32 0.0, %v1841
      %1843 = vmatmul.f32.gmra.mxu0 %v1801
      %v1844 = vpop.f32.mrf.mxu0
      %v1845 = vadd.f32 0.0, %v1844
      %1846 = vmatmul.f32.gmra.mxu0 %v1804
      %v1847 = vpop.f32.mrf.mxu0
      %v1848 = vadd.f32 0.0, %v1847
      %1849 = vmatmul.f32.gmra.mxu0 %v1807
      %v1850 = vpop.f32.mrf.mxu0
      %v1851 = vadd.f32 0.0, %v1850
      %1852 = vmatmul.f32.gmra.mxu0 %v1810
      %v1853 = vpop.f32.mrf.mxu0
      %v1854 = vadd.f32 0.0, %v1853
      %1855 = vmatmul.f32.gmra.mxu0 %v1813
      %v1856 = vpop.f32.mrf.mxu0
      %v1857 = vadd.f32 0.0, %v1856
      %1858 = vmatmul.f32.gmra.mxu0 %v1816
      %v1859 = vpop.f32.mrf.mxu0
      %v1860 = vadd.f32 0.0, %v1859
      %1861 = vmatmul.f32.gmra.mxu0 %v1819
      %v1862 = vpop.f32.mrf.mxu0
      %v1863 = vadd.f32 0.0, %v1862
      %1864 = vdwg.mxu0
      %v1865 = vadd.f32 %v1778, %v1842
      %v1866 = vadd.f32 %v1779, %v1845
      %v1867 = vadd.f32 %v1780, %v1848
      %v1868 = vadd.f32 %v1781, %v1851
      %v1869 = vadd.f32 %v1782, %v1854
      %v1870 = vadd.f32 %v1783, %v1857
      %v1871 = vadd.f32 %v1784, %v1860
      %v1872 = vadd.f32 %v1785, %v1863
      %v1873 = vld [vmem:[%s1786 + $0x1] sm:$0xff]
      %v1874 = vld [vmem:[%s1786 + $0x11] sm:$0xff]
      %v1875 = vld [vmem:[%s1786 + $0x21] sm:$0xff]
      %v1876 = vld [vmem:[%s1786 + $0x31] sm:$0xff]
      %v1877 = vld [vmem:[%s1786 + $0x41] sm:$0xff]
      %v1878 = vld [vmem:[%s1786 + $0x51] sm:$0xff]
      %v1879 = vld [vmem:[%s1786 + $0x61] sm:$0xff]
      %v1880 = vld [vmem:[%s1786 + $0x71] sm:$0xff]
      %s1881 = scalar_lea.vmem %s3, 64
      %v1882 = vld [vmem:[%s1881] sm:$0xf]
      %v1884 = vsel %vm455, %v1873, 0
      %v1887 = vsel %vm455, %v1874, 0
      %v1890 = vsel %vm455, %v1875, 0
      %v1893 = vsel %vm455, %v1876, 0
      %v1896 = vsel %vm455, %v1877, 0
      %v1899 = vsel %vm455, %v1878, 0
      %v1902 = vsel %vm455, %v1879, 0
      %v1905 = vsel %vm455, %v1880, 0
      %v1908 = vsel %vm528, %v1882, 0
      %1910 = vmatpush.msra.mxu0 0.0
      %1911 = vmatpush.msra.mxu0 0.0
      %1912 = vmatpush.msra.mxu0 0.0
      %1913 = vmatpush.msra.mxu0 0.0
      %1914 = vmatpush.msra.mxu0 0.0
      %1915 = vmatpush.msra.mxu0 0.0
      %1916 = vmatpush.msra.mxu0 0.0
      %1917 = vmatpush.msra.mxu0 0.0
      %1918 = vmatpush.msra.mxu0 0.0
      %1919 = vmatpush.msra.mxu0 0.0
      %1920 = vmatpush.msra.mxu0 0.0
      %1921 = vmatpush.msra.mxu0 0.0
      %1922 = vmatpush.msra.mxu0 0.0
      %1923 = vmatpush.msra.mxu0 0.0
      %1924 = vmatpush.msra.mxu0 0.0
      %1925 = vmatpush.msra.mxu0 %v1908
      %1926 = vmatmul.f32.gmra.mxu0 %v1884
      %v1927 = vpop.f32.mrf.mxu0
      %v1928 = vadd.f32 0.0, %v1927
      %1929 = vmatmul.f32.gmra.mxu0 %v1887
      %v1930 = vpop.f32.mrf.mxu0
      %v1931 = vadd.f32 0.0, %v1930
      %1932 = vmatmul.f32.gmra.mxu0 %v1890
      %v1933 = vpop.f32.mrf.mxu0
      %v1934 = vadd.f32 0.0, %v1933
      %1935 = vmatmul.f32.gmra.mxu0 %v1893
      %v1936 = vpop.f32.mrf.mxu0
      %v1937 = vadd.f32 0.0, %v1936
      %1938 = vmatmul.f32.gmra.mxu0 %v1896
      %v1939 = vpop.f32.mrf.mxu0
      %v1940 = vadd.f32 0.0, %v1939
      %1941 = vmatmul.f32.gmra.mxu0 %v1899
      %v1942 = vpop.f32.mrf.mxu0
      %v1943 = vadd.f32 0.0, %v1942
      %1944 = vmatmul.f32.gmra.mxu0 %v1902
      %v1945 = vpop.f32.mrf.mxu0
      %v1946 = vadd.f32 0.0, %v1945
      %1947 = vmatmul.f32.gmra.mxu0 %v1905
      %v1948 = vpop.f32.mrf.mxu0
      %v1949 = vadd.f32 0.0, %v1948
      %1950 = vdwg.mxu0
      %v1951 = vadd.f32 %v1865, %v1928
      %v1952 = vadd.f32 %v1866, %v1931
      %v1953 = vadd.f32 %v1867, %v1934
      %v1954 = vadd.f32 %v1868, %v1937
      %v1955 = vadd.f32 %v1869, %v1940
      %v1956 = vadd.f32 %v1870, %v1943
      %v1957 = vadd.f32 %v1871, %v1946
      %v1958 = vadd.f32 %v1872, %v1949
      %v1959 = vld [vmem:[%s1786 + $0x2] sm:$0xff]
      %v1960 = vld [vmem:[%s1786 + $0x12] sm:$0xff]
      %v1961 = vld [vmem:[%s1786 + $0x22] sm:$0xff]
      %v1962 = vld [vmem:[%s1786 + $0x32] sm:$0xff]
      %v1963 = vld [vmem:[%s1786 + $0x42] sm:$0xff]
      %v1964 = vld [vmem:[%s1786 + $0x52] sm:$0xff]
      %v1965 = vld [vmem:[%s1786 + $0x62] sm:$0xff]
      %v1966 = vld [vmem:[%s1786 + $0x72] sm:$0xff]
      %s1967 = scalar_lea.vmem %s3, 68
      %v1968 = vld [vmem:[%s1967] sm:$0xf]
      %v1970 = vsel %vm455, %v1959, 0
      %v1973 = vsel %vm455, %v1960, 0
      %v1976 = vsel %vm455, %v1961, 0
      %v1979 = vsel %vm455, %v1962, 0
      %v1982 = vsel %vm455, %v1963, 0
      %v1985 = vsel %vm455, %v1964, 0
      %v1988 = vsel %vm455, %v1965, 0
      %v1991 = vsel %vm455, %v1966, 0
      %v1994 = vsel %vm528, %v1968, 0
      %1996 = vmatpush.msra.mxu0 0.0
      %1997 = vmatpush.msra.mxu0 0.0
      %1998 = vmatpush.msra.mxu0 0.0
      %1999 = vmatpush.msra.mxu0 0.0
      %2000 = vmatpush.msra.mxu0 0.0
      %2001 = vmatpush.msra.mxu0 0.0
      %2002 = vmatpush.msra.mxu0 0.0
      %2003 = vmatpush.msra.mxu0 0.0
      %2004 = vmatpush.msra.mxu0 0.0
      %2005 = vmatpush.msra.mxu0 0.0
      %2006 = vmatpush.msra.mxu0 0.0
      %2007 = vmatpush.msra.mxu0 0.0
      %2008 = vmatpush.msra.mxu0 0.0
      %2009 = vmatpush.msra.mxu0 0.0
      %2010 = vmatpush.msra.mxu0 0.0
      %2011 = vmatpush.msra.mxu0 %v1994
      %2012 = vmatmul.f32.gmra.mxu0 %v1970
      %v2013 = vpop.f32.mrf.mxu0
      %v2014 = vadd.f32 0.0, %v2013
      %2015 = vmatmul.f32.gmra.mxu0 %v1973
      %v2016 = vpop.f32.mrf.mxu0
      %v2017 = vadd.f32 0.0, %v2016
      %2018 = vmatmul.f32.gmra.mxu0 %v1976
      %v2019 = vpop.f32.mrf.mxu0
      %v2020 = vadd.f32 0.0, %v2019
      %2021 = vmatmul.f32.gmra.mxu0 %v1979
      %v2022 = vpop.f32.mrf.mxu0
      %v2023 = vadd.f32 0.0, %v2022
      %2024 = vmatmul.f32.gmra.mxu0 %v1982
      %v2025 = vpop.f32.mrf.mxu0
      %v2026 = vadd.f32 0.0, %v2025
      %2027 = vmatmul.f32.gmra.mxu0 %v1985
      %v2028 = vpop.f32.mrf.mxu0
      %v2029 = vadd.f32 0.0, %v2028
      %2030 = vmatmul.f32.gmra.mxu0 %v1988
      %v2031 = vpop.f32.mrf.mxu0
      %v2032 = vadd.f32 0.0, %v2031
      %2033 = vmatmul.f32.gmra.mxu0 %v1991
      %v2034 = vpop.f32.mrf.mxu0
      %v2035 = vadd.f32 0.0, %v2034
      %2036 = vdwg.mxu0
      %v2037 = vadd.f32 %v1951, %v2014
      %v2038 = vadd.f32 %v1952, %v2017
      %v2039 = vadd.f32 %v1953, %v2020
      %v2040 = vadd.f32 %v1954, %v2023
      %v2041 = vadd.f32 %v1955, %v2026
      %v2042 = vadd.f32 %v1956, %v2029
      %v2043 = vadd.f32 %v1957, %v2032
      %v2044 = vadd.f32 %v1958, %v2035
      %v2045 = vld [vmem:[%s1786 + $0x3] sm:$0xff]
      %v2046 = vld [vmem:[%s1786 + $0x13] sm:$0xff]
      %v2047 = vld [vmem:[%s1786 + $0x23] sm:$0xff]
      %v2048 = vld [vmem:[%s1786 + $0x33] sm:$0xff]
      %v2049 = vld [vmem:[%s1786 + $0x43] sm:$0xff]
      %v2050 = vld [vmem:[%s1786 + $0x53] sm:$0xff]
      %v2051 = vld [vmem:[%s1786 + $0x63] sm:$0xff]
      %v2052 = vld [vmem:[%s1786 + $0x73] sm:$0xff]
      %s2053 = scalar_lea.vmem %s3, 72
      %v2054 = vld [vmem:[%s2053] sm:$0xf]
      %v2056 = vsel %vm455, %v2045, 0
      %v2059 = vsel %vm455, %v2046, 0
      %v2062 = vsel %vm455, %v2047, 0
      %v2065 = vsel %vm455, %v2048, 0
      %v2068 = vsel %vm455, %v2049, 0
      %v2071 = vsel %vm455, %v2050, 0
      %v2074 = vsel %vm455, %v2051, 0
      %v2077 = vsel %vm455, %v2052, 0
      %v2080 = vsel %vm528, %v2054, 0
      %2082 = vmatpush.msra.mxu0 0.0
      %2083 = vmatpush.msra.mxu0 0.0
      %2084 = vmatpush.msra.mxu0 0.0
      %2085 = vmatpush.msra.mxu0 0.0
      %2086 = vmatpush.msra.mxu0 0.0
      %2087 = vmatpush.msra.mxu0 0.0
      %2088 = vmatpush.msra.mxu0 0.0
      %2089 = vmatpush.msra.mxu0 0.0
      %2090 = vmatpush.msra.mxu0 0.0
      %2091 = vmatpush.msra.mxu0 0.0
      %2092 = vmatpush.msra.mxu0 0.0
      %2093 = vmatpush.msra.mxu0 0.0
      %2094 = vmatpush.msra.mxu0 0.0
      %2095 = vmatpush.msra.mxu0 0.0
      %2096 = vmatpush.msra.mxu0 0.0
      %2097 = vmatpush.msra.mxu0 %v2080
      %2098 = vmatmul.f32.gmra.mxu0 %v2056
      %v2099 = vpop.f32.mrf.mxu0
      %v2100 = vadd.f32 0.0, %v2099
      %2101 = vmatmul.f32.gmra.mxu0 %v2059
      %v2102 = vpop.f32.mrf.mxu0
      %v2103 = vadd.f32 0.0, %v2102
      %2104 = vmatmul.f32.gmra.mxu0 %v2062
      %v2105 = vpop.f32.mrf.mxu0
      %v2106 = vadd.f32 0.0, %v2105
      %2107 = vmatmul.f32.gmra.mxu0 %v2065
      %v2108 = vpop.f32.mrf.mxu0
      %v2109 = vadd.f32 0.0, %v2108
      %2110 = vmatmul.f32.gmra.mxu0 %v2068
      %v2111 = vpop.f32.mrf.mxu0
      %v2112 = vadd.f32 0.0, %v2111
      %2113 = vmatmul.f32.gmra.mxu0 %v2071
      %v2114 = vpop.f32.mrf.mxu0
      %v2115 = vadd.f32 0.0, %v2114
      %2116 = vmatmul.f32.gmra.mxu0 %v2074
      %v2117 = vpop.f32.mrf.mxu0
      %v2118 = vadd.f32 0.0, %v2117
      %2119 = vmatmul.f32.gmra.mxu0 %v2077
      %v2120 = vpop.f32.mrf.mxu0
      %v2121 = vadd.f32 0.0, %v2120
      %2122 = vdwg.mxu0
      %v2123 = vadd.f32 %v2037, %v2100
      %v2124 = vadd.f32 %v2038, %v2103
      %v2125 = vadd.f32 %v2039, %v2106
      %v2126 = vadd.f32 %v2040, %v2109
      %v2127 = vadd.f32 %v2041, %v2112
      %v2128 = vadd.f32 %v2042, %v2115
      %v2129 = vadd.f32 %v2043, %v2118
      %v2130 = vadd.f32 %v2044, %v2121
      %v2131 = vld [vmem:[%s1786 + $0x4] sm:$0xff]
      %v2132 = vld [vmem:[%s1786 + $0x14] sm:$0xff]
      %v2133 = vld [vmem:[%s1786 + $0x24] sm:$0xff]
      %v2134 = vld [vmem:[%s1786 + $0x34] sm:$0xff]
      %v2135 = vld [vmem:[%s1786 + $0x44] sm:$0xff]
      %v2136 = vld [vmem:[%s1786 + $0x54] sm:$0xff]
      %v2137 = vld [vmem:[%s1786 + $0x64] sm:$0xff]
      %v2138 = vld [vmem:[%s1786 + $0x74] sm:$0xff]
      %s2139 = scalar_lea.vmem %s3, 76
      %v2140 = vld [vmem:[%s2139] sm:$0xf]
      %v2142 = vsel %vm455, %v2131, 0
      %v2145 = vsel %vm455, %v2132, 0
      %v2148 = vsel %vm455, %v2133, 0
      %v2151 = vsel %vm455, %v2134, 0
      %v2154 = vsel %vm455, %v2135, 0
      %v2157 = vsel %vm455, %v2136, 0
      %v2160 = vsel %vm455, %v2137, 0
      %v2163 = vsel %vm455, %v2138, 0
      %v2166 = vsel %vm528, %v2140, 0
      %2168 = vmatpush.msra.mxu0 0.0
      %2169 = vmatpush.msra.mxu0 0.0
      %2170 = vmatpush.msra.mxu0 0.0
      %2171 = vmatpush.msra.mxu0 0.0
      %2172 = vmatpush.msra.mxu0 0.0
      %2173 = vmatpush.msra.mxu0 0.0
      %2174 = vmatpush.msra.mxu0 0.0
      %2175 = vmatpush.msra.mxu0 0.0
      %2176 = vmatpush.msra.mxu0 0.0
      %2177 = vmatpush.msra.mxu0 0.0
      %2178 = vmatpush.msra.mxu0 0.0
      %2179 = vmatpush.msra.mxu0 0.0
      %2180 = vmatpush.msra.mxu0 0.0
      %2181 = vmatpush.msra.mxu0 0.0
      %2182 = vmatpush.msra.mxu0 0.0
      %2183 = vmatpush.msra.mxu0 %v2166
      %2184 = vmatmul.f32.gmra.mxu0 %v2142
      %v2185 = vpop.f32.mrf.mxu0
      %v2186 = vadd.f32 0.0, %v2185
      %2187 = vmatmul.f32.gmra.mxu0 %v2145
      %v2188 = vpop.f32.mrf.mxu0
      %v2189 = vadd.f32 0.0, %v2188
      %2190 = vmatmul.f32.gmra.mxu0 %v2148
      %v2191 = vpop.f32.mrf.mxu0
      %v2192 = vadd.f32 0.0, %v2191
      %2193 = vmatmul.f32.gmra.mxu0 %v2151
      %v2194 = vpop.f32.mrf.mxu0
      %v2195 = vadd.f32 0.0, %v2194
      %2196 = vmatmul.f32.gmra.mxu0 %v2154
      %v2197 = vpop.f32.mrf.mxu0
      %v2198 = vadd.f32 0.0, %v2197
      %2199 = vmatmul.f32.gmra.mxu0 %v2157
      %v2200 = vpop.f32.mrf.mxu0
      %v2201 = vadd.f32 0.0, %v2200
      %2202 = vmatmul.f32.gmra.mxu0 %v2160
      %v2203 = vpop.f32.mrf.mxu0
      %v2204 = vadd.f32 0.0, %v2203
      %2205 = vmatmul.f32.gmra.mxu0 %v2163
      %v2206 = vpop.f32.mrf.mxu0
      %v2207 = vadd.f32 0.0, %v2206
      %2208 = vdwg.mxu0
      %v2209 = vadd.f32 %v2123, %v2186
      %v2210 = vadd.f32 %v2124, %v2189
      %v2211 = vadd.f32 %v2125, %v2192
      %v2212 = vadd.f32 %v2126, %v2195
      %v2213 = vadd.f32 %v2127, %v2198
      %v2214 = vadd.f32 %v2128, %v2201
      %v2215 = vadd.f32 %v2129, %v2204
      %v2216 = vadd.f32 %v2130, %v2207
      %s2217 = scalar_lea.vmem [#allocation2], 64
      %v2218 = vld [vmem:[%s2217] sm:$0xff]
      %v2219 = vld [vmem:[%s2217 + $0x10] sm:$0xff]
      %v2220 = vld [vmem:[%s2217 + $0x20] sm:$0xff]
      %v2221 = vld [vmem:[%s2217 + $0x30] sm:$0xff]
      %v2222 = vld [vmem:[%s2217 + $0x40] sm:$0xff]
      %v2223 = vld [vmem:[%s2217 + $0x50] sm:$0xff]
      %v2224 = vld [vmem:[%s2217 + $0x60] sm:$0xff]
      %v2225 = vld [vmem:[%s2217 + $0x70] sm:$0xff]
      %s2226 = scalar_lea.vmem %s3, 80
      %v2227 = vld [vmem:[%s2226] sm:$0xf]
      %v2229 = vsel %vm455, %v2218, 0
      %v2232 = vsel %vm455, %v2219, 0
      %v2235 = vsel %vm455, %v2220, 0
      %v2238 = vsel %vm455, %v2221, 0
      %v2241 = vsel %vm455, %v2222, 0
      %v2244 = vsel %vm455, %v2223, 0
      %v2247 = vsel %vm455, %v2224, 0
      %v2250 = vsel %vm455, %v2225, 0
      %v2253 = vsel %vm528, %v2227, 0
      %2255 = vmatpush.msra.mxu0 0.0
      %2256 = vmatpush.msra.mxu0 0.0
      %2257 = vmatpush.msra.mxu0 0.0
      %2258 = vmatpush.msra.mxu0 0.0
      %2259 = vmatpush.msra.mxu0 0.0
      %2260 = vmatpush.msra.mxu0 0.0
      %2261 = vmatpush.msra.mxu0 0.0
      %2262 = vmatpush.msra.mxu0 0.0
      %2263 = vmatpush.msra.mxu0 0.0
      %2264 = vmatpush.msra.mxu0 0.0
      %2265 = vmatpush.msra.mxu0 0.0
      %2266 = vmatpush.msra.mxu0 0.0
      %2267 = vmatpush.msra.mxu0 0.0
      %2268 = vmatpush.msra.mxu0 0.0
      %2269 = vmatpush.msra.mxu0 0.0
      %2270 = vmatpush.msra.mxu0 %v2253
      %2271 = vmatmul.f32.gmra.mxu0 %v2229
      %v2272 = vpop.f32.mrf.mxu0
      %v2273 = vadd.f32 0.0, %v2272
      %2274 = vmatmul.f32.gmra.mxu0 %v2232
      %v2275 = vpop.f32.mrf.mxu0
      %v2276 = vadd.f32 0.0, %v2275
      %2277 = vmatmul.f32.gmra.mxu0 %v2235
      %v2278 = vpop.f32.mrf.mxu0
      %v2279 = vadd.f32 0.0, %v2278
      %2280 = vmatmul.f32.gmra.mxu0 %v2238
      %v2281 = vpop.f32.mrf.mxu0
      %v2282 = vadd.f32 0.0, %v2281
      %2283 = vmatmul.f32.gmra.mxu0 %v2241
      %v2284 = vpop.f32.mrf.mxu0
      %v2285 = vadd.f32 0.0, %v2284
      %2286 = vmatmul.f32.gmra.mxu0 %v2244
      %v2287 = vpop.f32.mrf.mxu0
      %v2288 = vadd.f32 0.0, %v2287
      %2289 = vmatmul.f32.gmra.mxu0 %v2247
      %v2290 = vpop.f32.mrf.mxu0
      %v2291 = vadd.f32 0.0, %v2290
      %2292 = vmatmul.f32.gmra.mxu0 %v2250
      %v2293 = vpop.f32.mrf.mxu0
      %v2294 = vadd.f32 0.0, %v2293
      %2295 = vdwg.mxu0
      %v2296 = vadd.f32 %v2209, %v2273
      %v2297 = vadd.f32 %v2210, %v2276
      %v2298 = vadd.f32 %v2211, %v2279
      %v2299 = vadd.f32 %v2212, %v2282
      %v2300 = vadd.f32 %v2213, %v2285
      %v2301 = vadd.f32 %v2214, %v2288
      %v2302 = vadd.f32 %v2215, %v2291
      %v2303 = vadd.f32 %v2216, %v2294
      %v2304 = vld [vmem:[%s2217 + $0x1] sm:$0xff]
      %v2305 = vld [vmem:[%s2217 + $0x11] sm:$0xff]
      %v2306 = vld [vmem:[%s2217 + $0x21] sm:$0xff]
      %v2307 = vld [vmem:[%s2217 + $0x31] sm:$0xff]
      %v2308 = vld [vmem:[%s2217 + $0x41] sm:$0xff]
      %v2309 = vld [vmem:[%s2217 + $0x51] sm:$0xff]
      %v2310 = vld [vmem:[%s2217 + $0x61] sm:$0xff]
      %v2311 = vld [vmem:[%s2217 + $0x71] sm:$0xff]
      %s2312 = scalar_lea.vmem %s3, 84
      %v2313 = vld [vmem:[%s2312] sm:$0xf]
      %v2315 = vsel %vm455, %v2304, 0
      %v2318 = vsel %vm455, %v2305, 0
      %v2321 = vsel %vm455, %v2306, 0
      %v2324 = vsel %vm455, %v2307, 0
      %v2327 = vsel %vm455, %v2308, 0
      %v2330 = vsel %vm455, %v2309, 0
      %v2333 = vsel %vm455, %v2310, 0
      %v2336 = vsel %vm455, %v2311, 0
      %v2339 = vsel %vm528, %v2313, 0
      %2341 = vmatpush.msra.mxu0 0.0
      %2342 = vmatpush.msra.mxu0 0.0
      %2343 = vmatpush.msra.mxu0 0.0
      %2344 = vmatpush.msra.mxu0 0.0
      %2345 = vmatpush.msra.mxu0 0.0
      %2346 = vmatpush.msra.mxu0 0.0
      %2347 = vmatpush.msra.mxu0 0.0
      %2348 = vmatpush.msra.mxu0 0.0
      %2349 = vmatpush.msra.mxu0 0.0
      %2350 = vmatpush.msra.mxu0 0.0
      %2351 = vmatpush.msra.mxu0 0.0
      %2352 = vmatpush.msra.mxu0 0.0
      %2353 = vmatpush.msra.mxu0 0.0
      %2354 = vmatpush.msra.mxu0 0.0
      %2355 = vmatpush.msra.mxu0 0.0
      %2356 = vmatpush.msra.mxu0 %v2339
      %2357 = vmatmul.f32.gmra.mxu0 %v2315
      %v2358 = vpop.f32.mrf.mxu0
      %v2359 = vadd.f32 0.0, %v2358
      %2360 = vmatmul.f32.gmra.mxu0 %v2318
      %v2361 = vpop.f32.mrf.mxu0
      %v2362 = vadd.f32 0.0, %v2361
      %2363 = vmatmul.f32.gmra.mxu0 %v2321
      %v2364 = vpop.f32.mrf.mxu0
      %v2365 = vadd.f32 0.0, %v2364
      %2366 = vmatmul.f32.gmra.mxu0 %v2324
      %v2367 = vpop.f32.mrf.mxu0
      %v2368 = vadd.f32 0.0, %v2367
      %2369 = vmatmul.f32.gmra.mxu0 %v2327
      %v2370 = vpop.f32.mrf.mxu0
      %v2371 = vadd.f32 0.0, %v2370
      %2372 = vmatmul.f32.gmra.mxu0 %v2330
      %v2373 = vpop.f32.mrf.mxu0
      %v2374 = vadd.f32 0.0, %v2373
      %2375 = vmatmul.f32.gmra.mxu0 %v2333
      %v2376 = vpop.f32.mrf.mxu0
      %v2377 = vadd.f32 0.0, %v2376
      %2378 = vmatmul.f32.gmra.mxu0 %v2336
      %v2379 = vpop.f32.mrf.mxu0
      %v2380 = vadd.f32 0.0, %v2379
      %2381 = vdwg.mxu0
      %v2382 = vadd.f32 %v2296, %v2359
      %v2383 = vadd.f32 %v2297, %v2362
      %v2384 = vadd.f32 %v2298, %v2365
      %v2385 = vadd.f32 %v2299, %v2368
      %v2386 = vadd.f32 %v2300, %v2371
      %v2387 = vadd.f32 %v2301, %v2374
      %v2388 = vadd.f32 %v2302, %v2377
      %v2389 = vadd.f32 %v2303, %v2380
      %v2390 = vld [vmem:[%s2217 + $0x2] sm:$0xff]
      %v2391 = vld [vmem:[%s2217 + $0x12] sm:$0xff]
      %v2392 = vld [vmem:[%s2217 + $0x22] sm:$0xff]
      %v2393 = vld [vmem:[%s2217 + $0x32] sm:$0xff]
      %v2394 = vld [vmem:[%s2217 + $0x42] sm:$0xff]
      %v2395 = vld [vmem:[%s2217 + $0x52] sm:$0xff]
      %v2396 = vld [vmem:[%s2217 + $0x62] sm:$0xff]
      %v2397 = vld [vmem:[%s2217 + $0x72] sm:$0xff]
      %s2398 = scalar_lea.vmem %s3, 88
      %v2399 = vld [vmem:[%s2398] sm:$0xf]
      %v2401 = vsel %vm455, %v2390, 0
      %v2404 = vsel %vm455, %v2391, 0
      %v2407 = vsel %vm455, %v2392, 0
      %v2410 = vsel %vm455, %v2393, 0
      %v2413 = vsel %vm455, %v2394, 0
      %v2416 = vsel %vm455, %v2395, 0
      %v2419 = vsel %vm455, %v2396, 0
      %v2422 = vsel %vm455, %v2397, 0
      %v2425 = vsel %vm528, %v2399, 0
      %2427 = vmatpush.msra.mxu0 0.0
      %2428 = vmatpush.msra.mxu0 0.0
      %2429 = vmatpush.msra.mxu0 0.0
      %2430 = vmatpush.msra.mxu0 0.0
      %2431 = vmatpush.msra.mxu0 0.0
      %2432 = vmatpush.msra.mxu0 0.0
      %2433 = vmatpush.msra.mxu0 0.0
      %2434 = vmatpush.msra.mxu0 0.0
      %2435 = vmatpush.msra.mxu0 0.0
      %2436 = vmatpush.msra.mxu0 0.0
      %2437 = vmatpush.msra.mxu0 0.0
      %2438 = vmatpush.msra.mxu0 0.0
      %2439 = vmatpush.msra.mxu0 0.0
      %2440 = vmatpush.msra.mxu0 0.0
      %2441 = vmatpush.msra.mxu0 0.0
      %2442 = vmatpush.msra.mxu0 %v2425
      %2443 = vmatmul.f32.gmra.mxu0 %v2401
      %v2444 = vpop.f32.mrf.mxu0
      %v2445 = vadd.f32 0.0, %v2444
      %2446 = vmatmul.f32.gmra.mxu0 %v2404
      %v2447 = vpop.f32.mrf.mxu0
      %v2448 = vadd.f32 0.0, %v2447
      %2449 = vmatmul.f32.gmra.mxu0 %v2407
      %v2450 = vpop.f32.mrf.mxu0
      %v2451 = vadd.f32 0.0, %v2450
      %2452 = vmatmul.f32.gmra.mxu0 %v2410
      %v2453 = vpop.f32.mrf.mxu0
      %v2454 = vadd.f32 0.0, %v2453
      %2455 = vmatmul.f32.gmra.mxu0 %v2413
      %v2456 = vpop.f32.mrf.mxu0
      %v2457 = vadd.f32 0.0, %v2456
      %2458 = vmatmul.f32.gmra.mxu0 %v2416
      %v2459 = vpop.f32.mrf.mxu0
      %v2460 = vadd.f32 0.0, %v2459
      %2461 = vmatmul.f32.gmra.mxu0 %v2419
      %v2462 = vpop.f32.mrf.mxu0
      %v2463 = vadd.f32 0.0, %v2462
      %2464 = vmatmul.f32.gmra.mxu0 %v2422
      %v2465 = vpop.f32.mrf.mxu0
      %v2466 = vadd.f32 0.0, %v2465
      %2467 = vdwg.mxu0
      %v2468 = vadd.f32 %v2382, %v2445
      %v2469 = vadd.f32 %v2383, %v2448
      %v2470 = vadd.f32 %v2384, %v2451
      %v2471 = vadd.f32 %v2385, %v2454
      %v2472 = vadd.f32 %v2386, %v2457
      %v2473 = vadd.f32 %v2387, %v2460
      %v2474 = vadd.f32 %v2388, %v2463
      %v2475 = vadd.f32 %v2389, %v2466
      %v2476 = vld [vmem:[%s2217 + $0x3] sm:$0xff]
      %v2477 = vld [vmem:[%s2217 + $0x13] sm:$0xff]
      %v2478 = vld [vmem:[%s2217 + $0x23] sm:$0xff]
      %v2479 = vld [vmem:[%s2217 + $0x33] sm:$0xff]
      %v2480 = vld [vmem:[%s2217 + $0x43] sm:$0xff]
      %v2481 = vld [vmem:[%s2217 + $0x53] sm:$0xff]
      %v2482 = vld [vmem:[%s2217 + $0x63] sm:$0xff]
      %v2483 = vld [vmem:[%s2217 + $0x73] sm:$0xff]
      %s2484 = scalar_lea.vmem %s3, 92
      %v2485 = vld [vmem:[%s2484] sm:$0xf]
      %v2487 = vsel %vm455, %v2476, 0
      %v2490 = vsel %vm455, %v2477, 0
      %v2493 = vsel %vm455, %v2478, 0
      %v2496 = vsel %vm455, %v2479, 0
      %v2499 = vsel %vm455, %v2480, 0
      %v2502 = vsel %vm455, %v2481, 0
      %v2505 = vsel %vm455, %v2482, 0
      %v2508 = vsel %vm455, %v2483, 0
      %v2511 = vsel %vm528, %v2485, 0
      %2513 = vmatpush.msra.mxu0 0.0
      %2514 = vmatpush.msra.mxu0 0.0
      %2515 = vmatpush.msra.mxu0 0.0
      %2516 = vmatpush.msra.mxu0 0.0
      %2517 = vmatpush.msra.mxu0 0.0
      %2518 = vmatpush.msra.mxu0 0.0
      %2519 = vmatpush.msra.mxu0 0.0
      %2520 = vmatpush.msra.mxu0 0.0
      %2521 = vmatpush.msra.mxu0 0.0
      %2522 = vmatpush.msra.mxu0 0.0
      %2523 = vmatpush.msra.mxu0 0.0
      %2524 = vmatpush.msra.mxu0 0.0
      %2525 = vmatpush.msra.mxu0 0.0
      %2526 = vmatpush.msra.mxu0 0.0
      %2527 = vmatpush.msra.mxu0 0.0
      %2528 = vmatpush.msra.mxu0 %v2511
      %2529 = vmatmul.f32.gmra.mxu0 %v2487
      %v2530 = vpop.f32.mrf.mxu0
      %v2531 = vadd.f32 0.0, %v2530
      %2532 = vmatmul.f32.gmra.mxu0 %v2490
      %v2533 = vpop.f32.mrf.mxu0
      %v2534 = vadd.f32 0.0, %v2533
      %2535 = vmatmul.f32.gmra.mxu0 %v2493
      %v2536 = vpop.f32.mrf.mxu0
      %v2537 = vadd.f32 0.0, %v2536
      %2538 = vmatmul.f32.gmra.mxu0 %v2496
      %v2539 = vpop.f32.mrf.mxu0
      %v2540 = vadd.f32 0.0, %v2539
      %2541 = vmatmul.f32.gmra.mxu0 %v2499
      %v2542 = vpop.f32.mrf.mxu0
      %v2543 = vadd.f32 0.0, %v2542
      %2544 = vmatmul.f32.gmra.mxu0 %v2502
      %v2545 = vpop.f32.mrf.mxu0
      %v2546 = vadd.f32 0.0, %v2545
      %2547 = vmatmul.f32.gmra.mxu0 %v2505
      %v2548 = vpop.f32.mrf.mxu0
      %v2549 = vadd.f32 0.0, %v2548
      %2550 = vmatmul.f32.gmra.mxu0 %v2508
      %v2551 = vpop.f32.mrf.mxu0
      %v2552 = vadd.f32 0.0, %v2551
      %2553 = vdwg.mxu0
      %v2554 = vadd.f32 %v2468, %v2531
      %v2555 = vadd.f32 %v2469, %v2534
      %v2556 = vadd.f32 %v2470, %v2537
      %v2557 = vadd.f32 %v2471, %v2540
      %v2558 = vadd.f32 %v2472, %v2543
      %v2559 = vadd.f32 %v2473, %v2546
      %v2560 = vadd.f32 %v2474, %v2549
      %v2561 = vadd.f32 %v2475, %v2552
      %v2562 = vld [vmem:[%s2217 + $0x4] sm:$0xff]
      %v2563 = vld [vmem:[%s2217 + $0x14] sm:$0xff]
      %v2564 = vld [vmem:[%s2217 + $0x24] sm:$0xff]
      %v2565 = vld [vmem:[%s2217 + $0x34] sm:$0xff]
      %v2566 = vld [vmem:[%s2217 + $0x44] sm:$0xff]
      %v2567 = vld [vmem:[%s2217 + $0x54] sm:$0xff]
      %v2568 = vld [vmem:[%s2217 + $0x64] sm:$0xff]
      %v2569 = vld [vmem:[%s2217 + $0x74] sm:$0xff]
      %s2570 = scalar_lea.vmem %s3, 96
      %v2571 = vld [vmem:[%s2570] sm:$0xf]
      %v2573 = vsel %vm455, %v2562, 0
      %v2576 = vsel %vm455, %v2563, 0
      %v2579 = vsel %vm455, %v2564, 0
      %v2582 = vsel %vm455, %v2565, 0
      %v2585 = vsel %vm455, %v2566, 0
      %v2588 = vsel %vm455, %v2567, 0
      %v2591 = vsel %vm455, %v2568, 0
      %v2594 = vsel %vm455, %v2569, 0
      %v2597 = vsel %vm528, %v2571, 0
      %2599 = vmatpush.msra.mxu0 0.0
      %2600 = vmatpush.msra.mxu0 0.0
      %2601 = vmatpush.msra.mxu0 0.0
      %2602 = vmatpush.msra.mxu0 0.0
      %2603 = vmatpush.msra.mxu0 0.0
      %2604 = vmatpush.msra.mxu0 0.0
      %2605 = vmatpush.msra.mxu0 0.0
      %2606 = vmatpush.msra.mxu0 0.0
      %2607 = vmatpush.msra.mxu0 0.0
      %2608 = vmatpush.msra.mxu0 0.0
      %2609 = vmatpush.msra.mxu0 0.0
      %2610 = vmatpush.msra.mxu0 0.0
      %2611 = vmatpush.msra.mxu0 0.0
      %2612 = vmatpush.msra.mxu0 0.0
      %2613 = vmatpush.msra.mxu0 0.0
      %2614 = vmatpush.msra.mxu0 %v2597
      %2615 = vmatmul.f32.gmra.mxu0 %v2573
      %v2616 = vpop.f32.mrf.mxu0
      %v2617 = vadd.f32 0.0, %v2616
      %2618 = vmatmul.f32.gmra.mxu0 %v2576
      %v2619 = vpop.f32.mrf.mxu0
      %v2620 = vadd.f32 0.0, %v2619
      %2621 = vmatmul.f32.gmra.mxu0 %v2579
      %v2622 = vpop.f32.mrf.mxu0
      %v2623 = vadd.f32 0.0, %v2622
      %2624 = vmatmul.f32.gmra.mxu0 %v2582
      %v2625 = vpop.f32.mrf.mxu0
      %v2626 = vadd.f32 0.0, %v2625
      %2627 = vmatmul.f32.gmra.mxu0 %v2585
      %v2628 = vpop.f32.mrf.mxu0
      %v2629 = vadd.f32 0.0, %v2628
      %2630 = vmatmul.f32.gmra.mxu0 %v2588
      %v2631 = vpop.f32.mrf.mxu0
      %v2632 = vadd.f32 0.0, %v2631
      %2633 = vmatmul.f32.gmra.mxu0 %v2591
      %v2634 = vpop.f32.mrf.mxu0
      %v2635 = vadd.f32 0.0, %v2634
      %2636 = vmatmul.f32.gmra.mxu0 %v2594
      %v2637 = vpop.f32.mrf.mxu0
      %v2638 = vadd.f32 0.0, %v2637
      %2639 = vdwg.mxu0
      %v2640 = vadd.f32 %v2554, %v2617
      %v2641 = vadd.f32 %v2555, %v2620
      %v2642 = vadd.f32 %v2556, %v2623
      %v2643 = vadd.f32 %v2557, %v2626
      %v2644 = vadd.f32 %v2558, %v2629
      %v2645 = vadd.f32 %v2559, %v2632
      %v2646 = vadd.f32 %v2560, %v2635
      %v2647 = vadd.f32 %v2561, %v2638
      %vm2648 = vcmask 64512
      %2649 = vst.msk [vmem:[%s258] sm:$0xff] %vm2648, %v2640
      %2650 = vst.msk [vmem:[%s258 + $0x8] sm:$0xff] %vm2648, %v2641
      %2651 = vst.msk [vmem:[%s258 + $0x10] sm:$0xff] %vm2648, %v2642
      %2652 = vst.msk [vmem:[%s258 + $0x18] sm:$0xff] %vm2648, %v2643
      %2653 = vst.msk [vmem:[%s258 + $0x20] sm:$0xff] %vm2648, %v2644
      %2654 = vst.msk [vmem:[%s258 + $0x28] sm:$0xff] %vm2648, %v2645
      %2655 = vst.msk [vmem:[%s258 + $0x30] sm:$0xff] %vm2648, %v2646
      %2656 = vst.msk [vmem:[%s258 + $0x38] sm:$0xff] %vm2648, %v2647
      %v2657 = vsel %vm2648, %v2640, 0.0
      %v2658 = vsel %vm2648, %v2641, 0.0
      %v2659 = vadd.f32 %v2657, %v2658
      %v2660 = vsel %vm2648, %v2642, 0.0
      %v2661 = vadd.f32 %v2659, %v2660
      %v2662 = vsel %vm2648, %v2643, 0.0
      %v2663 = vadd.f32 %v2661, %v2662
      %v2664 = vsel %vm2648, %v2644, 0.0
      %v2665 = vadd.f32 %v2663, %v2664
      %v2666 = vsel %vm2648, %v2645, 0.0
      %v2667 = vadd.f32 %v2665, %v2666
      %v2668 = vsel %vm2648, %v2646, 0.0
      %v2669 = vadd.f32 %v2667, %v2668
      %v2670 = vsel %vm2648, %v2647, 0.0
      %v2671 = vadd.f32 %v2669, %v2670
      %v2672 = vrot.slane %v2671, 4
      %v2673 = vadd.f32 %v2671, %v2672
      %v2674 = vrot.slane %v2673, 2
      %v2675 = vadd.f32 %v2673, %v2674
      %v2676 = vrot.slane %v2675, 1
      %v2677 = vadd.f32 %v2675, %v2676
      %v2678 = vmul.f32 %v2640, %v2640
      %v2679 = vmul.f32 %v2641, %v2641
      %v2680 = vmul.f32 %v2642, %v2642
      %v2681 = vmul.f32 %v2643, %v2643
      %v2682 = vmul.f32 %v2644, %v2644
      %v2683 = vmul.f32 %v2645, %v2645
      %v2684 = vmul.f32 %v2646, %v2646
      %v2685 = vmul.f32 %v2647, %v2647
      %v2686 = vsel %vm2648, %v2678, 0.0
      %v2687 = vsel %vm2648, %v2679, 0.0
      %v2688 = vadd.f32 %v2686, %v2687
      %v2689 = vsel %vm2648, %v2680, 0.0
      %v2690 = vadd.f32 %v2688, %v2689
      %v2691 = vsel %vm2648, %v2681, 0.0
      %v2692 = vadd.f32 %v2690, %v2691
      %v2693 = vsel %vm2648, %v2682, 0.0
      %v2694 = vadd.f32 %v2692, %v2693
      %v2695 = vsel %vm2648, %v2683, 0.0
      %v2696 = vadd.f32 %v2694, %v2695
      %v2697 = vsel %vm2648, %v2684, 0.0
      %v2698 = vadd.f32 %v2696, %v2697
      %v2699 = vsel %vm2648, %v2685, 0.0
      %v2700 = vadd.f32 %v2698, %v2699
      %v2701 = vrot.slane %v2700, 4
      %v2702 = vadd.f32 %v2700, %v2701
      %v2703 = vrot.slane %v2702, 2
      %v2704 = vadd.f32 %v2702, %v2703
      %v2705 = vrot.slane %v2704, 1
      %v2706 = vadd.f32 %v2704, %v2705
      %vm2707 = vcmask 1040384
      %v2708 = vsel %vm2707, %v2677, %v2706
      %vm2709 = vcmask 58368
      %2710 = vst.msk [vmem:[%s262] sm:$0x3] %vm2709, %v2708
      %p2711 = scmp.lt.s32.totalorder %s18, 1
      %s2712 = scalar_select %p2711, %s18, 1
      %s2713 = smul.addr %s2712, 8
      %s2714 = smul.addr %s2713, 8
      %s2715 = scalar_lea.vmem %s5, %s2714
      %p2716 = scmp.lt.s32.totalorder %s18, 1
      %s2717 = scalar_select %p2716, %s18, 1
      %s2718 = smul.addr %s2717, 2
      %s2719 = scalar_lea.vmem %s6, %s2718
      // Predicated region
      $region41: #{conv_block_forward.8} parent=39 // pred_check
        %p2720 = pneg %p146
      $region42: #{conv_block_forward.8} parent=39 // pred_check_branch
        %2722 = sbr.rel (%p2720) target = $region44
      $region43: #{conv_block_forward.8} parent=39 // pred_region
        _
      $region44: #{conv_block_forward.8} parent=39 // pred_fallthru
        _
      // Predicated region
      $region45: #{conv_block_forward.8} parent=39 // pred_check
        %p2723 = pneg %p172
      $region46: #{conv_block_forward.8} parent=39 // pred_check_branch
        %2725 = sbr.rel (%p2723) target = $region48
      $region47: #{conv_block_forward.8} parent=39 // pred_region
        _
      $region48: #{conv_block_forward.8} parent=39 // pred_fallthru
        _
    $region40: #{conv_block_forward.8} parent=5 // pred_fallthru
      _
    %p2726 = scmp.le.s32.totalorder 2, %s13
    // Predicated region
    $region49: #{conv_block_forward.8} parent=5 // pred_check
      %p2727 = pneg %p2726
    $region50: #{conv_block_forward.8} parent=5 // pred_check_branch
      %2729 = sbr.rel (%p2727) target = $region52
    $region51: #{conv_block_forward.8} parent=5 // pred_region
      %s2730 = ssub.s32 %s13, 2
      // Predicated region
      $region53: #{conv_block_forward.8} parent=51 // pred_check
        %p2731 = pneg %p152
      $region54: #{conv_block_forward.8} parent=51 // pred_check_branch
        %2733 = sbr.rel (%p2731) target = $region56
      $region55: #{conv_block_forward.8} parent=51 // pred_region
        %p2734 = scmp.lt.s32.totalorder %s19, 1
        %s2735 = scalar_select %p2734, %s19, 1
        %s2736 = smul.addr %s2735, 8
        %s2737 = smul.addr %s2736, 8
        %s2738 = scalar_lea.vmem %s5, %s2737
      $region56: #{conv_block_forward.8} parent=51 // pred_fallthru
        _
      // Predicated region
      $region57: #{conv_block_forward.8} parent=51 // pred_check
        %p2739 = pneg %p178
      $region58: #{conv_block_forward.8} parent=51 // pred_check_branch
        %2741 = sbr.rel (%p2739) target = $region60
      $region59: #{conv_block_forward.8} parent=51 // pred_region
        %p2742 = scmp.lt.s32.totalorder %s19, 1
        %s2743 = scalar_select %p2742, %s19, 1
        %s2744 = smul.addr %s2743, 2
        %s2745 = scalar_lea.vmem %s6, %s2744
      $region60: #{conv_block_forward.8} parent=51 // pred_fallthru
        _
    $region52: #{conv_block_forward.8} parent=5 // pred_fallthru
      _
  $region6: #{conv_block_forward.8} parent=0 // loop_footer
    %s17 = sadd.s32 1, %s13
  $region7: #{conv_block_forward.8} parent=0 // loop_footer_branch
    %12 = sbr.rel target = $region3
  $region8: #{conv_block_forward.8} parent=0 // loop_exit
    _

</llo_original>
